<compile_context>
chip_gen: v6e
topology: v6e:2x2x1
jax: 0.10.0
libtpu: 0.0.40
codegen_flags: <defaults>
</compile_context>

<pallas_src>
import jax
import jax.numpy as jnp
from jax.experimental import pallas as pl
from jax.experimental.pallas import tpu as pltpu


def _round_up(n, m=128):
    return ((n + m - 1) // m) * m


def _write_padded(pad_ref, interior, H, W):
    """Write `interior` (H, W, C) into the center of pad_ref and zero the 1-px halo."""
    c = pad_ref.shape[-1]
    pad_ref[1:H + 1, 1:W + 1, :] = interior.astype(pad_ref.dtype)
    # Zero only the border strips (interior is written exactly once).
    pad_ref[0:1, :, :] = jnp.zeros((1, W + 2, c), pad_ref.dtype)
    pad_ref[H + 1:H + 2, :, :] = jnp.zeros((1, W + 2, c), pad_ref.dtype)
    pad_ref[:, 0:1, :] = jnp.zeros((H + 2, 1, c), pad_ref.dtype)
    pad_ref[:, W + 1:W + 2, :] = jnp.zeros((H + 2, 1, c), pad_ref.dtype)


def _conv_stage(pad_ref, w_ref, b_ref, H, W):
    """3x3 'same' conv (BN scale pre-folded) + bias + ReLU on a zero-padded VMEM tile.

    pad_ref: (H+2, W+2, Cin_p) f32 VMEM scratch, halo already zeroed.
    w_ref:   (3, 3*Cin_p, Cout_p) bf16 weights, laid out as (dy, dx*Cin_p + cin, cout).
    b_ref:   (1, Cout_p) f32 folded BN bias.
    Returns  (H*W, Cout_p) f32 post-activation.
    """
    cin_p = pad_ref.shape[-1]
    cout_p = w_ref.shape[-1]
    acc = jnp.zeros((H * W, cout_p), jnp.float32)
    for dy in range(3):
        # Concatenate the three dx-shifted windows along channels (lane axis, each
        # slab 128-aligned) and flatten spatial dims: one fat, lane-dense MXU matmul
        # per dy (3 per stage, 9 total for the fused module).
        patch = jnp.concatenate(
            [pad_ref[dy:dy + H, dx:dx + W, :] for dx in range(3)], axis=-1)
        patch = patch.reshape(H * W, 3 * cin_p).astype(jnp.bfloat16)
        acc += jnp.dot(patch, w_ref[dy], preferred_element_type=jnp.float32)
    return jnp.maximum(acc + b_ref[...], 0.0)


def triple_conv_kernel(x_ref, w1_ref, b1_ref, w2_ref, b2_ref, w3_ref, b3_ref,
                       o_ref, pad1_ref, pad2_ref, pad3_ref):
    H, W = o_ref.shape[1], o_ref.shape[2]

    # Stage 1: halo-pad the input tile directly in VMEM (no HBM pad round-trip).
    _write_padded(pad1_ref, x_ref[0], H, W)
    a1 = _conv_stage(pad1_ref, w1_ref, b1_ref, H, W)

    # Stage 2: stage-1 activation stays in VMEM (never written to HBM).
    _write_padded(pad2_ref, a1.reshape(H, W, a1.shape[-1]), H, W)
    a2 = _conv_stage(pad2_ref, w2_ref, b2_ref, H, W)

    # Stage 3.
    _write_padded(pad3_ref, a2.reshape(H, W, a2.shape[-1]), H, W)
    a3 = _conv_stage(pad3_ref, w3_ref, b3_ref, H, W)

    o_ref[0] = a3.reshape(H, W, a3.shape[-1]).astype(o_ref.dtype)


def _fold_stage_params(p, cin_p, cout_p, eps):
    """Fold BN into (scale-folded bf16 weights, f32 bias), channel-padded to 128."""
    w = p['w']                                    # (Cout, Cin, 3, 3)
    cout, cin = w.shape[0], w.shape[1]
    scale = p['gamma'] / jnp.sqrt(p['var'] + eps)
    bias = p['beta'] - p['mean'] * scale
    wf = w * scale[:, None, None, None]           # fold BN scale into conv weights
    wf = jnp.transpose(wf, (2, 3, 1, 0))          # (ky, kx, Cin, Cout)
    wf = jnp.pad(wf, ((0, 0), (0, 0), (0, cin_p - cin), (0, cout_p - cout)))
    wf = wf.reshape(3, 3 * cin_p, cout_p).astype(jnp.bfloat16)
    b = jnp.pad(bias, (0, cout_p - cout)).reshape(1, cout_p).astype(jnp.float32)
    return wf, b


def triple_conv(x_nchw, params, eps=1e-5):
    """TripleConv forward (eval mode). x_nchw: (B, Cin, H, W) -> (B, Cout, H, W)."""
    B, cin, H, W = x_nchw.shape
    chans = [cin] + [p['w'].shape[0] for p in params]        # [C0, C1, C2, C3]
    cp = [_round_up(c) for c in chans]                       # lane-dense channels

    # NCHW -> NHWC (channels on lanes), channel-pad, bf16 to halve input HBM traffic.
    x = jnp.transpose(x_nchw, (0, 2, 3, 1))
    x = jnp.pad(x, ((0, 0), (0, 0), (0, 0), (0, cp[0] - chans[0])))
    x = x.astype(jnp.bfloat16)

    folded = [_fold_stage_params(p, cp[i], cp[i + 1], eps)
              for i, p in enumerate(params)]
    (w1, b1), (w2, b2), (w3, b3) = folded

    out = pl.pallas_call(
        triple_conv_kernel,
        out_shape=jax.ShapeDtypeStruct((B, H, W, cp[3]), jnp.float32),
        grid_spec=pltpu.PrefetchScalarGridSpec(
            num_scalar_prefetch=0,
            grid=(B,),
            in_specs=[
                pl.BlockSpec((1, H, W, cp[0]), lambda b: (b, 0, 0, 0)),
                pl.BlockSpec((3, 3 * cp[0], cp[1]), lambda b: (0, 0, 0)),
                pl.BlockSpec((1, cp[1]), lambda b: (0, 0)),
                pl.BlockSpec((3, 3 * cp[1], cp[2]), lambda b: (0, 0, 0)),
                pl.BlockSpec((1, cp[2]), lambda b: (0, 0)),
                pl.BlockSpec((3, 3 * cp[2], cp[3]), lambda b: (0, 0, 0)),
                pl.BlockSpec((1, cp[3]), lambda b: (0, 0)),
            ],
            out_specs=pl.BlockSpec((1, H, W, cp[3]), lambda b: (b, 0, 0, 0)),
            scratch_shapes=[
                pltpu.VMEM((H + 2, W + 2, cp[0]), jnp.float32),
                pltpu.VMEM((H + 2, W + 2, cp[1]), jnp.float32),
                pltpu.VMEM((H + 2, W + 2, cp[2]), jnp.float32),
            ],
        ),
        compiler_params=pltpu.CompilerParams(
            dimension_semantics=("parallel",)),
    )(x, w1, b1, w2, b2, w3, b3)

    out = out[:, :, :, :chans[3]]                  # drop lane padding
    return jnp.transpose(out, (0, 3, 1, 2))        # NHWC -> NCHW


def make_params(key, in_channels, out_channels, mid_channels=None):
    """Deterministic synthetic parameters matching TripleConv.__init__ shapes."""
    mid = mid_channels if mid_channels is not None else out_channels
    chans = [(in_channels, mid), (mid, mid), (mid, out_channels)]
    params = []
    for (cin, cout) in chans:
        key, kw, kg, kb, km, kv = jax.random.split(key, 6)
        params.append({
            'w': 0.1 * jax.random.normal(kw, (cout, cin, 3, 3), jnp.float32),
            'gamma': 1.0 + 0.05 * jax.random.normal(kg, (cout,), jnp.float32),
            'beta': 0.05 * jax.random.normal(kb, (cout,), jnp.float32),
            'mean': 0.05 * jax.random.normal(km, (cout,), jnp.float32),
            'var': 1.0 + 0.05 * jax.random.uniform(kv, (cout,), jnp.float32),
        })
    return params


def _reference_triple_conv(x_nchw, params, eps=1e-5):
    """Pure-JAX reference in matching precision (bf16 matmul operands, f32 accum)."""
    x = x_nchw
    for p in params:
        scale = p['gamma'] / jnp.sqrt(p['var'] + eps)
        bias = (p['beta'] - p['mean'] * scale).reshape(1, -1, 1, 1)
        wf = (p['w'] * scale[:, None, None, None]).astype(jnp.bfloat16)
        y = jax.lax.conv_general_dilated(
            x.astype(jnp.bfloat16), wf, window_strides=(1, 1), padding='SAME',
            dimension_numbers=('NCHW', 'OIHW', 'NCHW'),
            preferred_element_type=jnp.float32)
        x = jnp.maximum(y + bias, 0.0)
    return x


if __name__ == "__main__":
    key = jax.random.PRNGKey(0)
    k_x, k_p = jax.random.split(key)

    B, Cin, H, W = 2, 4, 16, 16
    Cout = 8
    x = jax.random.normal(k_x, (B, Cin, H, W), jnp.float32)
    params = make_params(k_p, Cin, Cout)

    out = jax.block_until_ready(triple_conv(x, params))
    ref = _reference_triple_conv(x, params)

    assert out.shape == (B, Cout, H, W)
    assert jnp.allclose(out, ref, atol=2e-2, rtol=2e-2), "mismatch vs JAX reference"

    print("KERNEL_OK")
</pallas_src>

<mosaic_0001>
module attributes {stable_mosaic.version = 11 : i64} {
  func.func @triple_conv_kernel(%arg0: i32, %arg1: memref<1x16x16x128xbf16, #tpu.memory_space<vmem>>, %arg2: memref<3x384x128xbf16, #tpu.memory_space<vmem>>, %arg3: memref<1x128xf32, #tpu.memory_space<vmem>>, %arg4: memref<3x384x128xbf16, #tpu.memory_space<vmem>>, %arg5: memref<1x128xf32, #tpu.memory_space<vmem>>, %arg6: memref<3x384x128xbf16, #tpu.memory_space<vmem>>, %arg7: memref<1x128xf32, #tpu.memory_space<vmem>>, %arg8: memref<1x16x16x128xf32, #tpu.memory_space<vmem>>, %arg9: memref<18x18x128xf32, #tpu.memory_space<vmem>>, %arg10: memref<18x18x128xf32, #tpu.memory_space<vmem>>, %arg11: memref<18x18x128xf32, #tpu.memory_space<vmem>>) attributes {dimension_semantics = [#tpu.dimension_semantics<parallel>], iteration_bounds = array<i64: 2>, scalar_prefetch = 0 : i64, scratch_operands = 3 : i64, tpu.core_type = #tpu.core_type<tc>, window_params = [{transform_indices = @transform_0, window_bounds = array<i64: 1, 16, 16, 128>}, {pipeline_mode = #tpu.pipeline_mode<synchronous>, transform_indices = @transform_1, window_bounds = array<i64: 3, 384, 128>}, {pipeline_mode = #tpu.pipeline_mode<synchronous>, transform_indices = @transform_2, window_bounds = array<i64: 1, 128>}, {pipeline_mode = #tpu.pipeline_mode<synchronous>, transform_indices = @transform_3, window_bounds = array<i64: 3, 384, 128>}, {pipeline_mode = #tpu.pipeline_mode<synchronous>, transform_indices = @transform_4, window_bounds = array<i64: 1, 128>}, {pipeline_mode = #tpu.pipeline_mode<synchronous>, transform_indices = @transform_5, window_bounds = array<i64: 3, 384, 128>}, {pipeline_mode = #tpu.pipeline_mode<synchronous>, transform_indices = @transform_6, window_bounds = array<i64: 1, 128>}, {transform_indices = @transform_7, window_bounds = array<i64: 1, 16, 16, 128>}]} {
    %c0 = arith.constant 0 : index
    %c0_0 = arith.constant 0 : index
    %c0_1 = arith.constant 0 : index
    %c0_2 = arith.constant 0 : index
    %0 = vector.load %arg1[%c0, %c0_0, %c0_1, %c0_2] : memref<1x16x16x128xbf16, #tpu.memory_space<vmem>>, vector<1x16x16x128xbf16>
    %1 = vector.shape_cast %0 : vector<1x16x16x128xbf16> to vector<16x16x128xbf16>
    %2 = arith.extf %1 : vector<16x16x128xbf16> to vector<16x16x128xf32>
    %c1 = arith.constant 1 : index
    %c1_3 = arith.constant 1 : index
    %c0_4 = arith.constant 0 : index
    %3 = vector.load %arg9[%c1, %c1_3, %c0_4] : memref<18x18x128xf32, #tpu.memory_space<vmem>>, vector<16x16x128xf32>
    tpu.vector_store %arg9[%c1, %c1_3, %c0_4], %2 {strides = array<i32>} : memref<18x18x128xf32, #tpu.memory_space<vmem>>, vector<16x16x128xf32>,
    %cst = arith.constant 0.000000e+00 : f32
    %4 = vector.broadcast %cst : f32 to vector<1x18x128xf32>
    %c0_5 = arith.constant 0 : index
    %c0_6 = arith.constant 0 : index
    %c0_7 = arith.constant 0 : index
    %5 = vector.load %arg9[%c0_5, %c0_6, %c0_7] : memref<18x18x128xf32, #tpu.memory_space<vmem>>, vector<1x18x128xf32>
    tpu.vector_store %arg9[%c0_5, %c0_6, %c0_7], %4 {strides = array<i32>} : memref<18x18x128xf32, #tpu.memory_space<vmem>>, vector<1x18x128xf32>,
    %cst_8 = arith.constant 0.000000e+00 : f32
    %6 = vector.broadcast %cst_8 : f32 to vector<1x18x128xf32>
    %c17 = arith.constant 17 : index
    %c0_9 = arith.constant 0 : index
    %c0_10 = arith.constant 0 : index
    %7 = vector.load %arg9[%c17, %c0_9, %c0_10] : memref<18x18x128xf32, #tpu.memory_space<vmem>>, vector<1x18x128xf32>
    tpu.vector_store %arg9[%c17, %c0_9, %c0_10], %6 {strides = array<i32>} : memref<18x18x128xf32, #tpu.memory_space<vmem>>, vector<1x18x128xf32>,
    %cst_11 = arith.constant 0.000000e+00 : f32
    %8 = vector.broadcast %cst_11 : f32 to vector<18x1x128xf32>
    %c0_12 = arith.constant 0 : index
    %c0_13 = arith.constant 0 : index
    %c0_14 = arith.constant 0 : index
    %9 = vector.load %arg9[%c0_12, %c0_13, %c0_14] : memref<18x18x128xf32, #tpu.memory_space<vmem>>, vector<18x1x128xf32>
    tpu.vector_store %arg9[%c0_12, %c0_13, %c0_14], %8 {strides = array<i32>} : memref<18x18x128xf32, #tpu.memory_space<vmem>>, vector<18x1x128xf32>,
    %cst_15 = arith.constant 0.000000e+00 : f32
    %10 = vector.broadcast %cst_15 : f32 to vector<18x1x128xf32>
    %c0_16 = arith.constant 0 : index
    %c17_17 = arith.constant 17 : index
    %c0_18 = arith.constant 0 : index
    %11 = vector.load %arg9[%c0_16, %c17_17, %c0_18] : memref<18x18x128xf32, #tpu.memory_space<vmem>>, vector<18x1x128xf32>
    tpu.vector_store %arg9[%c0_16, %c17_17, %c0_18], %10 {strides = array<i32>} : memref<18x18x128xf32, #tpu.memory_space<vmem>>, vector<18x1x128xf32>,
    %cst_19 = arith.constant 0.000000e+00 : f32
    %12 = vector.broadcast %cst_19 : f32 to vector<256x128xf32>
    %c0_20 = arith.constant 0 : index
    %c0_21 = arith.constant 0 : index
    %c0_22 = arith.constant 0 : index
    %13 = vector.load %arg9[%c0_20, %c0_21, %c0_22] : memref<18x18x128xf32, #tpu.memory_space<vmem>>, vector<16x16x128xf32>
    %c0_23 = arith.constant 0 : index
    %c1_24 = arith.constant 1 : index
    %c0_25 = arith.constant 0 : index
    %14 = vector.load %arg9[%c0_23, %c1_24, %c0_25] : memref<18x18x128xf32, #tpu.memory_space<vmem>>, vector<16x16x128xf32>
    %c0_26 = arith.constant 0 : index
    %c2 = arith.constant 2 : index
    %c0_27 = arith.constant 0 : index
    %15 = vector.load %arg9[%c0_26, %c2, %c0_27] : memref<18x18x128xf32, #tpu.memory_space<vmem>>, vector<16x16x128xf32>
    %16 = tpu.concatenate %13, %14, %15 in 2 : vector<16x16x128xf32>, vector<16x16x128xf32>, vector<16x16x128xf32> -> vector<16x16x384xf32>
    %17 = vector.shape_cast %16 : vector<16x16x384xf32> to vector<256x384xf32>
    %18 = arith.truncf %17 : vector<256x384xf32> to vector<256x384xbf16>
    %c0_28 = arith.constant 0 : index
    %c0_29 = arith.constant 0 : index
    %c0_30 = arith.constant 0 : index
    %19 = vector.load %arg2[%c0_28, %c0_29, %c0_30] : memref<3x384x128xbf16, #tpu.memory_space<vmem>>, vector<1x384x128xbf16>
    %20 = vector.shape_cast %19 : vector<1x384x128xbf16> to vector<384x128xbf16>
    %cst_31 = arith.constant dense<0.000000e+00> : vector<256x128xf32>
    %21 = tpu.matmul %18, %20, %cst_31 {dimension_numbers = #tpu.dot_dimension_numbers<[1], [0], [0], [1], [0, 0, 1, 1], [], []>} : vector<256x384xbf16>, vector<384x128xbf16>, vector<256x128xf32> -> vector<256x128xf32>
    %22 = arith.addf %12, %21 : vector<256x128xf32>
    %c1_32 = arith.constant 1 : index
    %c0_33 = arith.constant 0 : index
    %c0_34 = arith.constant 0 : index
    %23 = vector.load %arg9[%c1_32, %c0_33, %c0_34] : memref<18x18x128xf32, #tpu.memory_space<vmem>>, vector<16x16x128xf32>
    %c1_35 = arith.constant 1 : index
    %c1_36 = arith.constant 1 : index
    %c0_37 = arith.constant 0 : index
    %24 = vector.load %arg9[%c1_35, %c1_36, %c0_37] : memref<18x18x128xf32, #tpu.memory_space<vmem>>, vector<16x16x128xf32>
    %c1_38 = arith.constant 1 : index
    %c2_39 = arith.constant 2 : index
    %c0_40 = arith.constant 0 : index
    %25 = vector.load %arg9[%c1_38, %c2_39, %c0_40] : memref<18x18x128xf32, #tpu.memory_space<vmem>>, vector<16x16x128xf32>
    %26 = tpu.concatenate %23, %24, %25 in 2 : vector<16x16x128xf32>, vector<16x16x128xf32>, vector<16x16x128xf32> -> vector<16x16x384xf32>
    %27 = vector.shape_cast %26 : vector<16x16x384xf32> to vector<256x384xf32>
    %28 = arith.truncf %27 : vector<256x384xf32> to vector<256x384xbf16>
    %c1_41 = arith.constant 1 : index
    %c0_42 = arith.constant 0 : index
    %c0_43 = arith.constant 0 : index
    %29 = vector.load %arg2[%c1_41, %c0_42, %c0_43] : memref<3x384x128xbf16, #tpu.memory_space<vmem>>, vector<1x384x128xbf16>
    %30 = vector.shape_cast %29 : vector<1x384x128xbf16> to vector<384x128xbf16>
    %cst_44 = arith.constant dense<0.000000e+00> : vector<256x128xf32>
    %31 = tpu.matmul %28, %30, %cst_44 {dimension_numbers = #tpu.dot_dimension_numbers<[1], [0], [0], [1], [0, 0, 1, 1], [], []>} : vector<256x384xbf16>, vector<384x128xbf16>, vector<256x128xf32> -> vector<256x128xf32>
    %32 = arith.addf %22, %31 : vector<256x128xf32>
    %c2_45 = arith.constant 2 : index
    %c0_46 = arith.constant 0 : index
    %c0_47 = arith.constant 0 : index
    %33 = vector.load %arg9[%c2_45, %c0_46, %c0_47] : memref<18x18x128xf32, #tpu.memory_space<vmem>>, vector<16x16x128xf32>
    %c2_48 = arith.constant 2 : index
    %c1_49 = arith.constant 1 : index
    %c0_50 = arith.constant 0 : index
    %34 = vector.load %arg9[%c2_48, %c1_49, %c0_50] : memref<18x18x128xf32, #tpu.memory_space<vmem>>, vector<16x16x128xf32>
    %c2_51 = arith.constant 2 : index
    %c2_52 = arith.constant 2 : index
    %c0_53 = arith.constant 0 : index
    %35 = vector.load %arg9[%c2_51, %c2_52, %c0_53] : memref<18x18x128xf32, #tpu.memory_space<vmem>>, vector<16x16x128xf32>
    %36 = tpu.concatenate %33, %34, %35 in 2 : vector<16x16x128xf32>, vector<16x16x128xf32>, vector<16x16x128xf32> -> vector<16x16x384xf32>
    %37 = vector.shape_cast %36 : vector<16x16x384xf32> to vector<256x384xf32>
    %38 = arith.truncf %37 : vector<256x384xf32> to vector<256x384xbf16>
    %c2_54 = arith.constant 2 : index
    %c0_55 = arith.constant 0 : index
    %c0_56 = arith.constant 0 : index
    %39 = vector.load %arg2[%c2_54, %c0_55, %c0_56] : memref<3x384x128xbf16, #tpu.memory_space<vmem>>, vector<1x384x128xbf16>
    %40 = vector.shape_cast %39 : vector<1x384x128xbf16> to vector<384x128xbf16>
    %cst_57 = arith.constant dense<0.000000e+00> : vector<256x128xf32>
    %41 = tpu.matmul %38, %40, %cst_57 {dimension_numbers = #tpu.dot_dimension_numbers<[1], [0], [0], [1], [0, 0, 1, 1], [], []>} : vector<256x384xbf16>, vector<384x128xbf16>, vector<256x128xf32> -> vector<256x128xf32>
    %42 = arith.addf %32, %41 : vector<256x128xf32>
    %c0_58 = arith.constant 0 : index
    %c0_59 = arith.constant 0 : index
    %43 = vector.load %arg3[%c0_58, %c0_59] : memref<1x128xf32, #tpu.memory_space<vmem>>, vector<1x128xf32>
    %44 = vector.broadcast %43 : vector<1x128xf32> to vector<256x128xf32>
    %45 = arith.addf %42, %44 : vector<256x128xf32>
    %cst_60 = arith.constant 0.000000e+00 : f32
    %46 = vector.broadcast %cst_60 : f32 to vector<256x128xf32>
    %47 = arith.maximumf %45, %46 : vector<256x128xf32>
    %48 = vector.shape_cast %47 : vector<256x128xf32> to vector<16x16x128xf32>
    %c1_61 = arith.constant 1 : index
    %c1_62 = arith.constant 1 : index
    %c0_63 = arith.constant 0 : index
    %49 = vector.load %arg10[%c1_61, %c1_62, %c0_63] : memref<18x18x128xf32, #tpu.memory_space<vmem>>, vector<16x16x128xf32>
    tpu.vector_store %arg10[%c1_61, %c1_62, %c0_63], %48 {strides = array<i32>} : memref<18x18x128xf32, #tpu.memory_space<vmem>>, vector<16x16x128xf32>,
    %cst_64 = arith.constant 0.000000e+00 : f32
    %50 = vector.broadcast %cst_64 : f32 to vector<1x18x128xf32>
    %c0_65 = arith.constant 0 : index
    %c0_66 = arith.constant 0 : index
    %c0_67 = arith.constant 0 : index
    %51 = vector.load %arg10[%c0_65, %c0_66, %c0_67] : memref<18x18x128xf32, #tpu.memory_space<vmem>>, vector<1x18x128xf32>
    tpu.vector_store %arg10[%c0_65, %c0_66, %c0_67], %50 {strides = array<i32>} : memref<18x18x128xf32, #tpu.memory_space<vmem>>, vector<1x18x128xf32>,
    %cst_68 = arith.constant 0.000000e+00 : f32
    %52 = vector.broadcast %cst_68 : f32 to vector<1x18x128xf32>
    %c17_69 = arith.constant 17 : index
    %c0_70 = arith.constant 0 : index
    %c0_71 = arith.constant 0 : index
    %53 = vector.load %arg10[%c17_69, %c0_70, %c0_71] : memref<18x18x128xf32, #tpu.memory_space<vmem>>, vector<1x18x128xf32>
    tpu.vector_store %arg10[%c17_69, %c0_70, %c0_71], %52 {strides = array<i32>} : memref<18x18x128xf32, #tpu.memory_space<vmem>>, vector<1x18x128xf32>,
    %cst_72 = arith.constant 0.000000e+00 : f32
    %54 = vector.broadcast %cst_72 : f32 to vector<18x1x128xf32>
    %c0_73 = arith.constant 0 : index
    %c0_74 = arith.constant 0 : index
    %c0_75 = arith.constant 0 : index
    %55 = vector.load %arg10[%c0_73, %c0_74, %c0_75] : memref<18x18x128xf32, #tpu.memory_space<vmem>>, vector<18x1x128xf32>
    tpu.vector_store %arg10[%c0_73, %c0_74, %c0_75], %54 {strides = array<i32>} : memref<18x18x128xf32, #tpu.memory_space<vmem>>, vector<18x1x128xf32>,
    %cst_76 = arith.constant 0.000000e+00 : f32
    %56 = vector.broadcast %cst_76 : f32 to vector<18x1x128xf32>
    %c0_77 = arith.constant 0 : index
    %c17_78 = arith.constant 17 : index
    %c0_79 = arith.constant 0 : index
    %57 = vector.load %arg10[%c0_77, %c17_78, %c0_79] : memref<18x18x128xf32, #tpu.memory_space<vmem>>, vector<18x1x128xf32>
    tpu.vector_store %arg10[%c0_77, %c17_78, %c0_79], %56 {strides = array<i32>} : memref<18x18x128xf32, #tpu.memory_space<vmem>>, vector<18x1x128xf32>,
    %cst_80 = arith.constant 0.000000e+00 : f32
    %58 = vector.broadcast %cst_80 : f32 to vector<256x128xf32>
    %c0_81 = arith.constant 0 : index
    %c0_82 = arith.constant 0 : index
    %c0_83 = arith.constant 0 : index
    %59 = vector.load %arg10[%c0_81, %c0_82, %c0_83] : memref<18x18x128xf32, #tpu.memory_space<vmem>>, vector<16x16x128xf32>
    %c0_84 = arith.constant 0 : index
    %c1_85 = arith.constant 1 : index
    %c0_86 = arith.constant 0 : index
    %60 = vector.load %arg10[%c0_84, %c1_85, %c0_86] : memref<18x18x128xf32, #tpu.memory_space<vmem>>, vector<16x16x128xf32>
    %c0_87 = arith.constant 0 : index
    %c2_88 = arith.constant 2 : index
    %c0_89 = arith.constant 0 : index
    %61 = vector.load %arg10[%c0_87, %c2_88, %c0_89] : memref<18x18x128xf32, #tpu.memory_space<vmem>>, vector<16x16x128xf32>
    %62 = tpu.concatenate %59, %60, %61 in 2 : vector<16x16x128xf32>, vector<16x16x128xf32>, vector<16x16x128xf32> -> vector<16x16x384xf32>
    %63 = vector.shape_cast %62 : vector<16x16x384xf32> to vector<256x384xf32>
    %64 = arith.truncf %63 : vector<256x384xf32> to vector<256x384xbf16>
    %c0_90 = arith.constant 0 : index
    %c0_91 = arith.constant 0 : index
    %c0_92 = arith.constant 0 : index
    %65 = vector.load %arg4[%c0_90, %c0_91, %c0_92] : memref<3x384x128xbf16, #tpu.memory_space<vmem>>, vector<1x384x128xbf16>
    %66 = vector.shape_cast %65 : vector<1x384x128xbf16> to vector<384x128xbf16>
    %cst_93 = arith.constant dense<0.000000e+00> : vector<256x128xf32>
    %67 = tpu.matmul %64, %66, %cst_93 {dimension_numbers = #tpu.dot_dimension_numbers<[1], [0], [0], [1], [0, 0, 1, 1], [], []>} : vector<256x384xbf16>, vector<384x128xbf16>, vector<256x128xf32> -> vector<256x128xf32>
    %68 = arith.addf %58, %67 : vector<256x128xf32>
    %c1_94 = arith.constant 1 : index
    %c0_95 = arith.constant 0 : index
    %c0_96 = arith.constant 0 : index
    %69 = vector.load %arg10[%c1_94, %c0_95, %c0_96] : memref<18x18x128xf32, #tpu.memory_space<vmem>>, vector<16x16x128xf32>
    %c1_97 = arith.constant 1 : index
    %c1_98 = arith.constant 1 : index
    %c0_99 = arith.constant 0 : index
    %70 = vector.load %arg10[%c1_97, %c1_98, %c0_99] : memref<18x18x128xf32, #tpu.memory_space<vmem>>, vector<16x16x128xf32>
    %c1_100 = arith.constant 1 : index
    %c2_101 = arith.constant 2 : index
    %c0_102 = arith.constant 0 : index
    %71 = vector.load %arg10[%c1_100, %c2_101, %c0_102] : memref<18x18x128xf32, #tpu.memory_space<vmem>>, vector<16x16x128xf32>
    %72 = tpu.concatenate %69, %70, %71 in 2 : vector<16x16x128xf32>, vector<16x16x128xf32>, vector<16x16x128xf32> -> vector<16x16x384xf32>
    %73 = vector.shape_cast %72 : vector<16x16x384xf32> to vector<256x384xf32>
    %74 = arith.truncf %73 : vector<256x384xf32> to vector<256x384xbf16>
    %c1_103 = arith.constant 1 : index
    %c0_104 = arith.constant 0 : index
    %c0_105 = arith.constant 0 : index
    %75 = vector.load %arg4[%c1_103, %c0_104, %c0_105] : memref<3x384x128xbf16, #tpu.memory_space<vmem>>, vector<1x384x128xbf16>
    %76 = vector.shape_cast %75 : vector<1x384x128xbf16> to vector<384x128xbf16>
    %cst_106 = arith.constant dense<0.000000e+00> : vector<256x128xf32>
    %77 = tpu.matmul %74, %76, %cst_106 {dimension_numbers = #tpu.dot_dimension_numbers<[1], [0], [0], [1], [0, 0, 1, 1], [], []>} : vector<256x384xbf16>, vector<384x128xbf16>, vector<256x128xf32> -> vector<256x128xf32>
    %78 = arith.addf %68, %77 : vector<256x128xf32>
    %c2_107 = arith.constant 2 : index
    %c0_108 = arith.constant 0 : index
    %c0_109 = arith.constant 0 : index
    %79 = vector.load %arg10[%c2_107, %c0_108, %c0_109] : memref<18x18x128xf32, #tpu.memory_space<vmem>>, vector<16x16x128xf32>
    %c2_110 = arith.constant 2 : index
    %c1_111 = arith.constant 1 : index
    %c0_112 = arith.constant 0 : index
    %80 = vector.load %arg10[%c2_110, %c1_111, %c0_112] : memref<18x18x128xf32, #tpu.memory_space<vmem>>, vector<16x16x128xf32>
    %c2_113 = arith.constant 2 : index
    %c2_114 = arith.constant 2 : index
    %c0_115 = arith.constant 0 : index
    %81 = vector.load %arg10[%c2_113, %c2_114, %c0_115] : memref<18x18x128xf32, #tpu.memory_space<vmem>>, vector<16x16x128xf32>
    %82 = tpu.concatenate %79, %80, %81 in 2 : vector<16x16x128xf32>, vector<16x16x128xf32>, vector<16x16x128xf32> -> vector<16x16x384xf32>
    %83 = vector.shape_cast %82 : vector<16x16x384xf32> to vector<256x384xf32>
    %84 = arith.truncf %83 : vector<256x384xf32> to vector<256x384xbf16>
    %c2_116 = arith.constant 2 : index
    %c0_117 = arith.constant 0 : index
    %c0_118 = arith.constant 0 : index
    %85 = vector.load %arg4[%c2_116, %c0_117, %c0_118] : memref<3x384x128xbf16, #tpu.memory_space<vmem>>, vector<1x384x128xbf16>
    %86 = vector.shape_cast %85 : vector<1x384x128xbf16> to vector<384x128xbf16>
    %cst_119 = arith.constant dense<0.000000e+00> : vector<256x128xf32>
    %87 = tpu.matmul %84, %86, %cst_119 {dimension_numbers = #tpu.dot_dimension_numbers<[1], [0], [0], [1], [0, 0, 1, 1], [], []>} : vector<256x384xbf16>, vector<384x128xbf16>, vector<256x128xf32> -> vector<256x128xf32>
    %88 = arith.addf %78, %87 : vector<256x128xf32>
    %c0_120 = arith.constant 0 : index
    %c0_121 = arith.constant 0 : index
    %89 = vector.load %arg5[%c0_120, %c0_121] : memref<1x128xf32, #tpu.memory_space<vmem>>, vector<1x128xf32>
    %90 = vector.broadcast %89 : vector<1x128xf32> to vector<256x128xf32>
    %91 = arith.addf %88, %90 : vector<256x128xf32>
    %cst_122 = arith.constant 0.000000e+00 : f32
    %92 = vector.broadcast %cst_122 : f32 to vector<256x128xf32>
    %93 = arith.maximumf %91, %92 : vector<256x128xf32>
    %94 = vector.shape_cast %93 : vector<256x128xf32> to vector<16x16x128xf32>
    %c1_123 = arith.constant 1 : index
    %c1_124 = arith.constant 1 : index
    %c0_125 = arith.constant 0 : index
    %95 = vector.load %arg11[%c1_123, %c1_124, %c0_125] : memref<18x18x128xf32, #tpu.memory_space<vmem>>, vector<16x16x128xf32>
    tpu.vector_store %arg11[%c1_123, %c1_124, %c0_125], %94 {strides = array<i32>} : memref<18x18x128xf32, #tpu.memory_space<vmem>>, vector<16x16x128xf32>,
    %cst_126 = arith.constant 0.000000e+00 : f32
    %96 = vector.broadcast %cst_126 : f32 to vector<1x18x128xf32>
    %c0_127 = arith.constant 0 : index
    %c0_128 = arith.constant 0 : index
    %c0_129 = arith.constant 0 : index
    %97 = vector.load %arg11[%c0_127, %c0_128, %c0_129] : memref<18x18x128xf32, #tpu.memory_space<vmem>>, vector<1x18x128xf32>
    tpu.vector_store %arg11[%c0_127, %c0_128, %c0_129], %96 {strides = array<i32>} : memref<18x18x128xf32, #tpu.memory_space<vmem>>, vector<1x18x128xf32>,
    %cst_130 = arith.constant 0.000000e+00 : f32
    %98 = vector.broadcast %cst_130 : f32 to vector<1x18x128xf32>
    %c17_131 = arith.constant 17 : index
    %c0_132 = arith.constant 0 : index
    %c0_133 = arith.constant 0 : index
    %99 = vector.load %arg11[%c17_131, %c0_132, %c0_133] : memref<18x18x128xf32, #tpu.memory_space<vmem>>, vector<1x18x128xf32>
    tpu.vector_store %arg11[%c17_131, %c0_132, %c0_133], %98 {strides = array<i32>} : memref<18x18x128xf32, #tpu.memory_space<vmem>>, vector<1x18x128xf32>,
    %cst_134 = arith.constant 0.000000e+00 : f32
    %100 = vector.broadcast %cst_134 : f32 to vector<18x1x128xf32>
    %c0_135 = arith.constant 0 : index
    %c0_136 = arith.constant 0 : index
    %c0_137 = arith.constant 0 : index
    %101 = vector.load %arg11[%c0_135, %c0_136, %c0_137] : memref<18x18x128xf32, #tpu.memory_space<vmem>>, vector<18x1x128xf32>
    tpu.vector_store %arg11[%c0_135, %c0_136, %c0_137], %100 {strides = array<i32>} : memref<18x18x128xf32, #tpu.memory_space<vmem>>, vector<18x1x128xf32>,
    %cst_138 = arith.constant 0.000000e+00 : f32
    %102 = vector.broadcast %cst_138 : f32 to vector<18x1x128xf32>
    %c0_139 = arith.constant 0 : index
    %c17_140 = arith.constant 17 : index
    %c0_141 = arith.constant 0 : index
    %103 = vector.load %arg11[%c0_139, %c17_140, %c0_141] : memref<18x18x128xf32, #tpu.memory_space<vmem>>, vector<18x1x128xf32>
    tpu.vector_store %arg11[%c0_139, %c17_140, %c0_141], %102 {strides = array<i32>} : memref<18x18x128xf32, #tpu.memory_space<vmem>>, vector<18x1x128xf32>,
    %cst_142 = arith.constant 0.000000e+00 : f32
    %104 = vector.broadcast %cst_142 : f32 to vector<256x128xf32>
    %c0_143 = arith.constant 0 : index
    %c0_144 = arith.constant 0 : index
    %c0_145 = arith.constant 0 : index
    %105 = vector.load %arg11[%c0_143, %c0_144, %c0_145] : memref<18x18x128xf32, #tpu.memory_space<vmem>>, vector<16x16x128xf32>
    %c0_146 = arith.constant 0 : index
    %c1_147 = arith.constant 1 : index
    %c0_148 = arith.constant 0 : index
    %106 = vector.load %arg11[%c0_146, %c1_147, %c0_148] : memref<18x18x128xf32, #tpu.memory_space<vmem>>, vector<16x16x128xf32>
    %c0_149 = arith.constant 0 : index
    %c2_150 = arith.constant 2 : index
    %c0_151 = arith.constant 0 : index
    %107 = vector.load %arg11[%c0_149, %c2_150, %c0_151] : memref<18x18x128xf32, #tpu.memory_space<vmem>>, vector<16x16x128xf32>
    %108 = tpu.concatenate %105, %106, %107 in 2 : vector<16x16x128xf32>, vector<16x16x128xf32>, vector<16x16x128xf32> -> vector<16x16x384xf32>
    %109 = vector.shape_cast %108 : vector<16x16x384xf32> to vector<256x384xf32>
    %110 = arith.truncf %109 : vector<256x384xf32> to vector<256x384xbf16>
    %c0_152 = arith.constant 0 : index
    %c0_153 = arith.constant 0 : index
    %c0_154 = arith.constant 0 : index
    %111 = vector.load %arg6[%c0_152, %c0_153, %c0_154] : memref<3x384x128xbf16, #tpu.memory_space<vmem>>, vector<1x384x128xbf16>
    %112 = vector.shape_cast %111 : vector<1x384x128xbf16> to vector<384x128xbf16>
    %cst_155 = arith.constant dense<0.000000e+00> : vector<256x128xf32>
    %113 = tpu.matmul %110, %112, %cst_155 {dimension_numbers = #tpu.dot_dimension_numbers<[1], [0], [0], [1], [0, 0, 1, 1], [], []>} : vector<256x384xbf16>, vector<384x128xbf16>, vector<256x128xf32> -> vector<256x128xf32>
    %114 = arith.addf %104, %113 : vector<256x128xf32>
    %c1_156 = arith.constant 1 : index
    %c0_157 = arith.constant 0 : index
    %c0_158 = arith.constant 0 : index
    %115 = vector.load %arg11[%c1_156, %c0_157, %c0_158] : memref<18x18x128xf32, #tpu.memory_space<vmem>>, vector<16x16x128xf32>
    %c1_159 = arith.constant 1 : index
    %c1_160 = arith.constant 1 : index
    %c0_161 = arith.constant 0 : index
    %116 = vector.load %arg11[%c1_159, %c1_160, %c0_161] : memref<18x18x128xf32, #tpu.memory_space<vmem>>, vector<16x16x128xf32>
    %c1_162 = arith.constant 1 : index
    %c2_163 = arith.constant 2 : index
    %c0_164 = arith.constant 0 : index
    %117 = vector.load %arg11[%c1_162, %c2_163, %c0_164] : memref<18x18x128xf32, #tpu.memory_space<vmem>>, vector<16x16x128xf32>
    %118 = tpu.concatenate %115, %116, %117 in 2 : vector<16x16x128xf32>, vector<16x16x128xf32>, vector<16x16x128xf32> -> vector<16x16x384xf32>
    %119 = vector.shape_cast %118 : vector<16x16x384xf32> to vector<256x384xf32>
    %120 = arith.truncf %119 : vector<256x384xf32> to vector<256x384xbf16>
    %c1_165 = arith.constant 1 : index
    %c0_166 = arith.constant 0 : index
    %c0_167 = arith.constant 0 : index
    %121 = vector.load %arg6[%c1_165, %c0_166, %c0_167] : memref<3x384x128xbf16, #tpu.memory_space<vmem>>, vector<1x384x128xbf16>
    %122 = vector.shape_cast %121 : vector<1x384x128xbf16> to vector<384x128xbf16>
    %cst_168 = arith.constant dense<0.000000e+00> : vector<256x128xf32>
    %123 = tpu.matmul %120, %122, %cst_168 {dimension_numbers = #tpu.dot_dimension_numbers<[1], [0], [0], [1], [0, 0, 1, 1], [], []>} : vector<256x384xbf16>, vector<384x128xbf16>, vector<256x128xf32> -> vector<256x128xf32>
    %124 = arith.addf %114, %123 : vector<256x128xf32>
    %c2_169 = arith.constant 2 : index
    %c0_170 = arith.constant 0 : index
    %c0_171 = arith.constant 0 : index
    %125 = vector.load %arg11[%c2_169, %c0_170, %c0_171] : memref<18x18x128xf32, #tpu.memory_space<vmem>>, vector<16x16x128xf32>
    %c2_172 = arith.constant 2 : index
    %c1_173 = arith.constant 1 : index
    %c0_174 = arith.constant 0 : index
    %126 = vector.load %arg11[%c2_172, %c1_173, %c0_174] : memref<18x18x128xf32, #tpu.memory_space<vmem>>, vector<16x16x128xf32>
    %c2_175 = arith.constant 2 : index
    %c2_176 = arith.constant 2 : index
    %c0_177 = arith.constant 0 : index
    %127 = vector.load %arg11[%c2_175, %c2_176, %c0_177] : memref<18x18x128xf32, #tpu.memory_space<vmem>>, vector<16x16x128xf32>
    %128 = tpu.concatenate %125, %126, %127 in 2 : vector<16x16x128xf32>, vector<16x16x128xf32>, vector<16x16x128xf32> -> vector<16x16x384xf32>
    %129 = vector.shape_cast %128 : vector<16x16x384xf32> to vector<256x384xf32>
    %130 = arith.truncf %129 : vector<256x384xf32> to vector<256x384xbf16>
    %c2_178 = arith.constant 2 : index
    %c0_179 = arith.constant 0 : index
    %c0_180 = arith.constant 0 : index
    %131 = vector.load %arg6[%c2_178, %c0_179, %c0_180] : memref<3x384x128xbf16, #tpu.memory_space<vmem>>, vector<1x384x128xbf16>
    %132 = vector.shape_cast %131 : vector<1x384x128xbf16> to vector<384x128xbf16>
    %cst_181 = arith.constant dense<0.000000e+00> : vector<256x128xf32>
    %133 = tpu.matmul %130, %132, %cst_181 {dimension_numbers = #tpu.dot_dimension_numbers<[1], [0], [0], [1], [0, 0, 1, 1], [], []>} : vector<256x384xbf16>, vector<384x128xbf16>, vector<256x128xf32> -> vector<256x128xf32>
    %134 = arith.addf %124, %133 : vector<256x128xf32>
    %c0_182 = arith.constant 0 : index
    %c0_183 = arith.constant 0 : index
    %135 = vector.load %arg7[%c0_182, %c0_183] : memref<1x128xf32, #tpu.memory_space<vmem>>, vector<1x128xf32>
    %136 = vector.broadcast %135 : vector<1x128xf32> to vector<256x128xf32>
    %137 = arith.addf %134, %136 : vector<256x128xf32>
    %cst_184 = arith.constant 0.000000e+00 : f32
    %138 = vector.broadcast %cst_184 : f32 to vector<256x128xf32>
    %139 = arith.maximumf %137, %138 : vector<256x128xf32>
    %140 = vector.shape_cast %139 : vector<256x128xf32> to vector<16x16x128xf32>
    %c0_185 = arith.constant 0 : index
    %c0_186 = arith.constant 0 : index
    %c0_187 = arith.constant 0 : index
    %c0_188 = arith.constant 0 : index
    %141 = vector.load %arg8[%c0_185, %c0_186, %c0_187, %c0_188] : memref<1x16x16x128xf32, #tpu.memory_space<vmem>>, vector<1x16x16x128xf32>
    %142 = vector.shape_cast %141 : vector<1x16x16x128xf32> to vector<16x16x128xf32>
    %143 = vector.shape_cast %140 : vector<16x16x128xf32> to vector<1x16x16x128xf32>
    tpu.vector_store %arg8[%c0_185, %c0_186, %c0_187, %c0_188], %143 {strides = array<i32>} : memref<1x16x16x128xf32, #tpu.memory_space<vmem>>, vector<1x16x16x128xf32>,
    return
  }
  func.func @transform_0(%arg0: i32) -> (i32, i32, i32, i32) {
    %c0_i32 = arith.constant 0 : i32
    %c0_i32_0 = arith.constant 0 : i32
    %c0_i32_1 = arith.constant 0 : i32
    %c0_i32_2 = arith.constant 0 : i32
    return %arg0, %c0_i32, %c0_i32_0, %c0_i32_1 : i32, i32, i32, i32
  }
  func.func @transform_1(%arg0: i32) -> (i32, i32, i32) {
    %c0_i32 = arith.constant 0 : i32
    %c0_i32_0 = arith.constant 0 : i32
    %c0_i32_1 = arith.constant 0 : i32
    %c0_i32_2 = arith.constant 0 : i32
    return %c0_i32, %c0_i32_0, %c0_i32_1 : i32, i32, i32
  }
  func.func @transform_2(%arg0: i32) -> (i32, i32) {
    %c0_i32 = arith.constant 0 : i32
    %c0_i32_0 = arith.constant 0 : i32
    %c0_i32_1 = arith.constant 0 : i32
    return %c0_i32, %c0_i32_0 : i32, i32
  }
  func.func @transform_3(%arg0: i32) -> (i32, i32, i32) {
    %c0_i32 = arith.constant 0 : i32
    %c0_i32_0 = arith.constant 0 : i32
    %c0_i32_1 = arith.constant 0 : i32
    %c0_i32_2 = arith.constant 0 : i32
    return %c0_i32, %c0_i32_0, %c0_i32_1 : i32, i32, i32
  }
  func.func @transform_4(%arg0: i32) -> (i32, i32) {
    %c0_i32 = arith.constant 0 : i32
    %c0_i32_0 = arith.constant 0 : i32
    %c0_i32_1 = arith.constant 0 : i32
    return %c0_i32, %c0_i32_0 : i32, i32
  }
  func.func @transform_5(%arg0: i32) -> (i32, i32, i32) {
    %c0_i32 = arith.constant 0 : i32
    %c0_i32_0 = arith.constant 0 : i32
    %c0_i32_1 = arith.constant 0 : i32
    %c0_i32_2 = arith.constant 0 : i32
    return %c0_i32, %c0_i32_0, %c0_i32_1 : i32, i32, i32
  }
  func.func @transform_6(%arg0: i32) -> (i32, i32) {
    %c0_i32 = arith.constant 0 : i32
    %c0_i32_0 = arith.constant 0 : i32
    %c0_i32_1 = arith.constant 0 : i32
    return %c0_i32, %c0_i32_0 : i32, i32
  }
  func.func @transform_7(%arg0: i32) -> (i32, i32, i32, i32) {
    %c0_i32 = arith.constant 0 : i32
    %c0_i32_0 = arith.constant 0 : i32
    %c0_i32_1 = arith.constant 0 : i32
    %c0_i32_2 = arith.constant 0 : i32
    return %arg0, %c0_i32, %c0_i32_0, %c0_i32_1 : i32, i32, i32, i32
  }
}

</mosaic_0001>

<llo_original>
// kernel: tpu_custom_call.1
$region0: #{tpu_custom_call.1}
  #allocation0 [shape = 'u32[]', space=smem, size = 0x4, offset = 0x4, fixed_abs, tag = 'smem constant byte address 0x4 - core index']
  #allocation1 [shape = 'u32[144,128]{1,0:T(1,128)}', space=vmem, size = 0x12000, scoped, tag = 'internal scratch']
  #allocation2 [shape = 'f32[18,18,128]{2,1,0:T(8,128)}', space=vmem, size = 0x36000, scoped, tag = 'scratch operand']
  #allocation3 [shape = 'f32[18,18,128]{2,1,0:T(8,128)}', space=vmem, size = 0x36000, scoped, tag = 'scratch operand']
  #allocation4 [shape = 'f32[18,18,128]{2,1,0:T(8,128)}', space=vmem, size = 0x36000, scoped, tag = 'scratch operand']
  %s0 = inlined_call_operand.hbm [shape: bf16[2,16,16,128], index: 0, kind: input, shape index: {}]
  %s1 = inlined_call_operand.hbm [shape: bf16[3,384,128], index: 1, kind: input, shape index: {}]
  %s2 = inlined_call_operand.vmem [shape: f32[1,128], index: 2, kind: input, shape index: {}]
  %s3 = inlined_call_operand.hbm [shape: bf16[3,384,128], index: 3, kind: input, shape index: {}]
  %s4 = inlined_call_operand.vmem [shape: f32[1,128], index: 4, kind: input, shape index: {}]
  %s5 = inlined_call_operand.hbm [shape: bf16[3,384,128], index: 5, kind: input, shape index: {}]
  %s6 = inlined_call_operand.vmem [shape: f32[1,128], index: 6, kind: input, shape index: {}]
  %s7 = inlined_call_operand.hbm [shape: f32[2,16,16,128], index: 7, kind: output, shape index: {}]
  %s8 = sld [smem:[#allocation0]]
  $region77: #{tpu_custom_call.1} parent=0
    _
  %s10 = ssub.s32 1, %s8
  %s11 = scalar_select 0, %s10, %s8
  $region1: #{tpu_custom_call.1} parent=0
    #allocation5 [shape = 'u8[131072]{0}', space=vmem, size = 0x20000, scoped, tag = 'input window, operand 0']
    #allocation6 [shape = 's32[2]{0}', space=sflag, size = 0x8, scoped, tag = 'scoped memory for tpu_custom_call.1']
    #allocation7 [shape = 's32[2]{0}', space=sflag, size = 0x8, scoped, tag = 'scoped memory for tpu_custom_call.1']
    #allocation8 [shape = 'u8[294912]{0}', space=vmem, size = 0x48000, scoped, tag = 'input window, operand 1, single buffered']
    #allocation9 [shape = 's32[1]{0}', space=sflag, size = 0x4, scoped, tag = 'scoped memory for tpu_custom_call.1']
    #allocation10 [shape = 'u8[294912]{0}', space=vmem, size = 0x48000, scoped, tag = 'input window, operand 3, single buffered']
    #allocation11 [shape = 'u8[294912]{0}', space=vmem, size = 0x48000, scoped, tag = 'input window, operand 5, single buffered']
    #allocation12 [shape = 's32[1]{0}', space=sflag, size = 0x4, scoped, tag = 'scoped memory for tpu_custom_call.1']
    #allocation13 [shape = 'u8[262144]{0}', space=vmem, size = 0x40000, scoped, tag = 'output window, operand 0']
    %12 = vsyncpa [#allocation6], 0
    %s13 = scalar_lea.sflag [#allocation6], 1
    %14 = vsyncpa %s13, 0
    %15 = vsyncpa [#allocation9], 0
    %16 = vsyncpa [#allocation12], 0
    %17 = vsyncpa [#allocation7], 0
    %s18 = scalar_lea.sflag [#allocation7], 1
    %19 = vsyncpa %s18, 0
    loop: start=0, step=1, limit=4
    $region2: #{tpu_custom_call.1} parent=1 // loop_pre_header
      _
    $region3: #{tpu_custom_call.1} parent=1 // loop_header
      %s21 = sphi 0, %s25
      %p22 = scmp.ge.s32.totalorder %s21, 4
      %s31 = sphi 0, %s33
      %s34 = sphi 0, %s31
      %s35 = sphi 0, %s34
      %s51 = sphi 0, %s35
      %s55 = sphi 0, %s55
      %s57 = sphi 0, %s55
      %s58 = sphi 0, %s57
      %s72 = sphi 0, %s58
      %s76 = sphi 0, %s76
      %s78 = sphi 0, %s76
      %s79 = sphi 0, %s78
      %s93 = sphi 0, %s79
      %s97 = sphi 0, %s97
      %s99 = sphi 0, %s97
      %s100 = sphi 0, %s99
      %s114 = sphi 0, %s100
      %s118 = sphi 0, %s118
      %s120 = sphi 0, %s118
      %s121 = sphi 0, %s120
      %s135 = sphi 0, %s121
      %s139 = sphi 0, %s139
      %s141 = sphi 0, %s139
      %s142 = sphi 0, %s141
      %s156 = sphi 0, %s142
      %s160 = sphi 0, %s160
      %s162 = sphi 0, %s160
      %s163 = sphi 0, %s162
      %s177 = sphi 0, %s163
      %s183 = sphi 0, %s185
      %s186 = sphi 0, %s183
      %s187 = sphi 0, %s186
      %s203 = sphi 0, %s187
    $region4: #{tpu_custom_call.1} parent=1 // loop_header_branch
      %24 = sbr.rel (%p22) target = $region8
    $region5: #{tpu_custom_call.1} parent=1 // loop_body
      %s26 = ssub.s32 %s21, 1
      %s27 = ssub.s32 %s21, 2
      %s28 = sadd.s32 %s21, 1
      %s29 = ssub.s32 %s21, %s28
      %p30 = scmp.eq.s32.totalorder %s29, 0
      %s32 = sadd.s32 %s31, 1
      %s33 = scalar_select %p30, %s31, %s32
      %p36 = pneg %p30
      %p37 = scmp.eq.s32.totalorder %s21, 1
      %p38 = por %p36, %p37
      %p39 = scmp.ne.s32.totalorder %s31, %s34
      %p40 = scmp.eq.s32.totalorder %s21, 0
      %p41 = por %p39, %p40
      %p42 = scmp.ne.s32.totalorder %s31, %s34
      %p43 = scmp.eq.s32.totalorder %s26, 1
      %p44 = por %p42, %p43
      %p45 = scmp.ne.s32.totalorder %s34, %s35
      %p46 = scmp.eq.s32.totalorder %s26, 0
      %p47 = por %p45, %p46
      %p48 = scmp.ne.s32.totalorder %s34, %s35
      %p49 = scmp.eq.s32.totalorder %s27, 1
      %p50 = por %p48, %p49
      %p52 = scmp.ne.s32.totalorder %s35, %s51
      %p53 = scmp.eq.s32.totalorder %s27, 0
      %p54 = por %p52, %p53
      %s56 = sadd.s32 %s55, 1
      %p59 = scmp.eq.s32.totalorder %s21, 1
      %p60 = scmp.ne.s32.totalorder %s55, %s57
      %p61 = scmp.eq.s32.totalorder %s21, 0
      %p62 = por %p60, %p61
      %p63 = scmp.ne.s32.totalorder %s55, %s57
      %p64 = scmp.eq.s32.totalorder %s26, 1
      %p65 = por %p63, %p64
      %p66 = scmp.ne.s32.totalorder %s57, %s58
      %p67 = scmp.eq.s32.totalorder %s26, 0
      %p68 = por %p66, %p67
      %p69 = scmp.ne.s32.totalorder %s57, %s58
      %p70 = scmp.eq.s32.totalorder %s27, 1
      %p71 = por %p69, %p70
      %p73 = scmp.ne.s32.totalorder %s58, %s72
      %p74 = scmp.eq.s32.totalorder %s27, 0
      %p75 = por %p73, %p74
      %s77 = sadd.s32 %s76, 1
      %p80 = scmp.eq.s32.totalorder %s21, 1
      %p81 = scmp.ne.s32.totalorder %s76, %s78
      %p82 = scmp.eq.s32.totalorder %s21, 0
      %p83 = por %p81, %p82
      %p84 = scmp.ne.s32.totalorder %s76, %s78
      %p85 = scmp.eq.s32.totalorder %s26, 1
      %p86 = por %p84, %p85
      %p87 = scmp.ne.s32.totalorder %s78, %s79
      %p88 = scmp.eq.s32.totalorder %s26, 0
      %p89 = por %p87, %p88
      %p90 = scmp.ne.s32.totalorder %s78, %s79
      %p91 = scmp.eq.s32.totalorder %s27, 1
      %p92 = por %p90, %p91
      %p94 = scmp.ne.s32.totalorder %s79, %s93
      %p95 = scmp.eq.s32.totalorder %s27, 0
      %p96 = por %p94, %p95
      %s98 = sadd.s32 %s97, 1
      %p101 = scmp.eq.s32.totalorder %s21, 1
      %p102 = scmp.ne.s32.totalorder %s97, %s99
      %p103 = scmp.eq.s32.totalorder %s21, 0
      %p104 = por %p102, %p103
      %p105 = scmp.ne.s32.totalorder %s97, %s99
      %p106 = scmp.eq.s32.totalorder %s26, 1
      %p107 = por %p105, %p106
      %p108 = scmp.ne.s32.totalorder %s99, %s100
      %p109 = scmp.eq.s32.totalorder %s26, 0
      %p110 = por %p108, %p109
      %p111 = scmp.ne.s32.totalorder %s99, %s100
      %p112 = scmp.eq.s32.totalorder %s27, 1
      %p113 = por %p111, %p112
      %p115 = scmp.ne.s32.totalorder %s100, %s114
      %p116 = scmp.eq.s32.totalorder %s27, 0
      %p117 = por %p115, %p116
      %s119 = sadd.s32 %s118, 1
      %p122 = scmp.eq.s32.totalorder %s21, 1
      %p123 = scmp.ne.s32.totalorder %s118, %s120
      %p124 = scmp.eq.s32.totalorder %s21, 0
      %p125 = por %p123, %p124
      %p126 = scmp.ne.s32.totalorder %s118, %s120
      %p127 = scmp.eq.s32.totalorder %s26, 1
      %p128 = por %p126, %p127
      %p129 = scmp.ne.s32.totalorder %s120, %s121
      %p130 = scmp.eq.s32.totalorder %s26, 0
      %p131 = por %p129, %p130
      %p132 = scmp.ne.s32.totalorder %s120, %s121
      %p133 = scmp.eq.s32.totalorder %s27, 1
      %p134 = por %p132, %p133
      %p136 = scmp.ne.s32.totalorder %s121, %s135
      %p137 = scmp.eq.s32.totalorder %s27, 0
      %p138 = por %p136, %p137
      %s140 = sadd.s32 %s139, 1
      %p143 = scmp.eq.s32.totalorder %s21, 1
      %p144 = scmp.ne.s32.totalorder %s139, %s141
      %p145 = scmp.eq.s32.totalorder %s21, 0
      %p146 = por %p144, %p145
      %p147 = scmp.ne.s32.totalorder %s139, %s141
      %p148 = scmp.eq.s32.totalorder %s26, 1
      %p149 = por %p147, %p148
      %p150 = scmp.ne.s32.totalorder %s141, %s142
      %p151 = scmp.eq.s32.totalorder %s26, 0
      %p152 = por %p150, %p151
      %p153 = scmp.ne.s32.totalorder %s141, %s142
      %p154 = scmp.eq.s32.totalorder %s27, 1
      %p155 = por %p153, %p154
      %p157 = scmp.ne.s32.totalorder %s142, %s156
      %p158 = scmp.eq.s32.totalorder %s27, 0
      %p159 = por %p157, %p158
      %s161 = sadd.s32 %s160, 1
      %p164 = scmp.eq.s32.totalorder %s21, 1
      %p165 = scmp.ne.s32.totalorder %s160, %s162
      %p166 = scmp.eq.s32.totalorder %s21, 0
      %p167 = por %p165, %p166
      %p168 = scmp.ne.s32.totalorder %s160, %s162
      %p169 = scmp.eq.s32.totalorder %s26, 1
      %p170 = por %p168, %p169
      %p171 = scmp.ne.s32.totalorder %s162, %s163
      %p172 = scmp.eq.s32.totalorder %s26, 0
      %p173 = por %p171, %p172
      %p174 = scmp.ne.s32.totalorder %s162, %s163
      %p175 = scmp.eq.s32.totalorder %s27, 1
      %p176 = por %p174, %p175
      %p178 = scmp.ne.s32.totalorder %s163, %s177
      %p179 = scmp.eq.s32.totalorder %s27, 0
      %p180 = por %p178, %p179
      %s181 = ssub.s32 %s21, %s28
      %p182 = scmp.eq.s32.totalorder %s181, 0
      %s184 = sadd.s32 %s183, 1
      %s185 = scalar_select %p182, %s183, %s184
      %p188 = pneg %p182
      %p189 = scmp.eq.s32.totalorder %s21, 1
      %p190 = por %p188, %p189
      %p191 = scmp.ne.s32.totalorder %s183, %s186
      %p192 = scmp.eq.s32.totalorder %s21, 0
      %p193 = por %p191, %p192
      %p194 = scmp.ne.s32.totalorder %s183, %s186
      %p195 = scmp.eq.s32.totalorder %s26, 1
      %p196 = por %p194, %p195
      %p197 = scmp.ne.s32.totalorder %s186, %s187
      %p198 = scmp.eq.s32.totalorder %s26, 0
      %p199 = por %p197, %p198
      %p200 = scmp.ne.s32.totalorder %s186, %s187
      %p201 = scmp.eq.s32.totalorder %s27, 1
      %p202 = por %p200, %p201
      %p204 = scmp.ne.s32.totalorder %s187, %s203
      %p205 = scmp.eq.s32.totalorder %s27, 0
      %p206 = por %p204, %p205
      %p207 = scmp.le.s32.totalorder 1, %s21
      %p208 = scmp.lt.s32.totalorder %s21, 3
      %p209 = pnand %p207, %p208
      %p210 = pneg %p209
      // Predicated region
      $region9: #{tpu_custom_call.1} parent=5 // pred_check
        _
      $region10: #{tpu_custom_call.1} parent=5 // pred_check_branch
        %212 = sbr.rel (%p209) target = $region12
      $region11: #{tpu_custom_call.1} parent=5 // pred_region
        %s213 = ssub.s32 %s21, 1
        // Predicated region
        $region13: #{tpu_custom_call.1} parent=11 // pred_check
          %p214 = pneg %p68
        $region14: #{tpu_custom_call.1} parent=11 // pred_check_branch
          %216 = sbr.rel (%p214) target = $region16
        $region15: #{tpu_custom_call.1} parent=11 // pred_region
          %s218 = ssub.s32 9216, 9216
          %219 = vsyncadd [#allocation9], %s218
          %s220 = sshll.u32 [#allocation8], 4
          %s221 = int_to_ptr.vmem [resolvable:$true] %s220
          %226 = dma.hbm_to_vmem [thread:$0]  %s1, 9216, %s221, [#allocation9], 64, 64, 4
        $region16: #{tpu_custom_call.1} parent=11 // pred_fallthru
          _
        // Predicated region
        $region17: #{tpu_custom_call.1} parent=11 // pred_check
          %p227 = pneg %p89
        $region18: #{tpu_custom_call.1} parent=11 // pred_check_branch
          %229 = sbr.rel (%p227) target = $region20
        $region19: #{tpu_custom_call.1} parent=11 // pred_region
          _
        $region20: #{tpu_custom_call.1} parent=11 // pred_fallthru
          _
        // Predicated region
        $region21: #{tpu_custom_call.1} parent=11 // pred_check
          %p230 = pneg %p110
        $region22: #{tpu_custom_call.1} parent=11 // pred_check_branch
          %232 = sbr.rel (%p230) target = $region24
        $region23: #{tpu_custom_call.1} parent=11 // pred_region
          %s234 = ssub.s32 9216, 9216
          %235 = vsyncadd [#allocation9], %s234
          %s236 = sshll.u32 [#allocation10], 4
          %s237 = int_to_ptr.vmem [resolvable:$true] %s236
          %242 = dma.hbm_to_vmem [thread:$0]  %s3, 9216, %s237, [#allocation9], 64, 64, 4
        $region24: #{tpu_custom_call.1} parent=11 // pred_fallthru
          _
        // Predicated region
        $region25: #{tpu_custom_call.1} parent=11 // pred_check
          %p243 = pneg %p131
        $region26: #{tpu_custom_call.1} parent=11 // pred_check_branch
          %245 = sbr.rel (%p243) target = $region28
        $region27: #{tpu_custom_call.1} parent=11 // pred_region
          _
        $region28: #{tpu_custom_call.1} parent=11 // pred_fallthru
          _
        // Predicated region
        $region29: #{tpu_custom_call.1} parent=11 // pred_check
          %p246 = pneg %p152
        $region30: #{tpu_custom_call.1} parent=11 // pred_check_branch
          %248 = sbr.rel (%p246) target = $region32
        $region31: #{tpu_custom_call.1} parent=11 // pred_region
          %s250 = ssub.s32 9216, 9216
          %251 = vsyncadd [#allocation12], %s250
          %s252 = sshll.u32 [#allocation11], 4
          %s253 = int_to_ptr.vmem [resolvable:$true] %s252
          %258 = dma.hbm_to_vmem [thread:$0]  %s5, 9216, %s253, [#allocation12], 64, 64, 4
        $region32: #{tpu_custom_call.1} parent=11 // pred_fallthru
          _
        // Predicated region
        $region33: #{tpu_custom_call.1} parent=11 // pred_check
          %p259 = pneg %p173
        $region34: #{tpu_custom_call.1} parent=11 // pred_check_branch
          %261 = sbr.rel (%p259) target = $region36
        $region35: #{tpu_custom_call.1} parent=11 // pred_region
          _
        $region36: #{tpu_custom_call.1} parent=11 // pred_fallthru
          _
      $region12: #{tpu_custom_call.1} parent=5 // pred_fallthru
        _
      %p262 = scmp.lt.s32.totalorder %s21, 2
      // Predicated region
      $region37: #{tpu_custom_call.1} parent=5 // pred_check
        %p263 = pneg %p262
      $region38: #{tpu_custom_call.1} parent=5 // pred_check_branch
        %265 = sbr.rel (%p263) target = $region40
      $region39: #{tpu_custom_call.1} parent=5 // pred_region
        // Predicated region
        $region41: #{tpu_custom_call.1} parent=39 // pred_check
          %p266 = pneg %p41
        $region42: #{tpu_custom_call.1} parent=39 // pred_check_branch
          %268 = sbr.rel (%p266) target = $region44
        $region43: #{tpu_custom_call.1} parent=39 // pred_region
          %s269 = sand.u32 %s31, 1
          %s270 = scalar_lea.sflag [#allocation6], %s269
          %s271 = sand.u32 %s31, 1
          %s272 = smul.addr %s271, 128
          %s273 = scalar_lea.vmem [#allocation5], %s272
          %s275 = ssub.s32 2048, 2048
          %276 = vsyncadd %s270, %s275
          %s277 = smul.addr %s21, 32
          %s278 = smul.addr %s277, 64
          %s279 = scalar_lea.hbm %s0, %s278
          %s280 = sshll.u32 %s273, 4
          %s281 = int_to_ptr.vmem [resolvable:$true] %s280
          %286 = dma.hbm_to_vmem [thread:$0]  %s279, 2048, %s281, %s270, 64, 64, 4
        $region44: #{tpu_custom_call.1} parent=39 // pred_fallthru
          _
      $region40: #{tpu_custom_call.1} parent=5 // pred_fallthru
        _
      %p287 = scmp.le.s32.totalorder 1, %s21
      %p288 = scmp.lt.s32.totalorder %s21, 3
      %p289 = pnand %p287, %p288
      %p290 = pneg %p289
      // Predicated region
      $region45: #{tpu_custom_call.1} parent=5 // pred_check
        _
      $region46: #{tpu_custom_call.1} parent=5 // pred_check_branch
        %292 = sbr.rel (%p289) target = $region48
      $region47: #{tpu_custom_call.1} parent=5 // pred_region
        %s293 = ssub.s32 %s21, 1
        %s294 = sand.u32 %s34, 1
        %s295 = scalar_lea.sflag [#allocation6], %s294
        %s296 = sand.u32 %s34, 1
        %s297 = smul.addr %s296, 128
        %s298 = scalar_lea.vmem [#allocation5], %s297
        // Predicated region
        $region49: #{tpu_custom_call.1} parent=47 // pred_check
          %p299 = pneg %p47
        $region50: #{tpu_custom_call.1} parent=47 // pred_check_branch
          %301 = sbr.rel (%p299) target = $region52
        $region51: #{tpu_custom_call.1} parent=47 // pred_region
          %302 = dma.done %s295, 2048
        $region52: #{tpu_custom_call.1} parent=47 // pred_fallthru
          _
        // Predicated region
        $region53: #{tpu_custom_call.1} parent=47 // pred_check
          %p303 = pneg %p68
        $region54: #{tpu_custom_call.1} parent=47 // pred_check_branch
          %305 = sbr.rel (%p303) target = $region56
        $region55: #{tpu_custom_call.1} parent=47 // pred_region
          %306 = dma.done [#allocation9], 9216
        $region56: #{tpu_custom_call.1} parent=47 // pred_fallthru
          _
        // Predicated region
        $region57: #{tpu_custom_call.1} parent=47 // pred_check
          %p307 = pneg %p110
        $region58: #{tpu_custom_call.1} parent=47 // pred_check_branch
          %309 = sbr.rel (%p307) target = $region60
        $region59: #{tpu_custom_call.1} parent=47 // pred_region
          %310 = dma.done [#allocation9], 9216
        $region60: #{tpu_custom_call.1} parent=47 // pred_fallthru
          _
        // Predicated region
        $region61: #{tpu_custom_call.1} parent=47 // pred_check
          %p311 = pneg %p152
        $region62: #{tpu_custom_call.1} parent=47 // pred_check_branch
          %313 = sbr.rel (%p311) target = $region64
        $region63: #{tpu_custom_call.1} parent=47 // pred_region
          %314 = dma.done [#allocation12], 9216
        $region64: #{tpu_custom_call.1} parent=47 // pred_fallthru
          _
        %s315 = sand.u32 %s34, 1
        %s316 = scalar_lea.sflag [#allocation6], %s315
        %s317 = sand.u32 %s34, 1
        %s318 = smul.addr %s317, 128
        %s319 = scalar_lea.vmem [#allocation5], %s318
        %p320 = pneg %p47
        %p321 = pneg %p44
        %p322 = pneg %p68
        %p323 = pneg %p65
        %p324 = pneg %p89
        %p325 = pneg %p86
        %p326 = pneg %p110
        %p327 = pneg %p107
        %p328 = pneg %p131
        %p329 = pneg %p128
        %p330 = pneg %p152
        %p331 = pneg %p149
        %p332 = pneg %p173
        %p333 = pneg %p170
        %p334 = pneg %p199
        %p335 = pneg %p196
        %s336 = sand.u32 %s186, 1
        %s337 = scalar_lea.sflag [#allocation7], %s336
        %s338 = sand.u32 %s186, 1
        %s339 = smul.addr %s338, 256
        %s340 = scalar_lea.vmem [#allocation13], %s339
        %v342 = vld [vmem:[%s298] sm:$0xf]
        %v343 = vld [vmem:[%s298 + $0x4] sm:$0xf]
        %v344 = vld [vmem:[%s298 + $0x8] sm:$0xf]
        %v345 = vld [vmem:[%s298 + $0xc] sm:$0xf]
        %v346 = vld [vmem:[%s298 + $0x10] sm:$0xf]
        %v347 = vld [vmem:[%s298 + $0x14] sm:$0xf]
        %v348 = vld [vmem:[%s298 + $0x18] sm:$0xf]
        %v349 = vld [vmem:[%s298 + $0x1c] sm:$0xf]
        %v350 = vld [vmem:[%s298 + $0x20] sm:$0xf]
        %v351 = vld [vmem:[%s298 + $0x24] sm:$0xf]
        %v352 = vld [vmem:[%s298 + $0x28] sm:$0xf]
        %v353 = vld [vmem:[%s298 + $0x2c] sm:$0xf]
        %v354 = vld [vmem:[%s298 + $0x30] sm:$0xf]
        %v355 = vld [vmem:[%s298 + $0x34] sm:$0xf]
        %v356 = vld [vmem:[%s298 + $0x38] sm:$0xf]
        %v357 = vld [vmem:[%s298 + $0x3c] sm:$0xf]
        %v358 = vld [vmem:[%s298 + $0x40] sm:$0xf]
        %v359 = vld [vmem:[%s298 + $0x44] sm:$0xf]
        %v360 = vld [vmem:[%s298 + $0x48] sm:$0xf]
        %v361 = vld [vmem:[%s298 + $0x4c] sm:$0xf]
        %v362 = vld [vmem:[%s298 + $0x50] sm:$0xf]
        %v363 = vld [vmem:[%s298 + $0x54] sm:$0xf]
        %v364 = vld [vmem:[%s298 + $0x58] sm:$0xf]
        %v365 = vld [vmem:[%s298 + $0x5c] sm:$0xf]
        %v366 = vld [vmem:[%s298 + $0x60] sm:$0xf]
        %v367 = vld [vmem:[%s298 + $0x64] sm:$0xf]
        %v368 = vld [vmem:[%s298 + $0x68] sm:$0xf]
        %v369 = vld [vmem:[%s298 + $0x6c] sm:$0xf]
        %v370 = vld [vmem:[%s298 + $0x70] sm:$0xf]
        %v371 = vld [vmem:[%s298 + $0x74] sm:$0xf]
        %v372 = vld [vmem:[%s298 + $0x78] sm:$0xf]
        %v373 = vld [vmem:[%s298 + $0x7c] sm:$0xf]
        %v374 = vunpack.c.l.bf16 %v342
        %v375 = vunpack.c.l.bf16 %v343
        %v376 = vunpack.c.l.bf16 %v344
        %v377 = vunpack.c.l.bf16 %v345
        %v378 = vunpack.c.l.bf16 %v346
        %v379 = vunpack.c.l.bf16 %v347
        %v380 = vunpack.c.l.bf16 %v348
        %v381 = vunpack.c.l.bf16 %v349
        %v382 = vunpack.c.l.bf16 %v350
        %v383 = vunpack.c.l.bf16 %v351
        %v384 = vunpack.c.l.bf16 %v352
        %v385 = vunpack.c.l.bf16 %v353
        %v386 = vunpack.c.l.bf16 %v354
        %v387 = vunpack.c.l.bf16 %v355
        %v388 = vunpack.c.l.bf16 %v356
        %v389 = vunpack.c.l.bf16 %v357
        %v390 = vunpack.c.l.bf16 %v358
        %v391 = vunpack.c.l.bf16 %v359
        %v392 = vunpack.c.l.bf16 %v360
        %v393 = vunpack.c.l.bf16 %v361
        %v394 = vunpack.c.l.bf16 %v362
        %v395 = vunpack.c.l.bf16 %v363
        %v396 = vunpack.c.l.bf16 %v364
        %v397 = vunpack.c.l.bf16 %v365
        %v398 = vunpack.c.l.bf16 %v366
        %v399 = vunpack.c.l.bf16 %v367
        %v400 = vunpack.c.l.bf16 %v368
        %v401 = vunpack.c.l.bf16 %v369
        %v402 = vunpack.c.l.bf16 %v370
        %v403 = vunpack.c.l.bf16 %v371
        %v404 = vunpack.c.l.bf16 %v372
        %v405 = vunpack.c.l.bf16 %v373
        %s406 = scalar_lea.vmem [#allocation2], 24
        %407 = vst [vmem:[%s406 + $0x1] sm:$0xff] %v374
        %408 = vst [vmem:[%s406 + $0x9] sm:$0xff] %v375
        %409 = vst [vmem:[%s406 + $0x19] sm:$0xff] %v376
        %410 = vst [vmem:[%s406 + $0x21] sm:$0xff] %v377
        %411 = vst [vmem:[%s406 + $0x31] sm:$0xff] %v378
        %412 = vst [vmem:[%s406 + $0x39] sm:$0xff] %v379
        %413 = vst [vmem:[%s406 + $0x49] sm:$0xff] %v380
        %414 = vst [vmem:[%s406 + $0x51] sm:$0xff] %v381
        %415 = vst [vmem:[%s406 + $0x61] sm:$0xff] %v382
        %416 = vst [vmem:[%s406 + $0x69] sm:$0xff] %v383
        %417 = vst [vmem:[%s406 + $0x79] sm:$0xff] %v384
        %418 = vst [vmem:[%s406 + $0x81] sm:$0xff] %v385
        %419 = vst [vmem:[%s406 + $0x91] sm:$0xff] %v386
        %420 = vst [vmem:[%s406 + $0x99] sm:$0xff] %v387
        %421 = vst [vmem:[%s406 + $0xa9] sm:$0xff] %v388
        %422 = vst [vmem:[%s406 + $0xb1] sm:$0xff] %v389
        %423 = vst [vmem:[%s406 + $0xc1] sm:$0xff] %v390
        %424 = vst [vmem:[%s406 + $0xc9] sm:$0xff] %v391
        %425 = vst [vmem:[%s406 + $0xd9] sm:$0xff] %v392
        %426 = vst [vmem:[%s406 + $0xe1] sm:$0xff] %v393
        %427 = vst [vmem:[%s406 + $0xf1] sm:$0xff] %v394
        %428 = vst [vmem:[%s406 + $0xf9] sm:$0xff] %v395
        %429 = vst [vmem:[%s406 + $0x109] sm:$0xff] %v396
        %430 = vst [vmem:[%s406 + $0x111] sm:$0xff] %v397
        %431 = vst [vmem:[%s406 + $0x121] sm:$0xff] %v398
        %432 = vst [vmem:[%s406 + $0x129] sm:$0xff] %v399
        %433 = vst [vmem:[%s406 + $0x139] sm:$0xff] %v400
        %434 = vst [vmem:[%s406 + $0x141] sm:$0xff] %v401
        %435 = vst [vmem:[%s406 + $0x151] sm:$0xff] %v402
        %436 = vst [vmem:[%s406 + $0x159] sm:$0xff] %v403
        %437 = vst [vmem:[%s406 + $0x169] sm:$0xff] %v404
        %438 = vst [vmem:[%s406 + $0x171] sm:$0xff] %v405
        %439 = vst [vmem:[#allocation2] sm:$0xff] 0.0
        %440 = vst [vmem:[#allocation2 + $0x8] sm:$0xff] 0.0
        %441 = vst [vmem:[#allocation2 + $0x10] sm:$0x3] 0.0
        %s442 = scalar_lea.vmem [#allocation2], 408
        %443 = vst [vmem:[%s442] sm:$0xff] 0.0
        %444 = vst [vmem:[%s442 + $0x8] sm:$0xff] 0.0
        %445 = vst [vmem:[%s442 + $0x10] sm:$0x3] 0.0
        %446 = vst [vmem:[#allocation2] sm:$0x1] 0.0
        %447 = vst [vmem:[#allocation2 + $0x18] sm:$0x1] 0.0
        %448 = vst [vmem:[#allocation2 + $0x30] sm:$0x1] 0.0
        %449 = vst [vmem:[#allocation2 + $0x48] sm:$0x1] 0.0
        %450 = vst [vmem:[#allocation2 + $0x60] sm:$0x1] 0.0
        %451 = vst [vmem:[#allocation2 + $0x78] sm:$0x1] 0.0
        %452 = vst [vmem:[#allocation2 + $0x90] sm:$0x1] 0.0
        %453 = vst [vmem:[#allocation2 + $0xa8] sm:$0x1] 0.0
        %454 = vst [vmem:[#allocation2 + $0xc0] sm:$0x1] 0.0
        %455 = vst [vmem:[#allocation2 + $0xd8] sm:$0x1] 0.0
        %456 = vst [vmem:[#allocation2 + $0xf0] sm:$0x1] 0.0
        %457 = vst [vmem:[#allocation2 + $0x108] sm:$0x1] 0.0
        %458 = vst [vmem:[#allocation2 + $0x120] sm:$0x1] 0.0
        %459 = vst [vmem:[#allocation2 + $0x138] sm:$0x1] 0.0
        %460 = vst [vmem:[#allocation2 + $0x150] sm:$0x1] 0.0
        %461 = vst [vmem:[#allocation2 + $0x168] sm:$0x1] 0.0
        %462 = vst [vmem:[#allocation2 + $0x180] sm:$0x1] 0.0
        %463 = vst [vmem:[#allocation2 + $0x198] sm:$0x1] 0.0
        %464 = vst [vmem:[#allocation2 + $0x11] sm:$0x1] 0.0
        %465 = vst [vmem:[#allocation2 + $0x29] sm:$0x1] 0.0
        %466 = vst [vmem:[#allocation2 + $0x41] sm:$0x1] 0.0
        %467 = vst [vmem:[#allocation2 + $0x59] sm:$0x1] 0.0
        %468 = vst [vmem:[#allocation2 + $0x71] sm:$0x1] 0.0
        %469 = vst [vmem:[#allocation2 + $0x89] sm:$0x1] 0.0
        %470 = vst [vmem:[#allocation2 + $0xa1] sm:$0x1] 0.0
        %471 = vst [vmem:[#allocation2 + $0xb9] sm:$0x1] 0.0
        %472 = vst [vmem:[#allocation2 + $0xd1] sm:$0x1] 0.0
        %473 = vst [vmem:[#allocation2 + $0xe9] sm:$0x1] 0.0
        %474 = vst [vmem:[#allocation2 + $0x101] sm:$0x1] 0.0
        %475 = vst [vmem:[#allocation2 + $0x119] sm:$0x1] 0.0
        %476 = vst [vmem:[#allocation2 + $0x131] sm:$0x1] 0.0
        %477 = vst [vmem:[#allocation2 + $0x149] sm:$0x1] 0.0
        %478 = vst [vmem:[#allocation2 + $0x161] sm:$0x1] 0.0
        %479 = vst [vmem:[#allocation2 + $0x179] sm:$0x1] 0.0
        %480 = vst [vmem:[#allocation2 + $0x191] sm:$0x1] 0.0
        %481 = vst [vmem:[#allocation2 + $0x1a9] sm:$0x1] 0.0
        %v482 = vld [vmem:[#allocation2] sm:$0xff]
        %v483 = vld [vmem:[#allocation2 + $0x8] sm:$0xff]
        %v484 = vld [vmem:[#allocation2 + $0x18] sm:$0xff]
        %v485 = vld [vmem:[#allocation2 + $0x20] sm:$0xff]
        %v486 = vld [vmem:[#allocation2 + $0x30] sm:$0xff]
        %v487 = vld [vmem:[#allocation2 + $0x38] sm:$0xff]
        %v488 = vld [vmem:[#allocation2 + $0x48] sm:$0xff]
        %v489 = vld [vmem:[#allocation2 + $0x50] sm:$0xff]
        %v490 = vld [vmem:[#allocation2 + $0x60] sm:$0xff]
        %v491 = vld [vmem:[#allocation2 + $0x68] sm:$0xff]
        %v492 = vld [vmem:[#allocation2 + $0x78] sm:$0xff]
        %v493 = vld [vmem:[#allocation2 + $0x80] sm:$0xff]
        %v494 = vld [vmem:[#allocation2 + $0x90] sm:$0xff]
        %v495 = vld [vmem:[#allocation2 + $0x98] sm:$0xff]
        %v496 = vld [vmem:[#allocation2 + $0xa8] sm:$0xff]
        %v497 = vld [vmem:[#allocation2 + $0xb0] sm:$0xff]
        %v498 = vld [vmem:[#allocation2 + $0xc0] sm:$0xff]
        %v499 = vld [vmem:[#allocation2 + $0xc8] sm:$0xff]
        %v500 = vld [vmem:[#allocation2 + $0xd8] sm:$0xff]
        %v501 = vld [vmem:[#allocation2 + $0xe0] sm:$0xff]
        %v502 = vld [vmem:[#allocation2 + $0xf0] sm:$0xff]
        %v503 = vld [vmem:[#allocation2 + $0xf8] sm:$0xff]
        %v504 = vld [vmem:[#allocation2 + $0x108] sm:$0xff]
        %v505 = vld [vmem:[#allocation2 + $0x110] sm:$0xff]
        %v506 = vld [vmem:[#allocation2 + $0x120] sm:$0xff]
        %v507 = vld [vmem:[#allocation2 + $0x128] sm:$0xff]
        %v508 = vld [vmem:[#allocation2 + $0x138] sm:$0xff]
        %v509 = vld [vmem:[#allocation2 + $0x140] sm:$0xff]
        %v510 = vld [vmem:[#allocation2 + $0x150] sm:$0xff]
        %v511 = vld [vmem:[#allocation2 + $0x158] sm:$0xff]
        %v512 = vld [vmem:[#allocation2 + $0x168] sm:$0xff]
        %v513 = vld [vmem:[#allocation2 + $0x170] sm:$0xff]
        %v514 = vld [vmem:[#allocation2 + $0x1] sm:$0xff]
        %v515 = vld [vmem:[#allocation2 + $0x9] sm:$0xff]
        %v516 = vld [vmem:[#allocation2 + $0x19] sm:$0xff]
        %v517 = vld [vmem:[#allocation2 + $0x21] sm:$0xff]
        %v518 = vld [vmem:[#allocation2 + $0x31] sm:$0xff]
        %v519 = vld [vmem:[#allocation2 + $0x39] sm:$0xff]
        %v520 = vld [vmem:[#allocation2 + $0x49] sm:$0xff]
        %v521 = vld [vmem:[#allocation2 + $0x51] sm:$0xff]
        %v522 = vld [vmem:[#allocation2 + $0x61] sm:$0xff]
        %v523 = vld [vmem:[#allocation2 + $0x69] sm:$0xff]
        %v524 = vld [vmem:[#allocation2 + $0x79] sm:$0xff]
        %v525 = vld [vmem:[#allocation2 + $0x81] sm:$0xff]
        %v526 = vld [vmem:[#allocation2 + $0x91] sm:$0xff]
        %v527 = vld [vmem:[#allocation2 + $0x99] sm:$0xff]
        %v528 = vld [vmem:[#allocation2 + $0xa9] sm:$0xff]
        %v529 = vld [vmem:[#allocation2 + $0xb1] sm:$0xff]
        %v530 = vld [vmem:[#allocation2 + $0xc1] sm:$0xff]
        %v531 = vld [vmem:[#allocation2 + $0xc9] sm:$0xff]
        %v532 = vld [vmem:[#allocation2 + $0xd9] sm:$0xff]
        %v533 = vld [vmem:[#allocation2 + $0xe1] sm:$0xff]
        %v534 = vld [vmem:[#allocation2 + $0xf1] sm:$0xff]
        %v535 = vld [vmem:[#allocation2 + $0xf9] sm:$0xff]
        %v536 = vld [vmem:[#allocation2 + $0x109] sm:$0xff]
        %v537 = vld [vmem:[#allocation2 + $0x111] sm:$0xff]
        %v538 = vld [vmem:[#allocation2 + $0x121] sm:$0xff]
        %v539 = vld [vmem:[#allocation2 + $0x129] sm:$0xff]
        %v540 = vld [vmem:[#allocation2 + $0x139] sm:$0xff]
        %v541 = vld [vmem:[#allocation2 + $0x141] sm:$0xff]
        %v542 = vld [vmem:[#allocation2 + $0x151] sm:$0xff]
        %v543 = vld [vmem:[#allocation2 + $0x159] sm:$0xff]
        %v544 = vld [vmem:[#allocation2 + $0x169] sm:$0xff]
        %v545 = vld [vmem:[#allocation2 + $0x171] sm:$0xff]
        %v546 = vld [vmem:[#allocation2 + $0x2] sm:$0xff]
        %v547 = vld [vmem:[#allocation2 + $0xa] sm:$0xff]
        %v548 = vld [vmem:[#allocation2 + $0x1a] sm:$0xff]
        %v549 = vld [vmem:[#allocation2 + $0x22] sm:$0xff]
        %v550 = vld [vmem:[#allocation2 + $0x32] sm:$0xff]
        %v551 = vld [vmem:[#allocation2 + $0x3a] sm:$0xff]
        %v552 = vld [vmem:[#allocation2 + $0x4a] sm:$0xff]
        %v553 = vld [vmem:[#allocation2 + $0x52] sm:$0xff]
        %v554 = vld [vmem:[#allocation2 + $0x62] sm:$0xff]
        %v555 = vld [vmem:[#allocation2 + $0x6a] sm:$0xff]
        %v556 = vld [vmem:[#allocation2 + $0x7a] sm:$0xff]
        %v557 = vld [vmem:[#allocation2 + $0x82] sm:$0xff]
        %v558 = vld [vmem:[#allocation2 + $0x92] sm:$0xff]
        %v559 = vld [vmem:[#allocation2 + $0x9a] sm:$0xff]
        %v560 = vld [vmem:[#allocation2 + $0xaa] sm:$0xff]
        %v561 = vld [vmem:[#allocation2 + $0xb2] sm:$0xff]
        %v562 = vld [vmem:[#allocation2 + $0xc2] sm:$0xff]
        %v563 = vld [vmem:[#allocation2 + $0xca] sm:$0xff]
        %v564 = vld [vmem:[#allocation2 + $0xda] sm:$0xff]
        %v565 = vld [vmem:[#allocation2 + $0xe2] sm:$0xff]
        %v566 = vld [vmem:[#allocation2 + $0xf2] sm:$0xff]
        %v567 = vld [vmem:[#allocation2 + $0xfa] sm:$0xff]
        %v568 = vld [vmem:[#allocation2 + $0x10a] sm:$0xff]
        %v569 = vld [vmem:[#allocation2 + $0x112] sm:$0xff]
        %v570 = vld [vmem:[#allocation2 + $0x122] sm:$0xff]
        %v571 = vld [vmem:[#allocation2 + $0x12a] sm:$0xff]
        %v572 = vld [vmem:[#allocation2 + $0x13a] sm:$0xff]
        %v573 = vld [vmem:[#allocation2 + $0x142] sm:$0xff]
        %v574 = vld [vmem:[#allocation2 + $0x152] sm:$0xff]
        %v575 = vld [vmem:[#allocation2 + $0x15a] sm:$0xff]
        %v576 = vld [vmem:[#allocation2 + $0x16a] sm:$0xff]
        %v577 = vld [vmem:[#allocation2 + $0x172] sm:$0xff]
        %v578 = vpack.c.bf16 %v483, %v482
        %v579 = vpack.c.bf16 %v515, %v514
        %v580 = vpack.c.bf16 %v547, %v546
        %v581 = vpack.c.bf16 %v485, %v484
        %v582 = vpack.c.bf16 %v517, %v516
        %v583 = vpack.c.bf16 %v549, %v548
        %v584 = vpack.c.bf16 %v487, %v486
        %v585 = vpack.c.bf16 %v519, %v518
        %v586 = vpack.c.bf16 %v551, %v550
        %v587 = vpack.c.bf16 %v489, %v488
        %v588 = vpack.c.bf16 %v521, %v520
        %v589 = vpack.c.bf16 %v553, %v552
        %v590 = vpack.c.bf16 %v491, %v490
        %v591 = vpack.c.bf16 %v523, %v522
        %v592 = vpack.c.bf16 %v555, %v554
        %v593 = vpack.c.bf16 %v493, %v492
        %v594 = vpack.c.bf16 %v525, %v524
        %v595 = vpack.c.bf16 %v557, %v556
        %v596 = vpack.c.bf16 %v495, %v494
        %v597 = vpack.c.bf16 %v527, %v526
        %v598 = vpack.c.bf16 %v559, %v558
        %v599 = vpack.c.bf16 %v497, %v496
        %v600 = vpack.c.bf16 %v529, %v528
        %v601 = vpack.c.bf16 %v561, %v560
        %v602 = vpack.c.bf16 %v499, %v498
        %v603 = vpack.c.bf16 %v531, %v530
        %v604 = vpack.c.bf16 %v563, %v562
        %v605 = vpack.c.bf16 %v501, %v500
        %v606 = vpack.c.bf16 %v533, %v532
        %v607 = vpack.c.bf16 %v565, %v564
        %v608 = vpack.c.bf16 %v503, %v502
        %v609 = vpack.c.bf16 %v535, %v534
        %v610 = vpack.c.bf16 %v567, %v566
        %v611 = vpack.c.bf16 %v505, %v504
        %v612 = vpack.c.bf16 %v537, %v536
        %v613 = vpack.c.bf16 %v569, %v568
        %v614 = vpack.c.bf16 %v507, %v506
        %v615 = vpack.c.bf16 %v539, %v538
        %v616 = vpack.c.bf16 %v571, %v570
        %v617 = vpack.c.bf16 %v509, %v508
        %v618 = vpack.c.bf16 %v541, %v540
        %v619 = vpack.c.bf16 %v573, %v572
        %v620 = vpack.c.bf16 %v511, %v510
        %v621 = vpack.c.bf16 %v543, %v542
        %v622 = vpack.c.bf16 %v575, %v574
        %v623 = vpack.c.bf16 %v513, %v512
        %v624 = vpack.c.bf16 %v545, %v544
        %v625 = vpack.c.bf16 %v577, %v576
        %v626 = vld [vmem:[#allocation8] sm:$0xf]
        %v627 = vld [vmem:[#allocation8 + $0x4] sm:$0xf]
        %v628 = vld [vmem:[#allocation8 + $0x8] sm:$0xf]
        %v629 = vld [vmem:[#allocation8 + $0xc] sm:$0xf]
        %v630 = vld [vmem:[#allocation8 + $0x10] sm:$0xf]
        %v631 = vld [vmem:[#allocation8 + $0x14] sm:$0xf]
        %v632 = vld [vmem:[#allocation8 + $0x18] sm:$0xf]
        %v633 = vld [vmem:[#allocation8 + $0x1c] sm:$0xf]
        %v634 = vld [vmem:[#allocation8 + $0x20] sm:$0xf]
        %v635 = vld [vmem:[#allocation8 + $0x24] sm:$0xf]
        %v636 = vld [vmem:[#allocation8 + $0x28] sm:$0xf]
        %v637 = vld [vmem:[#allocation8 + $0x2c] sm:$0xf]
        %v638 = vld [vmem:[#allocation8 + $0x30] sm:$0xf]
        %v639 = vld [vmem:[#allocation8 + $0x34] sm:$0xf]
        %v640 = vld [vmem:[#allocation8 + $0x38] sm:$0xf]
        %v641 = vld [vmem:[#allocation8 + $0x3c] sm:$0xf]
        %v642 = vld [vmem:[#allocation8 + $0x40] sm:$0xf]
        %v643 = vld [vmem:[#allocation8 + $0x44] sm:$0xf]
        %v644 = vld [vmem:[#allocation8 + $0x48] sm:$0xf]
        %v645 = vld [vmem:[#allocation8 + $0x4c] sm:$0xf]
        %v646 = vld [vmem:[#allocation8 + $0x50] sm:$0xf]
        %v647 = vld [vmem:[#allocation8 + $0x54] sm:$0xf]
        %v648 = vld [vmem:[#allocation8 + $0x58] sm:$0xf]
        %v649 = vld [vmem:[#allocation8 + $0x5c] sm:$0xf]
        %v650 = vld [vmem:[#allocation8 + $0x60] sm:$0xf]
        %v651 = vld [vmem:[#allocation8 + $0x64] sm:$0xf]
        %v652 = vld [vmem:[#allocation8 + $0x68] sm:$0xf]
        %v653 = vld [vmem:[#allocation8 + $0x6c] sm:$0xf]
        %v654 = vld [vmem:[#allocation8 + $0x70] sm:$0xf]
        %v655 = vld [vmem:[#allocation8 + $0x74] sm:$0xf]
        %v656 = vld [vmem:[#allocation8 + $0x78] sm:$0xf]
        %v657 = vld [vmem:[#allocation8 + $0x7c] sm:$0xf]
        %v658 = vld [vmem:[#allocation8 + $0x80] sm:$0xf]
        %v659 = vld [vmem:[#allocation8 + $0x84] sm:$0xf]
        %v660 = vld [vmem:[#allocation8 + $0x88] sm:$0xf]
        %v661 = vld [vmem:[#allocation8 + $0x8c] sm:$0xf]
        %v662 = vld [vmem:[#allocation8 + $0x90] sm:$0xf]
        %v663 = vld [vmem:[#allocation8 + $0x94] sm:$0xf]
        %v664 = vld [vmem:[#allocation8 + $0x98] sm:$0xf]
        %v665 = vld [vmem:[#allocation8 + $0x9c] sm:$0xf]
        %v666 = vld [vmem:[#allocation8 + $0xa0] sm:$0xf]
        %v667 = vld [vmem:[#allocation8 + $0xa4] sm:$0xf]
        %v668 = vld [vmem:[#allocation8 + $0xa8] sm:$0xf]
        %v669 = vld [vmem:[#allocation8 + $0xac] sm:$0xf]
        %v670 = vld [vmem:[#allocation8 + $0xb0] sm:$0xf]
        %v671 = vld [vmem:[#allocation8 + $0xb4] sm:$0xf]
        %v672 = vld [vmem:[#allocation8 + $0xb8] sm:$0xf]
        %v673 = vld [vmem:[#allocation8 + $0xbc] sm:$0xf]
        %v674 = vld [vmem:[%s406] sm:$0xff]
        %v675 = vld [vmem:[%s406 + $0x8] sm:$0xff]
        %v676 = vld [vmem:[%s406 + $0x18] sm:$0xff]
        %v677 = vld [vmem:[%s406 + $0x20] sm:$0xff]
        %v678 = vld [vmem:[%s406 + $0x30] sm:$0xff]
        %v679 = vld [vmem:[%s406 + $0x38] sm:$0xff]
        %v680 = vld [vmem:[%s406 + $0x48] sm:$0xff]
        %v681 = vld [vmem:[%s406 + $0x50] sm:$0xff]
        %v682 = vld [vmem:[%s406 + $0x60] sm:$0xff]
        %v683 = vld [vmem:[%s406 + $0x68] sm:$0xff]
        %v684 = vld [vmem:[%s406 + $0x78] sm:$0xff]
        %v685 = vld [vmem:[%s406 + $0x80] sm:$0xff]
        %v686 = vld [vmem:[%s406 + $0x90] sm:$0xff]
        %v687 = vld [vmem:[%s406 + $0x98] sm:$0xff]
        %v688 = vld [vmem:[%s406 + $0xa8] sm:$0xff]
        %v689 = vld [vmem:[%s406 + $0xb0] sm:$0xff]
        %v690 = vld [vmem:[%s406 + $0xc0] sm:$0xff]
        %v691 = vld [vmem:[%s406 + $0xc8] sm:$0xff]
        %v692 = vld [vmem:[%s406 + $0xd8] sm:$0xff]
        %v693 = vld [vmem:[%s406 + $0xe0] sm:$0xff]
        %v694 = vld [vmem:[%s406 + $0xf0] sm:$0xff]
        %v695 = vld [vmem:[%s406 + $0xf8] sm:$0xff]
        %v696 = vld [vmem:[%s406 + $0x108] sm:$0xff]
        %v697 = vld [vmem:[%s406 + $0x110] sm:$0xff]
        %v698 = vld [vmem:[%s406 + $0x120] sm:$0xff]
        %v699 = vld [vmem:[%s406 + $0x128] sm:$0xff]
        %v700 = vld [vmem:[%s406 + $0x138] sm:$0xff]
        %v701 = vld [vmem:[%s406 + $0x140] sm:$0xff]
        %v702 = vld [vmem:[%s406 + $0x150] sm:$0xff]
        %v703 = vld [vmem:[%s406 + $0x158] sm:$0xff]
        %v704 = vld [vmem:[%s406 + $0x168] sm:$0xff]
        %v705 = vld [vmem:[%s406 + $0x170] sm:$0xff]
        %v706 = vld [vmem:[%s406 + $0x1] sm:$0xff]
        %v707 = vld [vmem:[%s406 + $0x9] sm:$0xff]
        %v708 = vld [vmem:[%s406 + $0x19] sm:$0xff]
        %v709 = vld [vmem:[%s406 + $0x21] sm:$0xff]
        %v710 = vld [vmem:[%s406 + $0x31] sm:$0xff]
        %v711 = vld [vmem:[%s406 + $0x39] sm:$0xff]
        %v712 = vld [vmem:[%s406 + $0x49] sm:$0xff]
        %v713 = vld [vmem:[%s406 + $0x51] sm:$0xff]
        %v714 = vld [vmem:[%s406 + $0x61] sm:$0xff]
        %v715 = vld [vmem:[%s406 + $0x69] sm:$0xff]
        %v716 = vld [vmem:[%s406 + $0x79] sm:$0xff]
        %v717 = vld [vmem:[%s406 + $0x81] sm:$0xff]
        %v718 = vld [vmem:[%s406 + $0x91] sm:$0xff]
        %v719 = vld [vmem:[%s406 + $0x99] sm:$0xff]
        %v720 = vld [vmem:[%s406 + $0xa9] sm:$0xff]
        %v721 = vld [vmem:[%s406 + $0xb1] sm:$0xff]
        %v722 = vld [vmem:[%s406 + $0xc1] sm:$0xff]
        %v723 = vld [vmem:[%s406 + $0xc9] sm:$0xff]
        %v724 = vld [vmem:[%s406 + $0xd9] sm:$0xff]
        %v725 = vld [vmem:[%s406 + $0xe1] sm:$0xff]
        %v726 = vld [vmem:[%s406 + $0xf1] sm:$0xff]
        %v727 = vld [vmem:[%s406 + $0xf9] sm:$0xff]
        %v728 = vld [vmem:[%s406 + $0x109] sm:$0xff]
        %v729 = vld [vmem:[%s406 + $0x111] sm:$0xff]
        %v730 = vld [vmem:[%s406 + $0x121] sm:$0xff]
        %v731 = vld [vmem:[%s406 + $0x129] sm:$0xff]
        %v732 = vld [vmem:[%s406 + $0x139] sm:$0xff]
        %v733 = vld [vmem:[%s406 + $0x141] sm:$0xff]
        %v734 = vld [vmem:[%s406 + $0x151] sm:$0xff]
        %v735 = vld [vmem:[%s406 + $0x159] sm:$0xff]
        %v736 = vld [vmem:[%s406 + $0x169] sm:$0xff]
        %v737 = vld [vmem:[%s406 + $0x171] sm:$0xff]
        %v738 = vld [vmem:[%s406 + $0x2] sm:$0xff]
        %v739 = vld [vmem:[%s406 + $0xa] sm:$0xff]
        %v740 = vld [vmem:[%s406 + $0x1a] sm:$0xff]
        %v741 = vld [vmem:[%s406 + $0x22] sm:$0xff]
        %v742 = vld [vmem:[%s406 + $0x32] sm:$0xff]
        %v743 = vld [vmem:[%s406 + $0x3a] sm:$0xff]
        %v744 = vld [vmem:[%s406 + $0x4a] sm:$0xff]
        %v745 = vld [vmem:[%s406 + $0x52] sm:$0xff]
        %v746 = vld [vmem:[%s406 + $0x62] sm:$0xff]
        %v747 = vld [vmem:[%s406 + $0x6a] sm:$0xff]
        %v748 = vld [vmem:[%s406 + $0x7a] sm:$0xff]
        %v749 = vld [vmem:[%s406 + $0x82] sm:$0xff]
        %v750 = vld [vmem:[%s406 + $0x92] sm:$0xff]
        %v751 = vld [vmem:[%s406 + $0x9a] sm:$0xff]
        %v752 = vld [vmem:[%s406 + $0xaa] sm:$0xff]
        %v753 = vld [vmem:[%s406 + $0xb2] sm:$0xff]
        %v754 = vld [vmem:[%s406 + $0xc2] sm:$0xff]
        %v755 = vld [vmem:[%s406 + $0xca] sm:$0xff]
        %v756 = vld [vmem:[%s406 + $0xda] sm:$0xff]
        %v757 = vld [vmem:[%s406 + $0xe2] sm:$0xff]
        %v758 = vld [vmem:[%s406 + $0xf2] sm:$0xff]
        %v759 = vld [vmem:[%s406 + $0xfa] sm:$0xff]
        %v760 = vld [vmem:[%s406 + $0x10a] sm:$0xff]
        %v761 = vld [vmem:[%s406 + $0x112] sm:$0xff]
        %v762 = vld [vmem:[%s406 + $0x122] sm:$0xff]
        %v763 = vld [vmem:[%s406 + $0x12a] sm:$0xff]
        %v764 = vld [vmem:[%s406 + $0x13a] sm:$0xff]
        %v765 = vld [vmem:[%s406 + $0x142] sm:$0xff]
        %v766 = vld [vmem:[%s406 + $0x152] sm:$0xff]
        %v767 = vld [vmem:[%s406 + $0x15a] sm:$0xff]
        %v768 = vld [vmem:[%s406 + $0x16a] sm:$0xff]
        %v769 = vld [vmem:[%s406 + $0x172] sm:$0xff]
        %v770 = vpack.c.bf16 %v675, %v674
        %v771 = vpack.c.bf16 %v707, %v706
        %v772 = vpack.c.bf16 %v739, %v738
        %v773 = vpack.c.bf16 %v677, %v676
        %v774 = vpack.c.bf16 %v709, %v708
        %v775 = vpack.c.bf16 %v741, %v740
        %v776 = vpack.c.bf16 %v679, %v678
        %v777 = vpack.c.bf16 %v711, %v710
        %v778 = vpack.c.bf16 %v743, %v742
        %v779 = vpack.c.bf16 %v681, %v680
        %v780 = vpack.c.bf16 %v713, %v712
        %v781 = vpack.c.bf16 %v745, %v744
        %v782 = vpack.c.bf16 %v683, %v682
        %v783 = vpack.c.bf16 %v715, %v714
        %v784 = vpack.c.bf16 %v747, %v746
        %v785 = vpack.c.bf16 %v685, %v684
        %v786 = vpack.c.bf16 %v717, %v716
        %v787 = vpack.c.bf16 %v749, %v748
        %v788 = vpack.c.bf16 %v687, %v686
        %v789 = vpack.c.bf16 %v719, %v718
        %v790 = vpack.c.bf16 %v751, %v750
        %v791 = vpack.c.bf16 %v689, %v688
        %v792 = vpack.c.bf16 %v721, %v720
        %v793 = vpack.c.bf16 %v753, %v752
        %v794 = vpack.c.bf16 %v691, %v690
        %v795 = vpack.c.bf16 %v723, %v722
        %v796 = vpack.c.bf16 %v755, %v754
        %v797 = vpack.c.bf16 %v693, %v692
        %v798 = vpack.c.bf16 %v725, %v724
        %v799 = vpack.c.bf16 %v757, %v756
        %v800 = vpack.c.bf16 %v695, %v694
        %v801 = vpack.c.bf16 %v727, %v726
        %v802 = vpack.c.bf16 %v759, %v758
        %v803 = vpack.c.bf16 %v697, %v696
        %v804 = vpack.c.bf16 %v729, %v728
        %v805 = vpack.c.bf16 %v761, %v760
        %v806 = vpack.c.bf16 %v699, %v698
        %v807 = vpack.c.bf16 %v731, %v730
        %v808 = vpack.c.bf16 %v763, %v762
        %v809 = vpack.c.bf16 %v701, %v700
        %v810 = vpack.c.bf16 %v733, %v732
        %v811 = vpack.c.bf16 %v765, %v764
        %v812 = vpack.c.bf16 %v703, %v702
        %v813 = vpack.c.bf16 %v735, %v734
        %v814 = vpack.c.bf16 %v767, %v766
        %v815 = vpack.c.bf16 %v705, %v704
        %v816 = vpack.c.bf16 %v737, %v736
        %v817 = vpack.c.bf16 %v769, %v768
        %s818 = scalar_lea.vmem [#allocation8], 192
        %v819 = vld [vmem:[%s818] sm:$0xf]
        %v820 = vld [vmem:[%s818 + $0x4] sm:$0xf]
        %v821 = vld [vmem:[%s818 + $0x8] sm:$0xf]
        %v822 = vld [vmem:[%s818 + $0xc] sm:$0xf]
        %v823 = vld [vmem:[%s818 + $0x10] sm:$0xf]
        %v824 = vld [vmem:[%s818 + $0x14] sm:$0xf]
        %v825 = vld [vmem:[%s818 + $0x18] sm:$0xf]
        %v826 = vld [vmem:[%s818 + $0x1c] sm:$0xf]
        %v827 = vld [vmem:[%s818 + $0x20] sm:$0xf]
        %v828 = vld [vmem:[%s818 + $0x24] sm:$0xf]
        %v829 = vld [vmem:[%s818 + $0x28] sm:$0xf]
        %v830 = vld [vmem:[%s818 + $0x2c] sm:$0xf]
        %v831 = vld [vmem:[%s818 + $0x30] sm:$0xf]
        %v832 = vld [vmem:[%s818 + $0x34] sm:$0xf]
        %v833 = vld [vmem:[%s818 + $0x38] sm:$0xf]
        %v834 = vld [vmem:[%s818 + $0x3c] sm:$0xf]
        %v835 = vld [vmem:[%s818 + $0x40] sm:$0xf]
        %v836 = vld [vmem:[%s818 + $0x44] sm:$0xf]
        %v837 = vld [vmem:[%s818 + $0x48] sm:$0xf]
        %v838 = vld [vmem:[%s818 + $0x4c] sm:$0xf]
        %v839 = vld [vmem:[%s818 + $0x50] sm:$0xf]
        %v840 = vld [vmem:[%s818 + $0x54] sm:$0xf]
        %v841 = vld [vmem:[%s818 + $0x58] sm:$0xf]
        %v842 = vld [vmem:[%s818 + $0x5c] sm:$0xf]
        %v843 = vld [vmem:[%s818 + $0x60] sm:$0xf]
        %v844 = vld [vmem:[%s818 + $0x64] sm:$0xf]
        %v845 = vld [vmem:[%s818 + $0x68] sm:$0xf]
        %v846 = vld [vmem:[%s818 + $0x6c] sm:$0xf]
        %v847 = vld [vmem:[%s818 + $0x70] sm:$0xf]
        %v848 = vld [vmem:[%s818 + $0x74] sm:$0xf]
        %v849 = vld [vmem:[%s818 + $0x78] sm:$0xf]
        %v850 = vld [vmem:[%s818 + $0x7c] sm:$0xf]
        %v851 = vld [vmem:[%s818 + $0x80] sm:$0xf]
        %v852 = vld [vmem:[%s818 + $0x84] sm:$0xf]
        %v853 = vld [vmem:[%s818 + $0x88] sm:$0xf]
        %v854 = vld [vmem:[%s818 + $0x8c] sm:$0xf]
        %v855 = vld [vmem:[%s818 + $0x90] sm:$0xf]
        %v856 = vld [vmem:[%s818 + $0x94] sm:$0xf]
        %v857 = vld [vmem:[%s818 + $0x98] sm:$0xf]
        %v858 = vld [vmem:[%s818 + $0x9c] sm:$0xf]
        %v859 = vld [vmem:[%s818 + $0xa0] sm:$0xf]
        %v860 = vld [vmem:[%s818 + $0xa4] sm:$0xf]
        %v861 = vld [vmem:[%s818 + $0xa8] sm:$0xf]
        %v862 = vld [vmem:[%s818 + $0xac] sm:$0xf]
        %v863 = vld [vmem:[%s818 + $0xb0] sm:$0xf]
        %v864 = vld [vmem:[%s818 + $0xb4] sm:$0xf]
        %v865 = vld [vmem:[%s818 + $0xb8] sm:$0xf]
        %v866 = vld [vmem:[%s818 + $0xbc] sm:$0xf]
        %v915 = vunpack.c.l.b16 %v819
        %v916 = vunpack.c.l.b16 %v820
        %v917 = vunpack.c.l.b16 %v821
        %v918 = vunpack.c.l.b16 %v822
        %v919 = vunpack.c.l.b16 %v823
        %v920 = vunpack.c.l.b16 %v824
        %v921 = vunpack.c.l.b16 %v825
        %v922 = vunpack.c.l.b16 %v826
        %v923 = vunpack.c.l.b16 %v827
        %v924 = vunpack.c.l.b16 %v828
        %v925 = vunpack.c.l.b16 %v829
        %v926 = vunpack.c.l.b16 %v830
        %v927 = vunpack.c.l.b16 %v831
        %v928 = vunpack.c.l.b16 %v832
        %v929 = vunpack.c.l.b16 %v833
        %v930 = vunpack.c.l.b16 %v834
        %v931 = vunpack.c.l.b16 %v835
        %v932 = vunpack.c.l.b16 %v836
        %v933 = vunpack.c.l.b16 %v837
        %v934 = vunpack.c.l.b16 %v838
        %v935 = vunpack.c.l.b16 %v839
        %v936 = vunpack.c.l.b16 %v840
        %v937 = vunpack.c.l.b16 %v841
        %v938 = vunpack.c.l.b16 %v842
        %v939 = vunpack.c.l.b16 %v843
        %v940 = vunpack.c.l.b16 %v844
        %v941 = vunpack.c.l.b16 %v845
        %v942 = vunpack.c.l.b16 %v846
        %v943 = vunpack.c.l.b16 %v847
        %v944 = vunpack.c.l.b16 %v848
        %v945 = vunpack.c.l.b16 %v849
        %v946 = vunpack.c.l.b16 %v850
        %v947 = vunpack.c.l.b16 %v851
        %v948 = vunpack.c.l.b16 %v852
        %v949 = vunpack.c.l.b16 %v853
        %v950 = vunpack.c.l.b16 %v854
        %v951 = vunpack.c.l.b16 %v855
        %v952 = vunpack.c.l.b16 %v856
        %v953 = vunpack.c.l.b16 %v857
        %v954 = vunpack.c.l.b16 %v858
        %v955 = vunpack.c.l.b16 %v859
        %v956 = vunpack.c.l.b16 %v860
        %v957 = vunpack.c.l.b16 %v861
        %v958 = vunpack.c.l.b16 %v862
        %v959 = vunpack.c.l.b16 %v863
        %v960 = vunpack.c.l.b16 %v864
        %v961 = vunpack.c.l.b16 %v865
        %v962 = vunpack.c.l.b16 %v866
        %v963 = vpack.c.b16 %v916, %v915
        %v964 = vpack.c.b16 %v918, %v917
        %v965 = vpack.c.b16 %v920, %v919
        %v966 = vpack.c.b16 %v922, %v921
        %v967 = vpack.c.b16 %v924, %v923
        %v968 = vpack.c.b16 %v926, %v925
        %v969 = vpack.c.b16 %v928, %v927
        %v970 = vpack.c.b16 %v930, %v929
        %v971 = vpack.c.b16 %v932, %v931
        %v972 = vpack.c.b16 %v934, %v933
        %v973 = vpack.c.b16 %v936, %v935
        %v974 = vpack.c.b16 %v938, %v937
        %v975 = vpack.c.b16 %v940, %v939
        %v976 = vpack.c.b16 %v942, %v941
        %v977 = vpack.c.b16 %v944, %v943
        %v978 = vpack.c.b16 %v946, %v945
        %v979 = vpack.c.b16 %v948, %v947
        %v980 = vpack.c.b16 %v950, %v949
        %v981 = vpack.c.b16 %v952, %v951
        %v982 = vpack.c.b16 %v954, %v953
        %v983 = vpack.c.b16 %v956, %v955
        %v984 = vpack.c.b16 %v958, %v957
        %v985 = vpack.c.b16 %v960, %v959
        %v986 = vpack.c.b16 %v962, %v961
        %1011 = vmatprep.subr.bf16.mxu0 0
        %1012 = vmatpush1.bf16.msra.mxu0 %v970
        %1013 = vmatprep.subr.bf16.mxu0 0
        %1014 = vmatpush1.bf16.msra.mxu0 %v969
        %1015 = vmatprep.subr.bf16.mxu0 0
        %1016 = vmatpush1.bf16.msra.mxu0 %v968
        %1017 = vmatprep.subr.bf16.mxu0 0
        %1018 = vmatpush1.bf16.msra.mxu0 %v967
        %1019 = vmatprep.subr.bf16.mxu0 0
        %1020 = vmatpush1.bf16.msra.mxu0 %v966
        %1021 = vmatprep.subr.bf16.mxu0 0
        %1022 = vmatpush1.bf16.msra.mxu0 %v965
        %1023 = vmatprep.subr.bf16.mxu0 0
        %1024 = vmatpush1.bf16.msra.mxu0 %v964
        %1025 = vmatprep.subr.bf16.mxu0 0
        %1026 = vmatpush1.bf16.msra.mxu0 %v963
        %1027 = vmatprep.subr.bf16.mxu0 0
        %1028 = vmatpush2.bf16.msra.mxu0 %v978
        %1029 = vmatprep.subr.bf16.mxu0 0
        %1030 = vmatpush2.bf16.msra.mxu0 %v977
        %1031 = vmatprep.subr.bf16.mxu0 0
        %1032 = vmatpush2.bf16.msra.mxu0 %v976
        %1033 = vmatprep.subr.bf16.mxu0 0
        %1034 = vmatpush2.bf16.msra.mxu0 %v975
        %1035 = vmatprep.subr.bf16.mxu0 0
        %1036 = vmatpush2.bf16.msra.mxu0 %v974
        %1037 = vmatprep.subr.bf16.mxu0 0
        %1038 = vmatpush2.bf16.msra.mxu0 %v973
        %1039 = vmatprep.subr.bf16.mxu0 0
        %1040 = vmatpush2.bf16.msra.mxu0 %v972
        %1041 = vmatprep.subr.bf16.mxu0 0
        %1042 = vmatpush2.bf16.msra.mxu0 %v971
        %1043 = vmatprep.mubr.bf16.mxu0 %v771
        %1044 = vmatmul.mubr.bf16.gmra.mxu0 %v770
        %v1045 = vpop.f32.mrf.mxu0
        %v1046 = vadd.f32 0.0, %v1045
        %v1047 = vpop.f32.mrf.mxu0
        %v1048 = vpop.f32.mrf.mxu0
        %v1049 = vadd.f32 0.0, %v1048
        %v1050 = vpop.f32.mrf.mxu0
        %1051 = vmatprep.mubr.bf16.mxu0 %v774
        %1052 = vmatmul.mubr.bf16.gmra.mxu0 %v773
        %v1053 = vpop.f32.mrf.mxu0
        %v1054 = vadd.f32 0.0, %v1053
        %v1055 = vpop.f32.mrf.mxu0
        %v1056 = vpop.f32.mrf.mxu0
        %v1057 = vadd.f32 0.0, %v1056
        %v1058 = vpop.f32.mrf.mxu0
        %1059 = vmatprep.mubr.bf16.mxu0 %v777
        %1060 = vmatmul.mubr.bf16.gmra.mxu0 %v776
        %v1061 = vpop.f32.mrf.mxu0
        %v1062 = vadd.f32 0.0, %v1061
        %v1063 = vpop.f32.mrf.mxu0
        %v1064 = vpop.f32.mrf.mxu0
        %v1065 = vadd.f32 0.0, %v1064
        %v1066 = vpop.f32.mrf.mxu0
        %1067 = vmatprep.mubr.bf16.mxu0 %v780
        %1068 = vmatmul.mubr.bf16.gmra.mxu0 %v779
        %v1069 = vpop.f32.mrf.mxu0
        %v1070 = vadd.f32 0.0, %v1069
        %v1071 = vpop.f32.mrf.mxu0
        %v1072 = vpop.f32.mrf.mxu0
        %v1073 = vadd.f32 0.0, %v1072
        %v1074 = vpop.f32.mrf.mxu0
        %1075 = vmatprep.mubr.bf16.mxu0 %v783
        %1076 = vmatmul.mubr.bf16.gmra.mxu0 %v782
        %v1077 = vpop.f32.mrf.mxu0
        %v1078 = vadd.f32 0.0, %v1077
        %v1079 = vpop.f32.mrf.mxu0
        %v1080 = vpop.f32.mrf.mxu0
        %v1081 = vadd.f32 0.0, %v1080
        %v1082 = vpop.f32.mrf.mxu0
        %1083 = vmatprep.mubr.bf16.mxu0 %v786
        %1084 = vmatmul.mubr.bf16.gmra.mxu0 %v785
        %v1085 = vpop.f32.mrf.mxu0
        %v1086 = vadd.f32 0.0, %v1085
        %v1087 = vpop.f32.mrf.mxu0
        %v1088 = vpop.f32.mrf.mxu0
        %v1089 = vadd.f32 0.0, %v1088
        %v1090 = vpop.f32.mrf.mxu0
        %1091 = vmatprep.mubr.bf16.mxu0 %v789
        %1092 = vmatmul.mubr.bf16.gmra.mxu0 %v788
        %v1093 = vpop.f32.mrf.mxu0
        %v1094 = vadd.f32 0.0, %v1093
        %v1095 = vpop.f32.mrf.mxu0
        %v1096 = vpop.f32.mrf.mxu0
        %v1097 = vadd.f32 0.0, %v1096
        %v1098 = vpop.f32.mrf.mxu0
        %1099 = vmatprep.mubr.bf16.mxu0 %v792
        %1100 = vmatmul.mubr.bf16.gmra.mxu0 %v791
        %v1101 = vpop.f32.mrf.mxu0
        %v1102 = vadd.f32 0.0, %v1101
        %v1103 = vpop.f32.mrf.mxu0
        %v1104 = vpop.f32.mrf.mxu0
        %v1105 = vadd.f32 0.0, %v1104
        %v1106 = vpop.f32.mrf.mxu0
        %1107 = vmatprep.mubr.bf16.mxu0 %v795
        %1108 = vmatmul.mubr.bf16.gmra.mxu0 %v794
        %v1109 = vpop.f32.mrf.mxu0
        %v1110 = vadd.f32 0.0, %v1109
        %v1111 = vpop.f32.mrf.mxu0
        %v1112 = vpop.f32.mrf.mxu0
        %v1113 = vadd.f32 0.0, %v1112
        %v1114 = vpop.f32.mrf.mxu0
        %1115 = vmatprep.mubr.bf16.mxu0 %v798
        %1116 = vmatmul.mubr.bf16.gmra.mxu0 %v797
        %v1117 = vpop.f32.mrf.mxu0
        %v1118 = vadd.f32 0.0, %v1117
        %v1119 = vpop.f32.mrf.mxu0
        %v1120 = vpop.f32.mrf.mxu0
        %v1121 = vadd.f32 0.0, %v1120
        %v1122 = vpop.f32.mrf.mxu0
        %1123 = vmatprep.mubr.bf16.mxu0 %v801
        %1124 = vmatmul.mubr.bf16.gmra.mxu0 %v800
        %v1125 = vpop.f32.mrf.mxu0
        %v1126 = vadd.f32 0.0, %v1125
        %v1127 = vpop.f32.mrf.mxu0
        %v1128 = vpop.f32.mrf.mxu0
        %v1129 = vadd.f32 0.0, %v1128
        %v1130 = vpop.f32.mrf.mxu0
        %1131 = vmatprep.mubr.bf16.mxu0 %v804
        %1132 = vmatmul.mubr.bf16.gmra.mxu0 %v803
        %v1133 = vpop.f32.mrf.mxu0
        %v1134 = vadd.f32 0.0, %v1133
        %v1135 = vpop.f32.mrf.mxu0
        %v1136 = vpop.f32.mrf.mxu0
        %v1137 = vadd.f32 0.0, %v1136
        %v1138 = vpop.f32.mrf.mxu0
        %1139 = vmatprep.mubr.bf16.mxu0 %v807
        %1140 = vmatmul.mubr.bf16.gmra.mxu0 %v806
        %v1141 = vpop.f32.mrf.mxu0
        %v1142 = vadd.f32 0.0, %v1141
        %v1143 = vpop.f32.mrf.mxu0
        %v1144 = vpop.f32.mrf.mxu0
        %v1145 = vadd.f32 0.0, %v1144
        %v1146 = vpop.f32.mrf.mxu0
        %1147 = vmatprep.mubr.bf16.mxu0 %v810
        %1148 = vmatmul.mubr.bf16.gmra.mxu0 %v809
        %v1149 = vpop.f32.mrf.mxu0
        %v1150 = vadd.f32 0.0, %v1149
        %v1151 = vpop.f32.mrf.mxu0
        %v1152 = vpop.f32.mrf.mxu0
        %v1153 = vadd.f32 0.0, %v1152
        %v1154 = vpop.f32.mrf.mxu0
        %1155 = vmatprep.mubr.bf16.mxu0 %v813
        %1156 = vmatmul.mubr.bf16.gmra.mxu0 %v812
        %v1157 = vpop.f32.mrf.mxu0
        %v1158 = vadd.f32 0.0, %v1157
        %v1159 = vpop.f32.mrf.mxu0
        %v1160 = vpop.f32.mrf.mxu0
        %v1161 = vadd.f32 0.0, %v1160
        %v1162 = vpop.f32.mrf.mxu0
        %1163 = vmatprep.mubr.bf16.mxu0 %v816
        %1164 = vmatmul.mubr.bf16.gmra.mxu0 %v815
        %v1165 = vpop.f32.mrf.mxu0
        %v1166 = vadd.f32 0.0, %v1165
        %v1167 = vpop.f32.mrf.mxu0
        %v1168 = vpop.f32.mrf.mxu0
        %v1169 = vadd.f32 0.0, %v1168
        %v1170 = vpop.f32.mrf.mxu0
        %1171 = vdwg.mxu0
        %1172 = vmatprep.subr.bf16.mxu0 0
        %1173 = vmatpush1.bf16.msra.mxu0 %v986
        %1174 = vmatprep.subr.bf16.mxu0 0
        %1175 = vmatpush1.bf16.msra.mxu0 %v985
        %1176 = vmatprep.subr.bf16.mxu0 0
        %1177 = vmatpush1.bf16.msra.mxu0 %v984
        %1178 = vmatprep.subr.bf16.mxu0 0
        %1179 = vmatpush1.bf16.msra.mxu0 %v983
        %1180 = vmatprep.subr.bf16.mxu0 0
        %1181 = vmatpush1.bf16.msra.mxu0 %v982
        %1182 = vmatprep.subr.bf16.mxu0 0
        %1183 = vmatpush1.bf16.msra.mxu0 %v981
        %1184 = vmatprep.subr.bf16.mxu0 0
        %1185 = vmatpush1.bf16.msra.mxu0 %v980
        %1186 = vmatprep.subr.bf16.mxu0 0
        %1187 = vmatpush1.bf16.msra.mxu0 %v979
        %1188 = vmatprep.subr.bf16.mxu0 0
        %1189 = vmatpush2.bf16.msra.mxu0 0
        %1190 = vmatprep.subr.bf16.mxu0 0
        %1191 = vmatpush2.bf16.msra.mxu0 0
        %1192 = vmatprep.subr.bf16.mxu0 0
        %1193 = vmatpush2.bf16.msra.mxu0 0
        %1194 = vmatprep.subr.bf16.mxu0 0
        %1195 = vmatpush2.bf16.msra.mxu0 0
        %1196 = vmatprep.subr.bf16.mxu0 0
        %1197 = vmatpush2.bf16.msra.mxu0 0
        %1198 = vmatprep.subr.bf16.mxu0 0
        %1199 = vmatpush2.bf16.msra.mxu0 0
        %1200 = vmatprep.subr.bf16.mxu0 0
        %1201 = vmatpush2.bf16.msra.mxu0 0
        %1202 = vmatprep.subr.bf16.mxu0 0
        %1203 = vmatpush2.bf16.msra.mxu0 0
        %1204 = vmatprep.mubr.bf16.mxu0 0
        %1205 = vmatmul.mubr.bf16.gmra.mxu0 %v772
        %v1206 = vpop.f32.mrf.mxu0
        %v1207 = vadd.f32 %v1046, %v1206
        %v1208 = vpop.f32.mrf.mxu0
        %v1209 = vpop.f32.mrf.mxu0
        %v1210 = vadd.f32 %v1049, %v1209
        %v1211 = vpop.f32.mrf.mxu0
        %1212 = vmatprep.mubr.bf16.mxu0 0
        %1213 = vmatmul.mubr.bf16.gmra.mxu0 %v775
        %v1214 = vpop.f32.mrf.mxu0
        %v1215 = vadd.f32 %v1054, %v1214
        %v1216 = vpop.f32.mrf.mxu0
        %v1217 = vpop.f32.mrf.mxu0
        %v1218 = vadd.f32 %v1057, %v1217
        %v1219 = vpop.f32.mrf.mxu0
        %1220 = vmatprep.mubr.bf16.mxu0 0
        %1221 = vmatmul.mubr.bf16.gmra.mxu0 %v778
        %v1222 = vpop.f32.mrf.mxu0
        %v1223 = vadd.f32 %v1062, %v1222
        %v1224 = vpop.f32.mrf.mxu0
        %v1225 = vpop.f32.mrf.mxu0
        %v1226 = vadd.f32 %v1065, %v1225
        %v1227 = vpop.f32.mrf.mxu0
        %1228 = vmatprep.mubr.bf16.mxu0 0
        %1229 = vmatmul.mubr.bf16.gmra.mxu0 %v781
        %v1230 = vpop.f32.mrf.mxu0
        %v1231 = vadd.f32 %v1070, %v1230
        %v1232 = vpop.f32.mrf.mxu0
        %v1233 = vpop.f32.mrf.mxu0
        %v1234 = vadd.f32 %v1073, %v1233
        %v1235 = vpop.f32.mrf.mxu0
        %1236 = vmatprep.mubr.bf16.mxu0 0
        %1237 = vmatmul.mubr.bf16.gmra.mxu0 %v784
        %v1238 = vpop.f32.mrf.mxu0
        %v1239 = vadd.f32 %v1078, %v1238
        %v1240 = vpop.f32.mrf.mxu0
        %v1241 = vpop.f32.mrf.mxu0
        %v1242 = vadd.f32 %v1081, %v1241
        %v1243 = vpop.f32.mrf.mxu0
        %1244 = vmatprep.mubr.bf16.mxu0 0
        %1245 = vmatmul.mubr.bf16.gmra.mxu0 %v787
        %v1246 = vpop.f32.mrf.mxu0
        %v1247 = vadd.f32 %v1086, %v1246
        %v1248 = vpop.f32.mrf.mxu0
        %v1249 = vpop.f32.mrf.mxu0
        %v1250 = vadd.f32 %v1089, %v1249
        %v1251 = vpop.f32.mrf.mxu0
        %1252 = vmatprep.mubr.bf16.mxu0 0
        %1253 = vmatmul.mubr.bf16.gmra.mxu0 %v790
        %v1254 = vpop.f32.mrf.mxu0
        %v1255 = vadd.f32 %v1094, %v1254
        %v1256 = vpop.f32.mrf.mxu0
        %v1257 = vpop.f32.mrf.mxu0
        %v1258 = vadd.f32 %v1097, %v1257
        %v1259 = vpop.f32.mrf.mxu0
        %1260 = vmatprep.mubr.bf16.mxu0 0
        %1261 = vmatmul.mubr.bf16.gmra.mxu0 %v793
        %v1262 = vpop.f32.mrf.mxu0
        %v1263 = vadd.f32 %v1102, %v1262
        %v1264 = vpop.f32.mrf.mxu0
        %v1265 = vpop.f32.mrf.mxu0
        %v1266 = vadd.f32 %v1105, %v1265
        %v1267 = vpop.f32.mrf.mxu0
        %1268 = vmatprep.mubr.bf16.mxu0 0
        %1269 = vmatmul.mubr.bf16.gmra.mxu0 %v796
        %v1270 = vpop.f32.mrf.mxu0
        %v1271 = vadd.f32 %v1110, %v1270
        %v1272 = vpop.f32.mrf.mxu0
        %v1273 = vpop.f32.mrf.mxu0
        %v1274 = vadd.f32 %v1113, %v1273
        %v1275 = vpop.f32.mrf.mxu0
        %1276 = vmatprep.mubr.bf16.mxu0 0
        %1277 = vmatmul.mubr.bf16.gmra.mxu0 %v799
        %v1278 = vpop.f32.mrf.mxu0
        %v1279 = vadd.f32 %v1118, %v1278
        %v1280 = vpop.f32.mrf.mxu0
        %v1281 = vpop.f32.mrf.mxu0
        %v1282 = vadd.f32 %v1121, %v1281
        %v1283 = vpop.f32.mrf.mxu0
        %1284 = vmatprep.mubr.bf16.mxu0 0
        %1285 = vmatmul.mubr.bf16.gmra.mxu0 %v802
        %v1286 = vpop.f32.mrf.mxu0
        %v1287 = vadd.f32 %v1126, %v1286
        %v1288 = vpop.f32.mrf.mxu0
        %v1289 = vpop.f32.mrf.mxu0
        %v1290 = vadd.f32 %v1129, %v1289
        %v1291 = vpop.f32.mrf.mxu0
        %1292 = vmatprep.mubr.bf16.mxu0 0
        %1293 = vmatmul.mubr.bf16.gmra.mxu0 %v805
        %v1294 = vpop.f32.mrf.mxu0
        %v1295 = vadd.f32 %v1134, %v1294
        %v1296 = vpop.f32.mrf.mxu0
        %v1297 = vpop.f32.mrf.mxu0
        %v1298 = vadd.f32 %v1137, %v1297
        %v1299 = vpop.f32.mrf.mxu0
        %1300 = vmatprep.mubr.bf16.mxu0 0
        %1301 = vmatmul.mubr.bf16.gmra.mxu0 %v808
        %v1302 = vpop.f32.mrf.mxu0
        %v1303 = vadd.f32 %v1142, %v1302
        %v1304 = vpop.f32.mrf.mxu0
        %v1305 = vpop.f32.mrf.mxu0
        %v1306 = vadd.f32 %v1145, %v1305
        %v1307 = vpop.f32.mrf.mxu0
        %1308 = vmatprep.mubr.bf16.mxu0 0
        %1309 = vmatmul.mubr.bf16.gmra.mxu0 %v811
        %v1310 = vpop.f32.mrf.mxu0
        %v1311 = vadd.f32 %v1150, %v1310
        %v1312 = vpop.f32.mrf.mxu0
        %v1313 = vpop.f32.mrf.mxu0
        %v1314 = vadd.f32 %v1153, %v1313
        %v1315 = vpop.f32.mrf.mxu0
        %1316 = vmatprep.mubr.bf16.mxu0 0
        %1317 = vmatmul.mubr.bf16.gmra.mxu0 %v814
        %v1318 = vpop.f32.mrf.mxu0
        %v1319 = vadd.f32 %v1158, %v1318
        %v1320 = vpop.f32.mrf.mxu0
        %v1321 = vpop.f32.mrf.mxu0
        %v1322 = vadd.f32 %v1161, %v1321
        %v1323 = vpop.f32.mrf.mxu0
        %1324 = vmatprep.mubr.bf16.mxu0 0
        %1325 = vmatmul.mubr.bf16.gmra.mxu0 %v817
        %v1326 = vpop.f32.mrf.mxu0
        %v1327 = vadd.f32 %v1166, %v1326
        %v1328 = vpop.f32.mrf.mxu0
        %v1329 = vpop.f32.mrf.mxu0
        %v1330 = vadd.f32 %v1169, %v1329
        %v1331 = vpop.f32.mrf.mxu0
        %1332 = vdwg.mxu0
        %v1381 = vunpack.c.l.b16 %v626
        %v1382 = vunpack.c.l.b16 %v627
        %v1383 = vunpack.c.l.b16 %v628
        %v1384 = vunpack.c.l.b16 %v629
        %v1385 = vunpack.c.l.b16 %v630
        %v1386 = vunpack.c.l.b16 %v631
        %v1387 = vunpack.c.l.b16 %v632
        %v1388 = vunpack.c.l.b16 %v633
        %v1389 = vunpack.c.l.b16 %v634
        %v1390 = vunpack.c.l.b16 %v635
        %v1391 = vunpack.c.l.b16 %v636
        %v1392 = vunpack.c.l.b16 %v637
        %v1393 = vunpack.c.l.b16 %v638
        %v1394 = vunpack.c.l.b16 %v639
        %v1395 = vunpack.c.l.b16 %v640
        %v1396 = vunpack.c.l.b16 %v641
        %v1397 = vunpack.c.l.b16 %v642
        %v1398 = vunpack.c.l.b16 %v643
        %v1399 = vunpack.c.l.b16 %v644
        %v1400 = vunpack.c.l.b16 %v645
        %v1401 = vunpack.c.l.b16 %v646
        %v1402 = vunpack.c.l.b16 %v647
        %v1403 = vunpack.c.l.b16 %v648
        %v1404 = vunpack.c.l.b16 %v649
        %v1405 = vunpack.c.l.b16 %v650
        %v1406 = vunpack.c.l.b16 %v651
        %v1407 = vunpack.c.l.b16 %v652
        %v1408 = vunpack.c.l.b16 %v653
        %v1409 = vunpack.c.l.b16 %v654
        %v1410 = vunpack.c.l.b16 %v655
        %v1411 = vunpack.c.l.b16 %v656
        %v1412 = vunpack.c.l.b16 %v657
        %v1413 = vunpack.c.l.b16 %v658
        %v1414 = vunpack.c.l.b16 %v659
        %v1415 = vunpack.c.l.b16 %v660
        %v1416 = vunpack.c.l.b16 %v661
        %v1417 = vunpack.c.l.b16 %v662
        %v1418 = vunpack.c.l.b16 %v663
        %v1419 = vunpack.c.l.b16 %v664
        %v1420 = vunpack.c.l.b16 %v665
        %v1421 = vunpack.c.l.b16 %v666
        %v1422 = vunpack.c.l.b16 %v667
        %v1423 = vunpack.c.l.b16 %v668
        %v1424 = vunpack.c.l.b16 %v669
        %v1425 = vunpack.c.l.b16 %v670
        %v1426 = vunpack.c.l.b16 %v671
        %v1427 = vunpack.c.l.b16 %v672
        %v1428 = vunpack.c.l.b16 %v673
        %v1429 = vpack.c.b16 %v1382, %v1381
        %v1430 = vpack.c.b16 %v1384, %v1383
        %v1431 = vpack.c.b16 %v1386, %v1385
        %v1432 = vpack.c.b16 %v1388, %v1387
        %v1433 = vpack.c.b16 %v1390, %v1389
        %v1434 = vpack.c.b16 %v1392, %v1391
        %v1435 = vpack.c.b16 %v1394, %v1393
        %v1436 = vpack.c.b16 %v1396, %v1395
        %v1437 = vpack.c.b16 %v1398, %v1397
        %v1438 = vpack.c.b16 %v1400, %v1399
        %v1439 = vpack.c.b16 %v1402, %v1401
        %v1440 = vpack.c.b16 %v1404, %v1403
        %v1441 = vpack.c.b16 %v1406, %v1405
        %v1442 = vpack.c.b16 %v1408, %v1407
        %v1443 = vpack.c.b16 %v1410, %v1409
        %v1444 = vpack.c.b16 %v1412, %v1411
        %v1445 = vpack.c.b16 %v1414, %v1413
        %v1446 = vpack.c.b16 %v1416, %v1415
        %v1447 = vpack.c.b16 %v1418, %v1417
        %v1448 = vpack.c.b16 %v1420, %v1419
        %v1449 = vpack.c.b16 %v1422, %v1421
        %v1450 = vpack.c.b16 %v1424, %v1423
        %v1451 = vpack.c.b16 %v1426, %v1425
        %v1452 = vpack.c.b16 %v1428, %v1427
        %1477 = vmatprep.subr.bf16.mxu0 0
        %1478 = vmatpush1.bf16.msra.mxu0 %v1436
        %1479 = vmatprep.subr.bf16.mxu0 0
        %1480 = vmatpush1.bf16.msra.mxu0 %v1435
        %1481 = vmatprep.subr.bf16.mxu0 0
        %1482 = vmatpush1.bf16.msra.mxu0 %v1434
        %1483 = vmatprep.subr.bf16.mxu0 0
        %1484 = vmatpush1.bf16.msra.mxu0 %v1433
        %1485 = vmatprep.subr.bf16.mxu0 0
        %1486 = vmatpush1.bf16.msra.mxu0 %v1432
        %1487 = vmatprep.subr.bf16.mxu0 0
        %1488 = vmatpush1.bf16.msra.mxu0 %v1431
        %1489 = vmatprep.subr.bf16.mxu0 0
        %1490 = vmatpush1.bf16.msra.mxu0 %v1430
        %1491 = vmatprep.subr.bf16.mxu0 0
        %1492 = vmatpush1.bf16.msra.mxu0 %v1429
        %1493 = vmatprep.subr.bf16.mxu0 0
        %1494 = vmatpush2.bf16.msra.mxu0 %v1444
        %1495 = vmatprep.subr.bf16.mxu0 0
        %1496 = vmatpush2.bf16.msra.mxu0 %v1443
        %1497 = vmatprep.subr.bf16.mxu0 0
        %1498 = vmatpush2.bf16.msra.mxu0 %v1442
        %1499 = vmatprep.subr.bf16.mxu0 0
        %1500 = vmatpush2.bf16.msra.mxu0 %v1441
        %1501 = vmatprep.subr.bf16.mxu0 0
        %1502 = vmatpush2.bf16.msra.mxu0 %v1440
        %1503 = vmatprep.subr.bf16.mxu0 0
        %1504 = vmatpush2.bf16.msra.mxu0 %v1439
        %1505 = vmatprep.subr.bf16.mxu0 0
        %1506 = vmatpush2.bf16.msra.mxu0 %v1438
        %1507 = vmatprep.subr.bf16.mxu0 0
        %1508 = vmatpush2.bf16.msra.mxu0 %v1437
        %1509 = vmatprep.mubr.bf16.mxu0 %v579
        %1510 = vmatmul.mubr.bf16.gmra.mxu0 %v578
        %v1511 = vpop.f32.mrf.mxu0
        %v1512 = vadd.f32 %v1207, %v1511
        %v1513 = vpop.f32.mrf.mxu0
        %v1514 = vpop.f32.mrf.mxu0
        %v1515 = vadd.f32 %v1210, %v1514
        %v1516 = vpop.f32.mrf.mxu0
        %1517 = vmatprep.mubr.bf16.mxu0 %v582
        %1518 = vmatmul.mubr.bf16.gmra.mxu0 %v581
        %v1519 = vpop.f32.mrf.mxu0
        %v1520 = vadd.f32 %v1215, %v1519
        %v1521 = vpop.f32.mrf.mxu0
        %v1522 = vpop.f32.mrf.mxu0
        %v1523 = vadd.f32 %v1218, %v1522
        %v1524 = vpop.f32.mrf.mxu0
        %1525 = vmatprep.mubr.bf16.mxu0 %v585
        %1526 = vmatmul.mubr.bf16.gmra.mxu0 %v584
        %v1527 = vpop.f32.mrf.mxu0
        %v1528 = vadd.f32 %v1223, %v1527
        %v1529 = vpop.f32.mrf.mxu0
        %v1530 = vpop.f32.mrf.mxu0
        %v1531 = vadd.f32 %v1226, %v1530
        %v1532 = vpop.f32.mrf.mxu0
        %1533 = vmatprep.mubr.bf16.mxu0 %v588
        %1534 = vmatmul.mubr.bf16.gmra.mxu0 %v587
        %v1535 = vpop.f32.mrf.mxu0
        %v1536 = vadd.f32 %v1231, %v1535
        %v1537 = vpop.f32.mrf.mxu0
        %v1538 = vpop.f32.mrf.mxu0
        %v1539 = vadd.f32 %v1234, %v1538
        %v1540 = vpop.f32.mrf.mxu0
        %1541 = vmatprep.mubr.bf16.mxu0 %v591
        %1542 = vmatmul.mubr.bf16.gmra.mxu0 %v590
        %v1543 = vpop.f32.mrf.mxu0
        %v1544 = vadd.f32 %v1239, %v1543
        %v1545 = vpop.f32.mrf.mxu0
        %v1546 = vpop.f32.mrf.mxu0
        %v1547 = vadd.f32 %v1242, %v1546
        %v1548 = vpop.f32.mrf.mxu0
        %1549 = vmatprep.mubr.bf16.mxu0 %v594
        %1550 = vmatmul.mubr.bf16.gmra.mxu0 %v593
        %v1551 = vpop.f32.mrf.mxu0
        %v1552 = vadd.f32 %v1247, %v1551
        %v1553 = vpop.f32.mrf.mxu0
        %v1554 = vpop.f32.mrf.mxu0
        %v1555 = vadd.f32 %v1250, %v1554
        %v1556 = vpop.f32.mrf.mxu0
        %1557 = vmatprep.mubr.bf16.mxu0 %v597
        %1558 = vmatmul.mubr.bf16.gmra.mxu0 %v596
        %v1559 = vpop.f32.mrf.mxu0
        %v1560 = vadd.f32 %v1255, %v1559
        %v1561 = vpop.f32.mrf.mxu0
        %v1562 = vpop.f32.mrf.mxu0
        %v1563 = vadd.f32 %v1258, %v1562
        %v1564 = vpop.f32.mrf.mxu0
        %1565 = vmatprep.mubr.bf16.mxu0 %v600
        %1566 = vmatmul.mubr.bf16.gmra.mxu0 %v599
        %v1567 = vpop.f32.mrf.mxu0
        %v1568 = vadd.f32 %v1263, %v1567
        %v1569 = vpop.f32.mrf.mxu0
        %v1570 = vpop.f32.mrf.mxu0
        %v1571 = vadd.f32 %v1266, %v1570
        %v1572 = vpop.f32.mrf.mxu0
        %1573 = vmatprep.mubr.bf16.mxu0 %v603
        %1574 = vmatmul.mubr.bf16.gmra.mxu0 %v602
        %v1575 = vpop.f32.mrf.mxu0
        %v1576 = vadd.f32 %v1271, %v1575
        %v1577 = vpop.f32.mrf.mxu0
        %v1578 = vpop.f32.mrf.mxu0
        %v1579 = vadd.f32 %v1274, %v1578
        %v1580 = vpop.f32.mrf.mxu0
        %1581 = vmatprep.mubr.bf16.mxu0 %v606
        %1582 = vmatmul.mubr.bf16.gmra.mxu0 %v605
        %v1583 = vpop.f32.mrf.mxu0
        %v1584 = vadd.f32 %v1279, %v1583
        %v1585 = vpop.f32.mrf.mxu0
        %v1586 = vpop.f32.mrf.mxu0
        %v1587 = vadd.f32 %v1282, %v1586
        %v1588 = vpop.f32.mrf.mxu0
        %1589 = vmatprep.mubr.bf16.mxu0 %v609
        %1590 = vmatmul.mubr.bf16.gmra.mxu0 %v608
        %v1591 = vpop.f32.mrf.mxu0
        %v1592 = vadd.f32 %v1287, %v1591
        %v1593 = vpop.f32.mrf.mxu0
        %v1594 = vpop.f32.mrf.mxu0
        %v1595 = vadd.f32 %v1290, %v1594
        %v1596 = vpop.f32.mrf.mxu0
        %1597 = vmatprep.mubr.bf16.mxu0 %v612
        %1598 = vmatmul.mubr.bf16.gmra.mxu0 %v611
        %v1599 = vpop.f32.mrf.mxu0
        %v1600 = vadd.f32 %v1295, %v1599
        %v1601 = vpop.f32.mrf.mxu0
        %v1602 = vpop.f32.mrf.mxu0
        %v1603 = vadd.f32 %v1298, %v1602
        %v1604 = vpop.f32.mrf.mxu0
        %1605 = vmatprep.mubr.bf16.mxu0 %v615
        %1606 = vmatmul.mubr.bf16.gmra.mxu0 %v614
        %v1607 = vpop.f32.mrf.mxu0
        %v1608 = vadd.f32 %v1303, %v1607
        %v1609 = vpop.f32.mrf.mxu0
        %v1610 = vpop.f32.mrf.mxu0
        %v1611 = vadd.f32 %v1306, %v1610
        %v1612 = vpop.f32.mrf.mxu0
        %1613 = vmatprep.mubr.bf16.mxu0 %v618
        %1614 = vmatmul.mubr.bf16.gmra.mxu0 %v617
        %v1615 = vpop.f32.mrf.mxu0
        %v1616 = vadd.f32 %v1311, %v1615
        %v1617 = vpop.f32.mrf.mxu0
        %v1618 = vpop.f32.mrf.mxu0
        %v1619 = vadd.f32 %v1314, %v1618
        %v1620 = vpop.f32.mrf.mxu0
        %1621 = vmatprep.mubr.bf16.mxu0 %v621
        %1622 = vmatmul.mubr.bf16.gmra.mxu0 %v620
        %v1623 = vpop.f32.mrf.mxu0
        %v1624 = vadd.f32 %v1319, %v1623
        %v1625 = vpop.f32.mrf.mxu0
        %v1626 = vpop.f32.mrf.mxu0
        %v1627 = vadd.f32 %v1322, %v1626
        %v1628 = vpop.f32.mrf.mxu0
        %1629 = vmatprep.mubr.bf16.mxu0 %v624
        %1630 = vmatmul.mubr.bf16.gmra.mxu0 %v623
        %v1631 = vpop.f32.mrf.mxu0
        %v1632 = vadd.f32 %v1327, %v1631
        %v1633 = vpop.f32.mrf.mxu0
        %v1634 = vpop.f32.mrf.mxu0
        %v1635 = vadd.f32 %v1330, %v1634
        %v1636 = vpop.f32.mrf.mxu0
        %1637 = vdwg.mxu0
        %1638 = vmatprep.subr.bf16.mxu0 0
        %1639 = vmatpush1.bf16.msra.mxu0 %v1452
        %1640 = vmatprep.subr.bf16.mxu0 0
        %1641 = vmatpush1.bf16.msra.mxu0 %v1451
        %1642 = vmatprep.subr.bf16.mxu0 0
        %1643 = vmatpush1.bf16.msra.mxu0 %v1450
        %1644 = vmatprep.subr.bf16.mxu0 0
        %1645 = vmatpush1.bf16.msra.mxu0 %v1449
        %1646 = vmatprep.subr.bf16.mxu0 0
        %1647 = vmatpush1.bf16.msra.mxu0 %v1448
        %1648 = vmatprep.subr.bf16.mxu0 0
        %1649 = vmatpush1.bf16.msra.mxu0 %v1447
        %1650 = vmatprep.subr.bf16.mxu0 0
        %1651 = vmatpush1.bf16.msra.mxu0 %v1446
        %1652 = vmatprep.subr.bf16.mxu0 0
        %1653 = vmatpush1.bf16.msra.mxu0 %v1445
        %1654 = vmatprep.subr.bf16.mxu0 0
        %1655 = vmatpush2.bf16.msra.mxu0 0
        %1656 = vmatprep.subr.bf16.mxu0 0
        %1657 = vmatpush2.bf16.msra.mxu0 0
        %1658 = vmatprep.subr.bf16.mxu0 0
        %1659 = vmatpush2.bf16.msra.mxu0 0
        %1660 = vmatprep.subr.bf16.mxu0 0
        %1661 = vmatpush2.bf16.msra.mxu0 0
        %1662 = vmatprep.subr.bf16.mxu0 0
        %1663 = vmatpush2.bf16.msra.mxu0 0
        %1664 = vmatprep.subr.bf16.mxu0 0
        %1665 = vmatpush2.bf16.msra.mxu0 0
        %1666 = vmatprep.subr.bf16.mxu0 0
        %1667 = vmatpush2.bf16.msra.mxu0 0
        %1668 = vmatprep.subr.bf16.mxu0 0
        %1669 = vmatpush2.bf16.msra.mxu0 0
        %1670 = vmatprep.mubr.bf16.mxu0 0
        %1671 = vmatmul.mubr.bf16.gmra.mxu0 %v580
        %v1672 = vpop.f32.mrf.mxu0
        %v1673 = vadd.f32 %v1512, %v1672
        %v1674 = vpop.f32.mrf.mxu0
        %v1675 = vpop.f32.mrf.mxu0
        %v1676 = vadd.f32 %v1515, %v1675
        %v1677 = vpop.f32.mrf.mxu0
        %1678 = vmatprep.mubr.bf16.mxu0 0
        %1679 = vmatmul.mubr.bf16.gmra.mxu0 %v583
        %v1680 = vpop.f32.mrf.mxu0
        %v1681 = vadd.f32 %v1520, %v1680
        %v1682 = vpop.f32.mrf.mxu0
        %v1683 = vpop.f32.mrf.mxu0
        %v1684 = vadd.f32 %v1523, %v1683
        %v1685 = vpop.f32.mrf.mxu0
        %1686 = vmatprep.mubr.bf16.mxu0 0
        %1687 = vmatmul.mubr.bf16.gmra.mxu0 %v586
        %v1688 = vpop.f32.mrf.mxu0
        %v1689 = vadd.f32 %v1528, %v1688
        %v1690 = vpop.f32.mrf.mxu0
        %v1691 = vpop.f32.mrf.mxu0
        %v1692 = vadd.f32 %v1531, %v1691
        %v1693 = vpop.f32.mrf.mxu0
        %1694 = vmatprep.mubr.bf16.mxu0 0
        %1695 = vmatmul.mubr.bf16.gmra.mxu0 %v589
        %v1696 = vpop.f32.mrf.mxu0
        %v1697 = vadd.f32 %v1536, %v1696
        %v1698 = vpop.f32.mrf.mxu0
        %v1699 = vpop.f32.mrf.mxu0
        %v1700 = vadd.f32 %v1539, %v1699
        %v1701 = vpop.f32.mrf.mxu0
        %1702 = vmatprep.mubr.bf16.mxu0 0
        %1703 = vmatmul.mubr.bf16.gmra.mxu0 %v592
        %v1704 = vpop.f32.mrf.mxu0
        %v1705 = vadd.f32 %v1544, %v1704
        %v1706 = vpop.f32.mrf.mxu0
        %v1707 = vpop.f32.mrf.mxu0
        %v1708 = vadd.f32 %v1547, %v1707
        %v1709 = vpop.f32.mrf.mxu0
        %1710 = vmatprep.mubr.bf16.mxu0 0
        %1711 = vmatmul.mubr.bf16.gmra.mxu0 %v595
        %v1712 = vpop.f32.mrf.mxu0
        %v1713 = vadd.f32 %v1552, %v1712
        %v1714 = vpop.f32.mrf.mxu0
        %v1715 = vpop.f32.mrf.mxu0
        %v1716 = vadd.f32 %v1555, %v1715
        %v1717 = vpop.f32.mrf.mxu0
        %1718 = vmatprep.mubr.bf16.mxu0 0
        %1719 = vmatmul.mubr.bf16.gmra.mxu0 %v598
        %v1720 = vpop.f32.mrf.mxu0
        %v1721 = vadd.f32 %v1560, %v1720
        %v1722 = vpop.f32.mrf.mxu0
        %v1723 = vpop.f32.mrf.mxu0
        %v1724 = vadd.f32 %v1563, %v1723
        %v1725 = vpop.f32.mrf.mxu0
        %1726 = vmatprep.mubr.bf16.mxu0 0
        %1727 = vmatmul.mubr.bf16.gmra.mxu0 %v601
        %v1728 = vpop.f32.mrf.mxu0
        %v1729 = vadd.f32 %v1568, %v1728
        %v1730 = vpop.f32.mrf.mxu0
        %v1731 = vpop.f32.mrf.mxu0
        %v1732 = vadd.f32 %v1571, %v1731
        %v1733 = vpop.f32.mrf.mxu0
        %1734 = vmatprep.mubr.bf16.mxu0 0
        %1735 = vmatmul.mubr.bf16.gmra.mxu0 %v604
        %v1736 = vpop.f32.mrf.mxu0
        %v1737 = vadd.f32 %v1576, %v1736
        %v1738 = vpop.f32.mrf.mxu0
        %v1739 = vpop.f32.mrf.mxu0
        %v1740 = vadd.f32 %v1579, %v1739
        %v1741 = vpop.f32.mrf.mxu0
        %1742 = vmatprep.mubr.bf16.mxu0 0
        %1743 = vmatmul.mubr.bf16.gmra.mxu0 %v607
        %v1744 = vpop.f32.mrf.mxu0
        %v1745 = vadd.f32 %v1584, %v1744
        %v1746 = vpop.f32.mrf.mxu0
        %v1747 = vpop.f32.mrf.mxu0
        %v1748 = vadd.f32 %v1587, %v1747
        %v1749 = vpop.f32.mrf.mxu0
        %1750 = vmatprep.mubr.bf16.mxu0 0
        %1751 = vmatmul.mubr.bf16.gmra.mxu0 %v610
        %v1752 = vpop.f32.mrf.mxu0
        %v1753 = vadd.f32 %v1592, %v1752
        %v1754 = vpop.f32.mrf.mxu0
        %v1755 = vpop.f32.mrf.mxu0
        %v1756 = vadd.f32 %v1595, %v1755
        %v1757 = vpop.f32.mrf.mxu0
        %1758 = vmatprep.mubr.bf16.mxu0 0
        %1759 = vmatmul.mubr.bf16.gmra.mxu0 %v613
        %v1760 = vpop.f32.mrf.mxu0
        %v1761 = vadd.f32 %v1600, %v1760
        %v1762 = vpop.f32.mrf.mxu0
        %v1763 = vpop.f32.mrf.mxu0
        %v1764 = vadd.f32 %v1603, %v1763
        %v1765 = vpop.f32.mrf.mxu0
        %1766 = vmatprep.mubr.bf16.mxu0 0
        %1767 = vmatmul.mubr.bf16.gmra.mxu0 %v616
        %v1768 = vpop.f32.mrf.mxu0
        %v1769 = vadd.f32 %v1608, %v1768
        %v1770 = vpop.f32.mrf.mxu0
        %v1771 = vpop.f32.mrf.mxu0
        %v1772 = vadd.f32 %v1611, %v1771
        %v1773 = vpop.f32.mrf.mxu0
        %1774 = vmatprep.mubr.bf16.mxu0 0
        %1775 = vmatmul.mubr.bf16.gmra.mxu0 %v619
        %v1776 = vpop.f32.mrf.mxu0
        %v1777 = vadd.f32 %v1616, %v1776
        %v1778 = vpop.f32.mrf.mxu0
        %v1779 = vpop.f32.mrf.mxu0
        %v1780 = vadd.f32 %v1619, %v1779
        %v1781 = vpop.f32.mrf.mxu0
        %1782 = vmatprep.mubr.bf16.mxu0 0
        %1783 = vmatmul.mubr.bf16.gmra.mxu0 %v622
        %v1784 = vpop.f32.mrf.mxu0
        %v1785 = vadd.f32 %v1624, %v1784
        %v1786 = vpop.f32.mrf.mxu0
        %v1787 = vpop.f32.mrf.mxu0
        %v1788 = vadd.f32 %v1627, %v1787
        %v1789 = vpop.f32.mrf.mxu0
        %1790 = vmatprep.mubr.bf16.mxu0 0
        %1791 = vmatmul.mubr.bf16.gmra.mxu0 %v625
        %v1792 = vpop.f32.mrf.mxu0
        %v1793 = vadd.f32 %v1632, %v1792
        %v1794 = vpop.f32.mrf.mxu0
        %v1795 = vpop.f32.mrf.mxu0
        %v1796 = vadd.f32 %v1635, %v1795
        %v1797 = vpop.f32.mrf.mxu0
        %1798 = vdwg.mxu0
        %s1799 = scalar_lea.vmem [#allocation2], 48
        %v1800 = vld [vmem:[%s1799] sm:$0xff]
        %v1801 = vld [vmem:[%s1799 + $0x8] sm:$0xff]
        %v1802 = vld [vmem:[%s1799 + $0x18] sm:$0xff]
        %v1803 = vld [vmem:[%s1799 + $0x20] sm:$0xff]
        %v1804 = vld [vmem:[%s1799 + $0x30] sm:$0xff]
        %v1805 = vld [vmem:[%s1799 + $0x38] sm:$0xff]
        %v1806 = vld [vmem:[%s1799 + $0x48] sm:$0xff]
        %v1807 = vld [vmem:[%s1799 + $0x50] sm:$0xff]
        %v1808 = vld [vmem:[%s1799 + $0x60] sm:$0xff]
        %v1809 = vld [vmem:[%s1799 + $0x68] sm:$0xff]
        %v1810 = vld [vmem:[%s1799 + $0x78] sm:$0xff]
        %v1811 = vld [vmem:[%s1799 + $0x80] sm:$0xff]
        %v1812 = vld [vmem:[%s1799 + $0x90] sm:$0xff]
        %v1813 = vld [vmem:[%s1799 + $0x98] sm:$0xff]
        %v1814 = vld [vmem:[%s1799 + $0xa8] sm:$0xff]
        %v1815 = vld [vmem:[%s1799 + $0xb0] sm:$0xff]
        %v1816 = vld [vmem:[%s1799 + $0xc0] sm:$0xff]
        %v1817 = vld [vmem:[%s1799 + $0xc8] sm:$0xff]
        %v1818 = vld [vmem:[%s1799 + $0xd8] sm:$0xff]
        %v1819 = vld [vmem:[%s1799 + $0xe0] sm:$0xff]
        %v1820 = vld [vmem:[%s1799 + $0xf0] sm:$0xff]
        %v1821 = vld [vmem:[%s1799 + $0xf8] sm:$0xff]
        %v1822 = vld [vmem:[%s1799 + $0x108] sm:$0xff]
        %v1823 = vld [vmem:[%s1799 + $0x110] sm:$0xff]
        %v1824 = vld [vmem:[%s1799 + $0x120] sm:$0xff]
        %v1825 = vld [vmem:[%s1799 + $0x128] sm:$0xff]
        %v1826 = vld [vmem:[%s1799 + $0x138] sm:$0xff]
        %v1827 = vld [vmem:[%s1799 + $0x140] sm:$0xff]
        %v1828 = vld [vmem:[%s1799 + $0x150] sm:$0xff]
        %v1829 = vld [vmem:[%s1799 + $0x158] sm:$0xff]
        %v1830 = vld [vmem:[%s1799 + $0x168] sm:$0xff]
        %v1831 = vld [vmem:[%s1799 + $0x170] sm:$0xff]
        %v1832 = vld [vmem:[%s1799 + $0x1] sm:$0xff]
        %v1833 = vld [vmem:[%s1799 + $0x9] sm:$0xff]
        %v1834 = vld [vmem:[%s1799 + $0x19] sm:$0xff]
        %v1835 = vld [vmem:[%s1799 + $0x21] sm:$0xff]
        %v1836 = vld [vmem:[%s1799 + $0x31] sm:$0xff]
        %v1837 = vld [vmem:[%s1799 + $0x39] sm:$0xff]
        %v1838 = vld [vmem:[%s1799 + $0x49] sm:$0xff]
        %v1839 = vld [vmem:[%s1799 + $0x51] sm:$0xff]
        %v1840 = vld [vmem:[%s1799 + $0x61] sm:$0xff]
        %v1841 = vld [vmem:[%s1799 + $0x69] sm:$0xff]
        %v1842 = vld [vmem:[%s1799 + $0x79] sm:$0xff]
        %v1843 = vld [vmem:[%s1799 + $0x81] sm:$0xff]
        %v1844 = vld [vmem:[%s1799 + $0x91] sm:$0xff]
        %v1845 = vld [vmem:[%s1799 + $0x99] sm:$0xff]
        %v1846 = vld [vmem:[%s1799 + $0xa9] sm:$0xff]
        %v1847 = vld [vmem:[%s1799 + $0xb1] sm:$0xff]
        %v1848 = vld [vmem:[%s1799 + $0xc1] sm:$0xff]
        %v1849 = vld [vmem:[%s1799 + $0xc9] sm:$0xff]
        %v1850 = vld [vmem:[%s1799 + $0xd9] sm:$0xff]
        %v1851 = vld [vmem:[%s1799 + $0xe1] sm:$0xff]
        %v1852 = vld [vmem:[%s1799 + $0xf1] sm:$0xff]
        %v1853 = vld [vmem:[%s1799 + $0xf9] sm:$0xff]
        %v1854 = vld [vmem:[%s1799 + $0x109] sm:$0xff]
        %v1855 = vld [vmem:[%s1799 + $0x111] sm:$0xff]
        %v1856 = vld [vmem:[%s1799 + $0x121] sm:$0xff]
        %v1857 = vld [vmem:[%s1799 + $0x129] sm:$0xff]
        %v1858 = vld [vmem:[%s1799 + $0x139] sm:$0xff]
        %v1859 = vld [vmem:[%s1799 + $0x141] sm:$0xff]
        %v1860 = vld [vmem:[%s1799 + $0x151] sm:$0xff]
        %v1861 = vld [vmem:[%s1799 + $0x159] sm:$0xff]
        %v1862 = vld [vmem:[%s1799 + $0x169] sm:$0xff]
        %v1863 = vld [vmem:[%s1799 + $0x171] sm:$0xff]
        %v1864 = vld [vmem:[%s1799 + $0x2] sm:$0xff]
        %v1865 = vld [vmem:[%s1799 + $0xa] sm:$0xff]
        %v1866 = vld [vmem:[%s1799 + $0x1a] sm:$0xff]
        %v1867 = vld [vmem:[%s1799 + $0x22] sm:$0xff]
        %v1868 = vld [vmem:[%s1799 + $0x32] sm:$0xff]
        %v1869 = vld [vmem:[%s1799 + $0x3a] sm:$0xff]
        %v1870 = vld [vmem:[%s1799 + $0x4a] sm:$0xff]
        %v1871 = vld [vmem:[%s1799 + $0x52] sm:$0xff]
        %v1872 = vld [vmem:[%s1799 + $0x62] sm:$0xff]
        %v1873 = vld [vmem:[%s1799 + $0x6a] sm:$0xff]
        %v1874 = vld [vmem:[%s1799 + $0x7a] sm:$0xff]
        %v1875 = vld [vmem:[%s1799 + $0x82] sm:$0xff]
        %v1876 = vld [vmem:[%s1799 + $0x92] sm:$0xff]
        %v1877 = vld [vmem:[%s1799 + $0x9a] sm:$0xff]
        %v1878 = vld [vmem:[%s1799 + $0xaa] sm:$0xff]
        %v1879 = vld [vmem:[%s1799 + $0xb2] sm:$0xff]
        %v1880 = vld [vmem:[%s1799 + $0xc2] sm:$0xff]
        %v1881 = vld [vmem:[%s1799 + $0xca] sm:$0xff]
        %v1882 = vld [vmem:[%s1799 + $0xda] sm:$0xff]
        %v1883 = vld [vmem:[%s1799 + $0xe2] sm:$0xff]
        %v1884 = vld [vmem:[%s1799 + $0xf2] sm:$0xff]
        %v1885 = vld [vmem:[%s1799 + $0xfa] sm:$0xff]
        %v1886 = vld [vmem:[%s1799 + $0x10a] sm:$0xff]
        %v1887 = vld [vmem:[%s1799 + $0x112] sm:$0xff]
        %v1888 = vld [vmem:[%s1799 + $0x122] sm:$0xff]
        %v1889 = vld [vmem:[%s1799 + $0x12a] sm:$0xff]
        %v1890 = vld [vmem:[%s1799 + $0x13a] sm:$0xff]
        %v1891 = vld [vmem:[%s1799 + $0x142] sm:$0xff]
        %v1892 = vld [vmem:[%s1799 + $0x152] sm:$0xff]
        %v1893 = vld [vmem:[%s1799 + $0x15a] sm:$0xff]
        %v1894 = vld [vmem:[%s1799 + $0x16a] sm:$0xff]
        %v1895 = vld [vmem:[%s1799 + $0x172] sm:$0xff]
        %v1896 = vpack.c.bf16 %v1801, %v1800
        %v1897 = vpack.c.bf16 %v1833, %v1832
        %v1898 = vpack.c.bf16 %v1865, %v1864
        %v1899 = vpack.c.bf16 %v1803, %v1802
        %v1900 = vpack.c.bf16 %v1835, %v1834
        %v1901 = vpack.c.bf16 %v1867, %v1866
        %v1902 = vpack.c.bf16 %v1805, %v1804
        %v1903 = vpack.c.bf16 %v1837, %v1836
        %v1904 = vpack.c.bf16 %v1869, %v1868
        %v1905 = vpack.c.bf16 %v1807, %v1806
        %v1906 = vpack.c.bf16 %v1839, %v1838
        %v1907 = vpack.c.bf16 %v1871, %v1870
        %v1908 = vpack.c.bf16 %v1809, %v1808
        %v1909 = vpack.c.bf16 %v1841, %v1840
        %v1910 = vpack.c.bf16 %v1873, %v1872
        %v1911 = vpack.c.bf16 %v1811, %v1810
        %v1912 = vpack.c.bf16 %v1843, %v1842
        %v1913 = vpack.c.bf16 %v1875, %v1874
        %v1914 = vpack.c.bf16 %v1813, %v1812
        %v1915 = vpack.c.bf16 %v1845, %v1844
        %v1916 = vpack.c.bf16 %v1877, %v1876
        %v1917 = vpack.c.bf16 %v1815, %v1814
        %v1918 = vpack.c.bf16 %v1847, %v1846
        %v1919 = vpack.c.bf16 %v1879, %v1878
        %v1920 = vpack.c.bf16 %v1817, %v1816
        %v1921 = vpack.c.bf16 %v1849, %v1848
        %v1922 = vpack.c.bf16 %v1881, %v1880
        %v1923 = vpack.c.bf16 %v1819, %v1818
        %v1924 = vpack.c.bf16 %v1851, %v1850
        %v1925 = vpack.c.bf16 %v1883, %v1882
        %v1926 = vpack.c.bf16 %v1821, %v1820
        %v1927 = vpack.c.bf16 %v1853, %v1852
        %v1928 = vpack.c.bf16 %v1885, %v1884
        %v1929 = vpack.c.bf16 %v1823, %v1822
        %v1930 = vpack.c.bf16 %v1855, %v1854
        %v1931 = vpack.c.bf16 %v1887, %v1886
        %v1932 = vpack.c.bf16 %v1825, %v1824
        %v1933 = vpack.c.bf16 %v1857, %v1856
        %v1934 = vpack.c.bf16 %v1889, %v1888
        %v1935 = vpack.c.bf16 %v1827, %v1826
        %v1936 = vpack.c.bf16 %v1859, %v1858
        %v1937 = vpack.c.bf16 %v1891, %v1890
        %v1938 = vpack.c.bf16 %v1829, %v1828
        %v1939 = vpack.c.bf16 %v1861, %v1860
        %v1940 = vpack.c.bf16 %v1893, %v1892
        %v1941 = vpack.c.bf16 %v1831, %v1830
        %v1942 = vpack.c.bf16 %v1863, %v1862
        %v1943 = vpack.c.bf16 %v1895, %v1894
        %s1944 = scalar_lea.vmem [#allocation8], 384
        %v1945 = vld [vmem:[%s1944] sm:$0xf]
        %v1946 = vld [vmem:[%s1944 + $0x4] sm:$0xf]
        %v1947 = vld [vmem:[%s1944 + $0x8] sm:$0xf]
        %v1948 = vld [vmem:[%s1944 + $0xc] sm:$0xf]
        %v1949 = vld [vmem:[%s1944 + $0x10] sm:$0xf]
        %v1950 = vld [vmem:[%s1944 + $0x14] sm:$0xf]
        %v1951 = vld [vmem:[%s1944 + $0x18] sm:$0xf]
        %v1952 = vld [vmem:[%s1944 + $0x1c] sm:$0xf]
        %v1953 = vld [vmem:[%s1944 + $0x20] sm:$0xf]
        %v1954 = vld [vmem:[%s1944 + $0x24] sm:$0xf]
        %v1955 = vld [vmem:[%s1944 + $0x28] sm:$0xf]
        %v1956 = vld [vmem:[%s1944 + $0x2c] sm:$0xf]
        %v1957 = vld [vmem:[%s1944 + $0x30] sm:$0xf]
        %v1958 = vld [vmem:[%s1944 + $0x34] sm:$0xf]
        %v1959 = vld [vmem:[%s1944 + $0x38] sm:$0xf]
        %v1960 = vld [vmem:[%s1944 + $0x3c] sm:$0xf]
        %v1961 = vld [vmem:[%s1944 + $0x40] sm:$0xf]
        %v1962 = vld [vmem:[%s1944 + $0x44] sm:$0xf]
        %v1963 = vld [vmem:[%s1944 + $0x48] sm:$0xf]
        %v1964 = vld [vmem:[%s1944 + $0x4c] sm:$0xf]
        %v1965 = vld [vmem:[%s1944 + $0x50] sm:$0xf]
        %v1966 = vld [vmem:[%s1944 + $0x54] sm:$0xf]
        %v1967 = vld [vmem:[%s1944 + $0x58] sm:$0xf]
        %v1968 = vld [vmem:[%s1944 + $0x5c] sm:$0xf]
        %v1969 = vld [vmem:[%s1944 + $0x60] sm:$0xf]
        %v1970 = vld [vmem:[%s1944 + $0x64] sm:$0xf]
        %v1971 = vld [vmem:[%s1944 + $0x68] sm:$0xf]
        %v1972 = vld [vmem:[%s1944 + $0x6c] sm:$0xf]
        %v1973 = vld [vmem:[%s1944 + $0x70] sm:$0xf]
        %v1974 = vld [vmem:[%s1944 + $0x74] sm:$0xf]
        %v1975 = vld [vmem:[%s1944 + $0x78] sm:$0xf]
        %v1976 = vld [vmem:[%s1944 + $0x7c] sm:$0xf]
        %v1977 = vld [vmem:[%s1944 + $0x80] sm:$0xf]
        %v1978 = vld [vmem:[%s1944 + $0x84] sm:$0xf]
        %v1979 = vld [vmem:[%s1944 + $0x88] sm:$0xf]
        %v1980 = vld [vmem:[%s1944 + $0x8c] sm:$0xf]
        %v1981 = vld [vmem:[%s1944 + $0x90] sm:$0xf]
        %v1982 = vld [vmem:[%s1944 + $0x94] sm:$0xf]
        %v1983 = vld [vmem:[%s1944 + $0x98] sm:$0xf]
        %v1984 = vld [vmem:[%s1944 + $0x9c] sm:$0xf]
        %v1985 = vld [vmem:[%s1944 + $0xa0] sm:$0xf]
        %v1986 = vld [vmem:[%s1944 + $0xa4] sm:$0xf]
        %v1987 = vld [vmem:[%s1944 + $0xa8] sm:$0xf]
        %v1988 = vld [vmem:[%s1944 + $0xac] sm:$0xf]
        %v1989 = vld [vmem:[%s1944 + $0xb0] sm:$0xf]
        %v1990 = vld [vmem:[%s1944 + $0xb4] sm:$0xf]
        %v1991 = vld [vmem:[%s1944 + $0xb8] sm:$0xf]
        %v1992 = vld [vmem:[%s1944 + $0xbc] sm:$0xf]
        %v2041 = vunpack.c.l.b16 %v1945
        %v2042 = vunpack.c.l.b16 %v1946
        %v2043 = vunpack.c.l.b16 %v1947
        %v2044 = vunpack.c.l.b16 %v1948
        %v2045 = vunpack.c.l.b16 %v1949
        %v2046 = vunpack.c.l.b16 %v1950
        %v2047 = vunpack.c.l.b16 %v1951
        %v2048 = vunpack.c.l.b16 %v1952
        %v2049 = vunpack.c.l.b16 %v1953
        %v2050 = vunpack.c.l.b16 %v1954
        %v2051 = vunpack.c.l.b16 %v1955
        %v2052 = vunpack.c.l.b16 %v1956
        %v2053 = vunpack.c.l.b16 %v1957
        %v2054 = vunpack.c.l.b16 %v1958
        %v2055 = vunpack.c.l.b16 %v1959
        %v2056 = vunpack.c.l.b16 %v1960
        %v2057 = vunpack.c.l.b16 %v1961
        %v2058 = vunpack.c.l.b16 %v1962
        %v2059 = vunpack.c.l.b16 %v1963
        %v2060 = vunpack.c.l.b16 %v1964
        %v2061 = vunpack.c.l.b16 %v1965
        %v2062 = vunpack.c.l.b16 %v1966
        %v2063 = vunpack.c.l.b16 %v1967
        %v2064 = vunpack.c.l.b16 %v1968
        %v2065 = vunpack.c.l.b16 %v1969
        %v2066 = vunpack.c.l.b16 %v1970
        %v2067 = vunpack.c.l.b16 %v1971
        %v2068 = vunpack.c.l.b16 %v1972
        %v2069 = vunpack.c.l.b16 %v1973
        %v2070 = vunpack.c.l.b16 %v1974
        %v2071 = vunpack.c.l.b16 %v1975
        %v2072 = vunpack.c.l.b16 %v1976
        %v2073 = vunpack.c.l.b16 %v1977
        %v2074 = vunpack.c.l.b16 %v1978
        %v2075 = vunpack.c.l.b16 %v1979
        %v2076 = vunpack.c.l.b16 %v1980
        %v2077 = vunpack.c.l.b16 %v1981
        %v2078 = vunpack.c.l.b16 %v1982
        %v2079 = vunpack.c.l.b16 %v1983
        %v2080 = vunpack.c.l.b16 %v1984
        %v2081 = vunpack.c.l.b16 %v1985
        %v2082 = vunpack.c.l.b16 %v1986
        %v2083 = vunpack.c.l.b16 %v1987
        %v2084 = vunpack.c.l.b16 %v1988
        %v2085 = vunpack.c.l.b16 %v1989
        %v2086 = vunpack.c.l.b16 %v1990
        %v2087 = vunpack.c.l.b16 %v1991
        %v2088 = vunpack.c.l.b16 %v1992
        %v2089 = vpack.c.b16 %v2042, %v2041
        %v2090 = vpack.c.b16 %v2044, %v2043
        %v2091 = vpack.c.b16 %v2046, %v2045
        %v2092 = vpack.c.b16 %v2048, %v2047
        %v2093 = vpack.c.b16 %v2050, %v2049
        %v2094 = vpack.c.b16 %v2052, %v2051
        %v2095 = vpack.c.b16 %v2054, %v2053
        %v2096 = vpack.c.b16 %v2056, %v2055
        %v2097 = vpack.c.b16 %v2058, %v2057
        %v2098 = vpack.c.b16 %v2060, %v2059
        %v2099 = vpack.c.b16 %v2062, %v2061
        %v2100 = vpack.c.b16 %v2064, %v2063
        %v2101 = vpack.c.b16 %v2066, %v2065
        %v2102 = vpack.c.b16 %v2068, %v2067
        %v2103 = vpack.c.b16 %v2070, %v2069
        %v2104 = vpack.c.b16 %v2072, %v2071
        %v2105 = vpack.c.b16 %v2074, %v2073
        %v2106 = vpack.c.b16 %v2076, %v2075
        %v2107 = vpack.c.b16 %v2078, %v2077
        %v2108 = vpack.c.b16 %v2080, %v2079
        %v2109 = vpack.c.b16 %v2082, %v2081
        %v2110 = vpack.c.b16 %v2084, %v2083
        %v2111 = vpack.c.b16 %v2086, %v2085
        %v2112 = vpack.c.b16 %v2088, %v2087
        %2137 = vmatprep.subr.bf16.mxu0 0
        %2138 = vmatpush1.bf16.msra.mxu0 %v2096
        %2139 = vmatprep.subr.bf16.mxu0 0
        %2140 = vmatpush1.bf16.msra.mxu0 %v2095
        %2141 = vmatprep.subr.bf16.mxu0 0
        %2142 = vmatpush1.bf16.msra.mxu0 %v2094
        %2143 = vmatprep.subr.bf16.mxu0 0
        %2144 = vmatpush1.bf16.msra.mxu0 %v2093
        %2145 = vmatprep.subr.bf16.mxu0 0
        %2146 = vmatpush1.bf16.msra.mxu0 %v2092
        %2147 = vmatprep.subr.bf16.mxu0 0
        %2148 = vmatpush1.bf16.msra.mxu0 %v2091
        %2149 = vmatprep.subr.bf16.mxu0 0
        %2150 = vmatpush1.bf16.msra.mxu0 %v2090
        %2151 = vmatprep.subr.bf16.mxu0 0
        %2152 = vmatpush1.bf16.msra.mxu0 %v2089
        %2153 = vmatprep.subr.bf16.mxu0 0
        %2154 = vmatpush2.bf16.msra.mxu0 %v2104
        %2155 = vmatprep.subr.bf16.mxu0 0
        %2156 = vmatpush2.bf16.msra.mxu0 %v2103
        %2157 = vmatprep.subr.bf16.mxu0 0
        %2158 = vmatpush2.bf16.msra.mxu0 %v2102
        %2159 = vmatprep.subr.bf16.mxu0 0
        %2160 = vmatpush2.bf16.msra.mxu0 %v2101
        %2161 = vmatprep.subr.bf16.mxu0 0
        %2162 = vmatpush2.bf16.msra.mxu0 %v2100
        %2163 = vmatprep.subr.bf16.mxu0 0
        %2164 = vmatpush2.bf16.msra.mxu0 %v2099
        %2165 = vmatprep.subr.bf16.mxu0 0
        %2166 = vmatpush2.bf16.msra.mxu0 %v2098
        %2167 = vmatprep.subr.bf16.mxu0 0
        %2168 = vmatpush2.bf16.msra.mxu0 %v2097
        %2169 = vmatprep.mubr.bf16.mxu0 %v1897
        %2170 = vmatmul.mubr.bf16.gmra.mxu0 %v1896
        %v2171 = vpop.f32.mrf.mxu0
        %v2172 = vadd.f32 0.0, %v2171
        %v2173 = vpop.f32.mrf.mxu0
        %v2174 = vpop.f32.mrf.mxu0
        %v2175 = vadd.f32 0.0, %v2174
        %v2176 = vpop.f32.mrf.mxu0
        %2177 = vmatprep.mubr.bf16.mxu0 %v1900
        %2178 = vmatmul.mubr.bf16.gmra.mxu0 %v1899
        %v2179 = vpop.f32.mrf.mxu0
        %v2180 = vadd.f32 0.0, %v2179
        %v2181 = vpop.f32.mrf.mxu0
        %v2182 = vpop.f32.mrf.mxu0
        %v2183 = vadd.f32 0.0, %v2182
        %v2184 = vpop.f32.mrf.mxu0
        %2185 = vmatprep.mubr.bf16.mxu0 %v1903
        %2186 = vmatmul.mubr.bf16.gmra.mxu0 %v1902
        %v2187 = vpop.f32.mrf.mxu0
        %v2188 = vadd.f32 0.0, %v2187
        %v2189 = vpop.f32.mrf.mxu0
        %v2190 = vpop.f32.mrf.mxu0
        %v2191 = vadd.f32 0.0, %v2190
        %v2192 = vpop.f32.mrf.mxu0
        %2193 = vmatprep.mubr.bf16.mxu0 %v1906
        %2194 = vmatmul.mubr.bf16.gmra.mxu0 %v1905
        %v2195 = vpop.f32.mrf.mxu0
        %v2196 = vadd.f32 0.0, %v2195
        %v2197 = vpop.f32.mrf.mxu0
        %v2198 = vpop.f32.mrf.mxu0
        %v2199 = vadd.f32 0.0, %v2198
        %v2200 = vpop.f32.mrf.mxu0
        %2201 = vmatprep.mubr.bf16.mxu0 %v1909
        %2202 = vmatmul.mubr.bf16.gmra.mxu0 %v1908
        %v2203 = vpop.f32.mrf.mxu0
        %v2204 = vadd.f32 0.0, %v2203
        %v2205 = vpop.f32.mrf.mxu0
        %v2206 = vpop.f32.mrf.mxu0
        %v2207 = vadd.f32 0.0, %v2206
        %v2208 = vpop.f32.mrf.mxu0
        %2209 = vmatprep.mubr.bf16.mxu0 %v1912
        %2210 = vmatmul.mubr.bf16.gmra.mxu0 %v1911
        %v2211 = vpop.f32.mrf.mxu0
        %v2212 = vadd.f32 0.0, %v2211
        %v2213 = vpop.f32.mrf.mxu0
        %v2214 = vpop.f32.mrf.mxu0
        %v2215 = vadd.f32 0.0, %v2214
        %v2216 = vpop.f32.mrf.mxu0
        %2217 = vmatprep.mubr.bf16.mxu0 %v1915
        %2218 = vmatmul.mubr.bf16.gmra.mxu0 %v1914
        %v2219 = vpop.f32.mrf.mxu0
        %v2220 = vadd.f32 0.0, %v2219
        %v2221 = vpop.f32.mrf.mxu0
        %v2222 = vpop.f32.mrf.mxu0
        %v2223 = vadd.f32 0.0, %v2222
        %v2224 = vpop.f32.mrf.mxu0
        %2225 = vmatprep.mubr.bf16.mxu0 %v1918
        %2226 = vmatmul.mubr.bf16.gmra.mxu0 %v1917
        %v2227 = vpop.f32.mrf.mxu0
        %v2228 = vadd.f32 0.0, %v2227
        %v2229 = vpop.f32.mrf.mxu0
        %v2230 = vpop.f32.mrf.mxu0
        %v2231 = vadd.f32 0.0, %v2230
        %v2232 = vpop.f32.mrf.mxu0
        %2233 = vmatprep.mubr.bf16.mxu0 %v1921
        %2234 = vmatmul.mubr.bf16.gmra.mxu0 %v1920
        %v2235 = vpop.f32.mrf.mxu0
        %v2236 = vadd.f32 0.0, %v2235
        %v2237 = vpop.f32.mrf.mxu0
        %v2238 = vpop.f32.mrf.mxu0
        %v2239 = vadd.f32 0.0, %v2238
        %v2240 = vpop.f32.mrf.mxu0
        %2241 = vmatprep.mubr.bf16.mxu0 %v1924
        %2242 = vmatmul.mubr.bf16.gmra.mxu0 %v1923
        %v2243 = vpop.f32.mrf.mxu0
        %v2244 = vadd.f32 0.0, %v2243
        %v2245 = vpop.f32.mrf.mxu0
        %v2246 = vpop.f32.mrf.mxu0
        %v2247 = vadd.f32 0.0, %v2246
        %v2248 = vpop.f32.mrf.mxu0
        %2249 = vmatprep.mubr.bf16.mxu0 %v1927
        %2250 = vmatmul.mubr.bf16.gmra.mxu0 %v1926
        %v2251 = vpop.f32.mrf.mxu0
        %v2252 = vadd.f32 0.0, %v2251
        %v2253 = vpop.f32.mrf.mxu0
        %v2254 = vpop.f32.mrf.mxu0
        %v2255 = vadd.f32 0.0, %v2254
        %v2256 = vpop.f32.mrf.mxu0
        %2257 = vmatprep.mubr.bf16.mxu0 %v1930
        %2258 = vmatmul.mubr.bf16.gmra.mxu0 %v1929
        %v2259 = vpop.f32.mrf.mxu0
        %v2260 = vadd.f32 0.0, %v2259
        %v2261 = vpop.f32.mrf.mxu0
        %v2262 = vpop.f32.mrf.mxu0
        %v2263 = vadd.f32 0.0, %v2262
        %v2264 = vpop.f32.mrf.mxu0
        %2265 = vmatprep.mubr.bf16.mxu0 %v1933
        %2266 = vmatmul.mubr.bf16.gmra.mxu0 %v1932
        %v2267 = vpop.f32.mrf.mxu0
        %v2268 = vadd.f32 0.0, %v2267
        %v2269 = vpop.f32.mrf.mxu0
        %v2270 = vpop.f32.mrf.mxu0
        %v2271 = vadd.f32 0.0, %v2270
        %v2272 = vpop.f32.mrf.mxu0
        %2273 = vmatprep.mubr.bf16.mxu0 %v1936
        %2274 = vmatmul.mubr.bf16.gmra.mxu0 %v1935
        %v2275 = vpop.f32.mrf.mxu0
        %v2276 = vadd.f32 0.0, %v2275
        %v2277 = vpop.f32.mrf.mxu0
        %v2278 = vpop.f32.mrf.mxu0
        %v2279 = vadd.f32 0.0, %v2278
        %v2280 = vpop.f32.mrf.mxu0
        %2281 = vmatprep.mubr.bf16.mxu0 %v1939
        %2282 = vmatmul.mubr.bf16.gmra.mxu0 %v1938
        %v2283 = vpop.f32.mrf.mxu0
        %v2284 = vadd.f32 0.0, %v2283
        %v2285 = vpop.f32.mrf.mxu0
        %v2286 = vpop.f32.mrf.mxu0
        %v2287 = vadd.f32 0.0, %v2286
        %v2288 = vpop.f32.mrf.mxu0
        %2289 = vmatprep.mubr.bf16.mxu0 %v1942
        %2290 = vmatmul.mubr.bf16.gmra.mxu0 %v1941
        %v2291 = vpop.f32.mrf.mxu0
        %v2292 = vadd.f32 0.0, %v2291
        %v2293 = vpop.f32.mrf.mxu0
        %v2294 = vpop.f32.mrf.mxu0
        %v2295 = vadd.f32 0.0, %v2294
        %v2296 = vpop.f32.mrf.mxu0
        %2297 = vdwg.mxu0
        %2298 = vmatprep.subr.bf16.mxu0 0
        %2299 = vmatpush1.bf16.msra.mxu0 %v2112
        %2300 = vmatprep.subr.bf16.mxu0 0
        %2301 = vmatpush1.bf16.msra.mxu0 %v2111
        %2302 = vmatprep.subr.bf16.mxu0 0
        %2303 = vmatpush1.bf16.msra.mxu0 %v2110
        %2304 = vmatprep.subr.bf16.mxu0 0
        %2305 = vmatpush1.bf16.msra.mxu0 %v2109
        %2306 = vmatprep.subr.bf16.mxu0 0
        %2307 = vmatpush1.bf16.msra.mxu0 %v2108
        %2308 = vmatprep.subr.bf16.mxu0 0
        %2309 = vmatpush1.bf16.msra.mxu0 %v2107
        %2310 = vmatprep.subr.bf16.mxu0 0
        %2311 = vmatpush1.bf16.msra.mxu0 %v2106
        %2312 = vmatprep.subr.bf16.mxu0 0
        %2313 = vmatpush1.bf16.msra.mxu0 %v2105
        %2314 = vmatprep.subr.bf16.mxu0 0
        %2315 = vmatpush2.bf16.msra.mxu0 0
        %2316 = vmatprep.subr.bf16.mxu0 0
        %2317 = vmatpush2.bf16.msra.mxu0 0
        %2318 = vmatprep.subr.bf16.mxu0 0
        %2319 = vmatpush2.bf16.msra.mxu0 0
        %2320 = vmatprep.subr.bf16.mxu0 0
        %2321 = vmatpush2.bf16.msra.mxu0 0
        %2322 = vmatprep.subr.bf16.mxu0 0
        %2323 = vmatpush2.bf16.msra.mxu0 0
        %2324 = vmatprep.subr.bf16.mxu0 0
        %2325 = vmatpush2.bf16.msra.mxu0 0
        %2326 = vmatprep.subr.bf16.mxu0 0
        %2327 = vmatpush2.bf16.msra.mxu0 0
        %2328 = vmatprep.subr.bf16.mxu0 0
        %2329 = vmatpush2.bf16.msra.mxu0 0
        %2330 = vmatprep.mubr.bf16.mxu0 0
        %2331 = vmatmul.mubr.bf16.gmra.mxu0 %v1898
        %v2332 = vpop.f32.mrf.mxu0
        %v2333 = vadd.f32 %v2172, %v2332
        %v2334 = vpop.f32.mrf.mxu0
        %v2335 = vpop.f32.mrf.mxu0
        %v2336 = vadd.f32 %v2175, %v2335
        %v2337 = vpop.f32.mrf.mxu0
        %2338 = vmatprep.mubr.bf16.mxu0 0
        %2339 = vmatmul.mubr.bf16.gmra.mxu0 %v1901
        %v2340 = vpop.f32.mrf.mxu0
        %v2341 = vadd.f32 %v2180, %v2340
        %v2342 = vpop.f32.mrf.mxu0
        %v2343 = vpop.f32.mrf.mxu0
        %v2344 = vadd.f32 %v2183, %v2343
        %v2345 = vpop.f32.mrf.mxu0
        %2346 = vmatprep.mubr.bf16.mxu0 0
        %2347 = vmatmul.mubr.bf16.gmra.mxu0 %v1904
        %v2348 = vpop.f32.mrf.mxu0
        %v2349 = vadd.f32 %v2188, %v2348
        %v2350 = vpop.f32.mrf.mxu0
        %v2351 = vpop.f32.mrf.mxu0
        %v2352 = vadd.f32 %v2191, %v2351
        %v2353 = vpop.f32.mrf.mxu0
        %2354 = vmatprep.mubr.bf16.mxu0 0
        %2355 = vmatmul.mubr.bf16.gmra.mxu0 %v1907
        %v2356 = vpop.f32.mrf.mxu0
        %v2357 = vadd.f32 %v2196, %v2356
        %v2358 = vpop.f32.mrf.mxu0
        %v2359 = vpop.f32.mrf.mxu0
        %v2360 = vadd.f32 %v2199, %v2359
        %v2361 = vpop.f32.mrf.mxu0
        %2362 = vmatprep.mubr.bf16.mxu0 0
        %2363 = vmatmul.mubr.bf16.gmra.mxu0 %v1910
        %v2364 = vpop.f32.mrf.mxu0
        %v2365 = vadd.f32 %v2204, %v2364
        %v2366 = vpop.f32.mrf.mxu0
        %v2367 = vpop.f32.mrf.mxu0
        %v2368 = vadd.f32 %v2207, %v2367
        %v2369 = vpop.f32.mrf.mxu0
        %2370 = vmatprep.mubr.bf16.mxu0 0
        %2371 = vmatmul.mubr.bf16.gmra.mxu0 %v1913
        %v2372 = vpop.f32.mrf.mxu0
        %v2373 = vadd.f32 %v2212, %v2372
        %v2374 = vpop.f32.mrf.mxu0
        %v2375 = vpop.f32.mrf.mxu0
        %v2376 = vadd.f32 %v2215, %v2375
        %v2377 = vpop.f32.mrf.mxu0
        %2378 = vmatprep.mubr.bf16.mxu0 0
        %2379 = vmatmul.mubr.bf16.gmra.mxu0 %v1916
        %v2380 = vpop.f32.mrf.mxu0
        %v2381 = vadd.f32 %v2220, %v2380
        %v2382 = vpop.f32.mrf.mxu0
        %v2383 = vpop.f32.mrf.mxu0
        %v2384 = vadd.f32 %v2223, %v2383
        %v2385 = vpop.f32.mrf.mxu0
        %2386 = vmatprep.mubr.bf16.mxu0 0
        %2387 = vmatmul.mubr.bf16.gmra.mxu0 %v1919
        %v2388 = vpop.f32.mrf.mxu0
        %v2389 = vadd.f32 %v2228, %v2388
        %v2390 = vpop.f32.mrf.mxu0
        %v2391 = vpop.f32.mrf.mxu0
        %v2392 = vadd.f32 %v2231, %v2391
        %v2393 = vpop.f32.mrf.mxu0
        %2394 = vmatprep.mubr.bf16.mxu0 0
        %2395 = vmatmul.mubr.bf16.gmra.mxu0 %v1922
        %v2396 = vpop.f32.mrf.mxu0
        %v2397 = vadd.f32 %v2236, %v2396
        %v2398 = vpop.f32.mrf.mxu0
        %v2399 = vpop.f32.mrf.mxu0
        %v2400 = vadd.f32 %v2239, %v2399
        %v2401 = vpop.f32.mrf.mxu0
        %2402 = vmatprep.mubr.bf16.mxu0 0
        %2403 = vmatmul.mubr.bf16.gmra.mxu0 %v1925
        %v2404 = vpop.f32.mrf.mxu0
        %v2405 = vadd.f32 %v2244, %v2404
        %v2406 = vpop.f32.mrf.mxu0
        %v2407 = vpop.f32.mrf.mxu0
        %v2408 = vadd.f32 %v2247, %v2407
        %v2409 = vpop.f32.mrf.mxu0
        %2410 = vmatprep.mubr.bf16.mxu0 0
        %2411 = vmatmul.mubr.bf16.gmra.mxu0 %v1928
        %v2412 = vpop.f32.mrf.mxu0
        %v2413 = vadd.f32 %v2252, %v2412
        %v2414 = vpop.f32.mrf.mxu0
        %v2415 = vpop.f32.mrf.mxu0
        %v2416 = vadd.f32 %v2255, %v2415
        %v2417 = vpop.f32.mrf.mxu0
        %2418 = vmatprep.mubr.bf16.mxu0 0
        %2419 = vmatmul.mubr.bf16.gmra.mxu0 %v1931
        %v2420 = vpop.f32.mrf.mxu0
        %v2421 = vadd.f32 %v2260, %v2420
        %v2422 = vpop.f32.mrf.mxu0
        %v2423 = vpop.f32.mrf.mxu0
        %v2424 = vadd.f32 %v2263, %v2423
        %v2425 = vpop.f32.mrf.mxu0
        %2426 = vmatprep.mubr.bf16.mxu0 0
        %2427 = vmatmul.mubr.bf16.gmra.mxu0 %v1934
        %v2428 = vpop.f32.mrf.mxu0
        %v2429 = vadd.f32 %v2268, %v2428
        %v2430 = vpop.f32.mrf.mxu0
        %v2431 = vpop.f32.mrf.mxu0
        %v2432 = vadd.f32 %v2271, %v2431
        %v2433 = vpop.f32.mrf.mxu0
        %2434 = vmatprep.mubr.bf16.mxu0 0
        %2435 = vmatmul.mubr.bf16.gmra.mxu0 %v1937
        %v2436 = vpop.f32.mrf.mxu0
        %v2437 = vadd.f32 %v2276, %v2436
        %v2438 = vpop.f32.mrf.mxu0
        %v2439 = vpop.f32.mrf.mxu0
        %v2440 = vadd.f32 %v2279, %v2439
        %v2441 = vpop.f32.mrf.mxu0
        %2442 = vmatprep.mubr.bf16.mxu0 0
        %2443 = vmatmul.mubr.bf16.gmra.mxu0 %v1940
        %v2444 = vpop.f32.mrf.mxu0
        %v2445 = vadd.f32 %v2284, %v2444
        %v2446 = vpop.f32.mrf.mxu0
        %v2447 = vpop.f32.mrf.mxu0
        %v2448 = vadd.f32 %v2287, %v2447
        %v2449 = vpop.f32.mrf.mxu0
        %2450 = vmatprep.mubr.bf16.mxu0 0
        %2451 = vmatmul.mubr.bf16.gmra.mxu0 %v1943
        %v2452 = vpop.f32.mrf.mxu0
        %v2453 = vadd.f32 %v2292, %v2452
        %v2454 = vpop.f32.mrf.mxu0
        %v2455 = vpop.f32.mrf.mxu0
        %v2456 = vadd.f32 %v2295, %v2455
        %v2457 = vpop.f32.mrf.mxu0
        %2458 = vdwg.mxu0
        %v2459 = vadd.f32 %v1673, %v2333
        %v2460 = vadd.f32 %v1676, %v2336
        %v2461 = vadd.f32 %v1681, %v2341
        %v2462 = vadd.f32 %v1684, %v2344
        %v2463 = vadd.f32 %v1689, %v2349
        %v2464 = vadd.f32 %v1692, %v2352
        %v2465 = vadd.f32 %v1697, %v2357
        %v2466 = vadd.f32 %v1700, %v2360
        %v2467 = vadd.f32 %v1705, %v2365
        %v2468 = vadd.f32 %v1708, %v2368
        %v2469 = vadd.f32 %v1713, %v2373
        %v2470 = vadd.f32 %v1716, %v2376
        %v2471 = vadd.f32 %v1721, %v2381
        %v2472 = vadd.f32 %v1724, %v2384
        %v2473 = vadd.f32 %v1729, %v2389
        %v2474 = vadd.f32 %v1732, %v2392
        %v2475 = vadd.f32 %v1737, %v2397
        %v2476 = vadd.f32 %v1740, %v2400
        %v2477 = vadd.f32 %v1745, %v2405
        %v2478 = vadd.f32 %v1748, %v2408
        %v2479 = vadd.f32 %v1753, %v2413
        %v2480 = vadd.f32 %v1756, %v2416
        %v2481 = vadd.f32 %v1761, %v2421
        %v2482 = vadd.f32 %v1764, %v2424
        %v2483 = vadd.f32 %v1769, %v2429
        %v2484 = vadd.f32 %v1772, %v2432
        %v2485 = vadd.f32 %v1777, %v2437
        %v2486 = vadd.f32 %v1780, %v2440
        %v2487 = vadd.f32 %v1785, %v2445
        %v2488 = vadd.f32 %v1788, %v2448
        %v2489 = vadd.f32 %v1793, %v2453
        %v2490 = vadd.f32 %v1796, %v2456
        %v2491 = vld [vmem:[%s2] sm:$0x1]
        %v2493 = vlaneseq
        %v2494 = vshrl.u32 %v2493, 7
        %v2495 = vsub.s32 0, %v2494
        %v2496 = vrot.slane %v2491, %v2495
        %v2498 = vadd.f32 %v2459, %v2496
        %v2499 = vadd.f32 %v2460, %v2496
        %v2500 = vadd.f32 %v2461, %v2496
        %v2501 = vadd.f32 %v2462, %v2496
        %v2502 = vadd.f32 %v2463, %v2496
        %v2503 = vadd.f32 %v2464, %v2496
        %v2504 = vadd.f32 %v2465, %v2496
        %v2505 = vadd.f32 %v2466, %v2496
        %v2506 = vadd.f32 %v2467, %v2496
        %v2507 = vadd.f32 %v2468, %v2496
        %v2508 = vadd.f32 %v2469, %v2496
        %v2509 = vadd.f32 %v2470, %v2496
        %v2510 = vadd.f32 %v2471, %v2496
        %v2511 = vadd.f32 %v2472, %v2496
        %v2512 = vadd.f32 %v2473, %v2496
        %v2513 = vadd.f32 %v2474, %v2496
        %v2514 = vadd.f32 %v2475, %v2496
        %v2515 = vadd.f32 %v2476, %v2496
        %v2516 = vadd.f32 %v2477, %v2496
        %v2517 = vadd.f32 %v2478, %v2496
        %v2518 = vadd.f32 %v2479, %v2496
        %v2519 = vadd.f32 %v2480, %v2496
        %v2520 = vadd.f32 %v2481, %v2496
        %v2521 = vadd.f32 %v2482, %v2496
        %v2522 = vadd.f32 %v2483, %v2496
        %v2523 = vadd.f32 %v2484, %v2496
        %v2524 = vadd.f32 %v2485, %v2496
        %v2525 = vadd.f32 %v2486, %v2496
        %v2526 = vadd.f32 %v2487, %v2496
        %v2527 = vadd.f32 %v2488, %v2496
        %v2528 = vadd.f32 %v2489, %v2496
        %v2529 = vadd.f32 %v2490, %v2496
        %v2530 = vmax.f32 %v2498, 0.0
        %v2531 = vmax.f32 %v2499, 0.0
        %v2532 = vmax.f32 %v2500, 0.0
        %v2533 = vmax.f32 %v2501, 0.0
        %v2534 = vmax.f32 %v2502, 0.0
        %v2535 = vmax.f32 %v2503, 0.0
        %v2536 = vmax.f32 %v2504, 0.0
        %v2537 = vmax.f32 %v2505, 0.0
        %v2538 = vmax.f32 %v2506, 0.0
        %v2539 = vmax.f32 %v2507, 0.0
        %v2540 = vmax.f32 %v2508, 0.0
        %v2541 = vmax.f32 %v2509, 0.0
        %v2542 = vmax.f32 %v2510, 0.0
        %v2543 = vmax.f32 %v2511, 0.0
        %v2544 = vmax.f32 %v2512, 0.0
        %v2545 = vmax.f32 %v2513, 0.0
        %v2546 = vmax.f32 %v2514, 0.0
        %v2547 = vmax.f32 %v2515, 0.0
        %v2548 = vmax.f32 %v2516, 0.0
        %v2549 = vmax.f32 %v2517, 0.0
        %v2550 = vmax.f32 %v2518, 0.0
        %v2551 = vmax.f32 %v2519, 0.0
        %v2552 = vmax.f32 %v2520, 0.0
        %v2553 = vmax.f32 %v2521, 0.0
        %v2554 = vmax.f32 %v2522, 0.0
        %v2555 = vmax.f32 %v2523, 0.0
        %v2556 = vmax.f32 %v2524, 0.0
        %v2557 = vmax.f32 %v2525, 0.0
        %v2558 = vmax.f32 %v2526, 0.0
        %v2559 = vmax.f32 %v2527, 0.0
        %v2560 = vmax.f32 %v2528, 0.0
        %v2561 = vmax.f32 %v2529, 0.0
        %s2562 = scalar_lea.vmem [#allocation3], 24
        %2563 = vst [vmem:[%s2562 + $0x1] sm:$0xff] %v2530
        %2564 = vst [vmem:[%s2562 + $0x9] sm:$0xff] %v2531
        %2565 = vst [vmem:[%s2562 + $0x19] sm:$0xff] %v2532
        %2566 = vst [vmem:[%s2562 + $0x21] sm:$0xff] %v2533
        %2567 = vst [vmem:[%s2562 + $0x31] sm:$0xff] %v2534
        %2568 = vst [vmem:[%s2562 + $0x39] sm:$0xff] %v2535
        %2569 = vst [vmem:[%s2562 + $0x49] sm:$0xff] %v2536
        %2570 = vst [vmem:[%s2562 + $0x51] sm:$0xff] %v2537
        %2571 = vst [vmem:[%s2562 + $0x61] sm:$0xff] %v2538
        %2572 = vst [vmem:[%s2562 + $0x69] sm:$0xff] %v2539
        %2573 = vst [vmem:[%s2562 + $0x79] sm:$0xff] %v2540
        %2574 = vst [vmem:[%s2562 + $0x81] sm:$0xff] %v2541
        %2575 = vst [vmem:[%s2562 + $0x91] sm:$0xff] %v2542
        %2576 = vst [vmem:[%s2562 + $0x99] sm:$0xff] %v2543
        %2577 = vst [vmem:[%s2562 + $0xa9] sm:$0xff] %v2544
        %2578 = vst [vmem:[%s2562 + $0xb1] sm:$0xff] %v2545
        %2579 = vst [vmem:[%s2562 + $0xc1] sm:$0xff] %v2546
        %2580 = vst [vmem:[%s2562 + $0xc9] sm:$0xff] %v2547
        %2581 = vst [vmem:[%s2562 + $0xd9] sm:$0xff] %v2548
        %2582 = vst [vmem:[%s2562 + $0xe1] sm:$0xff] %v2549
        %2583 = vst [vmem:[%s2562 + $0xf1] sm:$0xff] %v2550
        %2584 = vst [vmem:[%s2562 + $0xf9] sm:$0xff] %v2551
        %2585 = vst [vmem:[%s2562 + $0x109] sm:$0xff] %v2552
        %2586 = vst [vmem:[%s2562 + $0x111] sm:$0xff] %v2553
        %2587 = vst [vmem:[%s2562 + $0x121] sm:$0xff] %v2554
        %2588 = vst [vmem:[%s2562 + $0x129] sm:$0xff] %v2555
        %2589 = vst [vmem:[%s2562 + $0x139] sm:$0xff] %v2556
        %2590 = vst [vmem:[%s2562 + $0x141] sm:$0xff] %v2557
        %2591 = vst [vmem:[%s2562 + $0x151] sm:$0xff] %v2558
        %2592 = vst [vmem:[%s2562 + $0x159] sm:$0xff] %v2559
        %2593 = vst [vmem:[%s2562 + $0x169] sm:$0xff] %v2560
        %2594 = vst [vmem:[%s2562 + $0x171] sm:$0xff] %v2561
        %2595 = vst [vmem:[#allocation3] sm:$0xff] 0.0
        %2596 = vst [vmem:[#allocation3 + $0x8] sm:$0xff] 0.0
        %2597 = vst [vmem:[#allocation3 + $0x10] sm:$0x3] 0.0
        %s2598 = scalar_lea.vmem [#allocation3], 408
        %2599 = vst [vmem:[%s2598] sm:$0xff] 0.0
        %2600 = vst [vmem:[%s2598 + $0x8] sm:$0xff] 0.0
        %2601 = vst [vmem:[%s2598 + $0x10] sm:$0x3] 0.0
        %2602 = vst [vmem:[#allocation3] sm:$0x1] 0.0
        %2603 = vst [vmem:[#allocation3 + $0x18] sm:$0x1] 0.0
        %2604 = vst [vmem:[#allocation3 + $0x30] sm:$0x1] 0.0
        %2605 = vst [vmem:[#allocation3 + $0x48] sm:$0x1] 0.0
        %2606 = vst [vmem:[#allocation3 + $0x60] sm:$0x1] 0.0
        %2607 = vst [vmem:[#allocation3 + $0x78] sm:$0x1] 0.0
        %2608 = vst [vmem:[#allocation3 + $0x90] sm:$0x1] 0.0
        %2609 = vst [vmem:[#allocation3 + $0xa8] sm:$0x1] 0.0
        %2610 = vst [vmem:[#allocation3 + $0xc0] sm:$0x1] 0.0
        %2611 = vst [vmem:[#allocation3 + $0xd8] sm:$0x1] 0.0
        %2612 = vst [vmem:[#allocation3 + $0xf0] sm:$0x1] 0.0
        %2613 = vst [vmem:[#allocation3 + $0x108] sm:$0x1] 0.0
        %2614 = vst [vmem:[#allocation3 + $0x120] sm:$0x1] 0.0
        %2615 = vst [vmem:[#allocation3 + $0x138] sm:$0x1] 0.0
        %2616 = vst [vmem:[#allocation3 + $0x150] sm:$0x1] 0.0
        %2617 = vst [vmem:[#allocation3 + $0x168] sm:$0x1] 0.0
        %2618 = vst [vmem:[#allocation3 + $0x180] sm:$0x1] 0.0
        %2619 = vst [vmem:[#allocation3 + $0x198] sm:$0x1] 0.0
        %2620 = vst [vmem:[#allocation3 + $0x11] sm:$0x1] 0.0
        %2621 = vst [vmem:[#allocation3 + $0x29] sm:$0x1] 0.0
        %2622 = vst [vmem:[#allocation3 + $0x41] sm:$0x1] 0.0
        %2623 = vst [vmem:[#allocation3 + $0x59] sm:$0x1] 0.0
        %2624 = vst [vmem:[#allocation3 + $0x71] sm:$0x1] 0.0
        %2625 = vst [vmem:[#allocation3 + $0x89] sm:$0x1] 0.0
        %2626 = vst [vmem:[#allocation3 + $0xa1] sm:$0x1] 0.0
        %2627 = vst [vmem:[#allocation3 + $0xb9] sm:$0x1] 0.0
        %2628 = vst [vmem:[#allocation3 + $0xd1] sm:$0x1] 0.0
        %2629 = vst [vmem:[#allocation3 + $0xe9] sm:$0x1] 0.0
        %2630 = vst [vmem:[#allocation3 + $0x101] sm:$0x1] 0.0
        %2631 = vst [vmem:[#allocation3 + $0x119] sm:$0x1] 0.0
        %2632 = vst [vmem:[#allocation3 + $0x131] sm:$0x1] 0.0
        %2633 = vst [vmem:[#allocation3 + $0x149] sm:$0x1] 0.0
        %2634 = vst [vmem:[#allocation3 + $0x161] sm:$0x1] 0.0
        %2635 = vst [vmem:[#allocation3 + $0x179] sm:$0x1] 0.0
        %2636 = vst [vmem:[#allocation3 + $0x191] sm:$0x1] 0.0
        %2637 = vst [vmem:[#allocation3 + $0x1a9] sm:$0x1] 0.0
        %v2638 = vld [vmem:[#allocation3] sm:$0xff]
        %v2639 = vld [vmem:[#allocation3 + $0x8] sm:$0xff]
        %v2640 = vld [vmem:[#allocation3 + $0x18] sm:$0xff]
        %v2641 = vld [vmem:[#allocation3 + $0x20] sm:$0xff]
        %v2642 = vld [vmem:[#allocation3 + $0x30] sm:$0xff]
        %v2643 = vld [vmem:[#allocation3 + $0x38] sm:$0xff]
        %v2644 = vld [vmem:[#allocation3 + $0x48] sm:$0xff]
        %v2645 = vld [vmem:[#allocation3 + $0x50] sm:$0xff]
        %v2646 = vld [vmem:[#allocation3 + $0x60] sm:$0xff]
        %v2647 = vld [vmem:[#allocation3 + $0x68] sm:$0xff]
        %v2648 = vld [vmem:[#allocation3 + $0x78] sm:$0xff]
        %v2649 = vld [vmem:[#allocation3 + $0x80] sm:$0xff]
        %v2650 = vld [vmem:[#allocation3 + $0x90] sm:$0xff]
        %v2651 = vld [vmem:[#allocation3 + $0x98] sm:$0xff]
        %v2652 = vld [vmem:[#allocation3 + $0xa8] sm:$0xff]
        %v2653 = vld [vmem:[#allocation3 + $0xb0] sm:$0xff]
        %v2654 = vld [vmem:[#allocation3 + $0xc0] sm:$0xff]
        %v2655 = vld [vmem:[#allocation3 + $0xc8] sm:$0xff]
        %v2656 = vld [vmem:[#allocation3 + $0xd8] sm:$0xff]
        %v2657 = vld [vmem:[#allocation3 + $0xe0] sm:$0xff]
        %v2658 = vld [vmem:[#allocation3 + $0xf0] sm:$0xff]
        %v2659 = vld [vmem:[#allocation3 + $0xf8] sm:$0xff]
        %v2660 = vld [vmem:[#allocation3 + $0x108] sm:$0xff]
        %v2661 = vld [vmem:[#allocation3 + $0x110] sm:$0xff]
        %v2662 = vld [vmem:[#allocation3 + $0x120] sm:$0xff]
        %v2663 = vld [vmem:[#allocation3 + $0x128] sm:$0xff]
        %v2664 = vld [vmem:[#allocation3 + $0x138] sm:$0xff]
        %v2665 = vld [vmem:[#allocation3 + $0x140] sm:$0xff]
        %v2666 = vld [vmem:[#allocation3 + $0x150] sm:$0xff]
        %v2667 = vld [vmem:[#allocation3 + $0x158] sm:$0xff]
        %v2668 = vld [vmem:[#allocation3 + $0x168] sm:$0xff]
        %v2669 = vld [vmem:[#allocation3 + $0x170] sm:$0xff]
        %v2670 = vld [vmem:[#allocation3 + $0x1] sm:$0xff]
        %v2671 = vld [vmem:[#allocation3 + $0x9] sm:$0xff]
        %v2672 = vld [vmem:[#allocation3 + $0x19] sm:$0xff]
        %v2673 = vld [vmem:[#allocation3 + $0x21] sm:$0xff]
        %v2674 = vld [vmem:[#allocation3 + $0x31] sm:$0xff]
        %v2675 = vld [vmem:[#allocation3 + $0x39] sm:$0xff]
        %v2676 = vld [vmem:[#allocation3 + $0x49] sm:$0xff]
        %v2677 = vld [vmem:[#allocation3 + $0x51] sm:$0xff]
        %v2678 = vld [vmem:[#allocation3 + $0x61] sm:$0xff]
        %v2679 = vld [vmem:[#allocation3 + $0x69] sm:$0xff]
        %v2680 = vld [vmem:[#allocation3 + $0x79] sm:$0xff]
        %v2681 = vld [vmem:[#allocation3 + $0x81] sm:$0xff]
        %v2682 = vld [vmem:[#allocation3 + $0x91] sm:$0xff]
        %v2683 = vld [vmem:[#allocation3 + $0x99] sm:$0xff]
        %v2684 = vld [vmem:[#allocation3 + $0xa9] sm:$0xff]
        %v2685 = vld [vmem:[#allocation3 + $0xb1] sm:$0xff]
        %v2686 = vld [vmem:[#allocation3 + $0xc1] sm:$0xff]
        %v2687 = vld [vmem:[#allocation3 + $0xc9] sm:$0xff]
        %v2688 = vld [vmem:[#allocation3 + $0xd9] sm:$0xff]
        %v2689 = vld [vmem:[#allocation3 + $0xe1] sm:$0xff]
        %v2690 = vld [vmem:[#allocation3 + $0xf1] sm:$0xff]
        %v2691 = vld [vmem:[#allocation3 + $0xf9] sm:$0xff]
        %v2692 = vld [vmem:[#allocation3 + $0x109] sm:$0xff]
        %v2693 = vld [vmem:[#allocation3 + $0x111] sm:$0xff]
        %v2694 = vld [vmem:[#allocation3 + $0x121] sm:$0xff]
        %v2695 = vld [vmem:[#allocation3 + $0x129] sm:$0xff]
        %v2696 = vld [vmem:[#allocation3 + $0x139] sm:$0xff]
        %v2697 = vld [vmem:[#allocation3 + $0x141] sm:$0xff]
        %v2698 = vld [vmem:[#allocation3 + $0x151] sm:$0xff]
        %v2699 = vld [vmem:[#allocation3 + $0x159] sm:$0xff]
        %v2700 = vld [vmem:[#allocation3 + $0x169] sm:$0xff]
        %v2701 = vld [vmem:[#allocation3 + $0x171] sm:$0xff]
        %v2702 = vld [vmem:[#allocation3 + $0x2] sm:$0xff]
        %v2703 = vld [vmem:[#allocation3 + $0xa] sm:$0xff]
        %v2704 = vld [vmem:[#allocation3 + $0x1a] sm:$0xff]
        %v2705 = vld [vmem:[#allocation3 + $0x22] sm:$0xff]
        %v2706 = vld [vmem:[#allocation3 + $0x32] sm:$0xff]
        %v2707 = vld [vmem:[#allocation3 + $0x3a] sm:$0xff]
        %v2708 = vld [vmem:[#allocation3 + $0x4a] sm:$0xff]
        %v2709 = vld [vmem:[#allocation3 + $0x52] sm:$0xff]
        %v2710 = vld [vmem:[#allocation3 + $0x62] sm:$0xff]
        %v2711 = vld [vmem:[#allocation3 + $0x6a] sm:$0xff]
        %v2712 = vld [vmem:[#allocation3 + $0x7a] sm:$0xff]
        %v2713 = vld [vmem:[#allocation3 + $0x82] sm:$0xff]
        %v2714 = vld [vmem:[#allocation3 + $0x92] sm:$0xff]
        %v2715 = vld [vmem:[#allocation3 + $0x9a] sm:$0xff]
        %v2716 = vld [vmem:[#allocation3 + $0xaa] sm:$0xff]
        %v2717 = vld [vmem:[#allocation3 + $0xb2] sm:$0xff]
        %v2718 = vld [vmem:[#allocation3 + $0xc2] sm:$0xff]
        %v2719 = vld [vmem:[#allocation3 + $0xca] sm:$0xff]
        %v2720 = vld [vmem:[#allocation3 + $0xda] sm:$0xff]
        %v2721 = vld [vmem:[#allocation3 + $0xe2] sm:$0xff]
        %v2722 = vld [vmem:[#allocation3 + $0xf2] sm:$0xff]
        %v2723 = vld [vmem:[#allocation3 + $0xfa] sm:$0xff]
        %v2724 = vld [vmem:[#allocation3 + $0x10a] sm:$0xff]
        %v2725 = vld [vmem:[#allocation3 + $0x112] sm:$0xff]
        %v2726 = vld [vmem:[#allocation3 + $0x122] sm:$0xff]
        %v2727 = vld [vmem:[#allocation3 + $0x12a] sm:$0xff]
        %v2728 = vld [vmem:[#allocation3 + $0x13a] sm:$0xff]
        %v2729 = vld [vmem:[#allocation3 + $0x142] sm:$0xff]
        %v2730 = vld [vmem:[#allocation3 + $0x152] sm:$0xff]
        %v2731 = vld [vmem:[#allocation3 + $0x15a] sm:$0xff]
        %v2732 = vld [vmem:[#allocation3 + $0x16a] sm:$0xff]
        %v2733 = vld [vmem:[#allocation3 + $0x172] sm:$0xff]
        %v2734 = vpack.c.bf16 %v2639, %v2638
        %v2735 = vpack.c.bf16 %v2671, %v2670
        %v2736 = vpack.c.bf16 %v2703, %v2702
        %v2737 = vpack.c.bf16 %v2641, %v2640
        %v2738 = vpack.c.bf16 %v2673, %v2672
        %v2739 = vpack.c.bf16 %v2705, %v2704
        %v2740 = vpack.c.bf16 %v2643, %v2642
        %v2741 = vpack.c.bf16 %v2675, %v2674
        %v2742 = vpack.c.bf16 %v2707, %v2706
        %v2743 = vpack.c.bf16 %v2645, %v2644
        %v2744 = vpack.c.bf16 %v2677, %v2676
        %v2745 = vpack.c.bf16 %v2709, %v2708
        %v2746 = vpack.c.bf16 %v2647, %v2646
        %v2747 = vpack.c.bf16 %v2679, %v2678
        %v2748 = vpack.c.bf16 %v2711, %v2710
        %v2749 = vpack.c.bf16 %v2649, %v2648
        %v2750 = vpack.c.bf16 %v2681, %v2680
        %v2751 = vpack.c.bf16 %v2713, %v2712
        %v2752 = vpack.c.bf16 %v2651, %v2650
        %v2753 = vpack.c.bf16 %v2683, %v2682
        %v2754 = vpack.c.bf16 %v2715, %v2714
        %v2755 = vpack.c.bf16 %v2653, %v2652
        %v2756 = vpack.c.bf16 %v2685, %v2684
        %v2757 = vpack.c.bf16 %v2717, %v2716
        %v2758 = vpack.c.bf16 %v2655, %v2654
        %v2759 = vpack.c.bf16 %v2687, %v2686
        %v2760 = vpack.c.bf16 %v2719, %v2718
        %v2761 = vpack.c.bf16 %v2657, %v2656
        %v2762 = vpack.c.bf16 %v2689, %v2688
        %v2763 = vpack.c.bf16 %v2721, %v2720
        %v2764 = vpack.c.bf16 %v2659, %v2658
        %v2765 = vpack.c.bf16 %v2691, %v2690
        %v2766 = vpack.c.bf16 %v2723, %v2722
        %v2767 = vpack.c.bf16 %v2661, %v2660
        %v2768 = vpack.c.bf16 %v2693, %v2692
        %v2769 = vpack.c.bf16 %v2725, %v2724
        %v2770 = vpack.c.bf16 %v2663, %v2662
        %v2771 = vpack.c.bf16 %v2695, %v2694
        %v2772 = vpack.c.bf16 %v2727, %v2726
        %v2773 = vpack.c.bf16 %v2665, %v2664
        %v2774 = vpack.c.bf16 %v2697, %v2696
        %v2775 = vpack.c.bf16 %v2729, %v2728
        %v2776 = vpack.c.bf16 %v2667, %v2666
        %v2777 = vpack.c.bf16 %v2699, %v2698
        %v2778 = vpack.c.bf16 %v2731, %v2730
        %v2779 = vpack.c.bf16 %v2669, %v2668
        %v2780 = vpack.c.bf16 %v2701, %v2700
        %v2781 = vpack.c.bf16 %v2733, %v2732
        %v2782 = vld [vmem:[#allocation10] sm:$0xf]
        %v2783 = vld [vmem:[#allocation10 + $0x4] sm:$0xf]
        %v2784 = vld [vmem:[#allocation10 + $0x8] sm:$0xf]
        %v2785 = vld [vmem:[#allocation10 + $0xc] sm:$0xf]
        %v2786 = vld [vmem:[#allocation10 + $0x10] sm:$0xf]
        %v2787 = vld [vmem:[#allocation10 + $0x14] sm:$0xf]
        %v2788 = vld [vmem:[#allocation10 + $0x18] sm:$0xf]
        %v2789 = vld [vmem:[#allocation10 + $0x1c] sm:$0xf]
        %v2790 = vld [vmem:[#allocation10 + $0x20] sm:$0xf]
        %v2791 = vld [vmem:[#allocation10 + $0x24] sm:$0xf]
        %v2792 = vld [vmem:[#allocation10 + $0x28] sm:$0xf]
        %v2793 = vld [vmem:[#allocation10 + $0x2c] sm:$0xf]
        %v2794 = vld [vmem:[#allocation10 + $0x30] sm:$0xf]
        %v2795 = vld [vmem:[#allocation10 + $0x34] sm:$0xf]
        %v2796 = vld [vmem:[#allocation10 + $0x38] sm:$0xf]
        %v2797 = vld [vmem:[#allocation10 + $0x3c] sm:$0xf]
        %v2798 = vld [vmem:[#allocation10 + $0x40] sm:$0xf]
        %v2799 = vld [vmem:[#allocation10 + $0x44] sm:$0xf]
        %v2800 = vld [vmem:[#allocation10 + $0x48] sm:$0xf]
        %v2801 = vld [vmem:[#allocation10 + $0x4c] sm:$0xf]
        %v2802 = vld [vmem:[#allocation10 + $0x50] sm:$0xf]
        %v2803 = vld [vmem:[#allocation10 + $0x54] sm:$0xf]
        %v2804 = vld [vmem:[#allocation10 + $0x58] sm:$0xf]
        %v2805 = vld [vmem:[#allocation10 + $0x5c] sm:$0xf]
        %v2806 = vld [vmem:[#allocation10 + $0x60] sm:$0xf]
        %v2807 = vld [vmem:[#allocation10 + $0x64] sm:$0xf]
        %v2808 = vld [vmem:[#allocation10 + $0x68] sm:$0xf]
        %v2809 = vld [vmem:[#allocation10 + $0x6c] sm:$0xf]
        %v2810 = vld [vmem:[#allocation10 + $0x70] sm:$0xf]
        %v2811 = vld [vmem:[#allocation10 + $0x74] sm:$0xf]
        %v2812 = vld [vmem:[#allocation10 + $0x78] sm:$0xf]
        %v2813 = vld [vmem:[#allocation10 + $0x7c] sm:$0xf]
        %v2814 = vld [vmem:[#allocation10 + $0x80] sm:$0xf]
        %v2815 = vld [vmem:[#allocation10 + $0x84] sm:$0xf]
        %v2816 = vld [vmem:[#allocation10 + $0x88] sm:$0xf]
        %v2817 = vld [vmem:[#allocation10 + $0x8c] sm:$0xf]
        %v2818 = vld [vmem:[#allocation10 + $0x90] sm:$0xf]
        %v2819 = vld [vmem:[#allocation10 + $0x94] sm:$0xf]
        %v2820 = vld [vmem:[#allocation10 + $0x98] sm:$0xf]
        %v2821 = vld [vmem:[#allocation10 + $0x9c] sm:$0xf]
        %v2822 = vld [vmem:[#allocation10 + $0xa0] sm:$0xf]
        %v2823 = vld [vmem:[#allocation10 + $0xa4] sm:$0xf]
        %v2824 = vld [vmem:[#allocation10 + $0xa8] sm:$0xf]
        %v2825 = vld [vmem:[#allocation10 + $0xac] sm:$0xf]
        %v2826 = vld [vmem:[#allocation10 + $0xb0] sm:$0xf]
        %v2827 = vld [vmem:[#allocation10 + $0xb4] sm:$0xf]
        %v2828 = vld [vmem:[#allocation10 + $0xb8] sm:$0xf]
        %v2829 = vld [vmem:[#allocation10 + $0xbc] sm:$0xf]
        %v2830 = vld [vmem:[%s2562] sm:$0xff]
        %v2831 = vld [vmem:[%s2562 + $0x8] sm:$0xff]
        %v2832 = vld [vmem:[%s2562 + $0x18] sm:$0xff]
        %v2833 = vld [vmem:[%s2562 + $0x20] sm:$0xff]
        %v2834 = vld [vmem:[%s2562 + $0x30] sm:$0xff]
        %v2835 = vld [vmem:[%s2562 + $0x38] sm:$0xff]
        %v2836 = vld [vmem:[%s2562 + $0x48] sm:$0xff]
        %v2837 = vld [vmem:[%s2562 + $0x50] sm:$0xff]
        %v2838 = vld [vmem:[%s2562 + $0x60] sm:$0xff]
        %v2839 = vld [vmem:[%s2562 + $0x68] sm:$0xff]
        %v2840 = vld [vmem:[%s2562 + $0x78] sm:$0xff]
        %v2841 = vld [vmem:[%s2562 + $0x80] sm:$0xff]
        %v2842 = vld [vmem:[%s2562 + $0x90] sm:$0xff]
        %v2843 = vld [vmem:[%s2562 + $0x98] sm:$0xff]
        %v2844 = vld [vmem:[%s2562 + $0xa8] sm:$0xff]
        %v2845 = vld [vmem:[%s2562 + $0xb0] sm:$0xff]
        %v2846 = vld [vmem:[%s2562 + $0xc0] sm:$0xff]
        %v2847 = vld [vmem:[%s2562 + $0xc8] sm:$0xff]
        %v2848 = vld [vmem:[%s2562 + $0xd8] sm:$0xff]
        %v2849 = vld [vmem:[%s2562 + $0xe0] sm:$0xff]
        %v2850 = vld [vmem:[%s2562 + $0xf0] sm:$0xff]
        %v2851 = vld [vmem:[%s2562 + $0xf8] sm:$0xff]
        %v2852 = vld [vmem:[%s2562 + $0x108] sm:$0xff]
        %v2853 = vld [vmem:[%s2562 + $0x110] sm:$0xff]
        %v2854 = vld [vmem:[%s2562 + $0x120] sm:$0xff]
        %v2855 = vld [vmem:[%s2562 + $0x128] sm:$0xff]
        %v2856 = vld [vmem:[%s2562 + $0x138] sm:$0xff]
        %v2857 = vld [vmem:[%s2562 + $0x140] sm:$0xff]
        %v2858 = vld [vmem:[%s2562 + $0x150] sm:$0xff]
        %v2859 = vld [vmem:[%s2562 + $0x158] sm:$0xff]
        %v2860 = vld [vmem:[%s2562 + $0x168] sm:$0xff]
        %v2861 = vld [vmem:[%s2562 + $0x170] sm:$0xff]
        %v2862 = vld [vmem:[%s2562 + $0x1] sm:$0xff]
        %v2863 = vld [vmem:[%s2562 + $0x9] sm:$0xff]
        %v2864 = vld [vmem:[%s2562 + $0x19] sm:$0xff]
        %v2865 = vld [vmem:[%s2562 + $0x21] sm:$0xff]
        %v2866 = vld [vmem:[%s2562 + $0x31] sm:$0xff]
        %v2867 = vld [vmem:[%s2562 + $0x39] sm:$0xff]
        %v2868 = vld [vmem:[%s2562 + $0x49] sm:$0xff]
        %v2869 = vld [vmem:[%s2562 + $0x51] sm:$0xff]
        %v2870 = vld [vmem:[%s2562 + $0x61] sm:$0xff]
        %v2871 = vld [vmem:[%s2562 + $0x69] sm:$0xff]
        %v2872 = vld [vmem:[%s2562 + $0x79] sm:$0xff]
        %v2873 = vld [vmem:[%s2562 + $0x81] sm:$0xff]
        %v2874 = vld [vmem:[%s2562 + $0x91] sm:$0xff]
        %v2875 = vld [vmem:[%s2562 + $0x99] sm:$0xff]
        %v2876 = vld [vmem:[%s2562 + $0xa9] sm:$0xff]
        %v2877 = vld [vmem:[%s2562 + $0xb1] sm:$0xff]
        %v2878 = vld [vmem:[%s2562 + $0xc1] sm:$0xff]
        %v2879 = vld [vmem:[%s2562 + $0xc9] sm:$0xff]
        %v2880 = vld [vmem:[%s2562 + $0xd9] sm:$0xff]
        %v2881 = vld [vmem:[%s2562 + $0xe1] sm:$0xff]
        %v2882 = vld [vmem:[%s2562 + $0xf1] sm:$0xff]
        %v2883 = vld [vmem:[%s2562 + $0xf9] sm:$0xff]
        %v2884 = vld [vmem:[%s2562 + $0x109] sm:$0xff]
        %v2885 = vld [vmem:[%s2562 + $0x111] sm:$0xff]
        %v2886 = vld [vmem:[%s2562 + $0x121] sm:$0xff]
        %v2887 = vld [vmem:[%s2562 + $0x129] sm:$0xff]
        %v2888 = vld [vmem:[%s2562 + $0x139] sm:$0xff]
        %v2889 = vld [vmem:[%s2562 + $0x141] sm:$0xff]
        %v2890 = vld [vmem:[%s2562 + $0x151] sm:$0xff]
        %v2891 = vld [vmem:[%s2562 + $0x159] sm:$0xff]
        %v2892 = vld [vmem:[%s2562 + $0x169] sm:$0xff]
        %v2893 = vld [vmem:[%s2562 + $0x171] sm:$0xff]
        %v2894 = vld [vmem:[%s2562 + $0x2] sm:$0xff]
        %v2895 = vld [vmem:[%s2562 + $0xa] sm:$0xff]
        %v2896 = vld [vmem:[%s2562 + $0x1a] sm:$0xff]
        %v2897 = vld [vmem:[%s2562 + $0x22] sm:$0xff]
        %v2898 = vld [vmem:[%s2562 + $0x32] sm:$0xff]
        %v2899 = vld [vmem:[%s2562 + $0x3a] sm:$0xff]
        %v2900 = vld [vmem:[%s2562 + $0x4a] sm:$0xff]
        %v2901 = vld [vmem:[%s2562 + $0x52] sm:$0xff]
        %v2902 = vld [vmem:[%s2562 + $0x62] sm:$0xff]
        %v2903 = vld [vmem:[%s2562 + $0x6a] sm:$0xff]
        %v2904 = vld [vmem:[%s2562 + $0x7a] sm:$0xff]
        %v2905 = vld [vmem:[%s2562 + $0x82] sm:$0xff]
        %v2906 = vld [vmem:[%s2562 + $0x92] sm:$0xff]
        %v2907 = vld [vmem:[%s2562 + $0x9a] sm:$0xff]
        %v2908 = vld [vmem:[%s2562 + $0xaa] sm:$0xff]
        %v2909 = vld [vmem:[%s2562 + $0xb2] sm:$0xff]
        %v2910 = vld [vmem:[%s2562 + $0xc2] sm:$0xff]
        %v2911 = vld [vmem:[%s2562 + $0xca] sm:$0xff]
        %v2912 = vld [vmem:[%s2562 + $0xda] sm:$0xff]
        %v2913 = vld [vmem:[%s2562 + $0xe2] sm:$0xff]
        %v2914 = vld [vmem:[%s2562 + $0xf2] sm:$0xff]
        %v2915 = vld [vmem:[%s2562 + $0xfa] sm:$0xff]
        %v2916 = vld [vmem:[%s2562 + $0x10a] sm:$0xff]
        %v2917 = vld [vmem:[%s2562 + $0x112] sm:$0xff]
        %v2918 = vld [vmem:[%s2562 + $0x122] sm:$0xff]
        %v2919 = vld [vmem:[%s2562 + $0x12a] sm:$0xff]
        %v2920 = vld [vmem:[%s2562 + $0x13a] sm:$0xff]
        %v2921 = vld [vmem:[%s2562 + $0x142] sm:$0xff]
        %v2922 = vld [vmem:[%s2562 + $0x152] sm:$0xff]
        %v2923 = vld [vmem:[%s2562 + $0x15a] sm:$0xff]
        %v2924 = vld [vmem:[%s2562 + $0x16a] sm:$0xff]
        %v2925 = vld [vmem:[%s2562 + $0x172] sm:$0xff]
        %v2926 = vpack.c.bf16 %v2831, %v2830
        %v2927 = vpack.c.bf16 %v2863, %v2862
        %v2928 = vpack.c.bf16 %v2895, %v2894
        %v2929 = vpack.c.bf16 %v2833, %v2832
        %v2930 = vpack.c.bf16 %v2865, %v2864
        %v2931 = vpack.c.bf16 %v2897, %v2896
        %v2932 = vpack.c.bf16 %v2835, %v2834
        %v2933 = vpack.c.bf16 %v2867, %v2866
        %v2934 = vpack.c.bf16 %v2899, %v2898
        %v2935 = vpack.c.bf16 %v2837, %v2836
        %v2936 = vpack.c.bf16 %v2869, %v2868
        %v2937 = vpack.c.bf16 %v2901, %v2900
        %v2938 = vpack.c.bf16 %v2839, %v2838
        %v2939 = vpack.c.bf16 %v2871, %v2870
        %v2940 = vpack.c.bf16 %v2903, %v2902
        %v2941 = vpack.c.bf16 %v2841, %v2840
        %v2942 = vpack.c.bf16 %v2873, %v2872
        %v2943 = vpack.c.bf16 %v2905, %v2904
        %v2944 = vpack.c.bf16 %v2843, %v2842
        %v2945 = vpack.c.bf16 %v2875, %v2874
        %v2946 = vpack.c.bf16 %v2907, %v2906
        %v2947 = vpack.c.bf16 %v2845, %v2844
        %v2948 = vpack.c.bf16 %v2877, %v2876
        %v2949 = vpack.c.bf16 %v2909, %v2908
        %v2950 = vpack.c.bf16 %v2847, %v2846
        %v2951 = vpack.c.bf16 %v2879, %v2878
        %v2952 = vpack.c.bf16 %v2911, %v2910
        %v2953 = vpack.c.bf16 %v2849, %v2848
        %v2954 = vpack.c.bf16 %v2881, %v2880
        %v2955 = vpack.c.bf16 %v2913, %v2912
        %v2956 = vpack.c.bf16 %v2851, %v2850
        %v2957 = vpack.c.bf16 %v2883, %v2882
        %v2958 = vpack.c.bf16 %v2915, %v2914
        %v2959 = vpack.c.bf16 %v2853, %v2852
        %v2960 = vpack.c.bf16 %v2885, %v2884
        %v2961 = vpack.c.bf16 %v2917, %v2916
        %v2962 = vpack.c.bf16 %v2855, %v2854
        %v2963 = vpack.c.bf16 %v2887, %v2886
        %v2964 = vpack.c.bf16 %v2919, %v2918
        %v2965 = vpack.c.bf16 %v2857, %v2856
        %v2966 = vpack.c.bf16 %v2889, %v2888
        %v2967 = vpack.c.bf16 %v2921, %v2920
        %v2968 = vpack.c.bf16 %v2859, %v2858
        %v2969 = vpack.c.bf16 %v2891, %v2890
        %v2970 = vpack.c.bf16 %v2923, %v2922
        %v2971 = vpack.c.bf16 %v2861, %v2860
        %v2972 = vpack.c.bf16 %v2893, %v2892
        %v2973 = vpack.c.bf16 %v2925, %v2924
        %s2974 = scalar_lea.vmem [#allocation10], 192
        %v2975 = vld [vmem:[%s2974] sm:$0xf]
        %v2976 = vld [vmem:[%s2974 + $0x4] sm:$0xf]
        %v2977 = vld [vmem:[%s2974 + $0x8] sm:$0xf]
        %v2978 = vld [vmem:[%s2974 + $0xc] sm:$0xf]
        %v2979 = vld [vmem:[%s2974 + $0x10] sm:$0xf]
        %v2980 = vld [vmem:[%s2974 + $0x14] sm:$0xf]
        %v2981 = vld [vmem:[%s2974 + $0x18] sm:$0xf]
        %v2982 = vld [vmem:[%s2974 + $0x1c] sm:$0xf]
        %v2983 = vld [vmem:[%s2974 + $0x20] sm:$0xf]
        %v2984 = vld [vmem:[%s2974 + $0x24] sm:$0xf]
        %v2985 = vld [vmem:[%s2974 + $0x28] sm:$0xf]
        %v2986 = vld [vmem:[%s2974 + $0x2c] sm:$0xf]
        %v2987 = vld [vmem:[%s2974 + $0x30] sm:$0xf]
        %v2988 = vld [vmem:[%s2974 + $0x34] sm:$0xf]
        %v2989 = vld [vmem:[%s2974 + $0x38] sm:$0xf]
        %v2990 = vld [vmem:[%s2974 + $0x3c] sm:$0xf]
        %v2991 = vld [vmem:[%s2974 + $0x40] sm:$0xf]
        %v2992 = vld [vmem:[%s2974 + $0x44] sm:$0xf]
        %v2993 = vld [vmem:[%s2974 + $0x48] sm:$0xf]
        %v2994 = vld [vmem:[%s2974 + $0x4c] sm:$0xf]
        %v2995 = vld [vmem:[%s2974 + $0x50] sm:$0xf]
        %v2996 = vld [vmem:[%s2974 + $0x54] sm:$0xf]
        %v2997 = vld [vmem:[%s2974 + $0x58] sm:$0xf]
        %v2998 = vld [vmem:[%s2974 + $0x5c] sm:$0xf]
        %v2999 = vld [vmem:[%s2974 + $0x60] sm:$0xf]
        %v3000 = vld [vmem:[%s2974 + $0x64] sm:$0xf]
        %v3001 = vld [vmem:[%s2974 + $0x68] sm:$0xf]
        %v3002 = vld [vmem:[%s2974 + $0x6c] sm:$0xf]
        %v3003 = vld [vmem:[%s2974 + $0x70] sm:$0xf]
        %v3004 = vld [vmem:[%s2974 + $0x74] sm:$0xf]
        %v3005 = vld [vmem:[%s2974 + $0x78] sm:$0xf]
        %v3006 = vld [vmem:[%s2974 + $0x7c] sm:$0xf]
        %v3007 = vld [vmem:[%s2974 + $0x80] sm:$0xf]
        %v3008 = vld [vmem:[%s2974 + $0x84] sm:$0xf]
        %v3009 = vld [vmem:[%s2974 + $0x88] sm:$0xf]
        %v3010 = vld [vmem:[%s2974 + $0x8c] sm:$0xf]
        %v3011 = vld [vmem:[%s2974 + $0x90] sm:$0xf]
        %v3012 = vld [vmem:[%s2974 + $0x94] sm:$0xf]
        %v3013 = vld [vmem:[%s2974 + $0x98] sm:$0xf]
        %v3014 = vld [vmem:[%s2974 + $0x9c] sm:$0xf]
        %v3015 = vld [vmem:[%s2974 + $0xa0] sm:$0xf]
        %v3016 = vld [vmem:[%s2974 + $0xa4] sm:$0xf]
        %v3017 = vld [vmem:[%s2974 + $0xa8] sm:$0xf]
        %v3018 = vld [vmem:[%s2974 + $0xac] sm:$0xf]
        %v3019 = vld [vmem:[%s2974 + $0xb0] sm:$0xf]
        %v3020 = vld [vmem:[%s2974 + $0xb4] sm:$0xf]
        %v3021 = vld [vmem:[%s2974 + $0xb8] sm:$0xf]
        %v3022 = vld [vmem:[%s2974 + $0xbc] sm:$0xf]
        %v3071 = vunpack.c.l.b16 %v2975
        %v3072 = vunpack.c.l.b16 %v2976
        %v3073 = vunpack.c.l.b16 %v2977
        %v3074 = vunpack.c.l.b16 %v2978
        %v3075 = vunpack.c.l.b16 %v2979
        %v3076 = vunpack.c.l.b16 %v2980
        %v3077 = vunpack.c.l.b16 %v2981
        %v3078 = vunpack.c.l.b16 %v2982
        %v3079 = vunpack.c.l.b16 %v2983
        %v3080 = vunpack.c.l.b16 %v2984
        %v3081 = vunpack.c.l.b16 %v2985
        %v3082 = vunpack.c.l.b16 %v2986
        %v3083 = vunpack.c.l.b16 %v2987
        %v3084 = vunpack.c.l.b16 %v2988
        %v3085 = vunpack.c.l.b16 %v2989
        %v3086 = vunpack.c.l.b16 %v2990
        %v3087 = vunpack.c.l.b16 %v2991
        %v3088 = vunpack.c.l.b16 %v2992
        %v3089 = vunpack.c.l.b16 %v2993
        %v3090 = vunpack.c.l.b16 %v2994
        %v3091 = vunpack.c.l.b16 %v2995
        %v3092 = vunpack.c.l.b16 %v2996
        %v3093 = vunpack.c.l.b16 %v2997
        %v3094 = vunpack.c.l.b16 %v2998
        %v3095 = vunpack.c.l.b16 %v2999
        %v3096 = vunpack.c.l.b16 %v3000
        %v3097 = vunpack.c.l.b16 %v3001
        %v3098 = vunpack.c.l.b16 %v3002
        %v3099 = vunpack.c.l.b16 %v3003
        %v3100 = vunpack.c.l.b16 %v3004
        %v3101 = vunpack.c.l.b16 %v3005
        %v3102 = vunpack.c.l.b16 %v3006
        %v3103 = vunpack.c.l.b16 %v3007
        %v3104 = vunpack.c.l.b16 %v3008
        %v3105 = vunpack.c.l.b16 %v3009
        %v3106 = vunpack.c.l.b16 %v3010
        %v3107 = vunpack.c.l.b16 %v3011
        %v3108 = vunpack.c.l.b16 %v3012
        %v3109 = vunpack.c.l.b16 %v3013
        %v3110 = vunpack.c.l.b16 %v3014
        %v3111 = vunpack.c.l.b16 %v3015
        %v3112 = vunpack.c.l.b16 %v3016
        %v3113 = vunpack.c.l.b16 %v3017
        %v3114 = vunpack.c.l.b16 %v3018
        %v3115 = vunpack.c.l.b16 %v3019
        %v3116 = vunpack.c.l.b16 %v3020
        %v3117 = vunpack.c.l.b16 %v3021
        %v3118 = vunpack.c.l.b16 %v3022
        %v3119 = vpack.c.b16 %v3072, %v3071
        %v3120 = vpack.c.b16 %v3074, %v3073
        %v3121 = vpack.c.b16 %v3076, %v3075
        %v3122 = vpack.c.b16 %v3078, %v3077
        %v3123 = vpack.c.b16 %v3080, %v3079
        %v3124 = vpack.c.b16 %v3082, %v3081
        %v3125 = vpack.c.b16 %v3084, %v3083
        %v3126 = vpack.c.b16 %v3086, %v3085
        %v3127 = vpack.c.b16 %v3088, %v3087
        %v3128 = vpack.c.b16 %v3090, %v3089
        %v3129 = vpack.c.b16 %v3092, %v3091
        %v3130 = vpack.c.b16 %v3094, %v3093
        %v3131 = vpack.c.b16 %v3096, %v3095
        %v3132 = vpack.c.b16 %v3098, %v3097
        %v3133 = vpack.c.b16 %v3100, %v3099
        %v3134 = vpack.c.b16 %v3102, %v3101
        %v3135 = vpack.c.b16 %v3104, %v3103
        %v3136 = vpack.c.b16 %v3106, %v3105
        %v3137 = vpack.c.b16 %v3108, %v3107
        %v3138 = vpack.c.b16 %v3110, %v3109
        %v3139 = vpack.c.b16 %v3112, %v3111
        %v3140 = vpack.c.b16 %v3114, %v3113
        %v3141 = vpack.c.b16 %v3116, %v3115
        %v3142 = vpack.c.b16 %v3118, %v3117
        %3167 = vmatprep.subr.bf16.mxu0 0
        %3168 = vmatpush1.bf16.msra.mxu0 %v3126
        %3169 = vmatprep.subr.bf16.mxu0 0
        %3170 = vmatpush1.bf16.msra.mxu0 %v3125
        %3171 = vmatprep.subr.bf16.mxu0 0
        %3172 = vmatpush1.bf16.msra.mxu0 %v3124
        %3173 = vmatprep.subr.bf16.mxu0 0
        %3174 = vmatpush1.bf16.msra.mxu0 %v3123
        %3175 = vmatprep.subr.bf16.mxu0 0
        %3176 = vmatpush1.bf16.msra.mxu0 %v3122
        %3177 = vmatprep.subr.bf16.mxu0 0
        %3178 = vmatpush1.bf16.msra.mxu0 %v3121
        %3179 = vmatprep.subr.bf16.mxu0 0
        %3180 = vmatpush1.bf16.msra.mxu0 %v3120
        %3181 = vmatprep.subr.bf16.mxu0 0
        %3182 = vmatpush1.bf16.msra.mxu0 %v3119
        %3183 = vmatprep.subr.bf16.mxu0 0
        %3184 = vmatpush2.bf16.msra.mxu0 %v3134
        %3185 = vmatprep.subr.bf16.mxu0 0
        %3186 = vmatpush2.bf16.msra.mxu0 %v3133
        %3187 = vmatprep.subr.bf16.mxu0 0
        %3188 = vmatpush2.bf16.msra.mxu0 %v3132
        %3189 = vmatprep.subr.bf16.mxu0 0
        %3190 = vmatpush2.bf16.msra.mxu0 %v3131
        %3191 = vmatprep.subr.bf16.mxu0 0
        %3192 = vmatpush2.bf16.msra.mxu0 %v3130
        %3193 = vmatprep.subr.bf16.mxu0 0
        %3194 = vmatpush2.bf16.msra.mxu0 %v3129
        %3195 = vmatprep.subr.bf16.mxu0 0
        %3196 = vmatpush2.bf16.msra.mxu0 %v3128
        %3197 = vmatprep.subr.bf16.mxu0 0
        %3198 = vmatpush2.bf16.msra.mxu0 %v3127
        %3199 = vmatprep.mubr.bf16.mxu0 %v2927
        %3200 = vmatmul.mubr.bf16.gmra.mxu0 %v2926
        %v3201 = vpop.f32.mrf.mxu0
        %v3202 = vadd.f32 0.0, %v3201
        %v3203 = vpop.f32.mrf.mxu0
        %v3204 = vpop.f32.mrf.mxu0
        %v3205 = vadd.f32 0.0, %v3204
        %v3206 = vpop.f32.mrf.mxu0
        %3207 = vmatprep.mubr.bf16.mxu0 %v2930
        %3208 = vmatmul.mubr.bf16.gmra.mxu0 %v2929
        %v3209 = vpop.f32.mrf.mxu0
        %v3210 = vadd.f32 0.0, %v3209
        %v3211 = vpop.f32.mrf.mxu0
        %v3212 = vpop.f32.mrf.mxu0
        %v3213 = vadd.f32 0.0, %v3212
        %v3214 = vpop.f32.mrf.mxu0
        %3215 = vmatprep.mubr.bf16.mxu0 %v2933
        %3216 = vmatmul.mubr.bf16.gmra.mxu0 %v2932
        %v3217 = vpop.f32.mrf.mxu0
        %v3218 = vadd.f32 0.0, %v3217
        %v3219 = vpop.f32.mrf.mxu0
        %v3220 = vpop.f32.mrf.mxu0
        %v3221 = vadd.f32 0.0, %v3220
        %v3222 = vpop.f32.mrf.mxu0
        %3223 = vmatprep.mubr.bf16.mxu0 %v2936
        %3224 = vmatmul.mubr.bf16.gmra.mxu0 %v2935
        %v3225 = vpop.f32.mrf.mxu0
        %v3226 = vadd.f32 0.0, %v3225
        %v3227 = vpop.f32.mrf.mxu0
        %v3228 = vpop.f32.mrf.mxu0
        %v3229 = vadd.f32 0.0, %v3228
        %v3230 = vpop.f32.mrf.mxu0
        %3231 = vmatprep.mubr.bf16.mxu0 %v2939
        %3232 = vmatmul.mubr.bf16.gmra.mxu0 %v2938
        %v3233 = vpop.f32.mrf.mxu0
        %v3234 = vadd.f32 0.0, %v3233
        %v3235 = vpop.f32.mrf.mxu0
        %v3236 = vpop.f32.mrf.mxu0
        %v3237 = vadd.f32 0.0, %v3236
        %v3238 = vpop.f32.mrf.mxu0
        %3239 = vmatprep.mubr.bf16.mxu0 %v2942
        %3240 = vmatmul.mubr.bf16.gmra.mxu0 %v2941
        %v3241 = vpop.f32.mrf.mxu0
        %v3242 = vadd.f32 0.0, %v3241
        %v3243 = vpop.f32.mrf.mxu0
        %v3244 = vpop.f32.mrf.mxu0
        %v3245 = vadd.f32 0.0, %v3244
        %v3246 = vpop.f32.mrf.mxu0
        %3247 = vmatprep.mubr.bf16.mxu0 %v2945
        %3248 = vmatmul.mubr.bf16.gmra.mxu0 %v2944
        %v3249 = vpop.f32.mrf.mxu0
        %v3250 = vadd.f32 0.0, %v3249
        %v3251 = vpop.f32.mrf.mxu0
        %v3252 = vpop.f32.mrf.mxu0
        %v3253 = vadd.f32 0.0, %v3252
        %v3254 = vpop.f32.mrf.mxu0
        %3255 = vmatprep.mubr.bf16.mxu0 %v2948
        %3256 = vmatmul.mubr.bf16.gmra.mxu0 %v2947
        %v3257 = vpop.f32.mrf.mxu0
        %v3258 = vadd.f32 0.0, %v3257
        %v3259 = vpop.f32.mrf.mxu0
        %v3260 = vpop.f32.mrf.mxu0
        %v3261 = vadd.f32 0.0, %v3260
        %v3262 = vpop.f32.mrf.mxu0
        %3263 = vmatprep.mubr.bf16.mxu0 %v2951
        %3264 = vmatmul.mubr.bf16.gmra.mxu0 %v2950
        %v3265 = vpop.f32.mrf.mxu0
        %v3266 = vadd.f32 0.0, %v3265
        %v3267 = vpop.f32.mrf.mxu0
        %v3268 = vpop.f32.mrf.mxu0
        %v3269 = vadd.f32 0.0, %v3268
        %v3270 = vpop.f32.mrf.mxu0
        %3271 = vmatprep.mubr.bf16.mxu0 %v2954
        %3272 = vmatmul.mubr.bf16.gmra.mxu0 %v2953
        %v3273 = vpop.f32.mrf.mxu0
        %v3274 = vadd.f32 0.0, %v3273
        %v3275 = vpop.f32.mrf.mxu0
        %v3276 = vpop.f32.mrf.mxu0
        %v3277 = vadd.f32 0.0, %v3276
        %v3278 = vpop.f32.mrf.mxu0
        %3279 = vmatprep.mubr.bf16.mxu0 %v2957
        %3280 = vmatmul.mubr.bf16.gmra.mxu0 %v2956
        %v3281 = vpop.f32.mrf.mxu0
        %v3282 = vadd.f32 0.0, %v3281
        %v3283 = vpop.f32.mrf.mxu0
        %v3284 = vpop.f32.mrf.mxu0
        %v3285 = vadd.f32 0.0, %v3284
        %v3286 = vpop.f32.mrf.mxu0
        %3287 = vmatprep.mubr.bf16.mxu0 %v2960
        %3288 = vmatmul.mubr.bf16.gmra.mxu0 %v2959
        %v3289 = vpop.f32.mrf.mxu0
        %v3290 = vadd.f32 0.0, %v3289
        %v3291 = vpop.f32.mrf.mxu0
        %v3292 = vpop.f32.mrf.mxu0
        %v3293 = vadd.f32 0.0, %v3292
        %v3294 = vpop.f32.mrf.mxu0
        %3295 = vmatprep.mubr.bf16.mxu0 %v2963
        %3296 = vmatmul.mubr.bf16.gmra.mxu0 %v2962
        %v3297 = vpop.f32.mrf.mxu0
        %v3298 = vadd.f32 0.0, %v3297
        %v3299 = vpop.f32.mrf.mxu0
        %v3300 = vpop.f32.mrf.mxu0
        %v3301 = vadd.f32 0.0, %v3300
        %v3302 = vpop.f32.mrf.mxu0
        %3303 = vmatprep.mubr.bf16.mxu0 %v2966
        %3304 = vmatmul.mubr.bf16.gmra.mxu0 %v2965
        %v3305 = vpop.f32.mrf.mxu0
        %v3306 = vadd.f32 0.0, %v3305
        %v3307 = vpop.f32.mrf.mxu0
        %v3308 = vpop.f32.mrf.mxu0
        %v3309 = vadd.f32 0.0, %v3308
        %v3310 = vpop.f32.mrf.mxu0
        %3311 = vmatprep.mubr.bf16.mxu0 %v2969
        %3312 = vmatmul.mubr.bf16.gmra.mxu0 %v2968
        %v3313 = vpop.f32.mrf.mxu0
        %v3314 = vadd.f32 0.0, %v3313
        %v3315 = vpop.f32.mrf.mxu0
        %v3316 = vpop.f32.mrf.mxu0
        %v3317 = vadd.f32 0.0, %v3316
        %v3318 = vpop.f32.mrf.mxu0
        %3319 = vmatprep.mubr.bf16.mxu0 %v2972
        %3320 = vmatmul.mubr.bf16.gmra.mxu0 %v2971
        %v3321 = vpop.f32.mrf.mxu0
        %v3322 = vadd.f32 0.0, %v3321
        %v3323 = vpop.f32.mrf.mxu0
        %v3324 = vpop.f32.mrf.mxu0
        %v3325 = vadd.f32 0.0, %v3324
        %v3326 = vpop.f32.mrf.mxu0
        %3327 = vdwg.mxu0
        %3328 = vmatprep.subr.bf16.mxu0 0
        %3329 = vmatpush1.bf16.msra.mxu0 %v3142
        %3330 = vmatprep.subr.bf16.mxu0 0
        %3331 = vmatpush1.bf16.msra.mxu0 %v3141
        %3332 = vmatprep.subr.bf16.mxu0 0
        %3333 = vmatpush1.bf16.msra.mxu0 %v3140
        %3334 = vmatprep.subr.bf16.mxu0 0
        %3335 = vmatpush1.bf16.msra.mxu0 %v3139
        %3336 = vmatprep.subr.bf16.mxu0 0
        %3337 = vmatpush1.bf16.msra.mxu0 %v3138
        %3338 = vmatprep.subr.bf16.mxu0 0
        %3339 = vmatpush1.bf16.msra.mxu0 %v3137
        %3340 = vmatprep.subr.bf16.mxu0 0
        %3341 = vmatpush1.bf16.msra.mxu0 %v3136
        %3342 = vmatprep.subr.bf16.mxu0 0
        %3343 = vmatpush1.bf16.msra.mxu0 %v3135
        %3344 = vmatprep.subr.bf16.mxu0 0
        %3345 = vmatpush2.bf16.msra.mxu0 0
        %3346 = vmatprep.subr.bf16.mxu0 0
        %3347 = vmatpush2.bf16.msra.mxu0 0
        %3348 = vmatprep.subr.bf16.mxu0 0
        %3349 = vmatpush2.bf16.msra.mxu0 0
        %3350 = vmatprep.subr.bf16.mxu0 0
        %3351 = vmatpush2.bf16.msra.mxu0 0
        %3352 = vmatprep.subr.bf16.mxu0 0
        %3353 = vmatpush2.bf16.msra.mxu0 0
        %3354 = vmatprep.subr.bf16.mxu0 0
        %3355 = vmatpush2.bf16.msra.mxu0 0
        %3356 = vmatprep.subr.bf16.mxu0 0
        %3357 = vmatpush2.bf16.msra.mxu0 0
        %3358 = vmatprep.subr.bf16.mxu0 0
        %3359 = vmatpush2.bf16.msra.mxu0 0
        %3360 = vmatprep.mubr.bf16.mxu0 0
        %3361 = vmatmul.mubr.bf16.gmra.mxu0 %v2928
        %v3362 = vpop.f32.mrf.mxu0
        %v3363 = vadd.f32 %v3202, %v3362
        %v3364 = vpop.f32.mrf.mxu0
        %v3365 = vpop.f32.mrf.mxu0
        %v3366 = vadd.f32 %v3205, %v3365
        %v3367 = vpop.f32.mrf.mxu0
        %3368 = vmatprep.mubr.bf16.mxu0 0
        %3369 = vmatmul.mubr.bf16.gmra.mxu0 %v2931
        %v3370 = vpop.f32.mrf.mxu0
        %v3371 = vadd.f32 %v3210, %v3370
        %v3372 = vpop.f32.mrf.mxu0
        %v3373 = vpop.f32.mrf.mxu0
        %v3374 = vadd.f32 %v3213, %v3373
        %v3375 = vpop.f32.mrf.mxu0
        %3376 = vmatprep.mubr.bf16.mxu0 0
        %3377 = vmatmul.mubr.bf16.gmra.mxu0 %v2934
        %v3378 = vpop.f32.mrf.mxu0
        %v3379 = vadd.f32 %v3218, %v3378
        %v3380 = vpop.f32.mrf.mxu0
        %v3381 = vpop.f32.mrf.mxu0
        %v3382 = vadd.f32 %v3221, %v3381
        %v3383 = vpop.f32.mrf.mxu0
        %3384 = vmatprep.mubr.bf16.mxu0 0
        %3385 = vmatmul.mubr.bf16.gmra.mxu0 %v2937
        %v3386 = vpop.f32.mrf.mxu0
        %v3387 = vadd.f32 %v3226, %v3386
        %v3388 = vpop.f32.mrf.mxu0
        %v3389 = vpop.f32.mrf.mxu0
        %v3390 = vadd.f32 %v3229, %v3389
        %v3391 = vpop.f32.mrf.mxu0
        %3392 = vmatprep.mubr.bf16.mxu0 0
        %3393 = vmatmul.mubr.bf16.gmra.mxu0 %v2940
        %v3394 = vpop.f32.mrf.mxu0
        %v3395 = vadd.f32 %v3234, %v3394
        %v3396 = vpop.f32.mrf.mxu0
        %v3397 = vpop.f32.mrf.mxu0
        %v3398 = vadd.f32 %v3237, %v3397
        %v3399 = vpop.f32.mrf.mxu0
        %3400 = vmatprep.mubr.bf16.mxu0 0
        %3401 = vmatmul.mubr.bf16.gmra.mxu0 %v2943
        %v3402 = vpop.f32.mrf.mxu0
        %v3403 = vadd.f32 %v3242, %v3402
        %v3404 = vpop.f32.mrf.mxu0
        %v3405 = vpop.f32.mrf.mxu0
        %v3406 = vadd.f32 %v3245, %v3405
        %v3407 = vpop.f32.mrf.mxu0
        %3408 = vmatprep.mubr.bf16.mxu0 0
        %3409 = vmatmul.mubr.bf16.gmra.mxu0 %v2946
        %v3410 = vpop.f32.mrf.mxu0
        %v3411 = vadd.f32 %v3250, %v3410
        %v3412 = vpop.f32.mrf.mxu0
        %v3413 = vpop.f32.mrf.mxu0
        %v3414 = vadd.f32 %v3253, %v3413
        %v3415 = vpop.f32.mrf.mxu0
        %3416 = vmatprep.mubr.bf16.mxu0 0
        %3417 = vmatmul.mubr.bf16.gmra.mxu0 %v2949
        %v3418 = vpop.f32.mrf.mxu0
        %v3419 = vadd.f32 %v3258, %v3418
        %v3420 = vpop.f32.mrf.mxu0
        %v3421 = vpop.f32.mrf.mxu0
        %v3422 = vadd.f32 %v3261, %v3421
        %v3423 = vpop.f32.mrf.mxu0
        %3424 = vmatprep.mubr.bf16.mxu0 0
        %3425 = vmatmul.mubr.bf16.gmra.mxu0 %v2952
        %v3426 = vpop.f32.mrf.mxu0
        %v3427 = vadd.f32 %v3266, %v3426
        %v3428 = vpop.f32.mrf.mxu0
        %v3429 = vpop.f32.mrf.mxu0
        %v3430 = vadd.f32 %v3269, %v3429
        %v3431 = vpop.f32.mrf.mxu0
        %3432 = vmatprep.mubr.bf16.mxu0 0
        %3433 = vmatmul.mubr.bf16.gmra.mxu0 %v2955
        %v3434 = vpop.f32.mrf.mxu0
        %v3435 = vadd.f32 %v3274, %v3434
        %v3436 = vpop.f32.mrf.mxu0
        %v3437 = vpop.f32.mrf.mxu0
        %v3438 = vadd.f32 %v3277, %v3437
        %v3439 = vpop.f32.mrf.mxu0
        %3440 = vmatprep.mubr.bf16.mxu0 0
        %3441 = vmatmul.mubr.bf16.gmra.mxu0 %v2958
        %v3442 = vpop.f32.mrf.mxu0
        %v3443 = vadd.f32 %v3282, %v3442
        %v3444 = vpop.f32.mrf.mxu0
        %v3445 = vpop.f32.mrf.mxu0
        %v3446 = vadd.f32 %v3285, %v3445
        %v3447 = vpop.f32.mrf.mxu0
        %3448 = vmatprep.mubr.bf16.mxu0 0
        %3449 = vmatmul.mubr.bf16.gmra.mxu0 %v2961
        %v3450 = vpop.f32.mrf.mxu0
        %v3451 = vadd.f32 %v3290, %v3450
        %v3452 = vpop.f32.mrf.mxu0
        %v3453 = vpop.f32.mrf.mxu0
        %v3454 = vadd.f32 %v3293, %v3453
        %v3455 = vpop.f32.mrf.mxu0
        %3456 = vmatprep.mubr.bf16.mxu0 0
        %3457 = vmatmul.mubr.bf16.gmra.mxu0 %v2964
        %v3458 = vpop.f32.mrf.mxu0
        %v3459 = vadd.f32 %v3298, %v3458
        %v3460 = vpop.f32.mrf.mxu0
        %v3461 = vpop.f32.mrf.mxu0
        %v3462 = vadd.f32 %v3301, %v3461
        %v3463 = vpop.f32.mrf.mxu0
        %3464 = vmatprep.mubr.bf16.mxu0 0
        %3465 = vmatmul.mubr.bf16.gmra.mxu0 %v2967
        %v3466 = vpop.f32.mrf.mxu0
        %v3467 = vadd.f32 %v3306, %v3466
        %v3468 = vpop.f32.mrf.mxu0
        %v3469 = vpop.f32.mrf.mxu0
        %v3470 = vadd.f32 %v3309, %v3469
        %v3471 = vpop.f32.mrf.mxu0
        %3472 = vmatprep.mubr.bf16.mxu0 0
        %3473 = vmatmul.mubr.bf16.gmra.mxu0 %v2970
        %v3474 = vpop.f32.mrf.mxu0
        %v3475 = vadd.f32 %v3314, %v3474
        %v3476 = vpop.f32.mrf.mxu0
        %v3477 = vpop.f32.mrf.mxu0
        %v3478 = vadd.f32 %v3317, %v3477
        %v3479 = vpop.f32.mrf.mxu0
        %3480 = vmatprep.mubr.bf16.mxu0 0
        %3481 = vmatmul.mubr.bf16.gmra.mxu0 %v2973
        %v3482 = vpop.f32.mrf.mxu0
        %v3483 = vadd.f32 %v3322, %v3482
        %v3484 = vpop.f32.mrf.mxu0
        %v3485 = vpop.f32.mrf.mxu0
        %v3486 = vadd.f32 %v3325, %v3485
        %v3487 = vpop.f32.mrf.mxu0
        %3488 = vdwg.mxu0
        %v3537 = vunpack.c.l.b16 %v2782
        %v3538 = vunpack.c.l.b16 %v2783
        %v3539 = vunpack.c.l.b16 %v2784
        %v3540 = vunpack.c.l.b16 %v2785
        %v3541 = vunpack.c.l.b16 %v2786
        %v3542 = vunpack.c.l.b16 %v2787
        %v3543 = vunpack.c.l.b16 %v2788
        %v3544 = vunpack.c.l.b16 %v2789
        %v3545 = vunpack.c.l.b16 %v2790
        %v3546 = vunpack.c.l.b16 %v2791
        %v3547 = vunpack.c.l.b16 %v2792
        %v3548 = vunpack.c.l.b16 %v2793
        %v3549 = vunpack.c.l.b16 %v2794
        %v3550 = vunpack.c.l.b16 %v2795
        %v3551 = vunpack.c.l.b16 %v2796
        %v3552 = vunpack.c.l.b16 %v2797
        %v3553 = vunpack.c.l.b16 %v2798
        %v3554 = vunpack.c.l.b16 %v2799
        %v3555 = vunpack.c.l.b16 %v2800
        %v3556 = vunpack.c.l.b16 %v2801
        %v3557 = vunpack.c.l.b16 %v2802
        %v3558 = vunpack.c.l.b16 %v2803
        %v3559 = vunpack.c.l.b16 %v2804
        %v3560 = vunpack.c.l.b16 %v2805
        %v3561 = vunpack.c.l.b16 %v2806
        %v3562 = vunpack.c.l.b16 %v2807
        %v3563 = vunpack.c.l.b16 %v2808
        %v3564 = vunpack.c.l.b16 %v2809
        %v3565 = vunpack.c.l.b16 %v2810
        %v3566 = vunpack.c.l.b16 %v2811
        %v3567 = vunpack.c.l.b16 %v2812
        %v3568 = vunpack.c.l.b16 %v2813
        %v3569 = vunpack.c.l.b16 %v2814
        %v3570 = vunpack.c.l.b16 %v2815
        %v3571 = vunpack.c.l.b16 %v2816
        %v3572 = vunpack.c.l.b16 %v2817
        %v3573 = vunpack.c.l.b16 %v2818
        %v3574 = vunpack.c.l.b16 %v2819
        %v3575 = vunpack.c.l.b16 %v2820
        %v3576 = vunpack.c.l.b16 %v2821
        %v3577 = vunpack.c.l.b16 %v2822
        %v3578 = vunpack.c.l.b16 %v2823
        %v3579 = vunpack.c.l.b16 %v2824
        %v3580 = vunpack.c.l.b16 %v2825
        %v3581 = vunpack.c.l.b16 %v2826
        %v3582 = vunpack.c.l.b16 %v2827
        %v3583 = vunpack.c.l.b16 %v2828
        %v3584 = vunpack.c.l.b16 %v2829
        %v3585 = vpack.c.b16 %v3538, %v3537
        %v3586 = vpack.c.b16 %v3540, %v3539
        %v3587 = vpack.c.b16 %v3542, %v3541
        %v3588 = vpack.c.b16 %v3544, %v3543
        %v3589 = vpack.c.b16 %v3546, %v3545
        %v3590 = vpack.c.b16 %v3548, %v3547
        %v3591 = vpack.c.b16 %v3550, %v3549
        %v3592 = vpack.c.b16 %v3552, %v3551
        %v3593 = vpack.c.b16 %v3554, %v3553
        %v3594 = vpack.c.b16 %v3556, %v3555
        %v3595 = vpack.c.b16 %v3558, %v3557
        %v3596 = vpack.c.b16 %v3560, %v3559
        %v3597 = vpack.c.b16 %v3562, %v3561
        %v3598 = vpack.c.b16 %v3564, %v3563
        %v3599 = vpack.c.b16 %v3566, %v3565
        %v3600 = vpack.c.b16 %v3568, %v3567
        %v3601 = vpack.c.b16 %v3570, %v3569
        %v3602 = vpack.c.b16 %v3572, %v3571
        %v3603 = vpack.c.b16 %v3574, %v3573
        %v3604 = vpack.c.b16 %v3576, %v3575
        %v3605 = vpack.c.b16 %v3578, %v3577
        %v3606 = vpack.c.b16 %v3580, %v3579
        %v3607 = vpack.c.b16 %v3582, %v3581
        %v3608 = vpack.c.b16 %v3584, %v3583
        %3633 = vmatprep.subr.bf16.mxu0 0
        %3634 = vmatpush1.bf16.msra.mxu0 %v3592
        %3635 = vmatprep.subr.bf16.mxu0 0
        %3636 = vmatpush1.bf16.msra.mxu0 %v3591
        %3637 = vmatprep.subr.bf16.mxu0 0
        %3638 = vmatpush1.bf16.msra.mxu0 %v3590
        %3639 = vmatprep.subr.bf16.mxu0 0
        %3640 = vmatpush1.bf16.msra.mxu0 %v3589
        %3641 = vmatprep.subr.bf16.mxu0 0
        %3642 = vmatpush1.bf16.msra.mxu0 %v3588
        %3643 = vmatprep.subr.bf16.mxu0 0
        %3644 = vmatpush1.bf16.msra.mxu0 %v3587
        %3645 = vmatprep.subr.bf16.mxu0 0
        %3646 = vmatpush1.bf16.msra.mxu0 %v3586
        %3647 = vmatprep.subr.bf16.mxu0 0
        %3648 = vmatpush1.bf16.msra.mxu0 %v3585
        %3649 = vmatprep.subr.bf16.mxu0 0
        %3650 = vmatpush2.bf16.msra.mxu0 %v3600
        %3651 = vmatprep.subr.bf16.mxu0 0
        %3652 = vmatpush2.bf16.msra.mxu0 %v3599
        %3653 = vmatprep.subr.bf16.mxu0 0
        %3654 = vmatpush2.bf16.msra.mxu0 %v3598
        %3655 = vmatprep.subr.bf16.mxu0 0
        %3656 = vmatpush2.bf16.msra.mxu0 %v3597
        %3657 = vmatprep.subr.bf16.mxu0 0
        %3658 = vmatpush2.bf16.msra.mxu0 %v3596
        %3659 = vmatprep.subr.bf16.mxu0 0
        %3660 = vmatpush2.bf16.msra.mxu0 %v3595
        %3661 = vmatprep.subr.bf16.mxu0 0
        %3662 = vmatpush2.bf16.msra.mxu0 %v3594
        %3663 = vmatprep.subr.bf16.mxu0 0
        %3664 = vmatpush2.bf16.msra.mxu0 %v3593
        %3665 = vmatprep.mubr.bf16.mxu0 %v2735
        %3666 = vmatmul.mubr.bf16.gmra.mxu0 %v2734
        %v3667 = vpop.f32.mrf.mxu0
        %v3668 = vadd.f32 %v3363, %v3667
        %v3669 = vpop.f32.mrf.mxu0
        %v3670 = vpop.f32.mrf.mxu0
        %v3671 = vadd.f32 %v3366, %v3670
        %v3672 = vpop.f32.mrf.mxu0
        %3673 = vmatprep.mubr.bf16.mxu0 %v2738
        %3674 = vmatmul.mubr.bf16.gmra.mxu0 %v2737
        %v3675 = vpop.f32.mrf.mxu0
        %v3676 = vadd.f32 %v3371, %v3675
        %v3677 = vpop.f32.mrf.mxu0
        %v3678 = vpop.f32.mrf.mxu0
        %v3679 = vadd.f32 %v3374, %v3678
        %v3680 = vpop.f32.mrf.mxu0
        %3681 = vmatprep.mubr.bf16.mxu0 %v2741
        %3682 = vmatmul.mubr.bf16.gmra.mxu0 %v2740
        %v3683 = vpop.f32.mrf.mxu0
        %v3684 = vadd.f32 %v3379, %v3683
        %v3685 = vpop.f32.mrf.mxu0
        %v3686 = vpop.f32.mrf.mxu0
        %v3687 = vadd.f32 %v3382, %v3686
        %v3688 = vpop.f32.mrf.mxu0
        %3689 = vmatprep.mubr.bf16.mxu0 %v2744
        %3690 = vmatmul.mubr.bf16.gmra.mxu0 %v2743
        %v3691 = vpop.f32.mrf.mxu0
        %v3692 = vadd.f32 %v3387, %v3691
        %v3693 = vpop.f32.mrf.mxu0
        %v3694 = vpop.f32.mrf.mxu0
        %v3695 = vadd.f32 %v3390, %v3694
        %v3696 = vpop.f32.mrf.mxu0
        %3697 = vmatprep.mubr.bf16.mxu0 %v2747
        %3698 = vmatmul.mubr.bf16.gmra.mxu0 %v2746
        %v3699 = vpop.f32.mrf.mxu0
        %v3700 = vadd.f32 %v3395, %v3699
        %v3701 = vpop.f32.mrf.mxu0
        %v3702 = vpop.f32.mrf.mxu0
        %v3703 = vadd.f32 %v3398, %v3702
        %v3704 = vpop.f32.mrf.mxu0
        %3705 = vmatprep.mubr.bf16.mxu0 %v2750
        %3706 = vmatmul.mubr.bf16.gmra.mxu0 %v2749
        %v3707 = vpop.f32.mrf.mxu0
        %v3708 = vadd.f32 %v3403, %v3707
        %v3709 = vpop.f32.mrf.mxu0
        %v3710 = vpop.f32.mrf.mxu0
        %v3711 = vadd.f32 %v3406, %v3710
        %v3712 = vpop.f32.mrf.mxu0
        %3713 = vmatprep.mubr.bf16.mxu0 %v2753
        %3714 = vmatmul.mubr.bf16.gmra.mxu0 %v2752
        %v3715 = vpop.f32.mrf.mxu0
        %v3716 = vadd.f32 %v3411, %v3715
        %v3717 = vpop.f32.mrf.mxu0
        %v3718 = vpop.f32.mrf.mxu0
        %v3719 = vadd.f32 %v3414, %v3718
        %v3720 = vpop.f32.mrf.mxu0
        %3721 = vmatprep.mubr.bf16.mxu0 %v2756
        %3722 = vmatmul.mubr.bf16.gmra.mxu0 %v2755
        %v3723 = vpop.f32.mrf.mxu0
        %v3724 = vadd.f32 %v3419, %v3723
        %v3725 = vpop.f32.mrf.mxu0
        %v3726 = vpop.f32.mrf.mxu0
        %v3727 = vadd.f32 %v3422, %v3726
        %v3728 = vpop.f32.mrf.mxu0
        %3729 = vmatprep.mubr.bf16.mxu0 %v2759
        %3730 = vmatmul.mubr.bf16.gmra.mxu0 %v2758
        %v3731 = vpop.f32.mrf.mxu0
        %v3732 = vadd.f32 %v3427, %v3731
        %v3733 = vpop.f32.mrf.mxu0
        %v3734 = vpop.f32.mrf.mxu0
        %v3735 = vadd.f32 %v3430, %v3734
        %v3736 = vpop.f32.mrf.mxu0
        %3737 = vmatprep.mubr.bf16.mxu0 %v2762
        %3738 = vmatmul.mubr.bf16.gmra.mxu0 %v2761
        %v3739 = vpop.f32.mrf.mxu0
        %v3740 = vadd.f32 %v3435, %v3739
        %v3741 = vpop.f32.mrf.mxu0
        %v3742 = vpop.f32.mrf.mxu0
        %v3743 = vadd.f32 %v3438, %v3742
        %v3744 = vpop.f32.mrf.mxu0
        %3745 = vmatprep.mubr.bf16.mxu0 %v2765
        %3746 = vmatmul.mubr.bf16.gmra.mxu0 %v2764
        %v3747 = vpop.f32.mrf.mxu0
        %v3748 = vadd.f32 %v3443, %v3747
        %v3749 = vpop.f32.mrf.mxu0
        %v3750 = vpop.f32.mrf.mxu0
        %v3751 = vadd.f32 %v3446, %v3750
        %v3752 = vpop.f32.mrf.mxu0
        %3753 = vmatprep.mubr.bf16.mxu0 %v2768
        %3754 = vmatmul.mubr.bf16.gmra.mxu0 %v2767
        %v3755 = vpop.f32.mrf.mxu0
        %v3756 = vadd.f32 %v3451, %v3755
        %v3757 = vpop.f32.mrf.mxu0
        %v3758 = vpop.f32.mrf.mxu0
        %v3759 = vadd.f32 %v3454, %v3758
        %v3760 = vpop.f32.mrf.mxu0
        %3761 = vmatprep.mubr.bf16.mxu0 %v2771
        %3762 = vmatmul.mubr.bf16.gmra.mxu0 %v2770
        %v3763 = vpop.f32.mrf.mxu0
        %v3764 = vadd.f32 %v3459, %v3763
        %v3765 = vpop.f32.mrf.mxu0
        %v3766 = vpop.f32.mrf.mxu0
        %v3767 = vadd.f32 %v3462, %v3766
        %v3768 = vpop.f32.mrf.mxu0
        %3769 = vmatprep.mubr.bf16.mxu0 %v2774
        %3770 = vmatmul.mubr.bf16.gmra.mxu0 %v2773
        %v3771 = vpop.f32.mrf.mxu0
        %v3772 = vadd.f32 %v3467, %v3771
        %v3773 = vpop.f32.mrf.mxu0
        %v3774 = vpop.f32.mrf.mxu0
        %v3775 = vadd.f32 %v3470, %v3774
        %v3776 = vpop.f32.mrf.mxu0
        %3777 = vmatprep.mubr.bf16.mxu0 %v2777
        %3778 = vmatmul.mubr.bf16.gmra.mxu0 %v2776
        %v3779 = vpop.f32.mrf.mxu0
        %v3780 = vadd.f32 %v3475, %v3779
        %v3781 = vpop.f32.mrf.mxu0
        %v3782 = vpop.f32.mrf.mxu0
        %v3783 = vadd.f32 %v3478, %v3782
        %v3784 = vpop.f32.mrf.mxu0
        %3785 = vmatprep.mubr.bf16.mxu0 %v2780
        %3786 = vmatmul.mubr.bf16.gmra.mxu0 %v2779
        %v3787 = vpop.f32.mrf.mxu0
        %v3788 = vadd.f32 %v3483, %v3787
        %v3789 = vpop.f32.mrf.mxu0
        %v3790 = vpop.f32.mrf.mxu0
        %v3791 = vadd.f32 %v3486, %v3790
        %v3792 = vpop.f32.mrf.mxu0
        %3793 = vdwg.mxu0
        %3794 = vmatprep.subr.bf16.mxu0 0
        %3795 = vmatpush1.bf16.msra.mxu0 %v3608
        %3796 = vmatprep.subr.bf16.mxu0 0
        %3797 = vmatpush1.bf16.msra.mxu0 %v3607
        %3798 = vmatprep.subr.bf16.mxu0 0
        %3799 = vmatpush1.bf16.msra.mxu0 %v3606
        %3800 = vmatprep.subr.bf16.mxu0 0
        %3801 = vmatpush1.bf16.msra.mxu0 %v3605
        %3802 = vmatprep.subr.bf16.mxu0 0
        %3803 = vmatpush1.bf16.msra.mxu0 %v3604
        %3804 = vmatprep.subr.bf16.mxu0 0
        %3805 = vmatpush1.bf16.msra.mxu0 %v3603
        %3806 = vmatprep.subr.bf16.mxu0 0
        %3807 = vmatpush1.bf16.msra.mxu0 %v3602
        %3808 = vmatprep.subr.bf16.mxu0 0
        %3809 = vmatpush1.bf16.msra.mxu0 %v3601
        %3810 = vmatprep.subr.bf16.mxu0 0
        %3811 = vmatpush2.bf16.msra.mxu0 0
        %3812 = vmatprep.subr.bf16.mxu0 0
        %3813 = vmatpush2.bf16.msra.mxu0 0
        %3814 = vmatprep.subr.bf16.mxu0 0
        %3815 = vmatpush2.bf16.msra.mxu0 0
        %3816 = vmatprep.subr.bf16.mxu0 0
        %3817 = vmatpush2.bf16.msra.mxu0 0
        %3818 = vmatprep.subr.bf16.mxu0 0
        %3819 = vmatpush2.bf16.msra.mxu0 0
        %3820 = vmatprep.subr.bf16.mxu0 0
        %3821 = vmatpush2.bf16.msra.mxu0 0
        %3822 = vmatprep.subr.bf16.mxu0 0
        %3823 = vmatpush2.bf16.msra.mxu0 0
        %3824 = vmatprep.subr.bf16.mxu0 0
        %3825 = vmatpush2.bf16.msra.mxu0 0
        %3826 = vmatprep.mubr.bf16.mxu0 0
        %3827 = vmatmul.mubr.bf16.gmra.mxu0 %v2736
        %v3828 = vpop.f32.mrf.mxu0
        %v3829 = vadd.f32 %v3668, %v3828
        %v3830 = vpop.f32.mrf.mxu0
        %v3831 = vpop.f32.mrf.mxu0
        %v3832 = vadd.f32 %v3671, %v3831
        %v3833 = vpop.f32.mrf.mxu0
        %3834 = vmatprep.mubr.bf16.mxu0 0
        %3835 = vmatmul.mubr.bf16.gmra.mxu0 %v2739
        %v3836 = vpop.f32.mrf.mxu0
        %v3837 = vadd.f32 %v3676, %v3836
        %v3838 = vpop.f32.mrf.mxu0
        %v3839 = vpop.f32.mrf.mxu0
        %v3840 = vadd.f32 %v3679, %v3839
        %v3841 = vpop.f32.mrf.mxu0
        %3842 = vmatprep.mubr.bf16.mxu0 0
        %3843 = vmatmul.mubr.bf16.gmra.mxu0 %v2742
        %v3844 = vpop.f32.mrf.mxu0
        %v3845 = vadd.f32 %v3684, %v3844
        %v3846 = vpop.f32.mrf.mxu0
        %v3847 = vpop.f32.mrf.mxu0
        %v3848 = vadd.f32 %v3687, %v3847
        %v3849 = vpop.f32.mrf.mxu0
        %3850 = vmatprep.mubr.bf16.mxu0 0
        %3851 = vmatmul.mubr.bf16.gmra.mxu0 %v2745
        %v3852 = vpop.f32.mrf.mxu0
        %v3853 = vadd.f32 %v3692, %v3852
        %v3854 = vpop.f32.mrf.mxu0
        %v3855 = vpop.f32.mrf.mxu0
        %v3856 = vadd.f32 %v3695, %v3855
        %v3857 = vpop.f32.mrf.mxu0
        %3858 = vmatprep.mubr.bf16.mxu0 0
        %3859 = vmatmul.mubr.bf16.gmra.mxu0 %v2748
        %v3860 = vpop.f32.mrf.mxu0
        %v3861 = vadd.f32 %v3700, %v3860
        %v3862 = vpop.f32.mrf.mxu0
        %v3863 = vpop.f32.mrf.mxu0
        %v3864 = vadd.f32 %v3703, %v3863
        %v3865 = vpop.f32.mrf.mxu0
        %3866 = vmatprep.mubr.bf16.mxu0 0
        %3867 = vmatmul.mubr.bf16.gmra.mxu0 %v2751
        %v3868 = vpop.f32.mrf.mxu0
        %v3869 = vadd.f32 %v3708, %v3868
        %v3870 = vpop.f32.mrf.mxu0
        %v3871 = vpop.f32.mrf.mxu0
        %v3872 = vadd.f32 %v3711, %v3871
        %v3873 = vpop.f32.mrf.mxu0
        %3874 = vmatprep.mubr.bf16.mxu0 0
        %3875 = vmatmul.mubr.bf16.gmra.mxu0 %v2754
        %v3876 = vpop.f32.mrf.mxu0
        %v3877 = vadd.f32 %v3716, %v3876
        %v3878 = vpop.f32.mrf.mxu0
        %v3879 = vpop.f32.mrf.mxu0
        %v3880 = vadd.f32 %v3719, %v3879
        %v3881 = vpop.f32.mrf.mxu0
        %3882 = vmatprep.mubr.bf16.mxu0 0
        %3883 = vmatmul.mubr.bf16.gmra.mxu0 %v2757
        %v3884 = vpop.f32.mrf.mxu0
        %v3885 = vadd.f32 %v3724, %v3884
        %v3886 = vpop.f32.mrf.mxu0
        %v3887 = vpop.f32.mrf.mxu0
        %v3888 = vadd.f32 %v3727, %v3887
        %v3889 = vpop.f32.mrf.mxu0
        %3890 = vmatprep.mubr.bf16.mxu0 0
        %3891 = vmatmul.mubr.bf16.gmra.mxu0 %v2760
        %v3892 = vpop.f32.mrf.mxu0
        %v3893 = vadd.f32 %v3732, %v3892
        %v3894 = vpop.f32.mrf.mxu0
        %v3895 = vpop.f32.mrf.mxu0
        %v3896 = vadd.f32 %v3735, %v3895
        %v3897 = vpop.f32.mrf.mxu0
        %3898 = vmatprep.mubr.bf16.mxu0 0
        %3899 = vmatmul.mubr.bf16.gmra.mxu0 %v2763
        %v3900 = vpop.f32.mrf.mxu0
        %v3901 = vadd.f32 %v3740, %v3900
        %v3902 = vpop.f32.mrf.mxu0
        %v3903 = vpop.f32.mrf.mxu0
        %v3904 = vadd.f32 %v3743, %v3903
        %v3905 = vpop.f32.mrf.mxu0
        %3906 = vmatprep.mubr.bf16.mxu0 0
        %3907 = vmatmul.mubr.bf16.gmra.mxu0 %v2766
        %v3908 = vpop.f32.mrf.mxu0
        %v3909 = vadd.f32 %v3748, %v3908
        %v3910 = vpop.f32.mrf.mxu0
        %v3911 = vpop.f32.mrf.mxu0
        %v3912 = vadd.f32 %v3751, %v3911
        %v3913 = vpop.f32.mrf.mxu0
        %3914 = vmatprep.mubr.bf16.mxu0 0
        %3915 = vmatmul.mubr.bf16.gmra.mxu0 %v2769
        %v3916 = vpop.f32.mrf.mxu0
        %v3917 = vadd.f32 %v3756, %v3916
        %v3918 = vpop.f32.mrf.mxu0
        %v3919 = vpop.f32.mrf.mxu0
        %v3920 = vadd.f32 %v3759, %v3919
        %v3921 = vpop.f32.mrf.mxu0
        %3922 = vmatprep.mubr.bf16.mxu0 0
        %3923 = vmatmul.mubr.bf16.gmra.mxu0 %v2772
        %v3924 = vpop.f32.mrf.mxu0
        %v3925 = vadd.f32 %v3764, %v3924
        %v3926 = vpop.f32.mrf.mxu0
        %v3927 = vpop.f32.mrf.mxu0
        %v3928 = vadd.f32 %v3767, %v3927
        %v3929 = vpop.f32.mrf.mxu0
        %3930 = vmatprep.mubr.bf16.mxu0 0
        %3931 = vmatmul.mubr.bf16.gmra.mxu0 %v2775
        %v3932 = vpop.f32.mrf.mxu0
        %v3933 = vadd.f32 %v3772, %v3932
        %v3934 = vpop.f32.mrf.mxu0
        %v3935 = vpop.f32.mrf.mxu0
        %v3936 = vadd.f32 %v3775, %v3935
        %v3937 = vpop.f32.mrf.mxu0
        %3938 = vmatprep.mubr.bf16.mxu0 0
        %3939 = vmatmul.mubr.bf16.gmra.mxu0 %v2778
        %v3940 = vpop.f32.mrf.mxu0
        %v3941 = vadd.f32 %v3780, %v3940
        %v3942 = vpop.f32.mrf.mxu0
        %v3943 = vpop.f32.mrf.mxu0
        %v3944 = vadd.f32 %v3783, %v3943
        %v3945 = vpop.f32.mrf.mxu0
        %3946 = vmatprep.mubr.bf16.mxu0 0
        %3947 = vmatmul.mubr.bf16.gmra.mxu0 %v2781
        %v3948 = vpop.f32.mrf.mxu0
        %v3949 = vadd.f32 %v3788, %v3948
        %v3950 = vpop.f32.mrf.mxu0
        %v3951 = vpop.f32.mrf.mxu0
        %v3952 = vadd.f32 %v3791, %v3951
        %v3953 = vpop.f32.mrf.mxu0
        %3954 = vdwg.mxu0
        %s3955 = scalar_lea.vmem [#allocation3], 48
        %v3956 = vld [vmem:[%s3955] sm:$0xff]
        %v3957 = vld [vmem:[%s3955 + $0x8] sm:$0xff]
        %v3958 = vld [vmem:[%s3955 + $0x18] sm:$0xff]
        %v3959 = vld [vmem:[%s3955 + $0x20] sm:$0xff]
        %v3960 = vld [vmem:[%s3955 + $0x30] sm:$0xff]
        %v3961 = vld [vmem:[%s3955 + $0x38] sm:$0xff]
        %v3962 = vld [vmem:[%s3955 + $0x48] sm:$0xff]
        %v3963 = vld [vmem:[%s3955 + $0x50] sm:$0xff]
        %v3964 = vld [vmem:[%s3955 + $0x60] sm:$0xff]
        %v3965 = vld [vmem:[%s3955 + $0x68] sm:$0xff]
        %v3966 = vld [vmem:[%s3955 + $0x78] sm:$0xff]
        %v3967 = vld [vmem:[%s3955 + $0x80] sm:$0xff]
        %v3968 = vld [vmem:[%s3955 + $0x90] sm:$0xff]
        %v3969 = vld [vmem:[%s3955 + $0x98] sm:$0xff]
        %v3970 = vld [vmem:[%s3955 + $0xa8] sm:$0xff]
        %v3971 = vld [vmem:[%s3955 + $0xb0] sm:$0xff]
        %v3972 = vld [vmem:[%s3955 + $0xc0] sm:$0xff]
        %v3973 = vld [vmem:[%s3955 + $0xc8] sm:$0xff]
        %v3974 = vld [vmem:[%s3955 + $0xd8] sm:$0xff]
        %v3975 = vld [vmem:[%s3955 + $0xe0] sm:$0xff]
        %v3976 = vld [vmem:[%s3955 + $0xf0] sm:$0xff]
        %v3977 = vld [vmem:[%s3955 + $0xf8] sm:$0xff]
        %v3978 = vld [vmem:[%s3955 + $0x108] sm:$0xff]
        %v3979 = vld [vmem:[%s3955 + $0x110] sm:$0xff]
        %v3980 = vld [vmem:[%s3955 + $0x120] sm:$0xff]
        %v3981 = vld [vmem:[%s3955 + $0x128] sm:$0xff]
        %v3982 = vld [vmem:[%s3955 + $0x138] sm:$0xff]
        %v3983 = vld [vmem:[%s3955 + $0x140] sm:$0xff]
        %v3984 = vld [vmem:[%s3955 + $0x150] sm:$0xff]
        %v3985 = vld [vmem:[%s3955 + $0x158] sm:$0xff]
        %v3986 = vld [vmem:[%s3955 + $0x168] sm:$0xff]
        %v3987 = vld [vmem:[%s3955 + $0x170] sm:$0xff]
        %v3988 = vld [vmem:[%s3955 + $0x1] sm:$0xff]
        %v3989 = vld [vmem:[%s3955 + $0x9] sm:$0xff]
        %v3990 = vld [vmem:[%s3955 + $0x19] sm:$0xff]
        %v3991 = vld [vmem:[%s3955 + $0x21] sm:$0xff]
        %v3992 = vld [vmem:[%s3955 + $0x31] sm:$0xff]
        %v3993 = vld [vmem:[%s3955 + $0x39] sm:$0xff]
        %v3994 = vld [vmem:[%s3955 + $0x49] sm:$0xff]
        %v3995 = vld [vmem:[%s3955 + $0x51] sm:$0xff]
        %v3996 = vld [vmem:[%s3955 + $0x61] sm:$0xff]
        %v3997 = vld [vmem:[%s3955 + $0x69] sm:$0xff]
        %v3998 = vld [vmem:[%s3955 + $0x79] sm:$0xff]
        %v3999 = vld [vmem:[%s3955 + $0x81] sm:$0xff]
        %v4000 = vld [vmem:[%s3955 + $0x91] sm:$0xff]
        %v4001 = vld [vmem:[%s3955 + $0x99] sm:$0xff]
        %v4002 = vld [vmem:[%s3955 + $0xa9] sm:$0xff]
        %v4003 = vld [vmem:[%s3955 + $0xb1] sm:$0xff]
        %v4004 = vld [vmem:[%s3955 + $0xc1] sm:$0xff]
        %v4005 = vld [vmem:[%s3955 + $0xc9] sm:$0xff]
        %v4006 = vld [vmem:[%s3955 + $0xd9] sm:$0xff]
        %v4007 = vld [vmem:[%s3955 + $0xe1] sm:$0xff]
        %v4008 = vld [vmem:[%s3955 + $0xf1] sm:$0xff]
        %v4009 = vld [vmem:[%s3955 + $0xf9] sm:$0xff]
        %v4010 = vld [vmem:[%s3955 + $0x109] sm:$0xff]
        %v4011 = vld [vmem:[%s3955 + $0x111] sm:$0xff]
        %v4012 = vld [vmem:[%s3955 + $0x121] sm:$0xff]
        %v4013 = vld [vmem:[%s3955 + $0x129] sm:$0xff]
        %v4014 = vld [vmem:[%s3955 + $0x139] sm:$0xff]
        %v4015 = vld [vmem:[%s3955 + $0x141] sm:$0xff]
        %v4016 = vld [vmem:[%s3955 + $0x151] sm:$0xff]
        %v4017 = vld [vmem:[%s3955 + $0x159] sm:$0xff]
        %v4018 = vld [vmem:[%s3955 + $0x169] sm:$0xff]
        %v4019 = vld [vmem:[%s3955 + $0x171] sm:$0xff]
        %v4020 = vld [vmem:[%s3955 + $0x2] sm:$0xff]
        %v4021 = vld [vmem:[%s3955 + $0xa] sm:$0xff]
        %v4022 = vld [vmem:[%s3955 + $0x1a] sm:$0xff]
        %v4023 = vld [vmem:[%s3955 + $0x22] sm:$0xff]
        %v4024 = vld [vmem:[%s3955 + $0x32] sm:$0xff]
        %v4025 = vld [vmem:[%s3955 + $0x3a] sm:$0xff]
        %v4026 = vld [vmem:[%s3955 + $0x4a] sm:$0xff]
        %v4027 = vld [vmem:[%s3955 + $0x52] sm:$0xff]
        %v4028 = vld [vmem:[%s3955 + $0x62] sm:$0xff]
        %v4029 = vld [vmem:[%s3955 + $0x6a] sm:$0xff]
        %v4030 = vld [vmem:[%s3955 + $0x7a] sm:$0xff]
        %v4031 = vld [vmem:[%s3955 + $0x82] sm:$0xff]
        %v4032 = vld [vmem:[%s3955 + $0x92] sm:$0xff]
        %v4033 = vld [vmem:[%s3955 + $0x9a] sm:$0xff]
        %v4034 = vld [vmem:[%s3955 + $0xaa] sm:$0xff]
        %v4035 = vld [vmem:[%s3955 + $0xb2] sm:$0xff]
        %v4036 = vld [vmem:[%s3955 + $0xc2] sm:$0xff]
        %v4037 = vld [vmem:[%s3955 + $0xca] sm:$0xff]
        %v4038 = vld [vmem:[%s3955 + $0xda] sm:$0xff]
        %v4039 = vld [vmem:[%s3955 + $0xe2] sm:$0xff]
        %v4040 = vld [vmem:[%s3955 + $0xf2] sm:$0xff]
        %v4041 = vld [vmem:[%s3955 + $0xfa] sm:$0xff]
        %v4042 = vld [vmem:[%s3955 + $0x10a] sm:$0xff]
        %v4043 = vld [vmem:[%s3955 + $0x112] sm:$0xff]
        %v4044 = vld [vmem:[%s3955 + $0x122] sm:$0xff]
        %v4045 = vld [vmem:[%s3955 + $0x12a] sm:$0xff]
        %v4046 = vld [vmem:[%s3955 + $0x13a] sm:$0xff]
        %v4047 = vld [vmem:[%s3955 + $0x142] sm:$0xff]
        %v4048 = vld [vmem:[%s3955 + $0x152] sm:$0xff]
        %v4049 = vld [vmem:[%s3955 + $0x15a] sm:$0xff]
        %v4050 = vld [vmem:[%s3955 + $0x16a] sm:$0xff]
        %v4051 = vld [vmem:[%s3955 + $0x172] sm:$0xff]
        %v4052 = vpack.c.bf16 %v3957, %v3956
        %v4053 = vpack.c.bf16 %v3989, %v3988
        %v4054 = vpack.c.bf16 %v4021, %v4020
        %v4055 = vpack.c.bf16 %v3959, %v3958
        %v4056 = vpack.c.bf16 %v3991, %v3990
        %v4057 = vpack.c.bf16 %v4023, %v4022
        %v4058 = vpack.c.bf16 %v3961, %v3960
        %v4059 = vpack.c.bf16 %v3993, %v3992
        %v4060 = vpack.c.bf16 %v4025, %v4024
        %v4061 = vpack.c.bf16 %v3963, %v3962
        %v4062 = vpack.c.bf16 %v3995, %v3994
        %v4063 = vpack.c.bf16 %v4027, %v4026
        %v4064 = vpack.c.bf16 %v3965, %v3964
        %v4065 = vpack.c.bf16 %v3997, %v3996
        %v4066 = vpack.c.bf16 %v4029, %v4028
        %v4067 = vpack.c.bf16 %v3967, %v3966
        %v4068 = vpack.c.bf16 %v3999, %v3998
        %v4069 = vpack.c.bf16 %v4031, %v4030
        %v4070 = vpack.c.bf16 %v3969, %v3968
        %v4071 = vpack.c.bf16 %v4001, %v4000
        %v4072 = vpack.c.bf16 %v4033, %v4032
        %v4073 = vpack.c.bf16 %v3971, %v3970
        %v4074 = vpack.c.bf16 %v4003, %v4002
        %v4075 = vpack.c.bf16 %v4035, %v4034
        %v4076 = vpack.c.bf16 %v3973, %v3972
        %v4077 = vpack.c.bf16 %v4005, %v4004
        %v4078 = vpack.c.bf16 %v4037, %v4036
        %v4079 = vpack.c.bf16 %v3975, %v3974
        %v4080 = vpack.c.bf16 %v4007, %v4006
        %v4081 = vpack.c.bf16 %v4039, %v4038
        %v4082 = vpack.c.bf16 %v3977, %v3976
        %v4083 = vpack.c.bf16 %v4009, %v4008
        %v4084 = vpack.c.bf16 %v4041, %v4040
        %v4085 = vpack.c.bf16 %v3979, %v3978
        %v4086 = vpack.c.bf16 %v4011, %v4010
        %v4087 = vpack.c.bf16 %v4043, %v4042
        %v4088 = vpack.c.bf16 %v3981, %v3980
        %v4089 = vpack.c.bf16 %v4013, %v4012
        %v4090 = vpack.c.bf16 %v4045, %v4044
        %v4091 = vpack.c.bf16 %v3983, %v3982
        %v4092 = vpack.c.bf16 %v4015, %v4014
        %v4093 = vpack.c.bf16 %v4047, %v4046
        %v4094 = vpack.c.bf16 %v3985, %v3984
        %v4095 = vpack.c.bf16 %v4017, %v4016
        %v4096 = vpack.c.bf16 %v4049, %v4048
        %v4097 = vpack.c.bf16 %v3987, %v3986
        %v4098 = vpack.c.bf16 %v4019, %v4018
        %v4099 = vpack.c.bf16 %v4051, %v4050
        %s4100 = scalar_lea.vmem [#allocation10], 384
        %v4101 = vld [vmem:[%s4100] sm:$0xf]
        %v4102 = vld [vmem:[%s4100 + $0x4] sm:$0xf]
        %v4103 = vld [vmem:[%s4100 + $0x8] sm:$0xf]
        %v4104 = vld [vmem:[%s4100 + $0xc] sm:$0xf]
        %v4105 = vld [vmem:[%s4100 + $0x10] sm:$0xf]
        %v4106 = vld [vmem:[%s4100 + $0x14] sm:$0xf]
        %v4107 = vld [vmem:[%s4100 + $0x18] sm:$0xf]
        %v4108 = vld [vmem:[%s4100 + $0x1c] sm:$0xf]
        %v4109 = vld [vmem:[%s4100 + $0x20] sm:$0xf]
        %v4110 = vld [vmem:[%s4100 + $0x24] sm:$0xf]
        %v4111 = vld [vmem:[%s4100 + $0x28] sm:$0xf]
        %v4112 = vld [vmem:[%s4100 + $0x2c] sm:$0xf]
        %v4113 = vld [vmem:[%s4100 + $0x30] sm:$0xf]
        %v4114 = vld [vmem:[%s4100 + $0x34] sm:$0xf]
        %v4115 = vld [vmem:[%s4100 + $0x38] sm:$0xf]
        %v4116 = vld [vmem:[%s4100 + $0x3c] sm:$0xf]
        %v4117 = vld [vmem:[%s4100 + $0x40] sm:$0xf]
        %v4118 = vld [vmem:[%s4100 + $0x44] sm:$0xf]
        %v4119 = vld [vmem:[%s4100 + $0x48] sm:$0xf]
        %v4120 = vld [vmem:[%s4100 + $0x4c] sm:$0xf]
        %v4121 = vld [vmem:[%s4100 + $0x50] sm:$0xf]
        %v4122 = vld [vmem:[%s4100 + $0x54] sm:$0xf]
        %v4123 = vld [vmem:[%s4100 + $0x58] sm:$0xf]
        %v4124 = vld [vmem:[%s4100 + $0x5c] sm:$0xf]
        %v4125 = vld [vmem:[%s4100 + $0x60] sm:$0xf]
        %v4126 = vld [vmem:[%s4100 + $0x64] sm:$0xf]
        %v4127 = vld [vmem:[%s4100 + $0x68] sm:$0xf]
        %v4128 = vld [vmem:[%s4100 + $0x6c] sm:$0xf]
        %v4129 = vld [vmem:[%s4100 + $0x70] sm:$0xf]
        %v4130 = vld [vmem:[%s4100 + $0x74] sm:$0xf]
        %v4131 = vld [vmem:[%s4100 + $0x78] sm:$0xf]
        %v4132 = vld [vmem:[%s4100 + $0x7c] sm:$0xf]
        %v4133 = vld [vmem:[%s4100 + $0x80] sm:$0xf]
        %v4134 = vld [vmem:[%s4100 + $0x84] sm:$0xf]
        %v4135 = vld [vmem:[%s4100 + $0x88] sm:$0xf]
        %v4136 = vld [vmem:[%s4100 + $0x8c] sm:$0xf]
        %v4137 = vld [vmem:[%s4100 + $0x90] sm:$0xf]
        %v4138 = vld [vmem:[%s4100 + $0x94] sm:$0xf]
        %v4139 = vld [vmem:[%s4100 + $0x98] sm:$0xf]
        %v4140 = vld [vmem:[%s4100 + $0x9c] sm:$0xf]
        %v4141 = vld [vmem:[%s4100 + $0xa0] sm:$0xf]
        %v4142 = vld [vmem:[%s4100 + $0xa4] sm:$0xf]
        %v4143 = vld [vmem:[%s4100 + $0xa8] sm:$0xf]
        %v4144 = vld [vmem:[%s4100 + $0xac] sm:$0xf]
        %v4145 = vld [vmem:[%s4100 + $0xb0] sm:$0xf]
        %v4146 = vld [vmem:[%s4100 + $0xb4] sm:$0xf]
        %v4147 = vld [vmem:[%s4100 + $0xb8] sm:$0xf]
        %v4148 = vld [vmem:[%s4100 + $0xbc] sm:$0xf]
        %v4197 = vunpack.c.l.b16 %v4101
        %v4198 = vunpack.c.l.b16 %v4102
        %v4199 = vunpack.c.l.b16 %v4103
        %v4200 = vunpack.c.l.b16 %v4104
        %v4201 = vunpack.c.l.b16 %v4105
        %v4202 = vunpack.c.l.b16 %v4106
        %v4203 = vunpack.c.l.b16 %v4107
        %v4204 = vunpack.c.l.b16 %v4108
        %v4205 = vunpack.c.l.b16 %v4109
        %v4206 = vunpack.c.l.b16 %v4110
        %v4207 = vunpack.c.l.b16 %v4111
        %v4208 = vunpack.c.l.b16 %v4112
        %v4209 = vunpack.c.l.b16 %v4113
        %v4210 = vunpack.c.l.b16 %v4114
        %v4211 = vunpack.c.l.b16 %v4115
        %v4212 = vunpack.c.l.b16 %v4116
        %v4213 = vunpack.c.l.b16 %v4117
        %v4214 = vunpack.c.l.b16 %v4118
        %v4215 = vunpack.c.l.b16 %v4119
        %v4216 = vunpack.c.l.b16 %v4120
        %v4217 = vunpack.c.l.b16 %v4121
        %v4218 = vunpack.c.l.b16 %v4122
        %v4219 = vunpack.c.l.b16 %v4123
        %v4220 = vunpack.c.l.b16 %v4124
        %v4221 = vunpack.c.l.b16 %v4125
        %v4222 = vunpack.c.l.b16 %v4126
        %v4223 = vunpack.c.l.b16 %v4127
        %v4224 = vunpack.c.l.b16 %v4128
        %v4225 = vunpack.c.l.b16 %v4129
        %v4226 = vunpack.c.l.b16 %v4130
        %v4227 = vunpack.c.l.b16 %v4131
        %v4228 = vunpack.c.l.b16 %v4132
        %v4229 = vunpack.c.l.b16 %v4133
        %v4230 = vunpack.c.l.b16 %v4134
        %v4231 = vunpack.c.l.b16 %v4135
        %v4232 = vunpack.c.l.b16 %v4136
        %v4233 = vunpack.c.l.b16 %v4137
        %v4234 = vunpack.c.l.b16 %v4138
        %v4235 = vunpack.c.l.b16 %v4139
        %v4236 = vunpack.c.l.b16 %v4140
        %v4237 = vunpack.c.l.b16 %v4141
        %v4238 = vunpack.c.l.b16 %v4142
        %v4239 = vunpack.c.l.b16 %v4143
        %v4240 = vunpack.c.l.b16 %v4144
        %v4241 = vunpack.c.l.b16 %v4145
        %v4242 = vunpack.c.l.b16 %v4146
        %v4243 = vunpack.c.l.b16 %v4147
        %v4244 = vunpack.c.l.b16 %v4148
        %v4245 = vpack.c.b16 %v4198, %v4197
        %v4246 = vpack.c.b16 %v4200, %v4199
        %v4247 = vpack.c.b16 %v4202, %v4201
        %v4248 = vpack.c.b16 %v4204, %v4203
        %v4249 = vpack.c.b16 %v4206, %v4205
        %v4250 = vpack.c.b16 %v4208, %v4207
        %v4251 = vpack.c.b16 %v4210, %v4209
        %v4252 = vpack.c.b16 %v4212, %v4211
        %v4253 = vpack.c.b16 %v4214, %v4213
        %v4254 = vpack.c.b16 %v4216, %v4215
        %v4255 = vpack.c.b16 %v4218, %v4217
        %v4256 = vpack.c.b16 %v4220, %v4219
        %v4257 = vpack.c.b16 %v4222, %v4221
        %v4258 = vpack.c.b16 %v4224, %v4223
        %v4259 = vpack.c.b16 %v4226, %v4225
        %v4260 = vpack.c.b16 %v4228, %v4227
        %v4261 = vpack.c.b16 %v4230, %v4229
        %v4262 = vpack.c.b16 %v4232, %v4231
        %v4263 = vpack.c.b16 %v4234, %v4233
        %v4264 = vpack.c.b16 %v4236, %v4235
        %v4265 = vpack.c.b16 %v4238, %v4237
        %v4266 = vpack.c.b16 %v4240, %v4239
        %v4267 = vpack.c.b16 %v4242, %v4241
        %v4268 = vpack.c.b16 %v4244, %v4243
        %4293 = vmatprep.subr.bf16.mxu0 0
        %4294 = vmatpush1.bf16.msra.mxu0 %v4252
        %4295 = vmatprep.subr.bf16.mxu0 0
        %4296 = vmatpush1.bf16.msra.mxu0 %v4251
        %4297 = vmatprep.subr.bf16.mxu0 0
        %4298 = vmatpush1.bf16.msra.mxu0 %v4250
        %4299 = vmatprep.subr.bf16.mxu0 0
        %4300 = vmatpush1.bf16.msra.mxu0 %v4249
        %4301 = vmatprep.subr.bf16.mxu0 0
        %4302 = vmatpush1.bf16.msra.mxu0 %v4248
        %4303 = vmatprep.subr.bf16.mxu0 0
        %4304 = vmatpush1.bf16.msra.mxu0 %v4247
        %4305 = vmatprep.subr.bf16.mxu0 0
        %4306 = vmatpush1.bf16.msra.mxu0 %v4246
        %4307 = vmatprep.subr.bf16.mxu0 0
        %4308 = vmatpush1.bf16.msra.mxu0 %v4245
        %4309 = vmatprep.subr.bf16.mxu0 0
        %4310 = vmatpush2.bf16.msra.mxu0 %v4260
        %4311 = vmatprep.subr.bf16.mxu0 0
        %4312 = vmatpush2.bf16.msra.mxu0 %v4259
        %4313 = vmatprep.subr.bf16.mxu0 0
        %4314 = vmatpush2.bf16.msra.mxu0 %v4258
        %4315 = vmatprep.subr.bf16.mxu0 0
        %4316 = vmatpush2.bf16.msra.mxu0 %v4257
        %4317 = vmatprep.subr.bf16.mxu0 0
        %4318 = vmatpush2.bf16.msra.mxu0 %v4256
        %4319 = vmatprep.subr.bf16.mxu0 0
        %4320 = vmatpush2.bf16.msra.mxu0 %v4255
        %4321 = vmatprep.subr.bf16.mxu0 0
        %4322 = vmatpush2.bf16.msra.mxu0 %v4254
        %4323 = vmatprep.subr.bf16.mxu0 0
        %4324 = vmatpush2.bf16.msra.mxu0 %v4253
        %4325 = vmatprep.mubr.bf16.mxu0 %v4053
        %4326 = vmatmul.mubr.bf16.gmra.mxu0 %v4052
        %v4327 = vpop.f32.mrf.mxu0
        %v4328 = vadd.f32 0.0, %v4327
        %v4329 = vpop.f32.mrf.mxu0
        %v4330 = vpop.f32.mrf.mxu0
        %v4331 = vadd.f32 0.0, %v4330
        %v4332 = vpop.f32.mrf.mxu0
        %4333 = vmatprep.mubr.bf16.mxu0 %v4056
        %4334 = vmatmul.mubr.bf16.gmra.mxu0 %v4055
        %v4335 = vpop.f32.mrf.mxu0
        %v4336 = vadd.f32 0.0, %v4335
        %v4337 = vpop.f32.mrf.mxu0
        %v4338 = vpop.f32.mrf.mxu0
        %v4339 = vadd.f32 0.0, %v4338
        %v4340 = vpop.f32.mrf.mxu0
        %4341 = vmatprep.mubr.bf16.mxu0 %v4059
        %4342 = vmatmul.mubr.bf16.gmra.mxu0 %v4058
        %v4343 = vpop.f32.mrf.mxu0
        %v4344 = vadd.f32 0.0, %v4343
        %v4345 = vpop.f32.mrf.mxu0
        %v4346 = vpop.f32.mrf.mxu0
        %v4347 = vadd.f32 0.0, %v4346
        %v4348 = vpop.f32.mrf.mxu0
        %4349 = vmatprep.mubr.bf16.mxu0 %v4062
        %4350 = vmatmul.mubr.bf16.gmra.mxu0 %v4061
        %v4351 = vpop.f32.mrf.mxu0
        %v4352 = vadd.f32 0.0, %v4351
        %v4353 = vpop.f32.mrf.mxu0
        %v4354 = vpop.f32.mrf.mxu0
        %v4355 = vadd.f32 0.0, %v4354
        %v4356 = vpop.f32.mrf.mxu0
        %4357 = vmatprep.mubr.bf16.mxu0 %v4065
        %4358 = vmatmul.mubr.bf16.gmra.mxu0 %v4064
        %v4359 = vpop.f32.mrf.mxu0
        %v4360 = vadd.f32 0.0, %v4359
        %v4361 = vpop.f32.mrf.mxu0
        %v4362 = vpop.f32.mrf.mxu0
        %v4363 = vadd.f32 0.0, %v4362
        %v4364 = vpop.f32.mrf.mxu0
        %4365 = vmatprep.mubr.bf16.mxu0 %v4068
        %4366 = vmatmul.mubr.bf16.gmra.mxu0 %v4067
        %v4367 = vpop.f32.mrf.mxu0
        %v4368 = vadd.f32 0.0, %v4367
        %v4369 = vpop.f32.mrf.mxu0
        %v4370 = vpop.f32.mrf.mxu0
        %v4371 = vadd.f32 0.0, %v4370
        %v4372 = vpop.f32.mrf.mxu0
        %4373 = vmatprep.mubr.bf16.mxu0 %v4071
        %4374 = vmatmul.mubr.bf16.gmra.mxu0 %v4070
        %v4375 = vpop.f32.mrf.mxu0
        %v4376 = vadd.f32 0.0, %v4375
        %v4377 = vpop.f32.mrf.mxu0
        %v4378 = vpop.f32.mrf.mxu0
        %v4379 = vadd.f32 0.0, %v4378
        %v4380 = vpop.f32.mrf.mxu0
        %4381 = vmatprep.mubr.bf16.mxu0 %v4074
        %4382 = vmatmul.mubr.bf16.gmra.mxu0 %v4073
        %v4383 = vpop.f32.mrf.mxu0
        %v4384 = vadd.f32 0.0, %v4383
        %v4385 = vpop.f32.mrf.mxu0
        %v4386 = vpop.f32.mrf.mxu0
        %v4387 = vadd.f32 0.0, %v4386
        %v4388 = vpop.f32.mrf.mxu0
        %4389 = vmatprep.mubr.bf16.mxu0 %v4077
        %4390 = vmatmul.mubr.bf16.gmra.mxu0 %v4076
        %v4391 = vpop.f32.mrf.mxu0
        %v4392 = vadd.f32 0.0, %v4391
        %v4393 = vpop.f32.mrf.mxu0
        %v4394 = vpop.f32.mrf.mxu0
        %v4395 = vadd.f32 0.0, %v4394
        %v4396 = vpop.f32.mrf.mxu0
        %4397 = vmatprep.mubr.bf16.mxu0 %v4080
        %4398 = vmatmul.mubr.bf16.gmra.mxu0 %v4079
        %v4399 = vpop.f32.mrf.mxu0
        %v4400 = vadd.f32 0.0, %v4399
        %v4401 = vpop.f32.mrf.mxu0
        %v4402 = vpop.f32.mrf.mxu0
        %v4403 = vadd.f32 0.0, %v4402
        %v4404 = vpop.f32.mrf.mxu0
        %4405 = vmatprep.mubr.bf16.mxu0 %v4083
        %4406 = vmatmul.mubr.bf16.gmra.mxu0 %v4082
        %v4407 = vpop.f32.mrf.mxu0
        %v4408 = vadd.f32 0.0, %v4407
        %v4409 = vpop.f32.mrf.mxu0
        %v4410 = vpop.f32.mrf.mxu0
        %v4411 = vadd.f32 0.0, %v4410
        %v4412 = vpop.f32.mrf.mxu0
        %4413 = vmatprep.mubr.bf16.mxu0 %v4086
        %4414 = vmatmul.mubr.bf16.gmra.mxu0 %v4085
        %v4415 = vpop.f32.mrf.mxu0
        %v4416 = vadd.f32 0.0, %v4415
        %v4417 = vpop.f32.mrf.mxu0
        %v4418 = vpop.f32.mrf.mxu0
        %v4419 = vadd.f32 0.0, %v4418
        %v4420 = vpop.f32.mrf.mxu0
        %4421 = vmatprep.mubr.bf16.mxu0 %v4089
        %4422 = vmatmul.mubr.bf16.gmra.mxu0 %v4088
        %v4423 = vpop.f32.mrf.mxu0
        %v4424 = vadd.f32 0.0, %v4423
        %v4425 = vpop.f32.mrf.mxu0
        %v4426 = vpop.f32.mrf.mxu0
        %v4427 = vadd.f32 0.0, %v4426
        %v4428 = vpop.f32.mrf.mxu0
        %4429 = vmatprep.mubr.bf16.mxu0 %v4092
        %4430 = vmatmul.mubr.bf16.gmra.mxu0 %v4091
        %v4431 = vpop.f32.mrf.mxu0
        %v4432 = vadd.f32 0.0, %v4431
        %v4433 = vpop.f32.mrf.mxu0
        %v4434 = vpop.f32.mrf.mxu0
        %v4435 = vadd.f32 0.0, %v4434
        %v4436 = vpop.f32.mrf.mxu0
        %4437 = vmatprep.mubr.bf16.mxu0 %v4095
        %4438 = vmatmul.mubr.bf16.gmra.mxu0 %v4094
        %v4439 = vpop.f32.mrf.mxu0
        %v4440 = vadd.f32 0.0, %v4439
        %v4441 = vpop.f32.mrf.mxu0
        %v4442 = vpop.f32.mrf.mxu0
        %v4443 = vadd.f32 0.0, %v4442
        %v4444 = vpop.f32.mrf.mxu0
        %4445 = vmatprep.mubr.bf16.mxu0 %v4098
        %4446 = vmatmul.mubr.bf16.gmra.mxu0 %v4097
        %v4447 = vpop.f32.mrf.mxu0
        %v4448 = vadd.f32 0.0, %v4447
        %v4449 = vpop.f32.mrf.mxu0
        %v4450 = vpop.f32.mrf.mxu0
        %v4451 = vadd.f32 0.0, %v4450
        %v4452 = vpop.f32.mrf.mxu0
        %4453 = vdwg.mxu0
        %4454 = vmatprep.subr.bf16.mxu0 0
        %4455 = vmatpush1.bf16.msra.mxu0 %v4268
        %4456 = vmatprep.subr.bf16.mxu0 0
        %4457 = vmatpush1.bf16.msra.mxu0 %v4267
        %4458 = vmatprep.subr.bf16.mxu0 0
        %4459 = vmatpush1.bf16.msra.mxu0 %v4266
        %4460 = vmatprep.subr.bf16.mxu0 0
        %4461 = vmatpush1.bf16.msra.mxu0 %v4265
        %4462 = vmatprep.subr.bf16.mxu0 0
        %4463 = vmatpush1.bf16.msra.mxu0 %v4264
        %4464 = vmatprep.subr.bf16.mxu0 0
        %4465 = vmatpush1.bf16.msra.mxu0 %v4263
        %4466 = vmatprep.subr.bf16.mxu0 0
        %4467 = vmatpush1.bf16.msra.mxu0 %v4262
        %4468 = vmatprep.subr.bf16.mxu0 0
        %4469 = vmatpush1.bf16.msra.mxu0 %v4261
        %4470 = vmatprep.subr.bf16.mxu0 0
        %4471 = vmatpush2.bf16.msra.mxu0 0
        %4472 = vmatprep.subr.bf16.mxu0 0
        %4473 = vmatpush2.bf16.msra.mxu0 0
        %4474 = vmatprep.subr.bf16.mxu0 0
        %4475 = vmatpush2.bf16.msra.mxu0 0
        %4476 = vmatprep.subr.bf16.mxu0 0
        %4477 = vmatpush2.bf16.msra.mxu0 0
        %4478 = vmatprep.subr.bf16.mxu0 0
        %4479 = vmatpush2.bf16.msra.mxu0 0
        %4480 = vmatprep.subr.bf16.mxu0 0
        %4481 = vmatpush2.bf16.msra.mxu0 0
        %4482 = vmatprep.subr.bf16.mxu0 0
        %4483 = vmatpush2.bf16.msra.mxu0 0
        %4484 = vmatprep.subr.bf16.mxu0 0
        %4485 = vmatpush2.bf16.msra.mxu0 0
        %4486 = vmatprep.mubr.bf16.mxu0 0
        %4487 = vmatmul.mubr.bf16.gmra.mxu0 %v4054
        %v4488 = vpop.f32.mrf.mxu0
        %v4489 = vadd.f32 %v4328, %v4488
        %v4490 = vpop.f32.mrf.mxu0
        %v4491 = vpop.f32.mrf.mxu0
        %v4492 = vadd.f32 %v4331, %v4491
        %v4493 = vpop.f32.mrf.mxu0
        %4494 = vmatprep.mubr.bf16.mxu0 0
        %4495 = vmatmul.mubr.bf16.gmra.mxu0 %v4057
        %v4496 = vpop.f32.mrf.mxu0
        %v4497 = vadd.f32 %v4336, %v4496
        %v4498 = vpop.f32.mrf.mxu0
        %v4499 = vpop.f32.mrf.mxu0
        %v4500 = vadd.f32 %v4339, %v4499
        %v4501 = vpop.f32.mrf.mxu0
        %4502 = vmatprep.mubr.bf16.mxu0 0
        %4503 = vmatmul.mubr.bf16.gmra.mxu0 %v4060
        %v4504 = vpop.f32.mrf.mxu0
        %v4505 = vadd.f32 %v4344, %v4504
        %v4506 = vpop.f32.mrf.mxu0
        %v4507 = vpop.f32.mrf.mxu0
        %v4508 = vadd.f32 %v4347, %v4507
        %v4509 = vpop.f32.mrf.mxu0
        %4510 = vmatprep.mubr.bf16.mxu0 0
        %4511 = vmatmul.mubr.bf16.gmra.mxu0 %v4063
        %v4512 = vpop.f32.mrf.mxu0
        %v4513 = vadd.f32 %v4352, %v4512
        %v4514 = vpop.f32.mrf.mxu0
        %v4515 = vpop.f32.mrf.mxu0
        %v4516 = vadd.f32 %v4355, %v4515
        %v4517 = vpop.f32.mrf.mxu0
        %4518 = vmatprep.mubr.bf16.mxu0 0
        %4519 = vmatmul.mubr.bf16.gmra.mxu0 %v4066
        %v4520 = vpop.f32.mrf.mxu0
        %v4521 = vadd.f32 %v4360, %v4520
        %v4522 = vpop.f32.mrf.mxu0
        %v4523 = vpop.f32.mrf.mxu0
        %v4524 = vadd.f32 %v4363, %v4523
        %v4525 = vpop.f32.mrf.mxu0
        %4526 = vmatprep.mubr.bf16.mxu0 0
        %4527 = vmatmul.mubr.bf16.gmra.mxu0 %v4069
        %v4528 = vpop.f32.mrf.mxu0
        %v4529 = vadd.f32 %v4368, %v4528
        %v4530 = vpop.f32.mrf.mxu0
        %v4531 = vpop.f32.mrf.mxu0
        %v4532 = vadd.f32 %v4371, %v4531
        %v4533 = vpop.f32.mrf.mxu0
        %4534 = vmatprep.mubr.bf16.mxu0 0
        %4535 = vmatmul.mubr.bf16.gmra.mxu0 %v4072
        %v4536 = vpop.f32.mrf.mxu0
        %v4537 = vadd.f32 %v4376, %v4536
        %v4538 = vpop.f32.mrf.mxu0
        %v4539 = vpop.f32.mrf.mxu0
        %v4540 = vadd.f32 %v4379, %v4539
        %v4541 = vpop.f32.mrf.mxu0
        %4542 = vmatprep.mubr.bf16.mxu0 0
        %4543 = vmatmul.mubr.bf16.gmra.mxu0 %v4075
        %v4544 = vpop.f32.mrf.mxu0
        %v4545 = vadd.f32 %v4384, %v4544
        %v4546 = vpop.f32.mrf.mxu0
        %v4547 = vpop.f32.mrf.mxu0
        %v4548 = vadd.f32 %v4387, %v4547
        %v4549 = vpop.f32.mrf.mxu0
        %4550 = vmatprep.mubr.bf16.mxu0 0
        %4551 = vmatmul.mubr.bf16.gmra.mxu0 %v4078
        %v4552 = vpop.f32.mrf.mxu0
        %v4553 = vadd.f32 %v4392, %v4552
        %v4554 = vpop.f32.mrf.mxu0
        %v4555 = vpop.f32.mrf.mxu0
        %v4556 = vadd.f32 %v4395, %v4555
        %v4557 = vpop.f32.mrf.mxu0
        %4558 = vmatprep.mubr.bf16.mxu0 0
        %4559 = vmatmul.mubr.bf16.gmra.mxu0 %v4081
        %v4560 = vpop.f32.mrf.mxu0
        %v4561 = vadd.f32 %v4400, %v4560
        %v4562 = vpop.f32.mrf.mxu0
        %v4563 = vpop.f32.mrf.mxu0
        %v4564 = vadd.f32 %v4403, %v4563
        %v4565 = vpop.f32.mrf.mxu0
        %4566 = vmatprep.mubr.bf16.mxu0 0
        %4567 = vmatmul.mubr.bf16.gmra.mxu0 %v4084
        %v4568 = vpop.f32.mrf.mxu0
        %v4569 = vadd.f32 %v4408, %v4568
        %v4570 = vpop.f32.mrf.mxu0
        %v4571 = vpop.f32.mrf.mxu0
        %v4572 = vadd.f32 %v4411, %v4571
        %v4573 = vpop.f32.mrf.mxu0
        %4574 = vmatprep.mubr.bf16.mxu0 0
        %4575 = vmatmul.mubr.bf16.gmra.mxu0 %v4087
        %v4576 = vpop.f32.mrf.mxu0
        %v4577 = vadd.f32 %v4416, %v4576
        %v4578 = vpop.f32.mrf.mxu0
        %v4579 = vpop.f32.mrf.mxu0
        %v4580 = vadd.f32 %v4419, %v4579
        %v4581 = vpop.f32.mrf.mxu0
        %4582 = vmatprep.mubr.bf16.mxu0 0
        %4583 = vmatmul.mubr.bf16.gmra.mxu0 %v4090
        %v4584 = vpop.f32.mrf.mxu0
        %v4585 = vadd.f32 %v4424, %v4584
        %v4586 = vpop.f32.mrf.mxu0
        %v4587 = vpop.f32.mrf.mxu0
        %v4588 = vadd.f32 %v4427, %v4587
        %v4589 = vpop.f32.mrf.mxu0
        %4590 = vmatprep.mubr.bf16.mxu0 0
        %4591 = vmatmul.mubr.bf16.gmra.mxu0 %v4093
        %v4592 = vpop.f32.mrf.mxu0
        %v4593 = vadd.f32 %v4432, %v4592
        %v4594 = vpop.f32.mrf.mxu0
        %v4595 = vpop.f32.mrf.mxu0
        %v4596 = vadd.f32 %v4435, %v4595
        %v4597 = vpop.f32.mrf.mxu0
        %4598 = vmatprep.mubr.bf16.mxu0 0
        %4599 = vmatmul.mubr.bf16.gmra.mxu0 %v4096
        %v4600 = vpop.f32.mrf.mxu0
        %v4601 = vadd.f32 %v4440, %v4600
        %v4602 = vpop.f32.mrf.mxu0
        %v4603 = vpop.f32.mrf.mxu0
        %v4604 = vadd.f32 %v4443, %v4603
        %v4605 = vpop.f32.mrf.mxu0
        %4606 = vmatprep.mubr.bf16.mxu0 0
        %4607 = vmatmul.mubr.bf16.gmra.mxu0 %v4099
        %v4608 = vpop.f32.mrf.mxu0
        %v4609 = vadd.f32 %v4448, %v4608
        %v4610 = vpop.f32.mrf.mxu0
        %v4611 = vpop.f32.mrf.mxu0
        %v4612 = vadd.f32 %v4451, %v4611
        %v4613 = vpop.f32.mrf.mxu0
        %4614 = vdwg.mxu0
        %v4615 = vadd.f32 %v3829, %v4489
        %v4616 = vadd.f32 %v3832, %v4492
        %v4617 = vadd.f32 %v3837, %v4497
        %v4618 = vadd.f32 %v3840, %v4500
        %v4619 = vadd.f32 %v3845, %v4505
        %v4620 = vadd.f32 %v3848, %v4508
        %v4621 = vadd.f32 %v3853, %v4513
        %v4622 = vadd.f32 %v3856, %v4516
        %v4623 = vadd.f32 %v3861, %v4521
        %v4624 = vadd.f32 %v3864, %v4524
        %v4625 = vadd.f32 %v3869, %v4529
        %v4626 = vadd.f32 %v3872, %v4532
        %v4627 = vadd.f32 %v3877, %v4537
        %v4628 = vadd.f32 %v3880, %v4540
        %v4629 = vadd.f32 %v3885, %v4545
        %v4630 = vadd.f32 %v3888, %v4548
        %v4631 = vadd.f32 %v3893, %v4553
        %v4632 = vadd.f32 %v3896, %v4556
        %v4633 = vadd.f32 %v3901, %v4561
        %v4634 = vadd.f32 %v3904, %v4564
        %v4635 = vadd.f32 %v3909, %v4569
        %v4636 = vadd.f32 %v3912, %v4572
        %v4637 = vadd.f32 %v3917, %v4577
        %v4638 = vadd.f32 %v3920, %v4580
        %v4639 = vadd.f32 %v3925, %v4585
        %v4640 = vadd.f32 %v3928, %v4588
        %v4641 = vadd.f32 %v3933, %v4593
        %v4642 = vadd.f32 %v3936, %v4596
        %v4643 = vadd.f32 %v3941, %v4601
        %v4644 = vadd.f32 %v3944, %v4604
        %v4645 = vadd.f32 %v3949, %v4609
        %v4646 = vadd.f32 %v3952, %v4612
        %v4647 = vld [vmem:[%s4] sm:$0x1]
        %v4649 = vlaneseq
        %v4650 = vshrl.u32 %v4649, 7
        %v4651 = vsub.s32 0, %v4650
        %v4652 = vrot.slane %v4647, %v4651
        %v4654 = vadd.f32 %v4615, %v4652
        %v4655 = vadd.f32 %v4616, %v4652
        %v4656 = vadd.f32 %v4617, %v4652
        %v4657 = vadd.f32 %v4618, %v4652
        %v4658 = vadd.f32 %v4619, %v4652
        %v4659 = vadd.f32 %v4620, %v4652
        %v4660 = vadd.f32 %v4621, %v4652
        %v4661 = vadd.f32 %v4622, %v4652
        %v4662 = vadd.f32 %v4623, %v4652
        %v4663 = vadd.f32 %v4624, %v4652
        %v4664 = vadd.f32 %v4625, %v4652
        %v4665 = vadd.f32 %v4626, %v4652
        %v4666 = vadd.f32 %v4627, %v4652
        %v4667 = vadd.f32 %v4628, %v4652
        %v4668 = vadd.f32 %v4629, %v4652
        %v4669 = vadd.f32 %v4630, %v4652
        %v4670 = vadd.f32 %v4631, %v4652
        %v4671 = vadd.f32 %v4632, %v4652
        %v4672 = vadd.f32 %v4633, %v4652
        %v4673 = vadd.f32 %v4634, %v4652
        %v4674 = vadd.f32 %v4635, %v4652
        %v4675 = vadd.f32 %v4636, %v4652
        %v4676 = vadd.f32 %v4637, %v4652
        %v4677 = vadd.f32 %v4638, %v4652
        %v4678 = vadd.f32 %v4639, %v4652
        %v4679 = vadd.f32 %v4640, %v4652
        %v4680 = vadd.f32 %v4641, %v4652
        %v4681 = vadd.f32 %v4642, %v4652
        %v4682 = vadd.f32 %v4643, %v4652
        %v4683 = vadd.f32 %v4644, %v4652
        %v4684 = vadd.f32 %v4645, %v4652
        %v4685 = vadd.f32 %v4646, %v4652
        %v4686 = vmax.f32 %v4654, 0.0
        %v4687 = vmax.f32 %v4655, 0.0
        %v4688 = vmax.f32 %v4656, 0.0
        %v4689 = vmax.f32 %v4657, 0.0
        %v4690 = vmax.f32 %v4658, 0.0
        %v4691 = vmax.f32 %v4659, 0.0
        %v4692 = vmax.f32 %v4660, 0.0
        %v4693 = vmax.f32 %v4661, 0.0
        %v4694 = vmax.f32 %v4662, 0.0
        %v4695 = vmax.f32 %v4663, 0.0
        %v4696 = vmax.f32 %v4664, 0.0
        %v4697 = vmax.f32 %v4665, 0.0
        %v4698 = vmax.f32 %v4666, 0.0
        %v4699 = vmax.f32 %v4667, 0.0
        %v4700 = vmax.f32 %v4668, 0.0
        %v4701 = vmax.f32 %v4669, 0.0
        %v4702 = vmax.f32 %v4670, 0.0
        %v4703 = vmax.f32 %v4671, 0.0
        %v4704 = vmax.f32 %v4672, 0.0
        %v4705 = vmax.f32 %v4673, 0.0
        %v4706 = vmax.f32 %v4674, 0.0
        %v4707 = vmax.f32 %v4675, 0.0
        %v4708 = vmax.f32 %v4676, 0.0
        %v4709 = vmax.f32 %v4677, 0.0
        %v4710 = vmax.f32 %v4678, 0.0
        %v4711 = vmax.f32 %v4679, 0.0
        %v4712 = vmax.f32 %v4680, 0.0
        %v4713 = vmax.f32 %v4681, 0.0
        %v4714 = vmax.f32 %v4682, 0.0
        %v4715 = vmax.f32 %v4683, 0.0
        %v4716 = vmax.f32 %v4684, 0.0
        %v4717 = vmax.f32 %v4685, 0.0
        %s4718 = scalar_lea.vmem [#allocation4], 24
        %4719 = vst [vmem:[%s4718 + $0x1] sm:$0xff] %v4686
        %4720 = vst [vmem:[%s4718 + $0x9] sm:$0xff] %v4687
        %4721 = vst [vmem:[%s4718 + $0x19] sm:$0xff] %v4688
        %4722 = vst [vmem:[%s4718 + $0x21] sm:$0xff] %v4689
        %4723 = vst [vmem:[%s4718 + $0x31] sm:$0xff] %v4690
        %4724 = vst [vmem:[%s4718 + $0x39] sm:$0xff] %v4691
        %4725 = vst [vmem:[%s4718 + $0x49] sm:$0xff] %v4692
        %4726 = vst [vmem:[%s4718 + $0x51] sm:$0xff] %v4693
        %4727 = vst [vmem:[%s4718 + $0x61] sm:$0xff] %v4694
        %4728 = vst [vmem:[%s4718 + $0x69] sm:$0xff] %v4695
        %4729 = vst [vmem:[%s4718 + $0x79] sm:$0xff] %v4696
        %4730 = vst [vmem:[%s4718 + $0x81] sm:$0xff] %v4697
        %4731 = vst [vmem:[%s4718 + $0x91] sm:$0xff] %v4698
        %4732 = vst [vmem:[%s4718 + $0x99] sm:$0xff] %v4699
        %4733 = vst [vmem:[%s4718 + $0xa9] sm:$0xff] %v4700
        %4734 = vst [vmem:[%s4718 + $0xb1] sm:$0xff] %v4701
        %4735 = vst [vmem:[%s4718 + $0xc1] sm:$0xff] %v4702
        %4736 = vst [vmem:[%s4718 + $0xc9] sm:$0xff] %v4703
        %4737 = vst [vmem:[%s4718 + $0xd9] sm:$0xff] %v4704
        %4738 = vst [vmem:[%s4718 + $0xe1] sm:$0xff] %v4705
        %4739 = vst [vmem:[%s4718 + $0xf1] sm:$0xff] %v4706
        %4740 = vst [vmem:[%s4718 + $0xf9] sm:$0xff] %v4707
        %4741 = vst [vmem:[%s4718 + $0x109] sm:$0xff] %v4708
        %4742 = vst [vmem:[%s4718 + $0x111] sm:$0xff] %v4709
        %4743 = vst [vmem:[%s4718 + $0x121] sm:$0xff] %v4710
        %4744 = vst [vmem:[%s4718 + $0x129] sm:$0xff] %v4711
        %4745 = vst [vmem:[%s4718 + $0x139] sm:$0xff] %v4712
        %4746 = vst [vmem:[%s4718 + $0x141] sm:$0xff] %v4713
        %4747 = vst [vmem:[%s4718 + $0x151] sm:$0xff] %v4714
        %4748 = vst [vmem:[%s4718 + $0x159] sm:$0xff] %v4715
        %4749 = vst [vmem:[%s4718 + $0x169] sm:$0xff] %v4716
        %4750 = vst [vmem:[%s4718 + $0x171] sm:$0xff] %v4717
        %4751 = vst [vmem:[#allocation4] sm:$0xff] 0.0
        %4752 = vst [vmem:[#allocation4 + $0x8] sm:$0xff] 0.0
        %4753 = vst [vmem:[#allocation4 + $0x10] sm:$0x3] 0.0
        %s4754 = scalar_lea.vmem [#allocation4], 408
        %4755 = vst [vmem:[%s4754] sm:$0xff] 0.0
        %4756 = vst [vmem:[%s4754 + $0x8] sm:$0xff] 0.0
        %4757 = vst [vmem:[%s4754 + $0x10] sm:$0x3] 0.0
        %4758 = vst [vmem:[#allocation4] sm:$0x1] 0.0
        %4759 = vst [vmem:[#allocation4 + $0x18] sm:$0x1] 0.0
        %4760 = vst [vmem:[#allocation4 + $0x30] sm:$0x1] 0.0
        %4761 = vst [vmem:[#allocation4 + $0x48] sm:$0x1] 0.0
        %4762 = vst [vmem:[#allocation4 + $0x60] sm:$0x1] 0.0
        %4763 = vst [vmem:[#allocation4 + $0x78] sm:$0x1] 0.0
        %4764 = vst [vmem:[#allocation4 + $0x90] sm:$0x1] 0.0
        %4765 = vst [vmem:[#allocation4 + $0xa8] sm:$0x1] 0.0
        %4766 = vst [vmem:[#allocation4 + $0xc0] sm:$0x1] 0.0
        %4767 = vst [vmem:[#allocation4 + $0xd8] sm:$0x1] 0.0
        %4768 = vst [vmem:[#allocation4 + $0xf0] sm:$0x1] 0.0
        %4769 = vst [vmem:[#allocation4 + $0x108] sm:$0x1] 0.0
        %4770 = vst [vmem:[#allocation4 + $0x120] sm:$0x1] 0.0
        %4771 = vst [vmem:[#allocation4 + $0x138] sm:$0x1] 0.0
        %4772 = vst [vmem:[#allocation4 + $0x150] sm:$0x1] 0.0
        %4773 = vst [vmem:[#allocation4 + $0x168] sm:$0x1] 0.0
        %4774 = vst [vmem:[#allocation4 + $0x180] sm:$0x1] 0.0
        %4775 = vst [vmem:[#allocation4 + $0x198] sm:$0x1] 0.0
        %4776 = vst [vmem:[#allocation4 + $0x11] sm:$0x1] 0.0
        %4777 = vst [vmem:[#allocation4 + $0x29] sm:$0x1] 0.0
        %4778 = vst [vmem:[#allocation4 + $0x41] sm:$0x1] 0.0
        %4779 = vst [vmem:[#allocation4 + $0x59] sm:$0x1] 0.0
        %4780 = vst [vmem:[#allocation4 + $0x71] sm:$0x1] 0.0
        %4781 = vst [vmem:[#allocation4 + $0x89] sm:$0x1] 0.0
        %4782 = vst [vmem:[#allocation4 + $0xa1] sm:$0x1] 0.0
        %4783 = vst [vmem:[#allocation4 + $0xb9] sm:$0x1] 0.0
        %4784 = vst [vmem:[#allocation4 + $0xd1] sm:$0x1] 0.0
        %4785 = vst [vmem:[#allocation4 + $0xe9] sm:$0x1] 0.0
        %4786 = vst [vmem:[#allocation4 + $0x101] sm:$0x1] 0.0
        %4787 = vst [vmem:[#allocation4 + $0x119] sm:$0x1] 0.0
        %4788 = vst [vmem:[#allocation4 + $0x131] sm:$0x1] 0.0
        %4789 = vst [vmem:[#allocation4 + $0x149] sm:$0x1] 0.0
        %4790 = vst [vmem:[#allocation4 + $0x161] sm:$0x1] 0.0
        %4791 = vst [vmem:[#allocation4 + $0x179] sm:$0x1] 0.0
        %4792 = vst [vmem:[#allocation4 + $0x191] sm:$0x1] 0.0
        %4793 = vst [vmem:[#allocation4 + $0x1a9] sm:$0x1] 0.0
        %v4794 = vld [vmem:[#allocation4] sm:$0xff]
        %v4795 = vld [vmem:[#allocation4 + $0x8] sm:$0xff]
        %v4796 = vld [vmem:[#allocation4 + $0x18] sm:$0xff]
        %v4797 = vld [vmem:[#allocation4 + $0x20] sm:$0xff]
        %v4798 = vld [vmem:[#allocation4 + $0x30] sm:$0xff]
        %v4799 = vld [vmem:[#allocation4 + $0x38] sm:$0xff]
        %v4800 = vld [vmem:[#allocation4 + $0x48] sm:$0xff]
        %v4801 = vld [vmem:[#allocation4 + $0x50] sm:$0xff]
        %v4802 = vld [vmem:[#allocation4 + $0x60] sm:$0xff]
        %v4803 = vld [vmem:[#allocation4 + $0x68] sm:$0xff]
        %v4804 = vld [vmem:[#allocation4 + $0x78] sm:$0xff]
        %v4805 = vld [vmem:[#allocation4 + $0x80] sm:$0xff]
        %v4806 = vld [vmem:[#allocation4 + $0x90] sm:$0xff]
        %v4807 = vld [vmem:[#allocation4 + $0x98] sm:$0xff]
        %v4808 = vld [vmem:[#allocation4 + $0xa8] sm:$0xff]
        %v4809 = vld [vmem:[#allocation4 + $0xb0] sm:$0xff]
        %v4810 = vld [vmem:[#allocation4 + $0xc0] sm:$0xff]
        %v4811 = vld [vmem:[#allocation4 + $0xc8] sm:$0xff]
        %v4812 = vld [vmem:[#allocation4 + $0xd8] sm:$0xff]
        %v4813 = vld [vmem:[#allocation4 + $0xe0] sm:$0xff]
        %v4814 = vld [vmem:[#allocation4 + $0xf0] sm:$0xff]
        %v4815 = vld [vmem:[#allocation4 + $0xf8] sm:$0xff]
        %v4816 = vld [vmem:[#allocation4 + $0x108] sm:$0xff]
        %v4817 = vld [vmem:[#allocation4 + $0x110] sm:$0xff]
        %v4818 = vld [vmem:[#allocation4 + $0x120] sm:$0xff]
        %v4819 = vld [vmem:[#allocation4 + $0x128] sm:$0xff]
        %v4820 = vld [vmem:[#allocation4 + $0x138] sm:$0xff]
        %v4821 = vld [vmem:[#allocation4 + $0x140] sm:$0xff]
        %v4822 = vld [vmem:[#allocation4 + $0x150] sm:$0xff]
        %v4823 = vld [vmem:[#allocation4 + $0x158] sm:$0xff]
        %v4824 = vld [vmem:[#allocation4 + $0x168] sm:$0xff]
        %v4825 = vld [vmem:[#allocation4 + $0x170] sm:$0xff]
        %v4826 = vld [vmem:[#allocation4 + $0x1] sm:$0xff]
        %v4827 = vld [vmem:[#allocation4 + $0x9] sm:$0xff]
        %v4828 = vld [vmem:[#allocation4 + $0x19] sm:$0xff]
        %v4829 = vld [vmem:[#allocation4 + $0x21] sm:$0xff]
        %v4830 = vld [vmem:[#allocation4 + $0x31] sm:$0xff]
        %v4831 = vld [vmem:[#allocation4 + $0x39] sm:$0xff]
        %v4832 = vld [vmem:[#allocation4 + $0x49] sm:$0xff]
        %v4833 = vld [vmem:[#allocation4 + $0x51] sm:$0xff]
        %v4834 = vld [vmem:[#allocation4 + $0x61] sm:$0xff]
        %v4835 = vld [vmem:[#allocation4 + $0x69] sm:$0xff]
        %v4836 = vld [vmem:[#allocation4 + $0x79] sm:$0xff]
        %v4837 = vld [vmem:[#allocation4 + $0x81] sm:$0xff]
        %v4838 = vld [vmem:[#allocation4 + $0x91] sm:$0xff]
        %v4839 = vld [vmem:[#allocation4 + $0x99] sm:$0xff]
        %v4840 = vld [vmem:[#allocation4 + $0xa9] sm:$0xff]
        %v4841 = vld [vmem:[#allocation4 + $0xb1] sm:$0xff]
        %v4842 = vld [vmem:[#allocation4 + $0xc1] sm:$0xff]
        %v4843 = vld [vmem:[#allocation4 + $0xc9] sm:$0xff]
        %v4844 = vld [vmem:[#allocation4 + $0xd9] sm:$0xff]
        %v4845 = vld [vmem:[#allocation4 + $0xe1] sm:$0xff]
        %v4846 = vld [vmem:[#allocation4 + $0xf1] sm:$0xff]
        %v4847 = vld [vmem:[#allocation4 + $0xf9] sm:$0xff]
        %v4848 = vld [vmem:[#allocation4 + $0x109] sm:$0xff]
        %v4849 = vld [vmem:[#allocation4 + $0x111] sm:$0xff]
        %v4850 = vld [vmem:[#allocation4 + $0x121] sm:$0xff]
        %v4851 = vld [vmem:[#allocation4 + $0x129] sm:$0xff]
        %v4852 = vld [vmem:[#allocation4 + $0x139] sm:$0xff]
        %v4853 = vld [vmem:[#allocation4 + $0x141] sm:$0xff]
        %v4854 = vld [vmem:[#allocation4 + $0x151] sm:$0xff]
        %v4855 = vld [vmem:[#allocation4 + $0x159] sm:$0xff]
        %v4856 = vld [vmem:[#allocation4 + $0x169] sm:$0xff]
        %v4857 = vld [vmem:[#allocation4 + $0x171] sm:$0xff]
        %v4858 = vld [vmem:[#allocation4 + $0x2] sm:$0xff]
        %v4859 = vld [vmem:[#allocation4 + $0xa] sm:$0xff]
        %v4860 = vld [vmem:[#allocation4 + $0x1a] sm:$0xff]
        %v4861 = vld [vmem:[#allocation4 + $0x22] sm:$0xff]
        %v4862 = vld [vmem:[#allocation4 + $0x32] sm:$0xff]
        %v4863 = vld [vmem:[#allocation4 + $0x3a] sm:$0xff]
        %v4864 = vld [vmem:[#allocation4 + $0x4a] sm:$0xff]
        %v4865 = vld [vmem:[#allocation4 + $0x52] sm:$0xff]
        %v4866 = vld [vmem:[#allocation4 + $0x62] sm:$0xff]
        %v4867 = vld [vmem:[#allocation4 + $0x6a] sm:$0xff]
        %v4868 = vld [vmem:[#allocation4 + $0x7a] sm:$0xff]
        %v4869 = vld [vmem:[#allocation4 + $0x82] sm:$0xff]
        %v4870 = vld [vmem:[#allocation4 + $0x92] sm:$0xff]
        %v4871 = vld [vmem:[#allocation4 + $0x9a] sm:$0xff]
        %v4872 = vld [vmem:[#allocation4 + $0xaa] sm:$0xff]
        %v4873 = vld [vmem:[#allocation4 + $0xb2] sm:$0xff]
        %v4874 = vld [vmem:[#allocation4 + $0xc2] sm:$0xff]
        %v4875 = vld [vmem:[#allocation4 + $0xca] sm:$0xff]
        %v4876 = vld [vmem:[#allocation4 + $0xda] sm:$0xff]
        %v4877 = vld [vmem:[#allocation4 + $0xe2] sm:$0xff]
        %v4878 = vld [vmem:[#allocation4 + $0xf2] sm:$0xff]
        %v4879 = vld [vmem:[#allocation4 + $0xfa] sm:$0xff]
        %v4880 = vld [vmem:[#allocation4 + $0x10a] sm:$0xff]
        %v4881 = vld [vmem:[#allocation4 + $0x112] sm:$0xff]
        %v4882 = vld [vmem:[#allocation4 + $0x122] sm:$0xff]
        %v4883 = vld [vmem:[#allocation4 + $0x12a] sm:$0xff]
        %v4884 = vld [vmem:[#allocation4 + $0x13a] sm:$0xff]
        %v4885 = vld [vmem:[#allocation4 + $0x142] sm:$0xff]
        %v4886 = vld [vmem:[#allocation4 + $0x152] sm:$0xff]
        %v4887 = vld [vmem:[#allocation4 + $0x15a] sm:$0xff]
        %v4888 = vld [vmem:[#allocation4 + $0x16a] sm:$0xff]
        %v4889 = vld [vmem:[#allocation4 + $0x172] sm:$0xff]
        %v4890 = vpack.c.bf16 %v4795, %v4794
        %v4891 = vpack.c.bf16 %v4827, %v4826
        %v4892 = vpack.c.bf16 %v4859, %v4858
        %v4893 = vpack.c.bf16 %v4797, %v4796
        %v4894 = vpack.c.bf16 %v4829, %v4828
        %v4895 = vpack.c.bf16 %v4861, %v4860
        %v4896 = vpack.c.bf16 %v4799, %v4798
        %v4897 = vpack.c.bf16 %v4831, %v4830
        %v4898 = vpack.c.bf16 %v4863, %v4862
        %v4899 = vpack.c.bf16 %v4801, %v4800
        %v4900 = vpack.c.bf16 %v4833, %v4832
        %v4901 = vpack.c.bf16 %v4865, %v4864
        %v4902 = vpack.c.bf16 %v4803, %v4802
        %v4903 = vpack.c.bf16 %v4835, %v4834
        %v4904 = vpack.c.bf16 %v4867, %v4866
        %v4905 = vpack.c.bf16 %v4805, %v4804
        %v4906 = vpack.c.bf16 %v4837, %v4836
        %v4907 = vpack.c.bf16 %v4869, %v4868
        %v4908 = vpack.c.bf16 %v4807, %v4806
        %v4909 = vpack.c.bf16 %v4839, %v4838
        %v4910 = vpack.c.bf16 %v4871, %v4870
        %v4911 = vpack.c.bf16 %v4809, %v4808
        %v4912 = vpack.c.bf16 %v4841, %v4840
        %v4913 = vpack.c.bf16 %v4873, %v4872
        %v4914 = vpack.c.bf16 %v4811, %v4810
        %v4915 = vpack.c.bf16 %v4843, %v4842
        %v4916 = vpack.c.bf16 %v4875, %v4874
        %v4917 = vpack.c.bf16 %v4813, %v4812
        %v4918 = vpack.c.bf16 %v4845, %v4844
        %v4919 = vpack.c.bf16 %v4877, %v4876
        %v4920 = vpack.c.bf16 %v4815, %v4814
        %v4921 = vpack.c.bf16 %v4847, %v4846
        %v4922 = vpack.c.bf16 %v4879, %v4878
        %v4923 = vpack.c.bf16 %v4817, %v4816
        %v4924 = vpack.c.bf16 %v4849, %v4848
        %v4925 = vpack.c.bf16 %v4881, %v4880
        %v4926 = vpack.c.bf16 %v4819, %v4818
        %v4927 = vpack.c.bf16 %v4851, %v4850
        %v4928 = vpack.c.bf16 %v4883, %v4882
        %v4929 = vpack.c.bf16 %v4821, %v4820
        %v4930 = vpack.c.bf16 %v4853, %v4852
        %v4931 = vpack.c.bf16 %v4885, %v4884
        %v4932 = vpack.c.bf16 %v4823, %v4822
        %v4933 = vpack.c.bf16 %v4855, %v4854
        %v4934 = vpack.c.bf16 %v4887, %v4886
        %v4935 = vpack.c.bf16 %v4825, %v4824
        %v4936 = vpack.c.bf16 %v4857, %v4856
        %v4937 = vpack.c.bf16 %v4889, %v4888
        %v4938 = vld [vmem:[#allocation11] sm:$0xf]
        %v4939 = vld [vmem:[#allocation11 + $0x4] sm:$0xf]
        %v4940 = vld [vmem:[#allocation11 + $0x8] sm:$0xf]
        %v4941 = vld [vmem:[#allocation11 + $0xc] sm:$0xf]
        %v4942 = vld [vmem:[#allocation11 + $0x10] sm:$0xf]
        %v4943 = vld [vmem:[#allocation11 + $0x14] sm:$0xf]
        %v4944 = vld [vmem:[#allocation11 + $0x18] sm:$0xf]
        %v4945 = vld [vmem:[#allocation11 + $0x1c] sm:$0xf]
        %v4946 = vld [vmem:[#allocation11 + $0x20] sm:$0xf]
        %v4947 = vld [vmem:[#allocation11 + $0x24] sm:$0xf]
        %v4948 = vld [vmem:[#allocation11 + $0x28] sm:$0xf]
        %v4949 = vld [vmem:[#allocation11 + $0x2c] sm:$0xf]
        %v4950 = vld [vmem:[#allocation11 + $0x30] sm:$0xf]
        %v4951 = vld [vmem:[#allocation11 + $0x34] sm:$0xf]
        %v4952 = vld [vmem:[#allocation11 + $0x38] sm:$0xf]
        %v4953 = vld [vmem:[#allocation11 + $0x3c] sm:$0xf]
        %v4954 = vld [vmem:[#allocation11 + $0x40] sm:$0xf]
        %v4955 = vld [vmem:[#allocation11 + $0x44] sm:$0xf]
        %v4956 = vld [vmem:[#allocation11 + $0x48] sm:$0xf]
        %v4957 = vld [vmem:[#allocation11 + $0x4c] sm:$0xf]
        %v4958 = vld [vmem:[#allocation11 + $0x50] sm:$0xf]
        %v4959 = vld [vmem:[#allocation11 + $0x54] sm:$0xf]
        %v4960 = vld [vmem:[#allocation11 + $0x58] sm:$0xf]
        %v4961 = vld [vmem:[#allocation11 + $0x5c] sm:$0xf]
        %v4962 = vld [vmem:[#allocation11 + $0x60] sm:$0xf]
        %v4963 = vld [vmem:[#allocation11 + $0x64] sm:$0xf]
        %v4964 = vld [vmem:[#allocation11 + $0x68] sm:$0xf]
        %v4965 = vld [vmem:[#allocation11 + $0x6c] sm:$0xf]
        %v4966 = vld [vmem:[#allocation11 + $0x70] sm:$0xf]
        %v4967 = vld [vmem:[#allocation11 + $0x74] sm:$0xf]
        %v4968 = vld [vmem:[#allocation11 + $0x78] sm:$0xf]
        %v4969 = vld [vmem:[#allocation11 + $0x7c] sm:$0xf]
        %v4970 = vld [vmem:[#allocation11 + $0x80] sm:$0xf]
        %v4971 = vld [vmem:[#allocation11 + $0x84] sm:$0xf]
        %v4972 = vld [vmem:[#allocation11 + $0x88] sm:$0xf]
        %v4973 = vld [vmem:[#allocation11 + $0x8c] sm:$0xf]
        %v4974 = vld [vmem:[#allocation11 + $0x90] sm:$0xf]
        %v4975 = vld [vmem:[#allocation11 + $0x94] sm:$0xf]
        %v4976 = vld [vmem:[#allocation11 + $0x98] sm:$0xf]
        %v4977 = vld [vmem:[#allocation11 + $0x9c] sm:$0xf]
        %v4978 = vld [vmem:[#allocation11 + $0xa0] sm:$0xf]
        %v4979 = vld [vmem:[#allocation11 + $0xa4] sm:$0xf]
        %v4980 = vld [vmem:[#allocation11 + $0xa8] sm:$0xf]
        %v4981 = vld [vmem:[#allocation11 + $0xac] sm:$0xf]
        %v4982 = vld [vmem:[#allocation11 + $0xb0] sm:$0xf]
        %v4983 = vld [vmem:[#allocation11 + $0xb4] sm:$0xf]
        %v4984 = vld [vmem:[#allocation11 + $0xb8] sm:$0xf]
        %v4985 = vld [vmem:[#allocation11 + $0xbc] sm:$0xf]
        %v4986 = vld [vmem:[%s4718] sm:$0xff]
        %v4987 = vld [vmem:[%s4718 + $0x8] sm:$0xff]
        %v4988 = vld [vmem:[%s4718 + $0x18] sm:$0xff]
        %v4989 = vld [vmem:[%s4718 + $0x20] sm:$0xff]
        %v4990 = vld [vmem:[%s4718 + $0x30] sm:$0xff]
        %v4991 = vld [vmem:[%s4718 + $0x38] sm:$0xff]
        %v4992 = vld [vmem:[%s4718 + $0x48] sm:$0xff]
        %v4993 = vld [vmem:[%s4718 + $0x50] sm:$0xff]
        %v4994 = vld [vmem:[%s4718 + $0x60] sm:$0xff]
        %v4995 = vld [vmem:[%s4718 + $0x68] sm:$0xff]
        %v4996 = vld [vmem:[%s4718 + $0x78] sm:$0xff]
        %v4997 = vld [vmem:[%s4718 + $0x80] sm:$0xff]
        %v4998 = vld [vmem:[%s4718 + $0x90] sm:$0xff]
        %v4999 = vld [vmem:[%s4718 + $0x98] sm:$0xff]
        %v5000 = vld [vmem:[%s4718 + $0xa8] sm:$0xff]
        %v5001 = vld [vmem:[%s4718 + $0xb0] sm:$0xff]
        %v5002 = vld [vmem:[%s4718 + $0xc0] sm:$0xff]
        %v5003 = vld [vmem:[%s4718 + $0xc8] sm:$0xff]
        %v5004 = vld [vmem:[%s4718 + $0xd8] sm:$0xff]
        %v5005 = vld [vmem:[%s4718 + $0xe0] sm:$0xff]
        %v5006 = vld [vmem:[%s4718 + $0xf0] sm:$0xff]
        %v5007 = vld [vmem:[%s4718 + $0xf8] sm:$0xff]
        %v5008 = vld [vmem:[%s4718 + $0x108] sm:$0xff]
        %v5009 = vld [vmem:[%s4718 + $0x110] sm:$0xff]
        %v5010 = vld [vmem:[%s4718 + $0x120] sm:$0xff]
        %v5011 = vld [vmem:[%s4718 + $0x128] sm:$0xff]
        %v5012 = vld [vmem:[%s4718 + $0x138] sm:$0xff]
        %v5013 = vld [vmem:[%s4718 + $0x140] sm:$0xff]
        %v5014 = vld [vmem:[%s4718 + $0x150] sm:$0xff]
        %v5015 = vld [vmem:[%s4718 + $0x158] sm:$0xff]
        %v5016 = vld [vmem:[%s4718 + $0x168] sm:$0xff]
        %v5017 = vld [vmem:[%s4718 + $0x170] sm:$0xff]
        %v5018 = vld [vmem:[%s4718 + $0x1] sm:$0xff]
        %v5019 = vld [vmem:[%s4718 + $0x9] sm:$0xff]
        %v5020 = vld [vmem:[%s4718 + $0x19] sm:$0xff]
        %v5021 = vld [vmem:[%s4718 + $0x21] sm:$0xff]
        %v5022 = vld [vmem:[%s4718 + $0x31] sm:$0xff]
        %v5023 = vld [vmem:[%s4718 + $0x39] sm:$0xff]
        %v5024 = vld [vmem:[%s4718 + $0x49] sm:$0xff]
        %v5025 = vld [vmem:[%s4718 + $0x51] sm:$0xff]
        %v5026 = vld [vmem:[%s4718 + $0x61] sm:$0xff]
        %v5027 = vld [vmem:[%s4718 + $0x69] sm:$0xff]
        %v5028 = vld [vmem:[%s4718 + $0x79] sm:$0xff]
        %v5029 = vld [vmem:[%s4718 + $0x81] sm:$0xff]
        %v5030 = vld [vmem:[%s4718 + $0x91] sm:$0xff]
        %v5031 = vld [vmem:[%s4718 + $0x99] sm:$0xff]
        %v5032 = vld [vmem:[%s4718 + $0xa9] sm:$0xff]
        %v5033 = vld [vmem:[%s4718 + $0xb1] sm:$0xff]
        %v5034 = vld [vmem:[%s4718 + $0xc1] sm:$0xff]
        %v5035 = vld [vmem:[%s4718 + $0xc9] sm:$0xff]
        %v5036 = vld [vmem:[%s4718 + $0xd9] sm:$0xff]
        %v5037 = vld [vmem:[%s4718 + $0xe1] sm:$0xff]
        %v5038 = vld [vmem:[%s4718 + $0xf1] sm:$0xff]
        %v5039 = vld [vmem:[%s4718 + $0xf9] sm:$0xff]
        %v5040 = vld [vmem:[%s4718 + $0x109] sm:$0xff]
        %v5041 = vld [vmem:[%s4718 + $0x111] sm:$0xff]
        %v5042 = vld [vmem:[%s4718 + $0x121] sm:$0xff]
        %v5043 = vld [vmem:[%s4718 + $0x129] sm:$0xff]
        %v5044 = vld [vmem:[%s4718 + $0x139] sm:$0xff]
        %v5045 = vld [vmem:[%s4718 + $0x141] sm:$0xff]
        %v5046 = vld [vmem:[%s4718 + $0x151] sm:$0xff]
        %v5047 = vld [vmem:[%s4718 + $0x159] sm:$0xff]
        %v5048 = vld [vmem:[%s4718 + $0x169] sm:$0xff]
        %v5049 = vld [vmem:[%s4718 + $0x171] sm:$0xff]
        %v5050 = vld [vmem:[%s4718 + $0x2] sm:$0xff]
        %v5051 = vld [vmem:[%s4718 + $0xa] sm:$0xff]
        %v5052 = vld [vmem:[%s4718 + $0x1a] sm:$0xff]
        %v5053 = vld [vmem:[%s4718 + $0x22] sm:$0xff]
        %v5054 = vld [vmem:[%s4718 + $0x32] sm:$0xff]
        %v5055 = vld [vmem:[%s4718 + $0x3a] sm:$0xff]
        %v5056 = vld [vmem:[%s4718 + $0x4a] sm:$0xff]
        %v5057 = vld [vmem:[%s4718 + $0x52] sm:$0xff]
        %v5058 = vld [vmem:[%s4718 + $0x62] sm:$0xff]
        %v5059 = vld [vmem:[%s4718 + $0x6a] sm:$0xff]
        %v5060 = vld [vmem:[%s4718 + $0x7a] sm:$0xff]
        %v5061 = vld [vmem:[%s4718 + $0x82] sm:$0xff]
        %v5062 = vld [vmem:[%s4718 + $0x92] sm:$0xff]
        %v5063 = vld [vmem:[%s4718 + $0x9a] sm:$0xff]
        %v5064 = vld [vmem:[%s4718 + $0xaa] sm:$0xff]
        %v5065 = vld [vmem:[%s4718 + $0xb2] sm:$0xff]
        %v5066 = vld [vmem:[%s4718 + $0xc2] sm:$0xff]
        %v5067 = vld [vmem:[%s4718 + $0xca] sm:$0xff]
        %v5068 = vld [vmem:[%s4718 + $0xda] sm:$0xff]
        %v5069 = vld [vmem:[%s4718 + $0xe2] sm:$0xff]
        %v5070 = vld [vmem:[%s4718 + $0xf2] sm:$0xff]
        %v5071 = vld [vmem:[%s4718 + $0xfa] sm:$0xff]
        %v5072 = vld [vmem:[%s4718 + $0x10a] sm:$0xff]
        %v5073 = vld [vmem:[%s4718 + $0x112] sm:$0xff]
        %v5074 = vld [vmem:[%s4718 + $0x122] sm:$0xff]
        %v5075 = vld [vmem:[%s4718 + $0x12a] sm:$0xff]
        %v5076 = vld [vmem:[%s4718 + $0x13a] sm:$0xff]
        %v5077 = vld [vmem:[%s4718 + $0x142] sm:$0xff]
        %v5078 = vld [vmem:[%s4718 + $0x152] sm:$0xff]
        %v5079 = vld [vmem:[%s4718 + $0x15a] sm:$0xff]
        %v5080 = vld [vmem:[%s4718 + $0x16a] sm:$0xff]
        %v5081 = vld [vmem:[%s4718 + $0x172] sm:$0xff]
        %v5082 = vpack.c.bf16 %v4987, %v4986
        %v5083 = vpack.c.bf16 %v5019, %v5018
        %v5084 = vpack.c.bf16 %v5051, %v5050
        %v5085 = vpack.c.bf16 %v4989, %v4988
        %v5086 = vpack.c.bf16 %v5021, %v5020
        %v5087 = vpack.c.bf16 %v5053, %v5052
        %v5088 = vpack.c.bf16 %v4991, %v4990
        %v5089 = vpack.c.bf16 %v5023, %v5022
        %v5090 = vpack.c.bf16 %v5055, %v5054
        %v5091 = vpack.c.bf16 %v4993, %v4992
        %v5092 = vpack.c.bf16 %v5025, %v5024
        %v5093 = vpack.c.bf16 %v5057, %v5056
        %v5094 = vpack.c.bf16 %v4995, %v4994
        %v5095 = vpack.c.bf16 %v5027, %v5026
        %v5096 = vpack.c.bf16 %v5059, %v5058
        %v5097 = vpack.c.bf16 %v4997, %v4996
        %v5098 = vpack.c.bf16 %v5029, %v5028
        %v5099 = vpack.c.bf16 %v5061, %v5060
        %v5100 = vpack.c.bf16 %v4999, %v4998
        %v5101 = vpack.c.bf16 %v5031, %v5030
        %v5102 = vpack.c.bf16 %v5063, %v5062
        %v5103 = vpack.c.bf16 %v5001, %v5000
        %v5104 = vpack.c.bf16 %v5033, %v5032
        %v5105 = vpack.c.bf16 %v5065, %v5064
        %v5106 = vpack.c.bf16 %v5003, %v5002
        %v5107 = vpack.c.bf16 %v5035, %v5034
        %v5108 = vpack.c.bf16 %v5067, %v5066
        %v5109 = vpack.c.bf16 %v5005, %v5004
        %v5110 = vpack.c.bf16 %v5037, %v5036
        %v5111 = vpack.c.bf16 %v5069, %v5068
        %v5112 = vpack.c.bf16 %v5007, %v5006
        %v5113 = vpack.c.bf16 %v5039, %v5038
        %v5114 = vpack.c.bf16 %v5071, %v5070
        %v5115 = vpack.c.bf16 %v5009, %v5008
        %v5116 = vpack.c.bf16 %v5041, %v5040
        %v5117 = vpack.c.bf16 %v5073, %v5072
        %v5118 = vpack.c.bf16 %v5011, %v5010
        %v5119 = vpack.c.bf16 %v5043, %v5042
        %v5120 = vpack.c.bf16 %v5075, %v5074
        %v5121 = vpack.c.bf16 %v5013, %v5012
        %v5122 = vpack.c.bf16 %v5045, %v5044
        %v5123 = vpack.c.bf16 %v5077, %v5076
        %v5124 = vpack.c.bf16 %v5015, %v5014
        %v5125 = vpack.c.bf16 %v5047, %v5046
        %v5126 = vpack.c.bf16 %v5079, %v5078
        %v5127 = vpack.c.bf16 %v5017, %v5016
        %v5128 = vpack.c.bf16 %v5049, %v5048
        %v5129 = vpack.c.bf16 %v5081, %v5080
        %s5130 = scalar_lea.vmem [#allocation11], 192
        %v5131 = vld [vmem:[%s5130] sm:$0xf]
        %v5132 = vld [vmem:[%s5130 + $0x4] sm:$0xf]
        %v5133 = vld [vmem:[%s5130 + $0x8] sm:$0xf]
        %v5134 = vld [vmem:[%s5130 + $0xc] sm:$0xf]
        %v5135 = vld [vmem:[%s5130 + $0x10] sm:$0xf]
        %v5136 = vld [vmem:[%s5130 + $0x14] sm:$0xf]
        %v5137 = vld [vmem:[%s5130 + $0x18] sm:$0xf]
        %v5138 = vld [vmem:[%s5130 + $0x1c] sm:$0xf]
        %v5139 = vld [vmem:[%s5130 + $0x20] sm:$0xf]
        %v5140 = vld [vmem:[%s5130 + $0x24] sm:$0xf]
        %v5141 = vld [vmem:[%s5130 + $0x28] sm:$0xf]
        %v5142 = vld [vmem:[%s5130 + $0x2c] sm:$0xf]
        %v5143 = vld [vmem:[%s5130 + $0x30] sm:$0xf]
        %v5144 = vld [vmem:[%s5130 + $0x34] sm:$0xf]
        %v5145 = vld [vmem:[%s5130 + $0x38] sm:$0xf]
        %v5146 = vld [vmem:[%s5130 + $0x3c] sm:$0xf]
        %v5147 = vld [vmem:[%s5130 + $0x40] sm:$0xf]
        %v5148 = vld [vmem:[%s5130 + $0x44] sm:$0xf]
        %v5149 = vld [vmem:[%s5130 + $0x48] sm:$0xf]
        %v5150 = vld [vmem:[%s5130 + $0x4c] sm:$0xf]
        %v5151 = vld [vmem:[%s5130 + $0x50] sm:$0xf]
        %v5152 = vld [vmem:[%s5130 + $0x54] sm:$0xf]
        %v5153 = vld [vmem:[%s5130 + $0x58] sm:$0xf]
        %v5154 = vld [vmem:[%s5130 + $0x5c] sm:$0xf]
        %v5155 = vld [vmem:[%s5130 + $0x60] sm:$0xf]
        %v5156 = vld [vmem:[%s5130 + $0x64] sm:$0xf]
        %v5157 = vld [vmem:[%s5130 + $0x68] sm:$0xf]
        %v5158 = vld [vmem:[%s5130 + $0x6c] sm:$0xf]
        %v5159 = vld [vmem:[%s5130 + $0x70] sm:$0xf]
        %v5160 = vld [vmem:[%s5130 + $0x74] sm:$0xf]
        %v5161 = vld [vmem:[%s5130 + $0x78] sm:$0xf]
        %v5162 = vld [vmem:[%s5130 + $0x7c] sm:$0xf]
        %v5163 = vld [vmem:[%s5130 + $0x80] sm:$0xf]
        %v5164 = vld [vmem:[%s5130 + $0x84] sm:$0xf]
        %v5165 = vld [vmem:[%s5130 + $0x88] sm:$0xf]
        %v5166 = vld [vmem:[%s5130 + $0x8c] sm:$0xf]
        %v5167 = vld [vmem:[%s5130 + $0x90] sm:$0xf]
        %v5168 = vld [vmem:[%s5130 + $0x94] sm:$0xf]
        %v5169 = vld [vmem:[%s5130 + $0x98] sm:$0xf]
        %v5170 = vld [vmem:[%s5130 + $0x9c] sm:$0xf]
        %v5171 = vld [vmem:[%s5130 + $0xa0] sm:$0xf]
        %v5172 = vld [vmem:[%s5130 + $0xa4] sm:$0xf]
        %v5173 = vld [vmem:[%s5130 + $0xa8] sm:$0xf]
        %v5174 = vld [vmem:[%s5130 + $0xac] sm:$0xf]
        %v5175 = vld [vmem:[%s5130 + $0xb0] sm:$0xf]
        %v5176 = vld [vmem:[%s5130 + $0xb4] sm:$0xf]
        %v5177 = vld [vmem:[%s5130 + $0xb8] sm:$0xf]
        %v5178 = vld [vmem:[%s5130 + $0xbc] sm:$0xf]
        %v5227 = vunpack.c.l.b16 %v5131
        %v5228 = vunpack.c.l.b16 %v5132
        %v5229 = vunpack.c.l.b16 %v5133
        %v5230 = vunpack.c.l.b16 %v5134
        %v5231 = vunpack.c.l.b16 %v5135
        %v5232 = vunpack.c.l.b16 %v5136
        %v5233 = vunpack.c.l.b16 %v5137
        %v5234 = vunpack.c.l.b16 %v5138
        %v5235 = vunpack.c.l.b16 %v5139
        %v5236 = vunpack.c.l.b16 %v5140
        %v5237 = vunpack.c.l.b16 %v5141
        %v5238 = vunpack.c.l.b16 %v5142
        %v5239 = vunpack.c.l.b16 %v5143
        %v5240 = vunpack.c.l.b16 %v5144
        %v5241 = vunpack.c.l.b16 %v5145
        %v5242 = vunpack.c.l.b16 %v5146
        %v5243 = vunpack.c.l.b16 %v5147
        %v5244 = vunpack.c.l.b16 %v5148
        %v5245 = vunpack.c.l.b16 %v5149
        %v5246 = vunpack.c.l.b16 %v5150
        %v5247 = vunpack.c.l.b16 %v5151
        %v5248 = vunpack.c.l.b16 %v5152
        %v5249 = vunpack.c.l.b16 %v5153
        %v5250 = vunpack.c.l.b16 %v5154
        %v5251 = vunpack.c.l.b16 %v5155
        %v5252 = vunpack.c.l.b16 %v5156
        %v5253 = vunpack.c.l.b16 %v5157
        %v5254 = vunpack.c.l.b16 %v5158
        %v5255 = vunpack.c.l.b16 %v5159
        %v5256 = vunpack.c.l.b16 %v5160
        %v5257 = vunpack.c.l.b16 %v5161
        %v5258 = vunpack.c.l.b16 %v5162
        %v5259 = vunpack.c.l.b16 %v5163
        %v5260 = vunpack.c.l.b16 %v5164
        %v5261 = vunpack.c.l.b16 %v5165
        %v5262 = vunpack.c.l.b16 %v5166
        %v5263 = vunpack.c.l.b16 %v5167
        %v5264 = vunpack.c.l.b16 %v5168
        %v5265 = vunpack.c.l.b16 %v5169
        %v5266 = vunpack.c.l.b16 %v5170
        %v5267 = vunpack.c.l.b16 %v5171
        %v5268 = vunpack.c.l.b16 %v5172
        %v5269 = vunpack.c.l.b16 %v5173
        %v5270 = vunpack.c.l.b16 %v5174
        %v5271 = vunpack.c.l.b16 %v5175
        %v5272 = vunpack.c.l.b16 %v5176
        %v5273 = vunpack.c.l.b16 %v5177
        %v5274 = vunpack.c.l.b16 %v5178
        %v5275 = vpack.c.b16 %v5228, %v5227
        %v5276 = vpack.c.b16 %v5230, %v5229
        %v5277 = vpack.c.b16 %v5232, %v5231
        %v5278 = vpack.c.b16 %v5234, %v5233
        %v5279 = vpack.c.b16 %v5236, %v5235
        %v5280 = vpack.c.b16 %v5238, %v5237
        %v5281 = vpack.c.b16 %v5240, %v5239
        %v5282 = vpack.c.b16 %v5242, %v5241
        %v5283 = vpack.c.b16 %v5244, %v5243
        %v5284 = vpack.c.b16 %v5246, %v5245
        %v5285 = vpack.c.b16 %v5248, %v5247
        %v5286 = vpack.c.b16 %v5250, %v5249
        %v5287 = vpack.c.b16 %v5252, %v5251
        %v5288 = vpack.c.b16 %v5254, %v5253
        %v5289 = vpack.c.b16 %v5256, %v5255
        %v5290 = vpack.c.b16 %v5258, %v5257
        %v5291 = vpack.c.b16 %v5260, %v5259
        %v5292 = vpack.c.b16 %v5262, %v5261
        %v5293 = vpack.c.b16 %v5264, %v5263
        %v5294 = vpack.c.b16 %v5266, %v5265
        %v5295 = vpack.c.b16 %v5268, %v5267
        %v5296 = vpack.c.b16 %v5270, %v5269
        %v5297 = vpack.c.b16 %v5272, %v5271
        %v5298 = vpack.c.b16 %v5274, %v5273
        %5323 = vmatprep.subr.bf16.mxu0 0
        %5324 = vmatpush1.bf16.msra.mxu0 %v5282
        %5325 = vmatprep.subr.bf16.mxu0 0
        %5326 = vmatpush1.bf16.msra.mxu0 %v5281
        %5327 = vmatprep.subr.bf16.mxu0 0
        %5328 = vmatpush1.bf16.msra.mxu0 %v5280
        %5329 = vmatprep.subr.bf16.mxu0 0
        %5330 = vmatpush1.bf16.msra.mxu0 %v5279
        %5331 = vmatprep.subr.bf16.mxu0 0
        %5332 = vmatpush1.bf16.msra.mxu0 %v5278
        %5333 = vmatprep.subr.bf16.mxu0 0
        %5334 = vmatpush1.bf16.msra.mxu0 %v5277
        %5335 = vmatprep.subr.bf16.mxu0 0
        %5336 = vmatpush1.bf16.msra.mxu0 %v5276
        %5337 = vmatprep.subr.bf16.mxu0 0
        %5338 = vmatpush1.bf16.msra.mxu0 %v5275
        %5339 = vmatprep.subr.bf16.mxu0 0
        %5340 = vmatpush2.bf16.msra.mxu0 %v5290
        %5341 = vmatprep.subr.bf16.mxu0 0
        %5342 = vmatpush2.bf16.msra.mxu0 %v5289
        %5343 = vmatprep.subr.bf16.mxu0 0
        %5344 = vmatpush2.bf16.msra.mxu0 %v5288
        %5345 = vmatprep.subr.bf16.mxu0 0
        %5346 = vmatpush2.bf16.msra.mxu0 %v5287
        %5347 = vmatprep.subr.bf16.mxu0 0
        %5348 = vmatpush2.bf16.msra.mxu0 %v5286
        %5349 = vmatprep.subr.bf16.mxu0 0
        %5350 = vmatpush2.bf16.msra.mxu0 %v5285
        %5351 = vmatprep.subr.bf16.mxu0 0
        %5352 = vmatpush2.bf16.msra.mxu0 %v5284
        %5353 = vmatprep.subr.bf16.mxu0 0
        %5354 = vmatpush2.bf16.msra.mxu0 %v5283
        %5355 = vmatprep.mubr.bf16.mxu0 %v5083
        %5356 = vmatmul.mubr.bf16.gmra.mxu0 %v5082
        %v5357 = vpop.f32.mrf.mxu0
        %v5358 = vadd.f32 0.0, %v5357
        %v5359 = vpop.f32.mrf.mxu0
        %v5360 = vpop.f32.mrf.mxu0
        %v5361 = vadd.f32 0.0, %v5360
        %v5362 = vpop.f32.mrf.mxu0
        %5363 = vmatprep.mubr.bf16.mxu0 %v5086
        %5364 = vmatmul.mubr.bf16.gmra.mxu0 %v5085
        %v5365 = vpop.f32.mrf.mxu0
        %v5366 = vadd.f32 0.0, %v5365
        %v5367 = vpop.f32.mrf.mxu0
        %v5368 = vpop.f32.mrf.mxu0
        %v5369 = vadd.f32 0.0, %v5368
        %v5370 = vpop.f32.mrf.mxu0
        %5371 = vmatprep.mubr.bf16.mxu0 %v5089
        %5372 = vmatmul.mubr.bf16.gmra.mxu0 %v5088
        %v5373 = vpop.f32.mrf.mxu0
        %v5374 = vadd.f32 0.0, %v5373
        %v5375 = vpop.f32.mrf.mxu0
        %v5376 = vpop.f32.mrf.mxu0
        %v5377 = vadd.f32 0.0, %v5376
        %v5378 = vpop.f32.mrf.mxu0
        %5379 = vmatprep.mubr.bf16.mxu0 %v5092
        %5380 = vmatmul.mubr.bf16.gmra.mxu0 %v5091
        %v5381 = vpop.f32.mrf.mxu0
        %v5382 = vadd.f32 0.0, %v5381
        %v5383 = vpop.f32.mrf.mxu0
        %v5384 = vpop.f32.mrf.mxu0
        %v5385 = vadd.f32 0.0, %v5384
        %v5386 = vpop.f32.mrf.mxu0
        %5387 = vmatprep.mubr.bf16.mxu0 %v5095
        %5388 = vmatmul.mubr.bf16.gmra.mxu0 %v5094
        %v5389 = vpop.f32.mrf.mxu0
        %v5390 = vadd.f32 0.0, %v5389
        %v5391 = vpop.f32.mrf.mxu0
        %v5392 = vpop.f32.mrf.mxu0
        %v5393 = vadd.f32 0.0, %v5392
        %v5394 = vpop.f32.mrf.mxu0
        %5395 = vmatprep.mubr.bf16.mxu0 %v5098
        %5396 = vmatmul.mubr.bf16.gmra.mxu0 %v5097
        %v5397 = vpop.f32.mrf.mxu0
        %v5398 = vadd.f32 0.0, %v5397
        %v5399 = vpop.f32.mrf.mxu0
        %v5400 = vpop.f32.mrf.mxu0
        %v5401 = vadd.f32 0.0, %v5400
        %v5402 = vpop.f32.mrf.mxu0
        %5403 = vmatprep.mubr.bf16.mxu0 %v5101
        %5404 = vmatmul.mubr.bf16.gmra.mxu0 %v5100
        %v5405 = vpop.f32.mrf.mxu0
        %v5406 = vadd.f32 0.0, %v5405
        %v5407 = vpop.f32.mrf.mxu0
        %v5408 = vpop.f32.mrf.mxu0
        %v5409 = vadd.f32 0.0, %v5408
        %v5410 = vpop.f32.mrf.mxu0
        %5411 = vmatprep.mubr.bf16.mxu0 %v5104
        %5412 = vmatmul.mubr.bf16.gmra.mxu0 %v5103
        %v5413 = vpop.f32.mrf.mxu0
        %v5414 = vadd.f32 0.0, %v5413
        %v5415 = vpop.f32.mrf.mxu0
        %v5416 = vpop.f32.mrf.mxu0
        %v5417 = vadd.f32 0.0, %v5416
        %v5418 = vpop.f32.mrf.mxu0
        %5419 = vmatprep.mubr.bf16.mxu0 %v5107
        %5420 = vmatmul.mubr.bf16.gmra.mxu0 %v5106
        %v5421 = vpop.f32.mrf.mxu0
        %v5422 = vadd.f32 0.0, %v5421
        %v5423 = vpop.f32.mrf.mxu0
        %v5424 = vpop.f32.mrf.mxu0
        %v5425 = vadd.f32 0.0, %v5424
        %v5426 = vpop.f32.mrf.mxu0
        %5427 = vmatprep.mubr.bf16.mxu0 %v5110
        %5428 = vmatmul.mubr.bf16.gmra.mxu0 %v5109
        %v5429 = vpop.f32.mrf.mxu0
        %v5430 = vadd.f32 0.0, %v5429
        %v5431 = vpop.f32.mrf.mxu0
        %v5432 = vpop.f32.mrf.mxu0
        %v5433 = vadd.f32 0.0, %v5432
        %v5434 = vpop.f32.mrf.mxu0
        %5435 = vmatprep.mubr.bf16.mxu0 %v5113
        %5436 = vmatmul.mubr.bf16.gmra.mxu0 %v5112
        %v5437 = vpop.f32.mrf.mxu0
        %v5438 = vadd.f32 0.0, %v5437
        %v5439 = vpop.f32.mrf.mxu0
        %v5440 = vpop.f32.mrf.mxu0
        %v5441 = vadd.f32 0.0, %v5440
        %v5442 = vpop.f32.mrf.mxu0
        %5443 = vmatprep.mubr.bf16.mxu0 %v5116
        %5444 = vmatmul.mubr.bf16.gmra.mxu0 %v5115
        %v5445 = vpop.f32.mrf.mxu0
        %v5446 = vadd.f32 0.0, %v5445
        %v5447 = vpop.f32.mrf.mxu0
        %v5448 = vpop.f32.mrf.mxu0
        %v5449 = vadd.f32 0.0, %v5448
        %v5450 = vpop.f32.mrf.mxu0
        %5451 = vmatprep.mubr.bf16.mxu0 %v5119
        %5452 = vmatmul.mubr.bf16.gmra.mxu0 %v5118
        %v5453 = vpop.f32.mrf.mxu0
        %v5454 = vadd.f32 0.0, %v5453
        %v5455 = vpop.f32.mrf.mxu0
        %v5456 = vpop.f32.mrf.mxu0
        %v5457 = vadd.f32 0.0, %v5456
        %v5458 = vpop.f32.mrf.mxu0
        %5459 = vmatprep.mubr.bf16.mxu0 %v5122
        %5460 = vmatmul.mubr.bf16.gmra.mxu0 %v5121
        %v5461 = vpop.f32.mrf.mxu0
        %v5462 = vadd.f32 0.0, %v5461
        %v5463 = vpop.f32.mrf.mxu0
        %v5464 = vpop.f32.mrf.mxu0
        %v5465 = vadd.f32 0.0, %v5464
        %v5466 = vpop.f32.mrf.mxu0
        %5467 = vmatprep.mubr.bf16.mxu0 %v5125
        %5468 = vmatmul.mubr.bf16.gmra.mxu0 %v5124
        %v5469 = vpop.f32.mrf.mxu0
        %v5470 = vadd.f32 0.0, %v5469
        %v5471 = vpop.f32.mrf.mxu0
        %v5472 = vpop.f32.mrf.mxu0
        %v5473 = vadd.f32 0.0, %v5472
        %v5474 = vpop.f32.mrf.mxu0
        %5475 = vmatprep.mubr.bf16.mxu0 %v5128
        %5476 = vmatmul.mubr.bf16.gmra.mxu0 %v5127
        %v5477 = vpop.f32.mrf.mxu0
        %v5478 = vadd.f32 0.0, %v5477
        %v5479 = vpop.f32.mrf.mxu0
        %v5480 = vpop.f32.mrf.mxu0
        %v5481 = vadd.f32 0.0, %v5480
        %v5482 = vpop.f32.mrf.mxu0
        %5483 = vdwg.mxu0
        %5484 = vmatprep.subr.bf16.mxu0 0
        %5485 = vmatpush1.bf16.msra.mxu0 %v5298
        %5486 = vmatprep.subr.bf16.mxu0 0
        %5487 = vmatpush1.bf16.msra.mxu0 %v5297
        %5488 = vmatprep.subr.bf16.mxu0 0
        %5489 = vmatpush1.bf16.msra.mxu0 %v5296
        %5490 = vmatprep.subr.bf16.mxu0 0
        %5491 = vmatpush1.bf16.msra.mxu0 %v5295
        %5492 = vmatprep.subr.bf16.mxu0 0
        %5493 = vmatpush1.bf16.msra.mxu0 %v5294
        %5494 = vmatprep.subr.bf16.mxu0 0
        %5495 = vmatpush1.bf16.msra.mxu0 %v5293
        %5496 = vmatprep.subr.bf16.mxu0 0
        %5497 = vmatpush1.bf16.msra.mxu0 %v5292
        %5498 = vmatprep.subr.bf16.mxu0 0
        %5499 = vmatpush1.bf16.msra.mxu0 %v5291
        %5500 = vmatprep.subr.bf16.mxu0 0
        %5501 = vmatpush2.bf16.msra.mxu0 0
        %5502 = vmatprep.subr.bf16.mxu0 0
        %5503 = vmatpush2.bf16.msra.mxu0 0
        %5504 = vmatprep.subr.bf16.mxu0 0
        %5505 = vmatpush2.bf16.msra.mxu0 0
        %5506 = vmatprep.subr.bf16.mxu0 0
        %5507 = vmatpush2.bf16.msra.mxu0 0
        %5508 = vmatprep.subr.bf16.mxu0 0
        %5509 = vmatpush2.bf16.msra.mxu0 0
        %5510 = vmatprep.subr.bf16.mxu0 0
        %5511 = vmatpush2.bf16.msra.mxu0 0
        %5512 = vmatprep.subr.bf16.mxu0 0
        %5513 = vmatpush2.bf16.msra.mxu0 0
        %5514 = vmatprep.subr.bf16.mxu0 0
        %5515 = vmatpush2.bf16.msra.mxu0 0
        %5516 = vmatprep.mubr.bf16.mxu0 0
        %5517 = vmatmul.mubr.bf16.gmra.mxu0 %v5084
        %v5518 = vpop.f32.mrf.mxu0
        %v5519 = vadd.f32 %v5358, %v5518
        %v5520 = vpop.f32.mrf.mxu0
        %v5521 = vpop.f32.mrf.mxu0
        %v5522 = vadd.f32 %v5361, %v5521
        %v5523 = vpop.f32.mrf.mxu0
        %5524 = vmatprep.mubr.bf16.mxu0 0
        %5525 = vmatmul.mubr.bf16.gmra.mxu0 %v5087
        %v5526 = vpop.f32.mrf.mxu0
        %v5527 = vadd.f32 %v5366, %v5526
        %v5528 = vpop.f32.mrf.mxu0
        %v5529 = vpop.f32.mrf.mxu0
        %v5530 = vadd.f32 %v5369, %v5529
        %v5531 = vpop.f32.mrf.mxu0
        %5532 = vmatprep.mubr.bf16.mxu0 0
        %5533 = vmatmul.mubr.bf16.gmra.mxu0 %v5090
        %v5534 = vpop.f32.mrf.mxu0
        %v5535 = vadd.f32 %v5374, %v5534
        %v5536 = vpop.f32.mrf.mxu0
        %v5537 = vpop.f32.mrf.mxu0
        %v5538 = vadd.f32 %v5377, %v5537
        %v5539 = vpop.f32.mrf.mxu0
        %5540 = vmatprep.mubr.bf16.mxu0 0
        %5541 = vmatmul.mubr.bf16.gmra.mxu0 %v5093
        %v5542 = vpop.f32.mrf.mxu0
        %v5543 = vadd.f32 %v5382, %v5542
        %v5544 = vpop.f32.mrf.mxu0
        %v5545 = vpop.f32.mrf.mxu0
        %v5546 = vadd.f32 %v5385, %v5545
        %v5547 = vpop.f32.mrf.mxu0
        %5548 = vmatprep.mubr.bf16.mxu0 0
        %5549 = vmatmul.mubr.bf16.gmra.mxu0 %v5096
        %v5550 = vpop.f32.mrf.mxu0
        %v5551 = vadd.f32 %v5390, %v5550
        %v5552 = vpop.f32.mrf.mxu0
        %v5553 = vpop.f32.mrf.mxu0
        %v5554 = vadd.f32 %v5393, %v5553
        %v5555 = vpop.f32.mrf.mxu0
        %5556 = vmatprep.mubr.bf16.mxu0 0
        %5557 = vmatmul.mubr.bf16.gmra.mxu0 %v5099
        %v5558 = vpop.f32.mrf.mxu0
        %v5559 = vadd.f32 %v5398, %v5558
        %v5560 = vpop.f32.mrf.mxu0
        %v5561 = vpop.f32.mrf.mxu0
        %v5562 = vadd.f32 %v5401, %v5561
        %v5563 = vpop.f32.mrf.mxu0
        %5564 = vmatprep.mubr.bf16.mxu0 0
        %5565 = vmatmul.mubr.bf16.gmra.mxu0 %v5102
        %v5566 = vpop.f32.mrf.mxu0
        %v5567 = vadd.f32 %v5406, %v5566
        %v5568 = vpop.f32.mrf.mxu0
        %v5569 = vpop.f32.mrf.mxu0
        %v5570 = vadd.f32 %v5409, %v5569
        %v5571 = vpop.f32.mrf.mxu0
        %5572 = vmatprep.mubr.bf16.mxu0 0
        %5573 = vmatmul.mubr.bf16.gmra.mxu0 %v5105
        %v5574 = vpop.f32.mrf.mxu0
        %v5575 = vadd.f32 %v5414, %v5574
        %v5576 = vpop.f32.mrf.mxu0
        %v5577 = vpop.f32.mrf.mxu0
        %v5578 = vadd.f32 %v5417, %v5577
        %v5579 = vpop.f32.mrf.mxu0
        %5580 = vmatprep.mubr.bf16.mxu0 0
        %5581 = vmatmul.mubr.bf16.gmra.mxu0 %v5108
        %v5582 = vpop.f32.mrf.mxu0
        %v5583 = vadd.f32 %v5422, %v5582
        %v5584 = vpop.f32.mrf.mxu0
        %v5585 = vpop.f32.mrf.mxu0
        %v5586 = vadd.f32 %v5425, %v5585
        %v5587 = vpop.f32.mrf.mxu0
        %5588 = vmatprep.mubr.bf16.mxu0 0
        %5589 = vmatmul.mubr.bf16.gmra.mxu0 %v5111
        %v5590 = vpop.f32.mrf.mxu0
        %v5591 = vadd.f32 %v5430, %v5590
        %v5592 = vpop.f32.mrf.mxu0
        %v5593 = vpop.f32.mrf.mxu0
        %v5594 = vadd.f32 %v5433, %v5593
        %v5595 = vpop.f32.mrf.mxu0
        %5596 = vmatprep.mubr.bf16.mxu0 0
        %5597 = vmatmul.mubr.bf16.gmra.mxu0 %v5114
        %v5598 = vpop.f32.mrf.mxu0
        %v5599 = vadd.f32 %v5438, %v5598
        %v5600 = vpop.f32.mrf.mxu0
        %v5601 = vpop.f32.mrf.mxu0
        %v5602 = vadd.f32 %v5441, %v5601
        %v5603 = vpop.f32.mrf.mxu0
        %5604 = vmatprep.mubr.bf16.mxu0 0
        %5605 = vmatmul.mubr.bf16.gmra.mxu0 %v5117
        %v5606 = vpop.f32.mrf.mxu0
        %v5607 = vadd.f32 %v5446, %v5606
        %v5608 = vpop.f32.mrf.mxu0
        %v5609 = vpop.f32.mrf.mxu0
        %v5610 = vadd.f32 %v5449, %v5609
        %v5611 = vpop.f32.mrf.mxu0
        %5612 = vmatprep.mubr.bf16.mxu0 0
        %5613 = vmatmul.mubr.bf16.gmra.mxu0 %v5120
        %v5614 = vpop.f32.mrf.mxu0
        %v5615 = vadd.f32 %v5454, %v5614
        %v5616 = vpop.f32.mrf.mxu0
        %v5617 = vpop.f32.mrf.mxu0
        %v5618 = vadd.f32 %v5457, %v5617
        %v5619 = vpop.f32.mrf.mxu0
        %5620 = vmatprep.mubr.bf16.mxu0 0
        %5621 = vmatmul.mubr.bf16.gmra.mxu0 %v5123
        %v5622 = vpop.f32.mrf.mxu0
        %v5623 = vadd.f32 %v5462, %v5622
        %v5624 = vpop.f32.mrf.mxu0
        %v5625 = vpop.f32.mrf.mxu0
        %v5626 = vadd.f32 %v5465, %v5625
        %v5627 = vpop.f32.mrf.mxu0
        %5628 = vmatprep.mubr.bf16.mxu0 0
        %5629 = vmatmul.mubr.bf16.gmra.mxu0 %v5126
        %v5630 = vpop.f32.mrf.mxu0
        %v5631 = vadd.f32 %v5470, %v5630
        %v5632 = vpop.f32.mrf.mxu0
        %v5633 = vpop.f32.mrf.mxu0
        %v5634 = vadd.f32 %v5473, %v5633
        %v5635 = vpop.f32.mrf.mxu0
        %5636 = vmatprep.mubr.bf16.mxu0 0
        %5637 = vmatmul.mubr.bf16.gmra.mxu0 %v5129
        %v5638 = vpop.f32.mrf.mxu0
        %v5639 = vadd.f32 %v5478, %v5638
        %v5640 = vpop.f32.mrf.mxu0
        %v5641 = vpop.f32.mrf.mxu0
        %v5642 = vadd.f32 %v5481, %v5641
        %v5643 = vpop.f32.mrf.mxu0
        %5644 = vdwg.mxu0
        %v5693 = vunpack.c.l.b16 %v4938
        %v5694 = vunpack.c.l.b16 %v4939
        %v5695 = vunpack.c.l.b16 %v4940
        %v5696 = vunpack.c.l.b16 %v4941
        %v5697 = vunpack.c.l.b16 %v4942
        %v5698 = vunpack.c.l.b16 %v4943
        %v5699 = vunpack.c.l.b16 %v4944
        %v5700 = vunpack.c.l.b16 %v4945
        %v5701 = vunpack.c.l.b16 %v4946
        %v5702 = vunpack.c.l.b16 %v4947
        %v5703 = vunpack.c.l.b16 %v4948
        %v5704 = vunpack.c.l.b16 %v4949
        %v5705 = vunpack.c.l.b16 %v4950
        %v5706 = vunpack.c.l.b16 %v4951
        %v5707 = vunpack.c.l.b16 %v4952
        %v5708 = vunpack.c.l.b16 %v4953
        %v5709 = vunpack.c.l.b16 %v4954
        %v5710 = vunpack.c.l.b16 %v4955
        %v5711 = vunpack.c.l.b16 %v4956
        %v5712 = vunpack.c.l.b16 %v4957
        %v5713 = vunpack.c.l.b16 %v4958
        %v5714 = vunpack.c.l.b16 %v4959
        %v5715 = vunpack.c.l.b16 %v4960
        %v5716 = vunpack.c.l.b16 %v4961
        %v5717 = vunpack.c.l.b16 %v4962
        %v5718 = vunpack.c.l.b16 %v4963
        %v5719 = vunpack.c.l.b16 %v4964
        %v5720 = vunpack.c.l.b16 %v4965
        %v5721 = vunpack.c.l.b16 %v4966
        %v5722 = vunpack.c.l.b16 %v4967
        %v5723 = vunpack.c.l.b16 %v4968
        %v5724 = vunpack.c.l.b16 %v4969
        %v5725 = vunpack.c.l.b16 %v4970
        %v5726 = vunpack.c.l.b16 %v4971
        %v5727 = vunpack.c.l.b16 %v4972
        %v5728 = vunpack.c.l.b16 %v4973
        %v5729 = vunpack.c.l.b16 %v4974
        %v5730 = vunpack.c.l.b16 %v4975
        %v5731 = vunpack.c.l.b16 %v4976
        %v5732 = vunpack.c.l.b16 %v4977
        %v5733 = vunpack.c.l.b16 %v4978
        %v5734 = vunpack.c.l.b16 %v4979
        %v5735 = vunpack.c.l.b16 %v4980
        %v5736 = vunpack.c.l.b16 %v4981
        %v5737 = vunpack.c.l.b16 %v4982
        %v5738 = vunpack.c.l.b16 %v4983
        %v5739 = vunpack.c.l.b16 %v4984
        %v5740 = vunpack.c.l.b16 %v4985
        %v5741 = vpack.c.b16 %v5694, %v5693
        %v5742 = vpack.c.b16 %v5696, %v5695
        %v5743 = vpack.c.b16 %v5698, %v5697
        %v5744 = vpack.c.b16 %v5700, %v5699
        %v5745 = vpack.c.b16 %v5702, %v5701
        %v5746 = vpack.c.b16 %v5704, %v5703
        %v5747 = vpack.c.b16 %v5706, %v5705
        %v5748 = vpack.c.b16 %v5708, %v5707
        %v5749 = vpack.c.b16 %v5710, %v5709
        %v5750 = vpack.c.b16 %v5712, %v5711
        %v5751 = vpack.c.b16 %v5714, %v5713
        %v5752 = vpack.c.b16 %v5716, %v5715
        %v5753 = vpack.c.b16 %v5718, %v5717
        %v5754 = vpack.c.b16 %v5720, %v5719
        %v5755 = vpack.c.b16 %v5722, %v5721
        %v5756 = vpack.c.b16 %v5724, %v5723
        %v5757 = vpack.c.b16 %v5726, %v5725
        %v5758 = vpack.c.b16 %v5728, %v5727
        %v5759 = vpack.c.b16 %v5730, %v5729
        %v5760 = vpack.c.b16 %v5732, %v5731
        %v5761 = vpack.c.b16 %v5734, %v5733
        %v5762 = vpack.c.b16 %v5736, %v5735
        %v5763 = vpack.c.b16 %v5738, %v5737
        %v5764 = vpack.c.b16 %v5740, %v5739
        %5789 = vmatprep.subr.bf16.mxu0 0
        %5790 = vmatpush1.bf16.msra.mxu0 %v5748
        %5791 = vmatprep.subr.bf16.mxu0 0
        %5792 = vmatpush1.bf16.msra.mxu0 %v5747
        %5793 = vmatprep.subr.bf16.mxu0 0
        %5794 = vmatpush1.bf16.msra.mxu0 %v5746
        %5795 = vmatprep.subr.bf16.mxu0 0
        %5796 = vmatpush1.bf16.msra.mxu0 %v5745
        %5797 = vmatprep.subr.bf16.mxu0 0
        %5798 = vmatpush1.bf16.msra.mxu0 %v5744
        %5799 = vmatprep.subr.bf16.mxu0 0
        %5800 = vmatpush1.bf16.msra.mxu0 %v5743
        %5801 = vmatprep.subr.bf16.mxu0 0
        %5802 = vmatpush1.bf16.msra.mxu0 %v5742
        %5803 = vmatprep.subr.bf16.mxu0 0
        %5804 = vmatpush1.bf16.msra.mxu0 %v5741
        %5805 = vmatprep.subr.bf16.mxu0 0
        %5806 = vmatpush2.bf16.msra.mxu0 %v5756
        %5807 = vmatprep.subr.bf16.mxu0 0
        %5808 = vmatpush2.bf16.msra.mxu0 %v5755
        %5809 = vmatprep.subr.bf16.mxu0 0
        %5810 = vmatpush2.bf16.msra.mxu0 %v5754
        %5811 = vmatprep.subr.bf16.mxu0 0
        %5812 = vmatpush2.bf16.msra.mxu0 %v5753
        %5813 = vmatprep.subr.bf16.mxu0 0
        %5814 = vmatpush2.bf16.msra.mxu0 %v5752
        %5815 = vmatprep.subr.bf16.mxu0 0
        %5816 = vmatpush2.bf16.msra.mxu0 %v5751
        %5817 = vmatprep.subr.bf16.mxu0 0
        %5818 = vmatpush2.bf16.msra.mxu0 %v5750
        %5819 = vmatprep.subr.bf16.mxu0 0
        %5820 = vmatpush2.bf16.msra.mxu0 %v5749
        %5821 = vmatprep.mubr.bf16.mxu0 %v4891
        %5822 = vmatmul.mubr.bf16.gmra.mxu0 %v4890
        %v5823 = vpop.f32.mrf.mxu0
        %v5824 = vadd.f32 %v5519, %v5823
        %v5825 = vpop.f32.mrf.mxu0
        %v5826 = vpop.f32.mrf.mxu0
        %v5827 = vadd.f32 %v5522, %v5826
        %v5828 = vpop.f32.mrf.mxu0
        %5829 = vmatprep.mubr.bf16.mxu0 %v4894
        %5830 = vmatmul.mubr.bf16.gmra.mxu0 %v4893
        %v5831 = vpop.f32.mrf.mxu0
        %v5832 = vadd.f32 %v5527, %v5831
        %v5833 = vpop.f32.mrf.mxu0
        %v5834 = vpop.f32.mrf.mxu0
        %v5835 = vadd.f32 %v5530, %v5834
        %v5836 = vpop.f32.mrf.mxu0
        %5837 = vmatprep.mubr.bf16.mxu0 %v4897
        %5838 = vmatmul.mubr.bf16.gmra.mxu0 %v4896
        %v5839 = vpop.f32.mrf.mxu0
        %v5840 = vadd.f32 %v5535, %v5839
        %v5841 = vpop.f32.mrf.mxu0
        %v5842 = vpop.f32.mrf.mxu0
        %v5843 = vadd.f32 %v5538, %v5842
        %v5844 = vpop.f32.mrf.mxu0
        %5845 = vmatprep.mubr.bf16.mxu0 %v4900
        %5846 = vmatmul.mubr.bf16.gmra.mxu0 %v4899
        %v5847 = vpop.f32.mrf.mxu0
        %v5848 = vadd.f32 %v5543, %v5847
        %v5849 = vpop.f32.mrf.mxu0
        %v5850 = vpop.f32.mrf.mxu0
        %v5851 = vadd.f32 %v5546, %v5850
        %v5852 = vpop.f32.mrf.mxu0
        %5853 = vmatprep.mubr.bf16.mxu0 %v4903
        %5854 = vmatmul.mubr.bf16.gmra.mxu0 %v4902
        %v5855 = vpop.f32.mrf.mxu0
        %v5856 = vadd.f32 %v5551, %v5855
        %v5857 = vpop.f32.mrf.mxu0
        %v5858 = vpop.f32.mrf.mxu0
        %v5859 = vadd.f32 %v5554, %v5858
        %v5860 = vpop.f32.mrf.mxu0
        %5861 = vmatprep.mubr.bf16.mxu0 %v4906
        %5862 = vmatmul.mubr.bf16.gmra.mxu0 %v4905
        %v5863 = vpop.f32.mrf.mxu0
        %v5864 = vadd.f32 %v5559, %v5863
        %v5865 = vpop.f32.mrf.mxu0
        %v5866 = vpop.f32.mrf.mxu0
        %v5867 = vadd.f32 %v5562, %v5866
        %v5868 = vpop.f32.mrf.mxu0
        %5869 = vmatprep.mubr.bf16.mxu0 %v4909
        %5870 = vmatmul.mubr.bf16.gmra.mxu0 %v4908
        %v5871 = vpop.f32.mrf.mxu0
        %v5872 = vadd.f32 %v5567, %v5871
        %v5873 = vpop.f32.mrf.mxu0
        %v5874 = vpop.f32.mrf.mxu0
        %v5875 = vadd.f32 %v5570, %v5874
        %v5876 = vpop.f32.mrf.mxu0
        %5877 = vmatprep.mubr.bf16.mxu0 %v4912
        %5878 = vmatmul.mubr.bf16.gmra.mxu0 %v4911
        %v5879 = vpop.f32.mrf.mxu0
        %v5880 = vadd.f32 %v5575, %v5879
        %v5881 = vpop.f32.mrf.mxu0
        %v5882 = vpop.f32.mrf.mxu0
        %v5883 = vadd.f32 %v5578, %v5882
        %v5884 = vpop.f32.mrf.mxu0
        %5885 = vmatprep.mubr.bf16.mxu0 %v4915
        %5886 = vmatmul.mubr.bf16.gmra.mxu0 %v4914
        %v5887 = vpop.f32.mrf.mxu0
        %v5888 = vadd.f32 %v5583, %v5887
        %v5889 = vpop.f32.mrf.mxu0
        %v5890 = vpop.f32.mrf.mxu0
        %v5891 = vadd.f32 %v5586, %v5890
        %v5892 = vpop.f32.mrf.mxu0
        %5893 = vmatprep.mubr.bf16.mxu0 %v4918
        %5894 = vmatmul.mubr.bf16.gmra.mxu0 %v4917
        %v5895 = vpop.f32.mrf.mxu0
        %v5896 = vadd.f32 %v5591, %v5895
        %v5897 = vpop.f32.mrf.mxu0
        %v5898 = vpop.f32.mrf.mxu0
        %v5899 = vadd.f32 %v5594, %v5898
        %v5900 = vpop.f32.mrf.mxu0
        %5901 = vmatprep.mubr.bf16.mxu0 %v4921
        %5902 = vmatmul.mubr.bf16.gmra.mxu0 %v4920
        %v5903 = vpop.f32.mrf.mxu0
        %v5904 = vadd.f32 %v5599, %v5903
        %v5905 = vpop.f32.mrf.mxu0
        %v5906 = vpop.f32.mrf.mxu0
        %v5907 = vadd.f32 %v5602, %v5906
        %v5908 = vpop.f32.mrf.mxu0
        %5909 = vmatprep.mubr.bf16.mxu0 %v4924
        %5910 = vmatmul.mubr.bf16.gmra.mxu0 %v4923
        %v5911 = vpop.f32.mrf.mxu0
        %v5912 = vadd.f32 %v5607, %v5911
        %v5913 = vpop.f32.mrf.mxu0
        %v5914 = vpop.f32.mrf.mxu0
        %v5915 = vadd.f32 %v5610, %v5914
        %v5916 = vpop.f32.mrf.mxu0
        %5917 = vmatprep.mubr.bf16.mxu0 %v4927
        %5918 = vmatmul.mubr.bf16.gmra.mxu0 %v4926
        %v5919 = vpop.f32.mrf.mxu0
        %v5920 = vadd.f32 %v5615, %v5919
        %v5921 = vpop.f32.mrf.mxu0
        %v5922 = vpop.f32.mrf.mxu0
        %v5923 = vadd.f32 %v5618, %v5922
        %v5924 = vpop.f32.mrf.mxu0
        %5925 = vmatprep.mubr.bf16.mxu0 %v4930
        %5926 = vmatmul.mubr.bf16.gmra.mxu0 %v4929
        %v5927 = vpop.f32.mrf.mxu0
        %v5928 = vadd.f32 %v5623, %v5927
        %v5929 = vpop.f32.mrf.mxu0
        %v5930 = vpop.f32.mrf.mxu0
        %v5931 = vadd.f32 %v5626, %v5930
        %v5932 = vpop.f32.mrf.mxu0
        %5933 = vmatprep.mubr.bf16.mxu0 %v4933
        %5934 = vmatmul.mubr.bf16.gmra.mxu0 %v4932
        %v5935 = vpop.f32.mrf.mxu0
        %v5936 = vadd.f32 %v5631, %v5935
        %v5937 = vpop.f32.mrf.mxu0
        %v5938 = vpop.f32.mrf.mxu0
        %v5939 = vadd.f32 %v5634, %v5938
        %v5940 = vpop.f32.mrf.mxu0
        %5941 = vmatprep.mubr.bf16.mxu0 %v4936
        %5942 = vmatmul.mubr.bf16.gmra.mxu0 %v4935
        %v5943 = vpop.f32.mrf.mxu0
        %v5944 = vadd.f32 %v5639, %v5943
        %v5945 = vpop.f32.mrf.mxu0
        %v5946 = vpop.f32.mrf.mxu0
        %v5947 = vadd.f32 %v5642, %v5946
        %v5948 = vpop.f32.mrf.mxu0
        %5949 = vdwg.mxu0
        %5950 = vmatprep.subr.bf16.mxu0 0
        %5951 = vmatpush1.bf16.msra.mxu0 %v5764
        %5952 = vmatprep.subr.bf16.mxu0 0
        %5953 = vmatpush1.bf16.msra.mxu0 %v5763
        %5954 = vmatprep.subr.bf16.mxu0 0
        %5955 = vmatpush1.bf16.msra.mxu0 %v5762
        %5956 = vmatprep.subr.bf16.mxu0 0
        %5957 = vmatpush1.bf16.msra.mxu0 %v5761
        %5958 = vmatprep.subr.bf16.mxu0 0
        %5959 = vmatpush1.bf16.msra.mxu0 %v5760
        %5960 = vmatprep.subr.bf16.mxu0 0
        %5961 = vmatpush1.bf16.msra.mxu0 %v5759
        %5962 = vmatprep.subr.bf16.mxu0 0
        %5963 = vmatpush1.bf16.msra.mxu0 %v5758
        %5964 = vmatprep.subr.bf16.mxu0 0
        %5965 = vmatpush1.bf16.msra.mxu0 %v5757
        %5966 = vmatprep.subr.bf16.mxu0 0
        %5967 = vmatpush2.bf16.msra.mxu0 0
        %5968 = vmatprep.subr.bf16.mxu0 0
        %5969 = vmatpush2.bf16.msra.mxu0 0
        %5970 = vmatprep.subr.bf16.mxu0 0
        %5971 = vmatpush2.bf16.msra.mxu0 0
        %5972 = vmatprep.subr.bf16.mxu0 0
        %5973 = vmatpush2.bf16.msra.mxu0 0
        %5974 = vmatprep.subr.bf16.mxu0 0
        %5975 = vmatpush2.bf16.msra.mxu0 0
        %5976 = vmatprep.subr.bf16.mxu0 0
        %5977 = vmatpush2.bf16.msra.mxu0 0
        %5978 = vmatprep.subr.bf16.mxu0 0
        %5979 = vmatpush2.bf16.msra.mxu0 0
        %5980 = vmatprep.subr.bf16.mxu0 0
        %5981 = vmatpush2.bf16.msra.mxu0 0
        %5982 = vmatprep.mubr.bf16.mxu0 0
        %5983 = vmatmul.mubr.bf16.gmra.mxu0 %v4892
        %v5984 = vpop.f32.mrf.mxu0
        %v5985 = vadd.f32 %v5824, %v5984
        %v5986 = vpop.f32.mrf.mxu0
        %v5987 = vpop.f32.mrf.mxu0
        %v5988 = vadd.f32 %v5827, %v5987
        %v5989 = vpop.f32.mrf.mxu0
        %5990 = vmatprep.mubr.bf16.mxu0 0
        %5991 = vmatmul.mubr.bf16.gmra.mxu0 %v4895
        %v5992 = vpop.f32.mrf.mxu0
        %v5993 = vadd.f32 %v5832, %v5992
        %v5994 = vpop.f32.mrf.mxu0
        %v5995 = vpop.f32.mrf.mxu0
        %v5996 = vadd.f32 %v5835, %v5995
        %v5997 = vpop.f32.mrf.mxu0
        %5998 = vmatprep.mubr.bf16.mxu0 0
        %5999 = vmatmul.mubr.bf16.gmra.mxu0 %v4898
        %v6000 = vpop.f32.mrf.mxu0
        %v6001 = vadd.f32 %v5840, %v6000
        %v6002 = vpop.f32.mrf.mxu0
        %v6003 = vpop.f32.mrf.mxu0
        %v6004 = vadd.f32 %v5843, %v6003
        %v6005 = vpop.f32.mrf.mxu0
        %6006 = vmatprep.mubr.bf16.mxu0 0
        %6007 = vmatmul.mubr.bf16.gmra.mxu0 %v4901
        %v6008 = vpop.f32.mrf.mxu0
        %v6009 = vadd.f32 %v5848, %v6008
        %v6010 = vpop.f32.mrf.mxu0
        %v6011 = vpop.f32.mrf.mxu0
        %v6012 = vadd.f32 %v5851, %v6011
        %v6013 = vpop.f32.mrf.mxu0
        %6014 = vmatprep.mubr.bf16.mxu0 0
        %6015 = vmatmul.mubr.bf16.gmra.mxu0 %v4904
        %v6016 = vpop.f32.mrf.mxu0
        %v6017 = vadd.f32 %v5856, %v6016
        %v6018 = vpop.f32.mrf.mxu0
        %v6019 = vpop.f32.mrf.mxu0
        %v6020 = vadd.f32 %v5859, %v6019
        %v6021 = vpop.f32.mrf.mxu0
        %6022 = vmatprep.mubr.bf16.mxu0 0
        %6023 = vmatmul.mubr.bf16.gmra.mxu0 %v4907
        %v6024 = vpop.f32.mrf.mxu0
        %v6025 = vadd.f32 %v5864, %v6024
        %v6026 = vpop.f32.mrf.mxu0
        %v6027 = vpop.f32.mrf.mxu0
        %v6028 = vadd.f32 %v5867, %v6027
        %v6029 = vpop.f32.mrf.mxu0
        %6030 = vmatprep.mubr.bf16.mxu0 0
        %6031 = vmatmul.mubr.bf16.gmra.mxu0 %v4910
        %v6032 = vpop.f32.mrf.mxu0
        %v6033 = vadd.f32 %v5872, %v6032
        %v6034 = vpop.f32.mrf.mxu0
        %v6035 = vpop.f32.mrf.mxu0
        %v6036 = vadd.f32 %v5875, %v6035
        %v6037 = vpop.f32.mrf.mxu0
        %6038 = vmatprep.mubr.bf16.mxu0 0
        %6039 = vmatmul.mubr.bf16.gmra.mxu0 %v4913
        %v6040 = vpop.f32.mrf.mxu0
        %v6041 = vadd.f32 %v5880, %v6040
        %v6042 = vpop.f32.mrf.mxu0
        %v6043 = vpop.f32.mrf.mxu0
        %v6044 = vadd.f32 %v5883, %v6043
        %v6045 = vpop.f32.mrf.mxu0
        %6046 = vmatprep.mubr.bf16.mxu0 0
        %6047 = vmatmul.mubr.bf16.gmra.mxu0 %v4916
        %v6048 = vpop.f32.mrf.mxu0
        %v6049 = vadd.f32 %v5888, %v6048
        %v6050 = vpop.f32.mrf.mxu0
        %v6051 = vpop.f32.mrf.mxu0
        %v6052 = vadd.f32 %v5891, %v6051
        %v6053 = vpop.f32.mrf.mxu0
        %6054 = vmatprep.mubr.bf16.mxu0 0
        %6055 = vmatmul.mubr.bf16.gmra.mxu0 %v4919
        %v6056 = vpop.f32.mrf.mxu0
        %v6057 = vadd.f32 %v5896, %v6056
        %v6058 = vpop.f32.mrf.mxu0
        %v6059 = vpop.f32.mrf.mxu0
        %v6060 = vadd.f32 %v5899, %v6059
        %v6061 = vpop.f32.mrf.mxu0
        %6062 = vmatprep.mubr.bf16.mxu0 0
        %6063 = vmatmul.mubr.bf16.gmra.mxu0 %v4922
        %v6064 = vpop.f32.mrf.mxu0
        %v6065 = vadd.f32 %v5904, %v6064
        %v6066 = vpop.f32.mrf.mxu0
        %v6067 = vpop.f32.mrf.mxu0
        %v6068 = vadd.f32 %v5907, %v6067
        %v6069 = vpop.f32.mrf.mxu0
        %6070 = vmatprep.mubr.bf16.mxu0 0
        %6071 = vmatmul.mubr.bf16.gmra.mxu0 %v4925
        %v6072 = vpop.f32.mrf.mxu0
        %v6073 = vadd.f32 %v5912, %v6072
        %v6074 = vpop.f32.mrf.mxu0
        %v6075 = vpop.f32.mrf.mxu0
        %v6076 = vadd.f32 %v5915, %v6075
        %v6077 = vpop.f32.mrf.mxu0
        %6078 = vmatprep.mubr.bf16.mxu0 0
        %6079 = vmatmul.mubr.bf16.gmra.mxu0 %v4928
        %v6080 = vpop.f32.mrf.mxu0
        %v6081 = vadd.f32 %v5920, %v6080
        %v6082 = vpop.f32.mrf.mxu0
        %v6083 = vpop.f32.mrf.mxu0
        %v6084 = vadd.f32 %v5923, %v6083
        %v6085 = vpop.f32.mrf.mxu0
        %6086 = vmatprep.mubr.bf16.mxu0 0
        %6087 = vmatmul.mubr.bf16.gmra.mxu0 %v4931
        %v6088 = vpop.f32.mrf.mxu0
        %v6089 = vadd.f32 %v5928, %v6088
        %v6090 = vpop.f32.mrf.mxu0
        %v6091 = vpop.f32.mrf.mxu0
        %v6092 = vadd.f32 %v5931, %v6091
        %v6093 = vpop.f32.mrf.mxu0
        %6094 = vmatprep.mubr.bf16.mxu0 0
        %6095 = vmatmul.mubr.bf16.gmra.mxu0 %v4934
        %v6096 = vpop.f32.mrf.mxu0
        %v6097 = vadd.f32 %v5936, %v6096
        %v6098 = vpop.f32.mrf.mxu0
        %v6099 = vpop.f32.mrf.mxu0
        %v6100 = vadd.f32 %v5939, %v6099
        %v6101 = vpop.f32.mrf.mxu0
        %6102 = vmatprep.mubr.bf16.mxu0 0
        %6103 = vmatmul.mubr.bf16.gmra.mxu0 %v4937
        %v6104 = vpop.f32.mrf.mxu0
        %v6105 = vadd.f32 %v5944, %v6104
        %v6106 = vpop.f32.mrf.mxu0
        %v6107 = vpop.f32.mrf.mxu0
        %v6108 = vadd.f32 %v5947, %v6107
        %v6109 = vpop.f32.mrf.mxu0
        %6110 = vdwg.mxu0
        %s6111 = scalar_lea.vmem [#allocation4], 48
        %v6112 = vld [vmem:[%s6111] sm:$0xff]
        %v6113 = vld [vmem:[%s6111 + $0x8] sm:$0xff]
        %v6114 = vld [vmem:[%s6111 + $0x18] sm:$0xff]
        %v6115 = vld [vmem:[%s6111 + $0x20] sm:$0xff]
        %v6116 = vld [vmem:[%s6111 + $0x30] sm:$0xff]
        %v6117 = vld [vmem:[%s6111 + $0x38] sm:$0xff]
        %v6118 = vld [vmem:[%s6111 + $0x48] sm:$0xff]
        %v6119 = vld [vmem:[%s6111 + $0x50] sm:$0xff]
        %v6120 = vld [vmem:[%s6111 + $0x60] sm:$0xff]
        %v6121 = vld [vmem:[%s6111 + $0x68] sm:$0xff]
        %v6122 = vld [vmem:[%s6111 + $0x78] sm:$0xff]
        %v6123 = vld [vmem:[%s6111 + $0x80] sm:$0xff]
        %v6124 = vld [vmem:[%s6111 + $0x90] sm:$0xff]
        %v6125 = vld [vmem:[%s6111 + $0x98] sm:$0xff]
        %v6126 = vld [vmem:[%s6111 + $0xa8] sm:$0xff]
        %v6127 = vld [vmem:[%s6111 + $0xb0] sm:$0xff]
        %v6128 = vld [vmem:[%s6111 + $0xc0] sm:$0xff]
        %v6129 = vld [vmem:[%s6111 + $0xc8] sm:$0xff]
        %v6130 = vld [vmem:[%s6111 + $0xd8] sm:$0xff]
        %v6131 = vld [vmem:[%s6111 + $0xe0] sm:$0xff]
        %v6132 = vld [vmem:[%s6111 + $0xf0] sm:$0xff]
        %v6133 = vld [vmem:[%s6111 + $0xf8] sm:$0xff]
        %v6134 = vld [vmem:[%s6111 + $0x108] sm:$0xff]
        %v6135 = vld [vmem:[%s6111 + $0x110] sm:$0xff]
        %v6136 = vld [vmem:[%s6111 + $0x120] sm:$0xff]
        %v6137 = vld [vmem:[%s6111 + $0x128] sm:$0xff]
        %v6138 = vld [vmem:[%s6111 + $0x138] sm:$0xff]
        %v6139 = vld [vmem:[%s6111 + $0x140] sm:$0xff]
        %v6140 = vld [vmem:[%s6111 + $0x150] sm:$0xff]
        %v6141 = vld [vmem:[%s6111 + $0x158] sm:$0xff]
        %v6142 = vld [vmem:[%s6111 + $0x168] sm:$0xff]
        %v6143 = vld [vmem:[%s6111 + $0x170] sm:$0xff]
        %v6144 = vld [vmem:[%s6111 + $0x1] sm:$0xff]
        %v6145 = vld [vmem:[%s6111 + $0x9] sm:$0xff]
        %v6146 = vld [vmem:[%s6111 + $0x19] sm:$0xff]
        %v6147 = vld [vmem:[%s6111 + $0x21] sm:$0xff]
        %v6148 = vld [vmem:[%s6111 + $0x31] sm:$0xff]
        %v6149 = vld [vmem:[%s6111 + $0x39] sm:$0xff]
        %v6150 = vld [vmem:[%s6111 + $0x49] sm:$0xff]
        %v6151 = vld [vmem:[%s6111 + $0x51] sm:$0xff]
        %v6152 = vld [vmem:[%s6111 + $0x61] sm:$0xff]
        %v6153 = vld [vmem:[%s6111 + $0x69] sm:$0xff]
        %v6154 = vld [vmem:[%s6111 + $0x79] sm:$0xff]
        %v6155 = vld [vmem:[%s6111 + $0x81] sm:$0xff]
        %v6156 = vld [vmem:[%s6111 + $0x91] sm:$0xff]
        %v6157 = vld [vmem:[%s6111 + $0x99] sm:$0xff]
        %v6158 = vld [vmem:[%s6111 + $0xa9] sm:$0xff]
        %v6159 = vld [vmem:[%s6111 + $0xb1] sm:$0xff]
        %v6160 = vld [vmem:[%s6111 + $0xc1] sm:$0xff]
        %v6161 = vld [vmem:[%s6111 + $0xc9] sm:$0xff]
        %v6162 = vld [vmem:[%s6111 + $0xd9] sm:$0xff]
        %v6163 = vld [vmem:[%s6111 + $0xe1] sm:$0xff]
        %v6164 = vld [vmem:[%s6111 + $0xf1] sm:$0xff]
        %v6165 = vld [vmem:[%s6111 + $0xf9] sm:$0xff]
        %v6166 = vld [vmem:[%s6111 + $0x109] sm:$0xff]
        %v6167 = vld [vmem:[%s6111 + $0x111] sm:$0xff]
        %v6168 = vld [vmem:[%s6111 + $0x121] sm:$0xff]
        %v6169 = vld [vmem:[%s6111 + $0x129] sm:$0xff]
        %v6170 = vld [vmem:[%s6111 + $0x139] sm:$0xff]
        %v6171 = vld [vmem:[%s6111 + $0x141] sm:$0xff]
        %v6172 = vld [vmem:[%s6111 + $0x151] sm:$0xff]
        %v6173 = vld [vmem:[%s6111 + $0x159] sm:$0xff]
        %v6174 = vld [vmem:[%s6111 + $0x169] sm:$0xff]
        %v6175 = vld [vmem:[%s6111 + $0x171] sm:$0xff]
        %v6176 = vld [vmem:[%s6111 + $0x2] sm:$0xff]
        %v6177 = vld [vmem:[%s6111 + $0xa] sm:$0xff]
        %v6178 = vld [vmem:[%s6111 + $0x1a] sm:$0xff]
        %v6179 = vld [vmem:[%s6111 + $0x22] sm:$0xff]
        %v6180 = vld [vmem:[%s6111 + $0x32] sm:$0xff]
        %v6181 = vld [vmem:[%s6111 + $0x3a] sm:$0xff]
        %v6182 = vld [vmem:[%s6111 + $0x4a] sm:$0xff]
        %v6183 = vld [vmem:[%s6111 + $0x52] sm:$0xff]
        %v6184 = vld [vmem:[%s6111 + $0x62] sm:$0xff]
        %v6185 = vld [vmem:[%s6111 + $0x6a] sm:$0xff]
        %v6186 = vld [vmem:[%s6111 + $0x7a] sm:$0xff]
        %v6187 = vld [vmem:[%s6111 + $0x82] sm:$0xff]
        %v6188 = vld [vmem:[%s6111 + $0x92] sm:$0xff]
        %v6189 = vld [vmem:[%s6111 + $0x9a] sm:$0xff]
        %v6190 = vld [vmem:[%s6111 + $0xaa] sm:$0xff]
        %v6191 = vld [vmem:[%s6111 + $0xb2] sm:$0xff]
        %v6192 = vld [vmem:[%s6111 + $0xc2] sm:$0xff]
        %v6193 = vld [vmem:[%s6111 + $0xca] sm:$0xff]
        %v6194 = vld [vmem:[%s6111 + $0xda] sm:$0xff]
        %v6195 = vld [vmem:[%s6111 + $0xe2] sm:$0xff]
        %v6196 = vld [vmem:[%s6111 + $0xf2] sm:$0xff]
        %v6197 = vld [vmem:[%s6111 + $0xfa] sm:$0xff]
        %v6198 = vld [vmem:[%s6111 + $0x10a] sm:$0xff]
        %v6199 = vld [vmem:[%s6111 + $0x112] sm:$0xff]
        %v6200 = vld [vmem:[%s6111 + $0x122] sm:$0xff]
        %v6201 = vld [vmem:[%s6111 + $0x12a] sm:$0xff]
        %v6202 = vld [vmem:[%s6111 + $0x13a] sm:$0xff]
        %v6203 = vld [vmem:[%s6111 + $0x142] sm:$0xff]
        %v6204 = vld [vmem:[%s6111 + $0x152] sm:$0xff]
        %v6205 = vld [vmem:[%s6111 + $0x15a] sm:$0xff]
        %v6206 = vld [vmem:[%s6111 + $0x16a] sm:$0xff]
        %v6207 = vld [vmem:[%s6111 + $0x172] sm:$0xff]
        %v6208 = vpack.c.bf16 %v6113, %v6112
        %v6209 = vpack.c.bf16 %v6145, %v6144
        %v6210 = vpack.c.bf16 %v6177, %v6176
        %v6211 = vpack.c.bf16 %v6115, %v6114
        %v6212 = vpack.c.bf16 %v6147, %v6146
        %v6213 = vpack.c.bf16 %v6179, %v6178
        %v6214 = vpack.c.bf16 %v6117, %v6116
        %v6215 = vpack.c.bf16 %v6149, %v6148
        %v6216 = vpack.c.bf16 %v6181, %v6180
        %v6217 = vpack.c.bf16 %v6119, %v6118
        %v6218 = vpack.c.bf16 %v6151, %v6150
        %v6219 = vpack.c.bf16 %v6183, %v6182
        %v6220 = vpack.c.bf16 %v6121, %v6120
        %v6221 = vpack.c.bf16 %v6153, %v6152
        %v6222 = vpack.c.bf16 %v6185, %v6184
        %v6223 = vpack.c.bf16 %v6123, %v6122
        %v6224 = vpack.c.bf16 %v6155, %v6154
        %v6225 = vpack.c.bf16 %v6187, %v6186
        %v6226 = vpack.c.bf16 %v6125, %v6124
        %v6227 = vpack.c.bf16 %v6157, %v6156
        %v6228 = vpack.c.bf16 %v6189, %v6188
        %v6229 = vpack.c.bf16 %v6127, %v6126
        %v6230 = vpack.c.bf16 %v6159, %v6158
        %v6231 = vpack.c.bf16 %v6191, %v6190
        %v6232 = vpack.c.bf16 %v6129, %v6128
        %v6233 = vpack.c.bf16 %v6161, %v6160
        %v6234 = vpack.c.bf16 %v6193, %v6192
        %v6235 = vpack.c.bf16 %v6131, %v6130
        %v6236 = vpack.c.bf16 %v6163, %v6162
        %v6237 = vpack.c.bf16 %v6195, %v6194
        %v6238 = vpack.c.bf16 %v6133, %v6132
        %v6239 = vpack.c.bf16 %v6165, %v6164
        %v6240 = vpack.c.bf16 %v6197, %v6196
        %v6241 = vpack.c.bf16 %v6135, %v6134
        %v6242 = vpack.c.bf16 %v6167, %v6166
        %v6243 = vpack.c.bf16 %v6199, %v6198
        %v6244 = vpack.c.bf16 %v6137, %v6136
        %v6245 = vpack.c.bf16 %v6169, %v6168
        %v6246 = vpack.c.bf16 %v6201, %v6200
        %v6247 = vpack.c.bf16 %v6139, %v6138
        %v6248 = vpack.c.bf16 %v6171, %v6170
        %v6249 = vpack.c.bf16 %v6203, %v6202
        %v6250 = vpack.c.bf16 %v6141, %v6140
        %v6251 = vpack.c.bf16 %v6173, %v6172
        %v6252 = vpack.c.bf16 %v6205, %v6204
        %v6253 = vpack.c.bf16 %v6143, %v6142
        %v6254 = vpack.c.bf16 %v6175, %v6174
        %v6255 = vpack.c.bf16 %v6207, %v6206
        %s6256 = scalar_lea.vmem [#allocation11], 384
        %v6257 = vld [vmem:[%s6256] sm:$0xf]
        %v6258 = vld [vmem:[%s6256 + $0x4] sm:$0xf]
        %v6259 = vld [vmem:[%s6256 + $0x8] sm:$0xf]
        %v6260 = vld [vmem:[%s6256 + $0xc] sm:$0xf]
        %v6261 = vld [vmem:[%s6256 + $0x10] sm:$0xf]
        %v6262 = vld [vmem:[%s6256 + $0x14] sm:$0xf]
        %v6263 = vld [vmem:[%s6256 + $0x18] sm:$0xf]
        %v6264 = vld [vmem:[%s6256 + $0x1c] sm:$0xf]
        %v6265 = vld [vmem:[%s6256 + $0x20] sm:$0xf]
        %v6266 = vld [vmem:[%s6256 + $0x24] sm:$0xf]
        %v6267 = vld [vmem:[%s6256 + $0x28] sm:$0xf]
        %v6268 = vld [vmem:[%s6256 + $0x2c] sm:$0xf]
        %v6269 = vld [vmem:[%s6256 + $0x30] sm:$0xf]
        %v6270 = vld [vmem:[%s6256 + $0x34] sm:$0xf]
        %v6271 = vld [vmem:[%s6256 + $0x38] sm:$0xf]
        %v6272 = vld [vmem:[%s6256 + $0x3c] sm:$0xf]
        %v6273 = vld [vmem:[%s6256 + $0x40] sm:$0xf]
        %v6274 = vld [vmem:[%s6256 + $0x44] sm:$0xf]
        %v6275 = vld [vmem:[%s6256 + $0x48] sm:$0xf]
        %v6276 = vld [vmem:[%s6256 + $0x4c] sm:$0xf]
        %v6277 = vld [vmem:[%s6256 + $0x50] sm:$0xf]
        %v6278 = vld [vmem:[%s6256 + $0x54] sm:$0xf]
        %v6279 = vld [vmem:[%s6256 + $0x58] sm:$0xf]
        %v6280 = vld [vmem:[%s6256 + $0x5c] sm:$0xf]
        %v6281 = vld [vmem:[%s6256 + $0x60] sm:$0xf]
        %v6282 = vld [vmem:[%s6256 + $0x64] sm:$0xf]
        %v6283 = vld [vmem:[%s6256 + $0x68] sm:$0xf]
        %v6284 = vld [vmem:[%s6256 + $0x6c] sm:$0xf]
        %v6285 = vld [vmem:[%s6256 + $0x70] sm:$0xf]
        %v6286 = vld [vmem:[%s6256 + $0x74] sm:$0xf]
        %v6287 = vld [vmem:[%s6256 + $0x78] sm:$0xf]
        %v6288 = vld [vmem:[%s6256 + $0x7c] sm:$0xf]
        %v6289 = vld [vmem:[%s6256 + $0x80] sm:$0xf]
        %v6290 = vld [vmem:[%s6256 + $0x84] sm:$0xf]
        %v6291 = vld [vmem:[%s6256 + $0x88] sm:$0xf]
        %v6292 = vld [vmem:[%s6256 + $0x8c] sm:$0xf]
        %v6293 = vld [vmem:[%s6256 + $0x90] sm:$0xf]
        %v6294 = vld [vmem:[%s6256 + $0x94] sm:$0xf]
        %v6295 = vld [vmem:[%s6256 + $0x98] sm:$0xf]
        %v6296 = vld [vmem:[%s6256 + $0x9c] sm:$0xf]
        %v6297 = vld [vmem:[%s6256 + $0xa0] sm:$0xf]
        %v6298 = vld [vmem:[%s6256 + $0xa4] sm:$0xf]
        %v6299 = vld [vmem:[%s6256 + $0xa8] sm:$0xf]
        %v6300 = vld [vmem:[%s6256 + $0xac] sm:$0xf]
        %v6301 = vld [vmem:[%s6256 + $0xb0] sm:$0xf]
        %v6302 = vld [vmem:[%s6256 + $0xb4] sm:$0xf]
        %v6303 = vld [vmem:[%s6256 + $0xb8] sm:$0xf]
        %v6304 = vld [vmem:[%s6256 + $0xbc] sm:$0xf]
        %v6353 = vunpack.c.l.b16 %v6257
        %v6354 = vunpack.c.l.b16 %v6258
        %v6355 = vunpack.c.l.b16 %v6259
        %v6356 = vunpack.c.l.b16 %v6260
        %v6357 = vunpack.c.l.b16 %v6261
        %v6358 = vunpack.c.l.b16 %v6262
        %v6359 = vunpack.c.l.b16 %v6263
        %v6360 = vunpack.c.l.b16 %v6264
        %v6361 = vunpack.c.l.b16 %v6265
        %v6362 = vunpack.c.l.b16 %v6266
        %v6363 = vunpack.c.l.b16 %v6267
        %v6364 = vunpack.c.l.b16 %v6268
        %v6365 = vunpack.c.l.b16 %v6269
        %v6366 = vunpack.c.l.b16 %v6270
        %v6367 = vunpack.c.l.b16 %v6271
        %v6368 = vunpack.c.l.b16 %v6272
        %v6369 = vunpack.c.l.b16 %v6273
        %v6370 = vunpack.c.l.b16 %v6274
        %v6371 = vunpack.c.l.b16 %v6275
        %v6372 = vunpack.c.l.b16 %v6276
        %v6373 = vunpack.c.l.b16 %v6277
        %v6374 = vunpack.c.l.b16 %v6278
        %v6375 = vunpack.c.l.b16 %v6279
        %v6376 = vunpack.c.l.b16 %v6280
        %v6377 = vunpack.c.l.b16 %v6281
        %v6378 = vunpack.c.l.b16 %v6282
        %v6379 = vunpack.c.l.b16 %v6283
        %v6380 = vunpack.c.l.b16 %v6284
        %v6381 = vunpack.c.l.b16 %v6285
        %v6382 = vunpack.c.l.b16 %v6286
        %v6383 = vunpack.c.l.b16 %v6287
        %v6384 = vunpack.c.l.b16 %v6288
        %v6385 = vunpack.c.l.b16 %v6289
        %v6386 = vunpack.c.l.b16 %v6290
        %v6387 = vunpack.c.l.b16 %v6291
        %v6388 = vunpack.c.l.b16 %v6292
        %v6389 = vunpack.c.l.b16 %v6293
        %v6390 = vunpack.c.l.b16 %v6294
        %v6391 = vunpack.c.l.b16 %v6295
        %v6392 = vunpack.c.l.b16 %v6296
        %v6393 = vunpack.c.l.b16 %v6297
        %v6394 = vunpack.c.l.b16 %v6298
        %v6395 = vunpack.c.l.b16 %v6299
        %v6396 = vunpack.c.l.b16 %v6300
        %v6397 = vunpack.c.l.b16 %v6301
        %v6398 = vunpack.c.l.b16 %v6302
        %v6399 = vunpack.c.l.b16 %v6303
        %v6400 = vunpack.c.l.b16 %v6304
        %v6401 = vpack.c.b16 %v6354, %v6353
        %v6402 = vpack.c.b16 %v6356, %v6355
        %v6403 = vpack.c.b16 %v6358, %v6357
        %v6404 = vpack.c.b16 %v6360, %v6359
        %v6405 = vpack.c.b16 %v6362, %v6361
        %v6406 = vpack.c.b16 %v6364, %v6363
        %v6407 = vpack.c.b16 %v6366, %v6365
        %v6408 = vpack.c.b16 %v6368, %v6367
        %v6409 = vpack.c.b16 %v6370, %v6369
        %v6410 = vpack.c.b16 %v6372, %v6371
        %v6411 = vpack.c.b16 %v6374, %v6373
        %v6412 = vpack.c.b16 %v6376, %v6375
        %v6413 = vpack.c.b16 %v6378, %v6377
        %v6414 = vpack.c.b16 %v6380, %v6379
        %v6415 = vpack.c.b16 %v6382, %v6381
        %v6416 = vpack.c.b16 %v6384, %v6383
        %v6417 = vpack.c.b16 %v6386, %v6385
        %v6418 = vpack.c.b16 %v6388, %v6387
        %v6419 = vpack.c.b16 %v6390, %v6389
        %v6420 = vpack.c.b16 %v6392, %v6391
        %v6421 = vpack.c.b16 %v6394, %v6393
        %v6422 = vpack.c.b16 %v6396, %v6395
        %v6423 = vpack.c.b16 %v6398, %v6397
        %v6424 = vpack.c.b16 %v6400, %v6399
        %6449 = vmatprep.subr.bf16.mxu0 0
        %6450 = vmatpush1.bf16.msra.mxu0 %v6408
        %6451 = vmatprep.subr.bf16.mxu0 0
        %6452 = vmatpush1.bf16.msra.mxu0 %v6407
        %6453 = vmatprep.subr.bf16.mxu0 0
        %6454 = vmatpush1.bf16.msra.mxu0 %v6406
        %6455 = vmatprep.subr.bf16.mxu0 0
        %6456 = vmatpush1.bf16.msra.mxu0 %v6405
        %6457 = vmatprep.subr.bf16.mxu0 0
        %6458 = vmatpush1.bf16.msra.mxu0 %v6404
        %6459 = vmatprep.subr.bf16.mxu0 0
        %6460 = vmatpush1.bf16.msra.mxu0 %v6403
        %6461 = vmatprep.subr.bf16.mxu0 0
        %6462 = vmatpush1.bf16.msra.mxu0 %v6402
        %6463 = vmatprep.subr.bf16.mxu0 0
        %6464 = vmatpush1.bf16.msra.mxu0 %v6401
        %6465 = vmatprep.subr.bf16.mxu0 0
        %6466 = vmatpush2.bf16.msra.mxu0 %v6416
        %6467 = vmatprep.subr.bf16.mxu0 0
        %6468 = vmatpush2.bf16.msra.mxu0 %v6415
        %6469 = vmatprep.subr.bf16.mxu0 0
        %6470 = vmatpush2.bf16.msra.mxu0 %v6414
        %6471 = vmatprep.subr.bf16.mxu0 0
        %6472 = vmatpush2.bf16.msra.mxu0 %v6413
        %6473 = vmatprep.subr.bf16.mxu0 0
        %6474 = vmatpush2.bf16.msra.mxu0 %v6412
        %6475 = vmatprep.subr.bf16.mxu0 0
        %6476 = vmatpush2.bf16.msra.mxu0 %v6411
        %6477 = vmatprep.subr.bf16.mxu0 0
        %6478 = vmatpush2.bf16.msra.mxu0 %v6410
        %6479 = vmatprep.subr.bf16.mxu0 0
        %6480 = vmatpush2.bf16.msra.mxu0 %v6409
        %6481 = vmatprep.mubr.bf16.mxu0 %v6209
        %6482 = vmatmul.mubr.bf16.gmra.mxu0 %v6208
        %v6483 = vpop.f32.mrf.mxu0
        %v6484 = vadd.f32 0.0, %v6483
        %v6485 = vpop.f32.mrf.mxu0
        %v6486 = vpop.f32.mrf.mxu0
        %v6487 = vadd.f32 0.0, %v6486
        %v6488 = vpop.f32.mrf.mxu0
        %6489 = vmatprep.mubr.bf16.mxu0 %v6212
        %6490 = vmatmul.mubr.bf16.gmra.mxu0 %v6211
        %v6491 = vpop.f32.mrf.mxu0
        %v6492 = vadd.f32 0.0, %v6491
        %v6493 = vpop.f32.mrf.mxu0
        %v6494 = vpop.f32.mrf.mxu0
        %v6495 = vadd.f32 0.0, %v6494
        %v6496 = vpop.f32.mrf.mxu0
        %6497 = vmatprep.mubr.bf16.mxu0 %v6215
        %6498 = vmatmul.mubr.bf16.gmra.mxu0 %v6214
        %v6499 = vpop.f32.mrf.mxu0
        %v6500 = vadd.f32 0.0, %v6499
        %v6501 = vpop.f32.mrf.mxu0
        %v6502 = vpop.f32.mrf.mxu0
        %v6503 = vadd.f32 0.0, %v6502
        %v6504 = vpop.f32.mrf.mxu0
        %6505 = vmatprep.mubr.bf16.mxu0 %v6218
        %6506 = vmatmul.mubr.bf16.gmra.mxu0 %v6217
        %v6507 = vpop.f32.mrf.mxu0
        %v6508 = vadd.f32 0.0, %v6507
        %v6509 = vpop.f32.mrf.mxu0
        %v6510 = vpop.f32.mrf.mxu0
        %v6511 = vadd.f32 0.0, %v6510
        %v6512 = vpop.f32.mrf.mxu0
        %6513 = vmatprep.mubr.bf16.mxu0 %v6221
        %6514 = vmatmul.mubr.bf16.gmra.mxu0 %v6220
        %v6515 = vpop.f32.mrf.mxu0
        %v6516 = vadd.f32 0.0, %v6515
        %v6517 = vpop.f32.mrf.mxu0
        %v6518 = vpop.f32.mrf.mxu0
        %v6519 = vadd.f32 0.0, %v6518
        %v6520 = vpop.f32.mrf.mxu0
        %6521 = vmatprep.mubr.bf16.mxu0 %v6224
        %6522 = vmatmul.mubr.bf16.gmra.mxu0 %v6223
        %v6523 = vpop.f32.mrf.mxu0
        %v6524 = vadd.f32 0.0, %v6523
        %v6525 = vpop.f32.mrf.mxu0
        %v6526 = vpop.f32.mrf.mxu0
        %v6527 = vadd.f32 0.0, %v6526
        %v6528 = vpop.f32.mrf.mxu0
        %6529 = vmatprep.mubr.bf16.mxu0 %v6227
        %6530 = vmatmul.mubr.bf16.gmra.mxu0 %v6226
        %v6531 = vpop.f32.mrf.mxu0
        %v6532 = vadd.f32 0.0, %v6531
        %v6533 = vpop.f32.mrf.mxu0
        %v6534 = vpop.f32.mrf.mxu0
        %v6535 = vadd.f32 0.0, %v6534
        %v6536 = vpop.f32.mrf.mxu0
        %6537 = vmatprep.mubr.bf16.mxu0 %v6230
        %6538 = vmatmul.mubr.bf16.gmra.mxu0 %v6229
        %v6539 = vpop.f32.mrf.mxu0
        %v6540 = vadd.f32 0.0, %v6539
        %v6541 = vpop.f32.mrf.mxu0
        %v6542 = vpop.f32.mrf.mxu0
        %v6543 = vadd.f32 0.0, %v6542
        %v6544 = vpop.f32.mrf.mxu0
        %6545 = vmatprep.mubr.bf16.mxu0 %v6233
        %6546 = vmatmul.mubr.bf16.gmra.mxu0 %v6232
        %v6547 = vpop.f32.mrf.mxu0
        %v6548 = vadd.f32 0.0, %v6547
        %v6549 = vpop.f32.mrf.mxu0
        %v6550 = vpop.f32.mrf.mxu0
        %v6551 = vadd.f32 0.0, %v6550
        %v6552 = vpop.f32.mrf.mxu0
        %6553 = vmatprep.mubr.bf16.mxu0 %v6236
        %6554 = vmatmul.mubr.bf16.gmra.mxu0 %v6235
        %v6555 = vpop.f32.mrf.mxu0
        %v6556 = vadd.f32 0.0, %v6555
        %v6557 = vpop.f32.mrf.mxu0
        %v6558 = vpop.f32.mrf.mxu0
        %v6559 = vadd.f32 0.0, %v6558
        %v6560 = vpop.f32.mrf.mxu0
        %6561 = vmatprep.mubr.bf16.mxu0 %v6239
        %6562 = vmatmul.mubr.bf16.gmra.mxu0 %v6238
        %v6563 = vpop.f32.mrf.mxu0
        %v6564 = vadd.f32 0.0, %v6563
        %v6565 = vpop.f32.mrf.mxu0
        %v6566 = vpop.f32.mrf.mxu0
        %v6567 = vadd.f32 0.0, %v6566
        %v6568 = vpop.f32.mrf.mxu0
        %6569 = vmatprep.mubr.bf16.mxu0 %v6242
        %6570 = vmatmul.mubr.bf16.gmra.mxu0 %v6241
        %v6571 = vpop.f32.mrf.mxu0
        %v6572 = vadd.f32 0.0, %v6571
        %v6573 = vpop.f32.mrf.mxu0
        %v6574 = vpop.f32.mrf.mxu0
        %v6575 = vadd.f32 0.0, %v6574
        %v6576 = vpop.f32.mrf.mxu0
        %6577 = vmatprep.mubr.bf16.mxu0 %v6245
        %6578 = vmatmul.mubr.bf16.gmra.mxu0 %v6244
        %v6579 = vpop.f32.mrf.mxu0
        %v6580 = vadd.f32 0.0, %v6579
        %v6581 = vpop.f32.mrf.mxu0
        %v6582 = vpop.f32.mrf.mxu0
        %v6583 = vadd.f32 0.0, %v6582
        %v6584 = vpop.f32.mrf.mxu0
        %6585 = vmatprep.mubr.bf16.mxu0 %v6248
        %6586 = vmatmul.mubr.bf16.gmra.mxu0 %v6247
        %v6587 = vpop.f32.mrf.mxu0
        %v6588 = vadd.f32 0.0, %v6587
        %v6589 = vpop.f32.mrf.mxu0
        %v6590 = vpop.f32.mrf.mxu0
        %v6591 = vadd.f32 0.0, %v6590
        %v6592 = vpop.f32.mrf.mxu0
        %6593 = vmatprep.mubr.bf16.mxu0 %v6251
        %6594 = vmatmul.mubr.bf16.gmra.mxu0 %v6250
        %v6595 = vpop.f32.mrf.mxu0
        %v6596 = vadd.f32 0.0, %v6595
        %v6597 = vpop.f32.mrf.mxu0
        %v6598 = vpop.f32.mrf.mxu0
        %v6599 = vadd.f32 0.0, %v6598
        %v6600 = vpop.f32.mrf.mxu0
        %6601 = vmatprep.mubr.bf16.mxu0 %v6254
        %6602 = vmatmul.mubr.bf16.gmra.mxu0 %v6253
        %v6603 = vpop.f32.mrf.mxu0
        %v6604 = vadd.f32 0.0, %v6603
        %v6605 = vpop.f32.mrf.mxu0
        %v6606 = vpop.f32.mrf.mxu0
        %v6607 = vadd.f32 0.0, %v6606
        %v6608 = vpop.f32.mrf.mxu0
        %6609 = vdwg.mxu0
        %6610 = vmatprep.subr.bf16.mxu0 0
        %6611 = vmatpush1.bf16.msra.mxu0 %v6424
        %6612 = vmatprep.subr.bf16.mxu0 0
        %6613 = vmatpush1.bf16.msra.mxu0 %v6423
        %6614 = vmatprep.subr.bf16.mxu0 0
        %6615 = vmatpush1.bf16.msra.mxu0 %v6422
        %6616 = vmatprep.subr.bf16.mxu0 0
        %6617 = vmatpush1.bf16.msra.mxu0 %v6421
        %6618 = vmatprep.subr.bf16.mxu0 0
        %6619 = vmatpush1.bf16.msra.mxu0 %v6420
        %6620 = vmatprep.subr.bf16.mxu0 0
        %6621 = vmatpush1.bf16.msra.mxu0 %v6419
        %6622 = vmatprep.subr.bf16.mxu0 0
        %6623 = vmatpush1.bf16.msra.mxu0 %v6418
        %6624 = vmatprep.subr.bf16.mxu0 0
        %6625 = vmatpush1.bf16.msra.mxu0 %v6417
        %6626 = vmatprep.subr.bf16.mxu0 0
        %6627 = vmatpush2.bf16.msra.mxu0 0
        %6628 = vmatprep.subr.bf16.mxu0 0
        %6629 = vmatpush2.bf16.msra.mxu0 0
        %6630 = vmatprep.subr.bf16.mxu0 0
        %6631 = vmatpush2.bf16.msra.mxu0 0
        %6632 = vmatprep.subr.bf16.mxu0 0
        %6633 = vmatpush2.bf16.msra.mxu0 0
        %6634 = vmatprep.subr.bf16.mxu0 0
        %6635 = vmatpush2.bf16.msra.mxu0 0
        %6636 = vmatprep.subr.bf16.mxu0 0
        %6637 = vmatpush2.bf16.msra.mxu0 0
        %6638 = vmatprep.subr.bf16.mxu0 0
        %6639 = vmatpush2.bf16.msra.mxu0 0
        %6640 = vmatprep.subr.bf16.mxu0 0
        %6641 = vmatpush2.bf16.msra.mxu0 0
        %6642 = vmatprep.mubr.bf16.mxu0 0
        %6643 = vmatmul.mubr.bf16.gmra.mxu0 %v6210
        %v6644 = vpop.f32.mrf.mxu0
        %v6645 = vadd.f32 %v6484, %v6644
        %v6646 = vpop.f32.mrf.mxu0
        %v6647 = vpop.f32.mrf.mxu0
        %v6648 = vadd.f32 %v6487, %v6647
        %v6649 = vpop.f32.mrf.mxu0
        %6650 = vmatprep.mubr.bf16.mxu0 0
        %6651 = vmatmul.mubr.bf16.gmra.mxu0 %v6213
        %v6652 = vpop.f32.mrf.mxu0
        %v6653 = vadd.f32 %v6492, %v6652
        %v6654 = vpop.f32.mrf.mxu0
        %v6655 = vpop.f32.mrf.mxu0
        %v6656 = vadd.f32 %v6495, %v6655
        %v6657 = vpop.f32.mrf.mxu0
        %6658 = vmatprep.mubr.bf16.mxu0 0
        %6659 = vmatmul.mubr.bf16.gmra.mxu0 %v6216
        %v6660 = vpop.f32.mrf.mxu0
        %v6661 = vadd.f32 %v6500, %v6660
        %v6662 = vpop.f32.mrf.mxu0
        %v6663 = vpop.f32.mrf.mxu0
        %v6664 = vadd.f32 %v6503, %v6663
        %v6665 = vpop.f32.mrf.mxu0
        %6666 = vmatprep.mubr.bf16.mxu0 0
        %6667 = vmatmul.mubr.bf16.gmra.mxu0 %v6219
        %v6668 = vpop.f32.mrf.mxu0
        %v6669 = vadd.f32 %v6508, %v6668
        %v6670 = vpop.f32.mrf.mxu0
        %v6671 = vpop.f32.mrf.mxu0
        %v6672 = vadd.f32 %v6511, %v6671
        %v6673 = vpop.f32.mrf.mxu0
        %6674 = vmatprep.mubr.bf16.mxu0 0
        %6675 = vmatmul.mubr.bf16.gmra.mxu0 %v6222
        %v6676 = vpop.f32.mrf.mxu0
        %v6677 = vadd.f32 %v6516, %v6676
        %v6678 = vpop.f32.mrf.mxu0
        %v6679 = vpop.f32.mrf.mxu0
        %v6680 = vadd.f32 %v6519, %v6679
        %v6681 = vpop.f32.mrf.mxu0
        %6682 = vmatprep.mubr.bf16.mxu0 0
        %6683 = vmatmul.mubr.bf16.gmra.mxu0 %v6225
        %v6684 = vpop.f32.mrf.mxu0
        %v6685 = vadd.f32 %v6524, %v6684
        %v6686 = vpop.f32.mrf.mxu0
        %v6687 = vpop.f32.mrf.mxu0
        %v6688 = vadd.f32 %v6527, %v6687
        %v6689 = vpop.f32.mrf.mxu0
        %6690 = vmatprep.mubr.bf16.mxu0 0
        %6691 = vmatmul.mubr.bf16.gmra.mxu0 %v6228
        %v6692 = vpop.f32.mrf.mxu0
        %v6693 = vadd.f32 %v6532, %v6692
        %v6694 = vpop.f32.mrf.mxu0
        %v6695 = vpop.f32.mrf.mxu0
        %v6696 = vadd.f32 %v6535, %v6695
        %v6697 = vpop.f32.mrf.mxu0
        %6698 = vmatprep.mubr.bf16.mxu0 0
        %6699 = vmatmul.mubr.bf16.gmra.mxu0 %v6231
        %v6700 = vpop.f32.mrf.mxu0
        %v6701 = vadd.f32 %v6540, %v6700
        %v6702 = vpop.f32.mrf.mxu0
        %v6703 = vpop.f32.mrf.mxu0
        %v6704 = vadd.f32 %v6543, %v6703
        %v6705 = vpop.f32.mrf.mxu0
        %6706 = vmatprep.mubr.bf16.mxu0 0
        %6707 = vmatmul.mubr.bf16.gmra.mxu0 %v6234
        %v6708 = vpop.f32.mrf.mxu0
        %v6709 = vadd.f32 %v6548, %v6708
        %v6710 = vpop.f32.mrf.mxu0
        %v6711 = vpop.f32.mrf.mxu0
        %v6712 = vadd.f32 %v6551, %v6711
        %v6713 = vpop.f32.mrf.mxu0
        %6714 = vmatprep.mubr.bf16.mxu0 0
        %6715 = vmatmul.mubr.bf16.gmra.mxu0 %v6237
        %v6716 = vpop.f32.mrf.mxu0
        %v6717 = vadd.f32 %v6556, %v6716
        %v6718 = vpop.f32.mrf.mxu0
        %v6719 = vpop.f32.mrf.mxu0
        %v6720 = vadd.f32 %v6559, %v6719
        %v6721 = vpop.f32.mrf.mxu0
        %6722 = vmatprep.mubr.bf16.mxu0 0
        %6723 = vmatmul.mubr.bf16.gmra.mxu0 %v6240
        %v6724 = vpop.f32.mrf.mxu0
        %v6725 = vadd.f32 %v6564, %v6724
        %v6726 = vpop.f32.mrf.mxu0
        %v6727 = vpop.f32.mrf.mxu0
        %v6728 = vadd.f32 %v6567, %v6727
        %v6729 = vpop.f32.mrf.mxu0
        %6730 = vmatprep.mubr.bf16.mxu0 0
        %6731 = vmatmul.mubr.bf16.gmra.mxu0 %v6243
        %v6732 = vpop.f32.mrf.mxu0
        %v6733 = vadd.f32 %v6572, %v6732
        %v6734 = vpop.f32.mrf.mxu0
        %v6735 = vpop.f32.mrf.mxu0
        %v6736 = vadd.f32 %v6575, %v6735
        %v6737 = vpop.f32.mrf.mxu0
        %6738 = vmatprep.mubr.bf16.mxu0 0
        %6739 = vmatmul.mubr.bf16.gmra.mxu0 %v6246
        %v6740 = vpop.f32.mrf.mxu0
        %v6741 = vadd.f32 %v6580, %v6740
        %v6742 = vpop.f32.mrf.mxu0
        %v6743 = vpop.f32.mrf.mxu0
        %v6744 = vadd.f32 %v6583, %v6743
        %v6745 = vpop.f32.mrf.mxu0
        %6746 = vmatprep.mubr.bf16.mxu0 0
        %6747 = vmatmul.mubr.bf16.gmra.mxu0 %v6249
        %v6748 = vpop.f32.mrf.mxu0
        %v6749 = vadd.f32 %v6588, %v6748
        %v6750 = vpop.f32.mrf.mxu0
        %v6751 = vpop.f32.mrf.mxu0
        %v6752 = vadd.f32 %v6591, %v6751
        %v6753 = vpop.f32.mrf.mxu0
        %6754 = vmatprep.mubr.bf16.mxu0 0
        %6755 = vmatmul.mubr.bf16.gmra.mxu0 %v6252
        %v6756 = vpop.f32.mrf.mxu0
        %v6757 = vadd.f32 %v6596, %v6756
        %v6758 = vpop.f32.mrf.mxu0
        %v6759 = vpop.f32.mrf.mxu0
        %v6760 = vadd.f32 %v6599, %v6759
        %v6761 = vpop.f32.mrf.mxu0
        %6762 = vmatprep.mubr.bf16.mxu0 0
        %6763 = vmatmul.mubr.bf16.gmra.mxu0 %v6255
        %v6764 = vpop.f32.mrf.mxu0
        %v6765 = vadd.f32 %v6604, %v6764
        %v6766 = vpop.f32.mrf.mxu0
        %v6767 = vpop.f32.mrf.mxu0
        %v6768 = vadd.f32 %v6607, %v6767
        %v6769 = vpop.f32.mrf.mxu0
        %6770 = vdwg.mxu0
        %v6771 = vadd.f32 %v5985, %v6645
        %v6772 = vadd.f32 %v5988, %v6648
        %v6773 = vadd.f32 %v5993, %v6653
        %v6774 = vadd.f32 %v5996, %v6656
        %v6775 = vadd.f32 %v6001, %v6661
        %v6776 = vadd.f32 %v6004, %v6664
        %v6777 = vadd.f32 %v6009, %v6669
        %v6778 = vadd.f32 %v6012, %v6672
        %v6779 = vadd.f32 %v6017, %v6677
        %v6780 = vadd.f32 %v6020, %v6680
        %v6781 = vadd.f32 %v6025, %v6685
        %v6782 = vadd.f32 %v6028, %v6688
        %v6783 = vadd.f32 %v6033, %v6693
        %v6784 = vadd.f32 %v6036, %v6696
        %v6785 = vadd.f32 %v6041, %v6701
        %v6786 = vadd.f32 %v6044, %v6704
        %v6787 = vadd.f32 %v6049, %v6709
        %v6788 = vadd.f32 %v6052, %v6712
        %v6789 = vadd.f32 %v6057, %v6717
        %v6790 = vadd.f32 %v6060, %v6720
        %v6791 = vadd.f32 %v6065, %v6725
        %v6792 = vadd.f32 %v6068, %v6728
        %v6793 = vadd.f32 %v6073, %v6733
        %v6794 = vadd.f32 %v6076, %v6736
        %v6795 = vadd.f32 %v6081, %v6741
        %v6796 = vadd.f32 %v6084, %v6744
        %v6797 = vadd.f32 %v6089, %v6749
        %v6798 = vadd.f32 %v6092, %v6752
        %v6799 = vadd.f32 %v6097, %v6757
        %v6800 = vadd.f32 %v6100, %v6760
        %v6801 = vadd.f32 %v6105, %v6765
        %v6802 = vadd.f32 %v6108, %v6768
        %v6803 = vld [vmem:[%s6] sm:$0x1]
        %v6805 = vlaneseq
        %v6806 = vshrl.u32 %v6805, 7
        %v6807 = vsub.s32 0, %v6806
        %v6808 = vrot.slane %v6803, %v6807
        %v6810 = vadd.f32 %v6771, %v6808
        %v6811 = vadd.f32 %v6772, %v6808
        %v6812 = vadd.f32 %v6773, %v6808
        %v6813 = vadd.f32 %v6774, %v6808
        %v6814 = vadd.f32 %v6775, %v6808
        %v6815 = vadd.f32 %v6776, %v6808
        %v6816 = vadd.f32 %v6777, %v6808
        %v6817 = vadd.f32 %v6778, %v6808
        %v6818 = vadd.f32 %v6779, %v6808
        %v6819 = vadd.f32 %v6780, %v6808
        %v6820 = vadd.f32 %v6781, %v6808
        %v6821 = vadd.f32 %v6782, %v6808
        %v6822 = vadd.f32 %v6783, %v6808
        %v6823 = vadd.f32 %v6784, %v6808
        %v6824 = vadd.f32 %v6785, %v6808
        %v6825 = vadd.f32 %v6786, %v6808
        %v6826 = vadd.f32 %v6787, %v6808
        %v6827 = vadd.f32 %v6788, %v6808
        %v6828 = vadd.f32 %v6789, %v6808
        %v6829 = vadd.f32 %v6790, %v6808
        %v6830 = vadd.f32 %v6791, %v6808
        %v6831 = vadd.f32 %v6792, %v6808
        %v6832 = vadd.f32 %v6793, %v6808
        %v6833 = vadd.f32 %v6794, %v6808
        %v6834 = vadd.f32 %v6795, %v6808
        %v6835 = vadd.f32 %v6796, %v6808
        %v6836 = vadd.f32 %v6797, %v6808
        %v6837 = vadd.f32 %v6798, %v6808
        %v6838 = vadd.f32 %v6799, %v6808
        %v6839 = vadd.f32 %v6800, %v6808
        %v6840 = vadd.f32 %v6801, %v6808
        %v6841 = vadd.f32 %v6802, %v6808
        %v6842 = vmax.f32 %v6810, 0.0
        %v6843 = vmax.f32 %v6811, 0.0
        %v6844 = vmax.f32 %v6812, 0.0
        %v6845 = vmax.f32 %v6813, 0.0
        %v6846 = vmax.f32 %v6814, 0.0
        %v6847 = vmax.f32 %v6815, 0.0
        %v6848 = vmax.f32 %v6816, 0.0
        %v6849 = vmax.f32 %v6817, 0.0
        %v6850 = vmax.f32 %v6818, 0.0
        %v6851 = vmax.f32 %v6819, 0.0
        %v6852 = vmax.f32 %v6820, 0.0
        %v6853 = vmax.f32 %v6821, 0.0
        %v6854 = vmax.f32 %v6822, 0.0
        %v6855 = vmax.f32 %v6823, 0.0
        %v6856 = vmax.f32 %v6824, 0.0
        %v6857 = vmax.f32 %v6825, 0.0
        %v6858 = vmax.f32 %v6826, 0.0
        %v6859 = vmax.f32 %v6827, 0.0
        %v6860 = vmax.f32 %v6828, 0.0
        %v6861 = vmax.f32 %v6829, 0.0
        %v6862 = vmax.f32 %v6830, 0.0
        %v6863 = vmax.f32 %v6831, 0.0
        %v6864 = vmax.f32 %v6832, 0.0
        %v6865 = vmax.f32 %v6833, 0.0
        %v6866 = vmax.f32 %v6834, 0.0
        %v6867 = vmax.f32 %v6835, 0.0
        %v6868 = vmax.f32 %v6836, 0.0
        %v6869 = vmax.f32 %v6837, 0.0
        %v6870 = vmax.f32 %v6838, 0.0
        %v6871 = vmax.f32 %v6839, 0.0
        %v6872 = vmax.f32 %v6840, 0.0
        %v6873 = vmax.f32 %v6841, 0.0
        %6874 = vst [vmem:[%s340] sm:$0xff] %v6842
        %6875 = vst [vmem:[%s340 + $0x8] sm:$0xff] %v6843
        %6876 = vst [vmem:[%s340 + $0x10] sm:$0xff] %v6844
        %6877 = vst [vmem:[%s340 + $0x18] sm:$0xff] %v6845
        %6878 = vst [vmem:[%s340 + $0x20] sm:$0xff] %v6846
        %6879 = vst [vmem:[%s340 + $0x28] sm:$0xff] %v6847
        %6880 = vst [vmem:[%s340 + $0x30] sm:$0xff] %v6848
        %6881 = vst [vmem:[%s340 + $0x38] sm:$0xff] %v6849
        %6882 = vst [vmem:[%s340 + $0x40] sm:$0xff] %v6850
        %6883 = vst [vmem:[%s340 + $0x48] sm:$0xff] %v6851
        %6884 = vst [vmem:[%s340 + $0x50] sm:$0xff] %v6852
        %6885 = vst [vmem:[%s340 + $0x58] sm:$0xff] %v6853
        %6886 = vst [vmem:[%s340 + $0x60] sm:$0xff] %v6854
        %6887 = vst [vmem:[%s340 + $0x68] sm:$0xff] %v6855
        %6888 = vst [vmem:[%s340 + $0x70] sm:$0xff] %v6856
        %6889 = vst [vmem:[%s340 + $0x78] sm:$0xff] %v6857
        %6890 = vst [vmem:[%s340 + $0x80] sm:$0xff] %v6858
        %6891 = vst [vmem:[%s340 + $0x88] sm:$0xff] %v6859
        %6892 = vst [vmem:[%s340 + $0x90] sm:$0xff] %v6860
        %6893 = vst [vmem:[%s340 + $0x98] sm:$0xff] %v6861
        %6894 = vst [vmem:[%s340 + $0xa0] sm:$0xff] %v6862
        %6895 = vst [vmem:[%s340 + $0xa8] sm:$0xff] %v6863
        %6896 = vst [vmem:[%s340 + $0xb0] sm:$0xff] %v6864
        %6897 = vst [vmem:[%s340 + $0xb8] sm:$0xff] %v6865
        %6898 = vst [vmem:[%s340 + $0xc0] sm:$0xff] %v6866
        %6899 = vst [vmem:[%s340 + $0xc8] sm:$0xff] %v6867
        %6900 = vst [vmem:[%s340 + $0xd0] sm:$0xff] %v6868
        %6901 = vst [vmem:[%s340 + $0xd8] sm:$0xff] %v6869
        %6902 = vst [vmem:[%s340 + $0xe0] sm:$0xff] %v6870
        %6903 = vst [vmem:[%s340 + $0xe8] sm:$0xff] %v6871
        %6904 = vst [vmem:[%s340 + $0xf0] sm:$0xff] %v6872
        %6905 = vst [vmem:[%s340 + $0xf8] sm:$0xff] %v6873
        %s6906 = sand.u32 %s186, 1
        %s6907 = scalar_lea.sflag [#allocation7], %s6906
        %s6908 = sand.u32 %s186, 1
        %s6909 = smul.addr %s6908, 256
        %s6910 = scalar_lea.vmem [#allocation13], %s6909
        // Predicated region
        $region65: #{tpu_custom_call.1} parent=47 // pred_check
          %p6911 = pneg %p196
        $region66: #{tpu_custom_call.1} parent=47 // pred_check_branch
          %6913 = sbr.rel (%p6911) target = $region68
        $region67: #{tpu_custom_call.1} parent=47 // pred_region
          %s6915 = ssub.s32 4096, 4096
          %6916 = vsyncadd %s6907, %s6915
          %s6917 = smul.addr %s26, 32
          %s6918 = smul.addr %s6917, 128
          %s6919 = scalar_lea.hbm %s7, %s6918
          %s6920 = sshll.u32 %s6910, 4
          %s6921 = int_to_ptr.vmem [resolvable:$true] %s6920
          %6926 = dma.vmem_to_hbm [thread:$0]  %s6921, 4096, %s6919, %s6907, 128, 128, 8
        $region68: #{tpu_custom_call.1} parent=47 // pred_fallthru
          _
      $region48: #{tpu_custom_call.1} parent=5 // pred_fallthru
        _
      %p6927 = scmp.le.s32.totalorder 2, %s21
      // Predicated region
      $region69: #{tpu_custom_call.1} parent=5 // pred_check
        %p6928 = pneg %p6927
      $region70: #{tpu_custom_call.1} parent=5 // pred_check_branch
        %6930 = sbr.rel (%p6928) target = $region72
      $region71: #{tpu_custom_call.1} parent=5 // pred_region
        %s6931 = ssub.s32 %s21, 2
        // Predicated region
        $region73: #{tpu_custom_call.1} parent=71 // pred_check
          %p6932 = pneg %p202
        $region74: #{tpu_custom_call.1} parent=71 // pred_check_branch
          %6934 = sbr.rel (%p6932) target = $region76
        $region75: #{tpu_custom_call.1} parent=71 // pred_region
          %s6935 = sand.u32 %s187, 1
          %s6936 = scalar_lea.sflag [#allocation7], %s6935
          %s6937 = sand.u32 %s187, 1
          %s6938 = smul.addr %s6937, 256
          %s6939 = scalar_lea.vmem [#allocation13], %s6938
          %6940 = dma.done %s6936, 4096
        $region76: #{tpu_custom_call.1} parent=71 // pred_fallthru
          _
      $region72: #{tpu_custom_call.1} parent=5 // pred_fallthru
        _
    $region6: #{tpu_custom_call.1} parent=1 // loop_footer
      %s25 = sadd.s32 1, %s21
    $region7: #{tpu_custom_call.1} parent=1 // loop_footer_branch
      %20 = sbr.rel target = $region3
    $region8: #{tpu_custom_call.1} parent=1 // loop_exit
      _
    %6941 = vsyncpa [#allocation6], 1
    %s6942 = scalar_lea.sflag [#allocation6], 1
    %6943 = vsyncpa %s6942, 1
    %6944 = vsyncpa [#allocation9], 1
    %6945 = vsyncpa [#allocation12], 1
    %6946 = vsyncpa [#allocation7], 1
    %s6947 = scalar_lea.sflag [#allocation7], 1
    %6948 = vsyncpa %s6947, 1

</llo_original>
